<compile_context>
chip_gen: v7x
topology: tpu7x:2x2x1
jax: 0.10.0
libtpu: 0.0.40
codegen_flags: <defaults>
</compile_context>

<pallas_src>
import functools
import math

import jax
import jax.numpy as jnp
from jax import lax
from jax.experimental import pallas as pl
from jax.experimental.pallas import tpu as pltpu

# ----------------------------- hyper-parameters --------------------------------
X_DIM = 13            # col 8 = start_soc, col 7 = second loc (-6) => x_dim = 13
TIME_STEP = 8
N_HEAD = 4
N_LAYERS = 2
D_MODEL = 32
N_LOC = 10
EMBED_LEN = 4
X_ENCLEN = X_DIM - 2 + 2 * EMBED_LEN                 # 19
D_IN_FULL = D_MODEL + 10 + 2 * EMBED_LEN             # 50 (type + all GMM heads)
D_IN_LOC = D_MODEL + 11 + EMBED_LEN                  # 47 (loc head)
GMM_COMPS = (8, 5, 5, 6, 3)                          # start_hour, dist, dur, end_soc, stay
N_GMM = sum(GMM_COMPS)                               # 27
P0_LATENT = 6
P0_HIDDEN = 256

# shared decoder-input layout: [xe(32) | c0(1) emb1(4) c2..c6(5) emb2(4) c8..c12(5)]
X_FULL = D_MODEL + 1 + EMBED_LEN + 5 + EMBED_LEN + 5          # 51
COND_LEN = X_FULL - D_MODEL                                   # 19
COND_C0 = 0                                                   # trip type
COND_SOC = 1 + EMBED_LEN + 5 + EMBED_LEN                      # 14 (cond col 8)
XF_C0 = D_MODEL                                               # dropped by type head
XF_EMB1 = D_MODEL + 1                                         # dropped by loc head
XF_CMID = D_MODEL + 1 + EMBED_LEN                             # 37 (GMM head j drops 37+j)

# packed decoder-head output lanes (lane-aligned sections inside 128 lanes)
HEAD_N = 128
DISC_OFF, DISC_W = 0, 2 + N_LOC                               # 12
GW_OFF, GM_OFF, GS_OFF = 16, 48, 80


# ----------------------------- fused Pallas kernel -----------------------------
def _fused_kernel(x_ref, cond_ref, y_ref, init_ref,
                  lw_ref, lb_ref, pe_ref, mask_ref,
                  wqkv_ref, bqkv_ref, wo_ref, bo_ref,
                  wff1_ref, bff1_ref, wff2_ref, bff2_ref,
                  ln1g_ref, ln1b_ref, ln2g_ref, ln2b_ref,
                  hw_ref, hb_ref,
                  p0w1_ref, p0b1_ref, p0w2_ref, p0b2_ref,
                  out_ref, *, b_blk, n_layers, n_head, d_model):
    t = TIME_STEP
    m = b_blk * t
    dh = d_model // n_head
    scale = 1.0 / math.sqrt(dh)

    def layer_norm(x, g, b):
        mu = jnp.mean(x, axis=-1, keepdims=True)
        var = jnp.mean((x - mu) ** 2, axis=-1, keepdims=True)
        return (x - mu) * lax.rsqrt(var + 1e-5) * g + b

    # ---- encoder on the flattened [m, .] slab (MXU-sized row counts) ----------
    x = jnp.dot(x_ref[...].astype(jnp.bfloat16), lw_ref[...],
                preferred_element_type=jnp.float32) + lb_ref[...]
    x = (x.reshape(b_blk, t, d_model) + pe_ref[...]).reshape(m, d_model)
    mask = mask_ref[...]

    for l in range(n_layers):
        xb = x.astype(jnp.bfloat16)
        qkv = jnp.dot(xb, wqkv_ref[l],
                      preferred_element_type=jnp.float32) + bqkv_ref[l]
        q = (qkv[:, 0:d_model] * scale).reshape(b_blk, t, d_model)
        k = qkv[:, d_model:2 * d_model].reshape(b_blk, t, d_model)
        v = qkv[:, 2 * d_model:3 * d_model].reshape(b_blk, t, d_model)

        heads = []
        for h in range(n_head):
            qh = q[:, :, h * dh:(h + 1) * dh].astype(jnp.bfloat16)
            kh = k[:, :, h * dh:(h + 1) * dh].astype(jnp.bfloat16)
            vh = v[:, :, h * dh:(h + 1) * dh].astype(jnp.bfloat16)
            s = jnp.einsum('bqd,bkd->bqk', qh, kh,
                           preferred_element_type=jnp.float32) + mask
            s = s - jnp.max(s, axis=-1, keepdims=True)
            p = jnp.exp(s)
            p = p * pl.reciprocal(jnp.sum(p, axis=-1, keepdims=True), approx=True)
            heads.append(jnp.einsum('bqk,bkd->bqd', p.astype(jnp.bfloat16), vh,
                                    preferred_element_type=jnp.float32))
        attn = jnp.concatenate(heads, axis=-1).reshape(m, d_model)
        attn = jnp.dot(attn.astype(jnp.bfloat16), wo_ref[l],
                       preferred_element_type=jnp.float32) + bo_ref[l]

        x = layer_norm(x + attn, ln1g_ref[l], ln1b_ref[l])
        ff = jnp.dot(x.astype(jnp.bfloat16), wff1_ref[l],
                     preferred_element_type=jnp.float32) + bff1_ref[l]
        ff = jnp.maximum(ff, 0.0)
        ff = jnp.dot(ff.astype(jnp.bfloat16), wff2_ref[l],
                     preferred_element_type=jnp.float32) + bff2_ref[l]
        x = layer_norm(x + ff, ln2g_ref[l], ln2b_ref[l])

    # ---- all 7 decoder heads in ONE packed [51,128] GEMM ----------------------
    cond = cond_ref[...]                                   # (m, 19)
    y = y_ref[...]                                         # (m, 7)
    x_full = jnp.concatenate([x, cond], axis=-1)           # (m, 51)
    ho = jnp.dot(x_full.astype(jnp.bfloat16), hw_ref[...],
                 preferred_element_type=jnp.float32) + hb_ref[...]   # (m, 128)

    disc = ho[:, DISC_OFF:DISC_OFF + DISC_W]
    gw = ho[:, GW_OFF:GW_OFF + N_GMM]
    gm = ho[:, GM_OFF:GM_OFF + N_GMM]
    gs = ho[:, GS_OFF:GS_OFF + N_GMM]

    def log_softmax(l_):
        mx = jnp.max(l_, axis=-1, keepdims=True)
        return l_ - mx - jnp.log(jnp.sum(jnp.exp(l_ - mx), axis=-1, keepdims=True))

    # discrete heads: type (2) and loc (N_LOC), clipped targets
    logp_sum = jnp.zeros((1, 1), jnp.float32)
    off = 0
    for j, n_out in enumerate((2, N_LOC)):
        ls = log_softmax(disc[:, off:off + n_out])
        yi = jnp.clip(y[:, j:j + 1].astype(jnp.int32), 0, n_out - 1)
        onehot = (lax.broadcasted_iota(jnp.int32, ls.shape, 1) == yi).astype(jnp.float32)
        logp_sum = logp_sum + jnp.sum(ls * onehot, keepdims=True)
        off += n_out

    # GMM heads: full-width element-wise math, per-head segment reductions
    def seg_bcast(parts):
        return jnp.concatenate(
            [jnp.broadcast_to(p_, (m, n)) for p_, n in zip(parts, GMM_COMPS)], axis=-1)

    def seg_reduce(x_, op):
        parts, o = [], 0
        for n in GMM_COMPS:
            parts.append(op(x_[:, o:o + n], axis=-1, keepdims=True))
            o += n
        return parts

    # stable softplus, full width
    sig = jnp.maximum(gs, 0.0) + jnp.log(1.0 + jnp.exp(-jnp.abs(gs))) + 1e-3
    y_gmm = seg_bcast([y[:, 2 + j:3 + j] for j in range(len(GMM_COMPS))])
    z = (y_gmm - gm) / sig                                  # exact divide (loss path)
    comp_lp = -0.5 * z * z - jnp.log(sig) - 0.5 * math.log(2.0 * math.pi)

    wmax = seg_bcast(seg_reduce(gw, jnp.max))
    ew = jnp.exp(gw - wmax)                                 # one full-width exp
    wsum = seg_bcast(seg_reduce(ew, jnp.sum))
    lw_ = gw - wmax - jnp.log(wsum)                         # log mixture weights
    probs_mu = (ew / wsum) * gm                             # for surrogate samples

    tot = lw_ + comp_lp
    tmax = seg_bcast(seg_reduce(tot, jnp.max))
    et = jnp.exp(tot - tmax)                                # one full-width exp
    tsum_parts = seg_reduce(et, jnp.sum)
    samp_parts = seg_reduce(probs_mu, jnp.sum)

    o = 0
    for j, n in enumerate(GMM_COMPS):
        lp_j = tmax[:, o:o + 1] + jnp.log(tsum_parts[j])    # (m,1) per-head logsumexp
        logp_sum = logp_sum + jnp.sum(lp_j, keepdims=True)
        o += n
    samp = jnp.concatenate(samp_parts, axis=-1)             # (m,5) surrogate samples

    # constraint-loss partial sums
    trip = cond[:, COND_C0:COND_C0 + 1]
    start_soc = cond[:, COND_SOC:COND_SOC + 1]
    flag = start_soc - samp[:, 3:4]                         # start_soc - end_soc
    s0 = jnp.maximum((1.0 - trip) * flag, 0.0)
    s1 = jnp.maximum(-trip * flag, 0.0)
    end_sum = jnp.sum(s0 * s0 + s1 * s1, keepdims=True)
    up = jnp.maximum(samp - 1.0, 0.0)
    lo = jnp.maximum(-samp, 0.0)
    bound_sum = jnp.sum(up * up + lo * lo, keepdims=True)

    # p0 MLP (Initial_Gen surrogate) - tiny, recomputed per block (identical value)
    h0 = jnp.maximum(jnp.dot(init_ref[...].astype(jnp.bfloat16), p0w1_ref[...],
                             preferred_element_type=jnp.float32) + p0b1_ref[...], 0.0)
    z0 = jnp.dot(h0.astype(jnp.bfloat16), p0w2_ref[...],
                 preferred_element_type=jnp.float32) + p0b2_ref[...]
    p0_val = jnp.mean(z0 * z0, keepdims=True)

    # lane-dense (1,1,128) partial-sum row: [logp_sum, end_sum, bound_sum, p0, 0...]
    lane = lax.broadcasted_iota(jnp.int32, (1, HEAD_N), 1)
    row = (jnp.where(lane == 0, logp_sum, 0.0)
           + jnp.where(lane == 1, end_sum, 0.0)
           + jnp.where(lane == 2, bound_sum, 0.0)
           + jnp.where(lane == 3, p0_val, 0.0))
    out_ref[...] = row.reshape(1, 1, HEAD_N)


def _pick_b_blk(batch, target=32):
    """Largest divisor of `batch` <= min(target, batch//2): >=2 parallel grid
    steps (v7x megacore) and up to 32 sequences (256 rows) per step."""
    cap = max(1, min(target, batch // 2 if batch >= 2 else batch))
    for d in range(cap, 0, -1):
        if batch % d == 0:
            return d
    return 1


# ----------------------------- parameters --------------------------------------
def _dense_init(key, fan_in, fan_out):
    kw, kb = jax.random.split(key)
    w = jax.random.normal(kw, (fan_in, fan_out), jnp.float32) / math.sqrt(fan_in)
    b = jax.random.normal(kb, (fan_out,), jnp.float32) * 0.01
    return w, b


def _scatter_rows(w, keep_rows):
    """Place rows of w at keep_rows of a zero [X_FULL, n] matrix (encodes each
    head's 'own feature column dropped' in the shared decoder input)."""
    out = jnp.zeros((X_FULL, w.shape[1]), jnp.float32)
    return out.at[jnp.asarray(keep_rows)].set(w)


def init_params(key):
    keys = iter(jax.random.split(key, 64))
    p = {}
    p["embed"] = jax.random.normal(next(keys), (N_LOC, EMBED_LEN), jnp.float32)

    lw, lb = _dense_init(next(keys), X_ENCLEN, D_MODEL)
    p["local_w"] = lw.astype(jnp.bfloat16)
    p["local_b"] = lb.reshape(1, D_MODEL)

    # sinusoidal positional encoding (PositionalEncoding reconstruction)
    pos = jnp.arange(TIME_STEP, dtype=jnp.float32)[:, None]
    div = jnp.exp(jnp.arange(0, D_MODEL, 2, dtype=jnp.float32)
                  * (-math.log(10000.0) / D_MODEL))
    pe = jnp.zeros((TIME_STEP, D_MODEL), jnp.float32)
    pe = pe.at[:, 0::2].set(jnp.sin(pos * div))
    pe = pe.at[:, 1::2].set(jnp.cos(pos * div))
    p["pos_enc"] = pe

    # additive causal mask (torch.triu(..., diagonal=1) == True -> masked)
    tri = jnp.triu(jnp.ones((TIME_STEP, TIME_STEP), jnp.float32), k=1)
    p["attn_mask"] = tri * (-1e9)

    # transformer layers, stacked along a leading layer axis (MXU weights bf16)
    wqkv, bqkv, wo, bo, wff1, bff1, wff2, bff2 = ([] for _ in range(8))
    ln1g, ln1b, ln2g, ln2b = ([] for _ in range(4))
    for _ in range(N_LAYERS):
        w, b = _dense_init(next(keys), D_MODEL, 3 * D_MODEL)
        wqkv.append(w); bqkv.append(b.reshape(1, -1))
        w, b = _dense_init(next(keys), D_MODEL, D_MODEL)
        wo.append(w); bo.append(b.reshape(1, -1))
        w, b = _dense_init(next(keys), D_MODEL, 4 * D_MODEL)
        wff1.append(w); bff1.append(b.reshape(1, -1))
        w, b = _dense_init(next(keys), 4 * D_MODEL, D_MODEL)
        wff2.append(w); bff2.append(b.reshape(1, -1))
        ln1g.append(jnp.ones((1, D_MODEL), jnp.float32))
        ln1b.append(jnp.zeros((1, D_MODEL), jnp.float32))
        ln2g.append(jnp.ones((1, D_MODEL), jnp.float32))
        ln2b.append(jnp.zeros((1, D_MODEL), jnp.float32))
    stack = lambda lst: jnp.stack(lst, axis=0)
    p["w_qkv"] = stack(wqkv).astype(jnp.bfloat16); p["b_qkv"] = stack(bqkv)
    p["w_o"] = stack(wo).astype(jnp.bfloat16);     p["b_o"] = stack(bo)
    p["w_ff1"] = stack(wff1).astype(jnp.bfloat16); p["b_ff1"] = stack(bff1)
    p["w_ff2"] = stack(wff2).astype(jnp.bfloat16); p["b_ff2"] = stack(bff2)
    p["ln1_g"] = stack(ln1g); p["ln1_b"] = stack(ln1b)
    p["ln2_g"] = stack(ln2g); p["ln2_b"] = stack(ln2b)

    # --- all 7 decoder heads packed into ONE lane-aligned [51,128] matrix ------
    type_w, type_b = _dense_init(next(keys), D_IN_FULL, 2)
    loc_w, loc_b = _dense_init(next(keys), D_IN_LOC, N_LOC)
    rows_type = [r for r in range(X_FULL) if r != XF_C0]
    rows_loc = [r for r in range(X_FULL) if not (XF_EMB1 <= r < XF_EMB1 + EMBED_LEN)]
    wd = jnp.concatenate([_scatter_rows(type_w, rows_type),
                          _scatter_rows(loc_w, rows_loc)], axis=1)      # [51,12]
    bd = jnp.concatenate([type_b, loc_b])

    ww_l, bw_l, wm_l, bm_l, ws_l, bs_l = ([] for _ in range(6))
    for j, n_comp in enumerate(GMM_COMPS):
        rows = [r for r in range(X_FULL) if r != XF_CMID + j]
        w, b = _dense_init(next(keys), D_IN_FULL, n_comp)
        ww_l.append(_scatter_rows(w, rows)); bw_l.append(b)
        w, b = _dense_init(next(keys), D_IN_FULL, n_comp)
        wm_l.append(_scatter_rows(w, rows)); bm_l.append(b)
        w, b = _dense_init(next(keys), D_IN_FULL, n_comp)
        ws_l.append(_scatter_rows(w, rows)); bs_l.append(b)
    ww = jnp.concatenate(ww_l, axis=1); bw = jnp.concatenate(bw_l)       # [51,27]
    wm = jnp.concatenate(wm_l, axis=1); bm = jnp.concatenate(bm_l)
    ws = jnp.concatenate(ws_l, axis=1); bs = jnp.concatenate(bs_l)

    hw = jnp.zeros((X_FULL, HEAD_N), jnp.float32)
    hb = jnp.zeros((HEAD_N,), jnp.float32)
    for w_, b_, o_ in ((wd, bd, DISC_OFF), (ww, bw, GW_OFF),
                       (wm, bm, GM_OFF), (ws, bs, GS_OFF)):
        hw = hw.at[:, o_:o_ + w_.shape[1]].set(w_)
        hb = hb.at[o_:o_ + b_.shape[0]].set(b_)
    p["head_w"] = hw.astype(jnp.bfloat16)
    p["head_b"] = hb.reshape(1, HEAD_N)

    w1, b1 = _dense_init(next(keys), P0_LATENT, P0_HIDDEN)
    w2, b2 = _dense_init(next(keys), P0_HIDDEN, P0_LATENT)
    p["p0_w1"] = w1.astype(jnp.bfloat16); p["p0_b1"] = b1.reshape(1, -1)
    p["p0_w2"] = w2.astype(jnp.bfloat16); p["p0_b2"] = b2.reshape(1, -1)
    return p


# ----------------------------- forward pass -------------------------------------
def forward(params, batch_x, init, *, b_blk=None):
    B, T, _ = batch_x.shape
    assert T == TIME_STEP
    if b_blk is None:
        b_blk = _pick_b_blk(B)
    assert B % b_blk == 0
    nb = B // b_blk
    M = B * T
    rows = b_blk * T

    # ---- input featurization (tiny glue in plain JAX: gathers + concats) ------
    y7 = batch_x[:, :, :7].reshape(M, 7)
    seq = jnp.concatenate([batch_x[:, :, :-1],
                           jnp.floor(batch_x[:, :, -1:] * 12.0)], axis=-1)
    emb_tab = params["embed"]
    loc1 = jnp.clip(seq[:, :, 1].astype(jnp.int32), 0, N_LOC - 1)
    loc2 = jnp.clip(seq[:, :, X_DIM - 6].astype(jnp.int32), 0, N_LOC - 1)
    emb1 = jnp.take(emb_tab, loc1, axis=0)
    emb2 = jnp.take(emb_tab, loc2, axis=0)

    x_init = jnp.concatenate([seq[:, :, 0:1], emb1, seq[:, :, 2:X_DIM - 6],
                              emb2, seq[:, :, X_DIM - 5:]], axis=-1)   # [B,T,19]
    head_w = X_ENCLEN - 5 - EMBED_LEN
    x_0 = jnp.concatenate([jnp.full((B, 1, head_w), -0.1, jnp.float32),
                           x_init[:, 0:1, -(5 + EMBED_LEN):]], axis=-1)
    x_init = jnp.concatenate([x_0, x_init[:, :-1, :]], axis=1).reshape(M, X_ENCLEN)

    cond_tail = jnp.concatenate([seq[:, :, 0:1], emb1, seq[:, :, 2:7],
                                 emb2, seq[:, :, 8:X_DIM]], axis=-1).reshape(M, COND_LEN)

    kernel = functools.partial(_fused_kernel, b_blk=b_blk, n_layers=N_LAYERS,
                               n_head=N_HEAD, d_model=D_MODEL)
    row_spec = lambda f: pl.BlockSpec((rows, f), lambda b: (b, 0))
    c2 = lambda b: (0, 0)
    c3 = lambda b: (0, 0, 0)
    L = N_LAYERS

    partials = pl.pallas_call(
        kernel,
        out_shape=jax.ShapeDtypeStruct((nb, 1, HEAD_N), jnp.float32),
        grid=(nb,),
        in_specs=[
            row_spec(X_ENCLEN),                               # x_init rows
            row_spec(COND_LEN),                               # cond tail rows
            row_spec(7),                                      # targets
            pl.BlockSpec(init.shape, c2),                     # p0 input
            pl.BlockSpec((X_ENCLEN, D_MODEL), c2),
            pl.BlockSpec((1, D_MODEL), c2),
            pl.BlockSpec((TIME_STEP, D_MODEL), c2),
            pl.BlockSpec((TIME_STEP, TIME_STEP), c2),
            pl.BlockSpec((L, D_MODEL, 3 * D_MODEL), c3),
            pl.BlockSpec((L, 1, 3 * D_MODEL), c3),
            pl.BlockSpec((L, D_MODEL, D_MODEL), c3),
            pl.BlockSpec((L, 1, D_MODEL), c3),
            pl.BlockSpec((L, D_MODEL, 4 * D_MODEL), c3),
            pl.BlockSpec((L, 1, 4 * D_MODEL), c3),
            pl.BlockSpec((L, 4 * D_MODEL, D_MODEL), c3),
            pl.BlockSpec((L, 1, D_MODEL), c3),
            pl.BlockSpec((L, 1, D_MODEL), c3),
            pl.BlockSpec((L, 1, D_MODEL), c3),
            pl.BlockSpec((L, 1, D_MODEL), c3),
            pl.BlockSpec((L, 1, D_MODEL), c3),
            pl.BlockSpec((X_FULL, HEAD_N), c2),
            pl.BlockSpec((1, HEAD_N), c2),
            pl.BlockSpec((P0_LATENT, P0_HIDDEN), c2),
            pl.BlockSpec((1, P0_HIDDEN), c2),
            pl.BlockSpec((P0_HIDDEN, P0_LATENT), c2),
            pl.BlockSpec((1, P0_LATENT), c2),
        ],
        out_specs=pl.BlockSpec((1, 1, HEAD_N), lambda b: (b, 0, 0)),
        compiler_params=pltpu.CompilerParams(dimension_semantics=("parallel",)),
    )(x_init, cond_tail, y7, init,
      params["local_w"], params["local_b"], params["pos_enc"], params["attn_mask"],
      params["w_qkv"], params["b_qkv"], params["w_o"], params["b_o"],
      params["w_ff1"], params["b_ff1"], params["w_ff2"], params["b_ff2"],
      params["ln1_g"], params["ln1_b"], params["ln2_g"], params["ln2_b"],
      params["head_w"], params["head_b"],
      params["p0_w1"], params["p0_b1"], params["p0_w2"], params["p0_b2"])

    # tiny final reduction over blocks (keeps the grid axis fully "parallel")
    parts = partials.reshape(nb, HEAD_N)
    logp_total = jnp.sum(parts[:, 0])
    end_total = jnp.sum(parts[:, 1])
    bound_total = jnp.sum(parts[:, 2])
    p0_loss = parts[0, 3]
    recon_loss = -logp_total / M
    cond_loss = end_total / M + bound_total / (M * 5)
    return p0_loss, recon_loss, cond_loss


# ----------------------------- demo ---------------------------------------------
if __name__ == "__main__":
    key = jax.random.PRNGKey(0)
    kp, kd, ki = jax.random.split(key, 3)
    params = init_params(kp)

    B, T = 4, TIME_STEP
    ks = jax.random.split(kd, 5)
    col0 = jax.random.randint(ks[0], (B, T, 1), 0, 2).astype(jnp.float32)        # type
    col1 = jax.random.randint(ks[1], (B, T, 1), 0, N_LOC).astype(jnp.float32)    # loc
    cols2_6 = jax.random.uniform(ks[2], (B, T, 5), jnp.float32)                  # hr/dist/dur/soc/stay
    col7 = jax.random.randint(ks[3], (B, T, 1), 0, N_LOC).astype(jnp.float32)    # loc (c0)
    cols8_12 = jax.random.uniform(ks[4], (B, T, 5), jnp.float32)                 # soc/.../day/month
    batch_x = jnp.concatenate([col0, col1, cols2_6, col7, cols8_12], axis=-1)    # [B,T,13]
    init = jax.random.uniform(ki, (B, P0_LATENT), jnp.float32)

    fwd = jax.jit(functools.partial(forward, params))
    p0_loss, recon_loss, cond_loss = fwd(batch_x, init)
    jax.block_until_ready((p0_loss, recon_loss, cond_loss))
    assert bool(jnp.isfinite(p0_loss)) and bool(jnp.isfinite(recon_loss)) \
        and bool(jnp.isfinite(cond_loss))
    print("KERNEL_OK")
</pallas_src>

<mosaic_0001>
module attributes {stable_mosaic.version = 11 : i64} {
  func.func @_fused_kernel(%arg0: i32, %arg1: memref<16x19xf32, #tpu.memory_space<vmem>>, %arg2: memref<16x19xf32, #tpu.memory_space<vmem>>, %arg3: memref<16x7xf32, #tpu.memory_space<vmem>>, %arg4: memref<4x6xf32, #tpu.memory_space<vmem>>, %arg5: memref<19x32xbf16, #tpu.memory_space<vmem>>, %arg6: memref<1x32xf32, #tpu.memory_space<vmem>>, %arg7: memref<8x32xf32, #tpu.memory_space<vmem>>, %arg8: memref<8x8xf32, #tpu.memory_space<vmem>>, %arg9: memref<2x32x96xbf16, #tpu.memory_space<vmem>>, %arg10: memref<2x1x96xf32, #tpu.memory_space<vmem>>, %arg11: memref<2x32x32xbf16, #tpu.memory_space<vmem>>, %arg12: memref<2x1x32xf32, #tpu.memory_space<vmem>>, %arg13: memref<2x32x128xbf16, #tpu.memory_space<vmem>>, %arg14: memref<2x1x128xf32, #tpu.memory_space<vmem>>, %arg15: memref<2x128x32xbf16, #tpu.memory_space<vmem>>, %arg16: memref<2x1x32xf32, #tpu.memory_space<vmem>>, %arg17: memref<2x1x32xf32, #tpu.memory_space<vmem>>, %arg18: memref<2x1x32xf32, #tpu.memory_space<vmem>>, %arg19: memref<2x1x32xf32, #tpu.memory_space<vmem>>, %arg20: memref<2x1x32xf32, #tpu.memory_space<vmem>>, %arg21: memref<51x128xbf16, #tpu.memory_space<vmem>>, %arg22: memref<1x128xf32, #tpu.memory_space<vmem>>, %arg23: memref<6x256xbf16, #tpu.memory_space<vmem>>, %arg24: memref<1x256xf32, #tpu.memory_space<vmem>>, %arg25: memref<256x6xbf16, #tpu.memory_space<vmem>>, %arg26: memref<1x6xf32, #tpu.memory_space<vmem>>, %arg27: memref<1x1x128xf32, #tpu.memory_space<vmem>>) attributes {dimension_semantics = [#tpu.dimension_semantics<parallel>], iteration_bounds = array<i64: 2>, scalar_prefetch = 0 : i64, scratch_operands = 0 : i64, tpu.core_type = #tpu.core_type<tc>, window_params = [{transform_indices = @transform_0, window_bounds = array<i64: 16, 19>}, {transform_indices = @transform_1, window_bounds = array<i64: 16, 19>}, {transform_indices = @transform_2, window_bounds = array<i64: 16, 7>}, {pipeline_mode = #tpu.pipeline_mode<synchronous>, transform_indices = @transform_3, window_bounds = array<i64: 4, 6>}, {pipeline_mode = #tpu.pipeline_mode<synchronous>, transform_indices = @transform_4, window_bounds = array<i64: 19, 32>}, {pipeline_mode = #tpu.pipeline_mode<synchronous>, transform_indices = @transform_5, window_bounds = array<i64: 1, 32>}, {pipeline_mode = #tpu.pipeline_mode<synchronous>, transform_indices = @transform_6, window_bounds = array<i64: 8, 32>}, {pipeline_mode = #tpu.pipeline_mode<synchronous>, transform_indices = @transform_7, window_bounds = array<i64: 8, 8>}, {pipeline_mode = #tpu.pipeline_mode<synchronous>, transform_indices = @transform_8, window_bounds = array<i64: 2, 32, 96>}, {pipeline_mode = #tpu.pipeline_mode<synchronous>, transform_indices = @transform_9, window_bounds = array<i64: 2, 1, 96>}, {pipeline_mode = #tpu.pipeline_mode<synchronous>, transform_indices = @transform_10, window_bounds = array<i64: 2, 32, 32>}, {pipeline_mode = #tpu.pipeline_mode<synchronous>, transform_indices = @transform_11, window_bounds = array<i64: 2, 1, 32>}, {pipeline_mode = #tpu.pipeline_mode<synchronous>, transform_indices = @transform_12, window_bounds = array<i64: 2, 32, 128>}, {pipeline_mode = #tpu.pipeline_mode<synchronous>, transform_indices = @transform_13, window_bounds = array<i64: 2, 1, 128>}, {pipeline_mode = #tpu.pipeline_mode<synchronous>, transform_indices = @transform_14, window_bounds = array<i64: 2, 128, 32>}, {pipeline_mode = #tpu.pipeline_mode<synchronous>, transform_indices = @transform_15, window_bounds = array<i64: 2, 1, 32>}, {pipeline_mode = #tpu.pipeline_mode<synchronous>, transform_indices = @transform_16, window_bounds = array<i64: 2, 1, 32>}, {pipeline_mode = #tpu.pipeline_mode<synchronous>, transform_indices = @transform_17, window_bounds = array<i64: 2, 1, 32>}, {pipeline_mode = #tpu.pipeline_mode<synchronous>, transform_indices = @transform_18, window_bounds = array<i64: 2, 1, 32>}, {pipeline_mode = #tpu.pipeline_mode<synchronous>, transform_indices = @transform_19, window_bounds = array<i64: 2, 1, 32>}, {pipeline_mode = #tpu.pipeline_mode<synchronous>, transform_indices = @transform_20, window_bounds = array<i64: 51, 128>}, {pipeline_mode = #tpu.pipeline_mode<synchronous>, transform_indices = @transform_21, window_bounds = array<i64: 1, 128>}, {pipeline_mode = #tpu.pipeline_mode<synchronous>, transform_indices = @transform_22, window_bounds = array<i64: 6, 256>}, {pipeline_mode = #tpu.pipeline_mode<synchronous>, transform_indices = @transform_23, window_bounds = array<i64: 1, 256>}, {pipeline_mode = #tpu.pipeline_mode<synchronous>, transform_indices = @transform_24, window_bounds = array<i64: 256, 6>}, {pipeline_mode = #tpu.pipeline_mode<synchronous>, transform_indices = @transform_25, window_bounds = array<i64: 1, 6>}, {transform_indices = @transform_26, window_bounds = array<i64: 1, 1, 128>}]} {
    %c0 = arith.constant 0 : index
    %c0_0 = arith.constant 0 : index
    %0 = vector.load %arg1[%c0, %c0_0] : memref<16x19xf32, #tpu.memory_space<vmem>>, vector<16x19xf32>
    %1 = arith.truncf %0 : vector<16x19xf32> to vector<16x19xbf16>
    %c0_1 = arith.constant 0 : index
    %c0_2 = arith.constant 0 : index
    %2 = vector.load %arg5[%c0_1, %c0_2] : memref<19x32xbf16, #tpu.memory_space<vmem>>, vector<19x32xbf16>
    %cst = arith.constant dense<0.000000e+00> : vector<16x32xf32>
    %3 = tpu.matmul %1, %2, %cst {dimension_numbers = #tpu.dot_dimension_numbers<[1], [0], [0], [1], [0, 0, 1, 1], [], []>} : vector<16x19xbf16>, vector<19x32xbf16>, vector<16x32xf32> -> vector<16x32xf32>
    %c0_3 = arith.constant 0 : index
    %c0_4 = arith.constant 0 : index
    %4 = vector.load %arg6[%c0_3, %c0_4] : memref<1x32xf32, #tpu.memory_space<vmem>>, vector<1x32xf32>
    %5 = vector.broadcast %4 : vector<1x32xf32> to vector<16x32xf32>
    %6 = arith.addf %3, %5 : vector<16x32xf32>
    %7 = vector.shape_cast %6 : vector<16x32xf32> to vector<2x8x32xf32>
    %c0_5 = arith.constant 0 : index
    %c0_6 = arith.constant 0 : index
    %8 = vector.load %arg7[%c0_5, %c0_6] : memref<8x32xf32, #tpu.memory_space<vmem>>, vector<8x32xf32>
    %9 = vector.shape_cast %8 : vector<8x32xf32> to vector<1x8x32xf32>
    %10 = vector.broadcast %9 : vector<1x8x32xf32> to vector<2x8x32xf32>
    %11 = arith.addf %7, %10 : vector<2x8x32xf32>
    %12 = vector.shape_cast %11 : vector<2x8x32xf32> to vector<16x32xf32>
    %c0_7 = arith.constant 0 : index
    %c0_8 = arith.constant 0 : index
    %13 = vector.load %arg8[%c0_7, %c0_8] : memref<8x8xf32, #tpu.memory_space<vmem>>, vector<8x8xf32>
    %14 = arith.truncf %12 : vector<16x32xf32> to vector<16x32xbf16>
    %c0_9 = arith.constant 0 : index
    %c0_10 = arith.constant 0 : index
    %c0_11 = arith.constant 0 : index
    %15 = vector.load %arg9[%c0_9, %c0_10, %c0_11] : memref<2x32x96xbf16, #tpu.memory_space<vmem>>, vector<1x32x96xbf16>
    %16 = vector.shape_cast %15 : vector<1x32x96xbf16> to vector<32x96xbf16>
    %cst_12 = arith.constant dense<0.000000e+00> : vector<16x96xf32>
    %17 = tpu.matmul %14, %16, %cst_12 {dimension_numbers = #tpu.dot_dimension_numbers<[1], [0], [0], [1], [0, 0, 1, 1], [], []>} : vector<16x32xbf16>, vector<32x96xbf16>, vector<16x96xf32> -> vector<16x96xf32>
    %c0_13 = arith.constant 0 : index
    %c0_14 = arith.constant 0 : index
    %c0_15 = arith.constant 0 : index
    %18 = vector.load %arg10[%c0_13, %c0_14, %c0_15] : memref<2x1x96xf32, #tpu.memory_space<vmem>>, vector<1x1x96xf32>
    %19 = vector.shape_cast %18 : vector<1x1x96xf32> to vector<1x96xf32>
    %20 = vector.broadcast %19 : vector<1x96xf32> to vector<16x96xf32>
    %21 = arith.addf %17, %20 : vector<16x96xf32>
    %22 = vector.extract_strided_slice %21 {offsets = [0, 0], sizes = [16, 32], strides = [1, 1]} : vector<16x96xf32> to vector<16x32xf32>
    %cst_16 = arith.constant 0.353553385 : f32
    %23 = vector.broadcast %cst_16 : f32 to vector<16x32xf32>
    %24 = arith.mulf %22, %23 : vector<16x32xf32>
    %25 = vector.shape_cast %24 : vector<16x32xf32> to vector<2x8x32xf32>
    %26 = vector.extract_strided_slice %21 {offsets = [0, 32], sizes = [16, 32], strides = [1, 1]} : vector<16x96xf32> to vector<16x32xf32>
    %27 = vector.shape_cast %26 : vector<16x32xf32> to vector<2x8x32xf32>
    %28 = vector.extract_strided_slice %21 {offsets = [0, 64], sizes = [16, 32], strides = [1, 1]} : vector<16x96xf32> to vector<16x32xf32>
    %29 = vector.shape_cast %28 : vector<16x32xf32> to vector<2x8x32xf32>
    %30 = vector.extract_strided_slice %25 {offsets = [0, 0, 0], sizes = [2, 8, 8], strides = [1, 1, 1]} : vector<2x8x32xf32> to vector<2x8x8xf32>
    %31 = arith.truncf %30 : vector<2x8x8xf32> to vector<2x8x8xbf16>
    %32 = vector.extract_strided_slice %27 {offsets = [0, 0, 0], sizes = [2, 8, 8], strides = [1, 1, 1]} : vector<2x8x32xf32> to vector<2x8x8xf32>
    %33 = arith.truncf %32 : vector<2x8x8xf32> to vector<2x8x8xbf16>
    %34 = vector.extract_strided_slice %29 {offsets = [0, 0, 0], sizes = [2, 8, 8], strides = [1, 1, 1]} : vector<2x8x32xf32> to vector<2x8x8xf32>
    %35 = arith.truncf %34 : vector<2x8x8xf32> to vector<2x8x8xbf16>
    "tpu.trace_start"() <{level = 10 : i32, message = "bqd,bkd->bqk"}> : () -> ()
    %cst_17 = arith.constant dense<0.000000e+00> : vector<2x8x8xf32>
    %36 = tpu.matmul %31, %33, %cst_17 {dimension_numbers = #tpu.dot_dimension_numbers<[2], [2], [1], [1], [0, 0, 0, 1, 1, 1], [0], [0]>} : vector<2x8x8xbf16>, vector<2x8x8xbf16>, vector<2x8x8xf32> -> vector<2x8x8xf32>
    "tpu.trace_stop"() : () -> ()
    %37 = vector.shape_cast %13 : vector<8x8xf32> to vector<1x8x8xf32>
    %38 = vector.broadcast %37 : vector<1x8x8xf32> to vector<2x8x8xf32>
    %39 = arith.addf %36, %38 : vector<2x8x8xf32>
    %cst_18 = arith.constant dense<0xFF800000> : vector<2x8xf32>
    %40 = vector.multi_reduction <maximumf>, %39, %cst_18 [2] : vector<2x8x8xf32> to vector<2x8xf32>
    %41 = vector.shape_cast %40 : vector<2x8xf32> to vector<2x8x1xf32>
    %42 = vector.broadcast %41 : vector<2x8x1xf32> to vector<2x8x8xf32>
    %43 = arith.subf %39, %42 : vector<2x8x8xf32>
    %44 = math.exp %43 : vector<2x8x8xf32>
    %cst_19 = arith.constant dense<0.000000e+00> : vector<2x8xf32>
    %45 = vector.multi_reduction <add>, %44, %cst_19 [2] : vector<2x8x8xf32> to vector<2x8xf32>
    %46 = vector.shape_cast %45 : vector<2x8xf32> to vector<2x8x1xf32>
    %47 = tpu.reciprocal %46 {approx = true} : vector<2x8x1xf32> -> vector<2x8x1xf32>
    %48 = vector.broadcast %47 : vector<2x8x1xf32> to vector<2x8x8xf32>
    %49 = arith.mulf %44, %48 : vector<2x8x8xf32>
    %50 = arith.truncf %49 : vector<2x8x8xf32> to vector<2x8x8xbf16>
    "tpu.trace_start"() <{level = 10 : i32, message = "bqk,bkd->bqd"}> : () -> ()
    %cst_20 = arith.constant dense<0.000000e+00> : vector<2x8x8xf32>
    %51 = tpu.matmul %50, %35, %cst_20 {dimension_numbers = #tpu.dot_dimension_numbers<[2], [1], [1], [2], [0, 0, 0, 1, 1, 2], [0], [0]>} : vector<2x8x8xbf16>, vector<2x8x8xbf16>, vector<2x8x8xf32> -> vector<2x8x8xf32>
    "tpu.trace_stop"() : () -> ()
    %52 = vector.extract_strided_slice %25 {offsets = [0, 0, 8], sizes = [2, 8, 8], strides = [1, 1, 1]} : vector<2x8x32xf32> to vector<2x8x8xf32>
    %53 = arith.truncf %52 : vector<2x8x8xf32> to vector<2x8x8xbf16>
    %54 = vector.extract_strided_slice %27 {offsets = [0, 0, 8], sizes = [2, 8, 8], strides = [1, 1, 1]} : vector<2x8x32xf32> to vector<2x8x8xf32>
    %55 = arith.truncf %54 : vector<2x8x8xf32> to vector<2x8x8xbf16>
    %56 = vector.extract_strided_slice %29 {offsets = [0, 0, 8], sizes = [2, 8, 8], strides = [1, 1, 1]} : vector<2x8x32xf32> to vector<2x8x8xf32>
    %57 = arith.truncf %56 : vector<2x8x8xf32> to vector<2x8x8xbf16>
    "tpu.trace_start"() <{level = 10 : i32, message = "bqd,bkd->bqk"}> : () -> ()
    %cst_21 = arith.constant dense<0.000000e+00> : vector<2x8x8xf32>
    %58 = tpu.matmul %53, %55, %cst_21 {dimension_numbers = #tpu.dot_dimension_numbers<[2], [2], [1], [1], [0, 0, 0, 1, 1, 1], [0], [0]>} : vector<2x8x8xbf16>, vector<2x8x8xbf16>, vector<2x8x8xf32> -> vector<2x8x8xf32>
    "tpu.trace_stop"() : () -> ()
    %59 = vector.shape_cast %13 : vector<8x8xf32> to vector<1x8x8xf32>
    %60 = vector.broadcast %59 : vector<1x8x8xf32> to vector<2x8x8xf32>
    %61 = arith.addf %58, %60 : vector<2x8x8xf32>
    %cst_22 = arith.constant dense<0xFF800000> : vector<2x8xf32>
    %62 = vector.multi_reduction <maximumf>, %61, %cst_22 [2] : vector<2x8x8xf32> to vector<2x8xf32>
    %63 = vector.shape_cast %62 : vector<2x8xf32> to vector<2x8x1xf32>
    %64 = vector.broadcast %63 : vector<2x8x1xf32> to vector<2x8x8xf32>
    %65 = arith.subf %61, %64 : vector<2x8x8xf32>
    %66 = math.exp %65 : vector<2x8x8xf32>
    %cst_23 = arith.constant dense<0.000000e+00> : vector<2x8xf32>
    %67 = vector.multi_reduction <add>, %66, %cst_23 [2] : vector<2x8x8xf32> to vector<2x8xf32>
    %68 = vector.shape_cast %67 : vector<2x8xf32> to vector<2x8x1xf32>
    %69 = tpu.reciprocal %68 {approx = true} : vector<2x8x1xf32> -> vector<2x8x1xf32>
    %70 = vector.broadcast %69 : vector<2x8x1xf32> to vector<2x8x8xf32>
    %71 = arith.mulf %66, %70 : vector<2x8x8xf32>
    %72 = arith.truncf %71 : vector<2x8x8xf32> to vector<2x8x8xbf16>
    "tpu.trace_start"() <{level = 10 : i32, message = "bqk,bkd->bqd"}> : () -> ()
    %cst_24 = arith.constant dense<0.000000e+00> : vector<2x8x8xf32>
    %73 = tpu.matmul %72, %57, %cst_24 {dimension_numbers = #tpu.dot_dimension_numbers<[2], [1], [1], [2], [0, 0, 0, 1, 1, 2], [0], [0]>} : vector<2x8x8xbf16>, vector<2x8x8xbf16>, vector<2x8x8xf32> -> vector<2x8x8xf32>
    "tpu.trace_stop"() : () -> ()
    %74 = vector.extract_strided_slice %25 {offsets = [0, 0, 16], sizes = [2, 8, 8], strides = [1, 1, 1]} : vector<2x8x32xf32> to vector<2x8x8xf32>
    %75 = arith.truncf %74 : vector<2x8x8xf32> to vector<2x8x8xbf16>
    %76 = vector.extract_strided_slice %27 {offsets = [0, 0, 16], sizes = [2, 8, 8], strides = [1, 1, 1]} : vector<2x8x32xf32> to vector<2x8x8xf32>
    %77 = arith.truncf %76 : vector<2x8x8xf32> to vector<2x8x8xbf16>
    %78 = vector.extract_strided_slice %29 {offsets = [0, 0, 16], sizes = [2, 8, 8], strides = [1, 1, 1]} : vector<2x8x32xf32> to vector<2x8x8xf32>
    %79 = arith.truncf %78 : vector<2x8x8xf32> to vector<2x8x8xbf16>
    "tpu.trace_start"() <{level = 10 : i32, message = "bqd,bkd->bqk"}> : () -> ()
    %cst_25 = arith.constant dense<0.000000e+00> : vector<2x8x8xf32>
    %80 = tpu.matmul %75, %77, %cst_25 {dimension_numbers = #tpu.dot_dimension_numbers<[2], [2], [1], [1], [0, 0, 0, 1, 1, 1], [0], [0]>} : vector<2x8x8xbf16>, vector<2x8x8xbf16>, vector<2x8x8xf32> -> vector<2x8x8xf32>
    "tpu.trace_stop"() : () -> ()
    %81 = vector.shape_cast %13 : vector<8x8xf32> to vector<1x8x8xf32>
    %82 = vector.broadcast %81 : vector<1x8x8xf32> to vector<2x8x8xf32>
    %83 = arith.addf %80, %82 : vector<2x8x8xf32>
    %cst_26 = arith.constant dense<0xFF800000> : vector<2x8xf32>
    %84 = vector.multi_reduction <maximumf>, %83, %cst_26 [2] : vector<2x8x8xf32> to vector<2x8xf32>
    %85 = vector.shape_cast %84 : vector<2x8xf32> to vector<2x8x1xf32>
    %86 = vector.broadcast %85 : vector<2x8x1xf32> to vector<2x8x8xf32>
    %87 = arith.subf %83, %86 : vector<2x8x8xf32>
    %88 = math.exp %87 : vector<2x8x8xf32>
    %cst_27 = arith.constant dense<0.000000e+00> : vector<2x8xf32>
    %89 = vector.multi_reduction <add>, %88, %cst_27 [2] : vector<2x8x8xf32> to vector<2x8xf32>
    %90 = vector.shape_cast %89 : vector<2x8xf32> to vector<2x8x1xf32>
    %91 = tpu.reciprocal %90 {approx = true} : vector<2x8x1xf32> -> vector<2x8x1xf32>
    %92 = vector.broadcast %91 : vector<2x8x1xf32> to vector<2x8x8xf32>
    %93 = arith.mulf %88, %92 : vector<2x8x8xf32>
    %94 = arith.truncf %93 : vector<2x8x8xf32> to vector<2x8x8xbf16>
    "tpu.trace_start"() <{level = 10 : i32, message = "bqk,bkd->bqd"}> : () -> ()
    %cst_28 = arith.constant dense<0.000000e+00> : vector<2x8x8xf32>
    %95 = tpu.matmul %94, %79, %cst_28 {dimension_numbers = #tpu.dot_dimension_numbers<[2], [1], [1], [2], [0, 0, 0, 1, 1, 2], [0], [0]>} : vector<2x8x8xbf16>, vector<2x8x8xbf16>, vector<2x8x8xf32> -> vector<2x8x8xf32>
    "tpu.trace_stop"() : () -> ()
    %96 = vector.extract_strided_slice %25 {offsets = [0, 0, 24], sizes = [2, 8, 8], strides = [1, 1, 1]} : vector<2x8x32xf32> to vector<2x8x8xf32>
    %97 = arith.truncf %96 : vector<2x8x8xf32> to vector<2x8x8xbf16>
    %98 = vector.extract_strided_slice %27 {offsets = [0, 0, 24], sizes = [2, 8, 8], strides = [1, 1, 1]} : vector<2x8x32xf32> to vector<2x8x8xf32>
    %99 = arith.truncf %98 : vector<2x8x8xf32> to vector<2x8x8xbf16>
    %100 = vector.extract_strided_slice %29 {offsets = [0, 0, 24], sizes = [2, 8, 8], strides = [1, 1, 1]} : vector<2x8x32xf32> to vector<2x8x8xf32>
    %101 = arith.truncf %100 : vector<2x8x8xf32> to vector<2x8x8xbf16>
    "tpu.trace_start"() <{level = 10 : i32, message = "bqd,bkd->bqk"}> : () -> ()
    %cst_29 = arith.constant dense<0.000000e+00> : vector<2x8x8xf32>
    %102 = tpu.matmul %97, %99, %cst_29 {dimension_numbers = #tpu.dot_dimension_numbers<[2], [2], [1], [1], [0, 0, 0, 1, 1, 1], [0], [0]>} : vector<2x8x8xbf16>, vector<2x8x8xbf16>, vector<2x8x8xf32> -> vector<2x8x8xf32>
    "tpu.trace_stop"() : () -> ()
    %103 = vector.shape_cast %13 : vector<8x8xf32> to vector<1x8x8xf32>
    %104 = vector.broadcast %103 : vector<1x8x8xf32> to vector<2x8x8xf32>
    %105 = arith.addf %102, %104 : vector<2x8x8xf32>
    %cst_30 = arith.constant dense<0xFF800000> : vector<2x8xf32>
    %106 = vector.multi_reduction <maximumf>, %105, %cst_30 [2] : vector<2x8x8xf32> to vector<2x8xf32>
    %107 = vector.shape_cast %106 : vector<2x8xf32> to vector<2x8x1xf32>
    %108 = vector.broadcast %107 : vector<2x8x1xf32> to vector<2x8x8xf32>
    %109 = arith.subf %105, %108 : vector<2x8x8xf32>
    %110 = math.exp %109 : vector<2x8x8xf32>
    %cst_31 = arith.constant dense<0.000000e+00> : vector<2x8xf32>
    %111 = vector.multi_reduction <add>, %110, %cst_31 [2] : vector<2x8x8xf32> to vector<2x8xf32>
    %112 = vector.shape_cast %111 : vector<2x8xf32> to vector<2x8x1xf32>
    %113 = tpu.reciprocal %112 {approx = true} : vector<2x8x1xf32> -> vector<2x8x1xf32>
    %114 = vector.broadcast %113 : vector<2x8x1xf32> to vector<2x8x8xf32>
    %115 = arith.mulf %110, %114 : vector<2x8x8xf32>
    %116 = arith.truncf %115 : vector<2x8x8xf32> to vector<2x8x8xbf16>
    "tpu.trace_start"() <{level = 10 : i32, message = "bqk,bkd->bqd"}> : () -> ()
    %cst_32 = arith.constant dense<0.000000e+00> : vector<2x8x8xf32>
    %117 = tpu.matmul %116, %101, %cst_32 {dimension_numbers = #tpu.dot_dimension_numbers<[2], [1], [1], [2], [0, 0, 0, 1, 1, 2], [0], [0]>} : vector<2x8x8xbf16>, vector<2x8x8xbf16>, vector<2x8x8xf32> -> vector<2x8x8xf32>
    "tpu.trace_stop"() : () -> ()
    %118 = tpu.concatenate %51, %73, %95, %117 in 2 : vector<2x8x8xf32>, vector<2x8x8xf32>, vector<2x8x8xf32>, vector<2x8x8xf32> -> vector<2x8x32xf32>
    %119 = vector.shape_cast %118 : vector<2x8x32xf32> to vector<16x32xf32>
    %120 = arith.truncf %119 : vector<16x32xf32> to vector<16x32xbf16>
    %c0_33 = arith.constant 0 : index
    %c0_34 = arith.constant 0 : index
    %c0_35 = arith.constant 0 : index
    %121 = vector.load %arg11[%c0_33, %c0_34, %c0_35] : memref<2x32x32xbf16, #tpu.memory_space<vmem>>, vector<1x32x32xbf16>
    %122 = vector.shape_cast %121 : vector<1x32x32xbf16> to vector<32x32xbf16>
    %cst_36 = arith.constant dense<0.000000e+00> : vector<16x32xf32>
    %123 = tpu.matmul %120, %122, %cst_36 {dimension_numbers = #tpu.dot_dimension_numbers<[1], [0], [0], [1], [0, 0, 1, 1], [], []>} : vector<16x32xbf16>, vector<32x32xbf16>, vector<16x32xf32> -> vector<16x32xf32>
    %c0_37 = arith.constant 0 : index
    %c0_38 = arith.constant 0 : index
    %c0_39 = arith.constant 0 : index
    %124 = vector.load %arg12[%c0_37, %c0_38, %c0_39] : memref<2x1x32xf32, #tpu.memory_space<vmem>>, vector<1x1x32xf32>
    %125 = vector.shape_cast %124 : vector<1x1x32xf32> to vector<1x32xf32>
    %126 = vector.broadcast %125 : vector<1x32xf32> to vector<16x32xf32>
    %127 = arith.addf %123, %126 : vector<16x32xf32>
    %128 = arith.addf %12, %127 : vector<16x32xf32>
    %c0_40 = arith.constant 0 : index
    %c0_41 = arith.constant 0 : index
    %c0_42 = arith.constant 0 : index
    %129 = vector.load %arg17[%c0_40, %c0_41, %c0_42] : memref<2x1x32xf32, #tpu.memory_space<vmem>>, vector<1x1x32xf32>
    %130 = vector.shape_cast %129 : vector<1x1x32xf32> to vector<1x32xf32>
    %c0_43 = arith.constant 0 : index
    %c0_44 = arith.constant 0 : index
    %c0_45 = arith.constant 0 : index
    %131 = vector.load %arg18[%c0_43, %c0_44, %c0_45] : memref<2x1x32xf32, #tpu.memory_space<vmem>>, vector<1x1x32xf32>
    %132 = vector.shape_cast %131 : vector<1x1x32xf32> to vector<1x32xf32>
    %cst_46 = arith.constant dense<0.000000e+00> : vector<16xf32>
    %133 = vector.multi_reduction <add>, %128, %cst_46 [1] : vector<16x32xf32> to vector<16xf32>
    %134 = vector.shape_cast %133 : vector<16xf32> to vector<16x1xf32>
    %cst_47 = arith.constant 3.200000e+01 : f32
    %135 = vector.broadcast %cst_47 : f32 to vector<16x1xf32>
    %136 = arith.divf %134, %135 : vector<16x1xf32>
    %137 = vector.broadcast %136 : vector<16x1xf32> to vector<16x32xf32>
    %138 = arith.subf %128, %137 : vector<16x32xf32>
    %139 = arith.mulf %138, %138 : vector<16x32xf32>
    %cst_48 = arith.constant dense<0.000000e+00> : vector<16xf32>
    %140 = vector.multi_reduction <add>, %139, %cst_48 [1] : vector<16x32xf32> to vector<16xf32>
    %141 = vector.shape_cast %140 : vector<16xf32> to vector<16x1xf32>
    %cst_49 = arith.constant 3.200000e+01 : f32
    %142 = vector.broadcast %cst_49 : f32 to vector<16x1xf32>
    %143 = arith.divf %141, %142 : vector<16x1xf32>
    %144 = vector.broadcast %136 : vector<16x1xf32> to vector<16x32xf32>
    %145 = arith.subf %128, %144 : vector<16x32xf32>
    %cst_50 = arith.constant 9.99999974E-6 : f32
    %146 = vector.broadcast %cst_50 : f32 to vector<16x1xf32>
    %147 = arith.addf %143, %146 : vector<16x1xf32>
    %148 = math.rsqrt %147 : vector<16x1xf32>
    %149 = vector.broadcast %148 : vector<16x1xf32> to vector<16x32xf32>
    %150 = arith.mulf %145, %149 : vector<16x32xf32>
    %151 = vector.broadcast %130 : vector<1x32xf32> to vector<16x32xf32>
    %152 = arith.mulf %150, %151 : vector<16x32xf32>
    %153 = vector.broadcast %132 : vector<1x32xf32> to vector<16x32xf32>
    %154 = arith.addf %152, %153 : vector<16x32xf32>
    %155 = arith.truncf %154 : vector<16x32xf32> to vector<16x32xbf16>
    %c0_51 = arith.constant 0 : index
    %c0_52 = arith.constant 0 : index
    %c0_53 = arith.constant 0 : index
    %156 = vector.load %arg13[%c0_51, %c0_52, %c0_53] : memref<2x32x128xbf16, #tpu.memory_space<vmem>>, vector<1x32x128xbf16>
    %157 = vector.shape_cast %156 : vector<1x32x128xbf16> to vector<32x128xbf16>
    %cst_54 = arith.constant dense<0.000000e+00> : vector<16x128xf32>
    %158 = tpu.matmul %155, %157, %cst_54 {dimension_numbers = #tpu.dot_dimension_numbers<[1], [0], [0], [1], [0, 0, 1, 1], [], []>} : vector<16x32xbf16>, vector<32x128xbf16>, vector<16x128xf32> -> vector<16x128xf32>
    %c0_55 = arith.constant 0 : index
    %c0_56 = arith.constant 0 : index
    %c0_57 = arith.constant 0 : index
    %159 = vector.load %arg14[%c0_55, %c0_56, %c0_57] : memref<2x1x128xf32, #tpu.memory_space<vmem>>, vector<1x1x128xf32>
    %160 = vector.shape_cast %159 : vector<1x1x128xf32> to vector<1x128xf32>
    %161 = vector.broadcast %160 : vector<1x128xf32> to vector<16x128xf32>
    %162 = arith.addf %158, %161 : vector<16x128xf32>
    %cst_58 = arith.constant 0.000000e+00 : f32
    %163 = vector.broadcast %cst_58 : f32 to vector<16x128xf32>
    %164 = arith.maximumf %162, %163 : vector<16x128xf32>
    %165 = arith.truncf %164 : vector<16x128xf32> to vector<16x128xbf16>
    %c0_59 = arith.constant 0 : index
    %c0_60 = arith.constant 0 : index
    %c0_61 = arith.constant 0 : index
    %166 = vector.load %arg15[%c0_59, %c0_60, %c0_61] : memref<2x128x32xbf16, #tpu.memory_space<vmem>>, vector<1x128x32xbf16>
    %167 = vector.shape_cast %166 : vector<1x128x32xbf16> to vector<128x32xbf16>
    %cst_62 = arith.constant dense<0.000000e+00> : vector<16x32xf32>
    %168 = tpu.matmul %165, %167, %cst_62 {dimension_numbers = #tpu.dot_dimension_numbers<[1], [0], [0], [1], [0, 0, 1, 1], [], []>} : vector<16x128xbf16>, vector<128x32xbf16>, vector<16x32xf32> -> vector<16x32xf32>
    %c0_63 = arith.constant 0 : index
    %c0_64 = arith.constant 0 : index
    %c0_65 = arith.constant 0 : index
    %169 = vector.load %arg16[%c0_63, %c0_64, %c0_65] : memref<2x1x32xf32, #tpu.memory_space<vmem>>, vector<1x1x32xf32>
    %170 = vector.shape_cast %169 : vector<1x1x32xf32> to vector<1x32xf32>
    %171 = vector.broadcast %170 : vector<1x32xf32> to vector<16x32xf32>
    %172 = arith.addf %168, %171 : vector<16x32xf32>
    %173 = arith.addf %154, %172 : vector<16x32xf32>
    %c0_66 = arith.constant 0 : index
    %c0_67 = arith.constant 0 : index
    %c0_68 = arith.constant 0 : index
    %174 = vector.load %arg19[%c0_66, %c0_67, %c0_68] : memref<2x1x32xf32, #tpu.memory_space<vmem>>, vector<1x1x32xf32>
    %175 = vector.shape_cast %174 : vector<1x1x32xf32> to vector<1x32xf32>
    %c0_69 = arith.constant 0 : index
    %c0_70 = arith.constant 0 : index
    %c0_71 = arith.constant 0 : index
    %176 = vector.load %arg20[%c0_69, %c0_70, %c0_71] : memref<2x1x32xf32, #tpu.memory_space<vmem>>, vector<1x1x32xf32>
    %177 = vector.shape_cast %176 : vector<1x1x32xf32> to vector<1x32xf32>
    %cst_72 = arith.constant dense<0.000000e+00> : vector<16xf32>
    %178 = vector.multi_reduction <add>, %173, %cst_72 [1] : vector<16x32xf32> to vector<16xf32>
    %179 = vector.shape_cast %178 : vector<16xf32> to vector<16x1xf32>
    %cst_73 = arith.constant 3.200000e+01 : f32
    %180 = vector.broadcast %cst_73 : f32 to vector<16x1xf32>
    %181 = arith.divf %179, %180 : vector<16x1xf32>
    %182 = vector.broadcast %181 : vector<16x1xf32> to vector<16x32xf32>
    %183 = arith.subf %173, %182 : vector<16x32xf32>
    %184 = arith.mulf %183, %183 : vector<16x32xf32>
    %cst_74 = arith.constant dense<0.000000e+00> : vector<16xf32>
    %185 = vector.multi_reduction <add>, %184, %cst_74 [1] : vector<16x32xf32> to vector<16xf32>
    %186 = vector.shape_cast %185 : vector<16xf32> to vector<16x1xf32>
    %cst_75 = arith.constant 3.200000e+01 : f32
    %187 = vector.broadcast %cst_75 : f32 to vector<16x1xf32>
    %188 = arith.divf %186, %187 : vector<16x1xf32>
    %189 = vector.broadcast %181 : vector<16x1xf32> to vector<16x32xf32>
    %190 = arith.subf %173, %189 : vector<16x32xf32>
    %cst_76 = arith.constant 9.99999974E-6 : f32
    %191 = vector.broadcast %cst_76 : f32 to vector<16x1xf32>
    %192 = arith.addf %188, %191 : vector<16x1xf32>
    %193 = math.rsqrt %192 : vector<16x1xf32>
    %194 = vector.broadcast %193 : vector<16x1xf32> to vector<16x32xf32>
    %195 = arith.mulf %190, %194 : vector<16x32xf32>
    %196 = vector.broadcast %175 : vector<1x32xf32> to vector<16x32xf32>
    %197 = arith.mulf %195, %196 : vector<16x32xf32>
    %198 = vector.broadcast %177 : vector<1x32xf32> to vector<16x32xf32>
    %199 = arith.addf %197, %198 : vector<16x32xf32>
    %200 = arith.truncf %199 : vector<16x32xf32> to vector<16x32xbf16>
    %c1 = arith.constant 1 : index
    %c0_77 = arith.constant 0 : index
    %c0_78 = arith.constant 0 : index
    %201 = vector.load %arg9[%c1, %c0_77, %c0_78] : memref<2x32x96xbf16, #tpu.memory_space<vmem>>, vector<1x32x96xbf16>
    %202 = vector.shape_cast %201 : vector<1x32x96xbf16> to vector<32x96xbf16>
    %cst_79 = arith.constant dense<0.000000e+00> : vector<16x96xf32>
    %203 = tpu.matmul %200, %202, %cst_79 {dimension_numbers = #tpu.dot_dimension_numbers<[1], [0], [0], [1], [0, 0, 1, 1], [], []>} : vector<16x32xbf16>, vector<32x96xbf16>, vector<16x96xf32> -> vector<16x96xf32>
    %c1_80 = arith.constant 1 : index
    %c0_81 = arith.constant 0 : index
    %c0_82 = arith.constant 0 : index
    %204 = vector.load %arg10[%c1_80, %c0_81, %c0_82] : memref<2x1x96xf32, #tpu.memory_space<vmem>>, vector<1x1x96xf32>
    %205 = vector.shape_cast %204 : vector<1x1x96xf32> to vector<1x96xf32>
    %206 = vector.broadcast %205 : vector<1x96xf32> to vector<16x96xf32>
    %207 = arith.addf %203, %206 : vector<16x96xf32>
    %208 = vector.extract_strided_slice %207 {offsets = [0, 0], sizes = [16, 32], strides = [1, 1]} : vector<16x96xf32> to vector<16x32xf32>
    %cst_83 = arith.constant 0.353553385 : f32
    %209 = vector.broadcast %cst_83 : f32 to vector<16x32xf32>
    %210 = arith.mulf %208, %209 : vector<16x32xf32>
    %211 = vector.shape_cast %210 : vector<16x32xf32> to vector<2x8x32xf32>
    %212 = vector.extract_strided_slice %207 {offsets = [0, 32], sizes = [16, 32], strides = [1, 1]} : vector<16x96xf32> to vector<16x32xf32>
    %213 = vector.shape_cast %212 : vector<16x32xf32> to vector<2x8x32xf32>
    %214 = vector.extract_strided_slice %207 {offsets = [0, 64], sizes = [16, 32], strides = [1, 1]} : vector<16x96xf32> to vector<16x32xf32>
    %215 = vector.shape_cast %214 : vector<16x32xf32> to vector<2x8x32xf32>
    %216 = vector.extract_strided_slice %211 {offsets = [0, 0, 0], sizes = [2, 8, 8], strides = [1, 1, 1]} : vector<2x8x32xf32> to vector<2x8x8xf32>
    %217 = arith.truncf %216 : vector<2x8x8xf32> to vector<2x8x8xbf16>
    %218 = vector.extract_strided_slice %213 {offsets = [0, 0, 0], sizes = [2, 8, 8], strides = [1, 1, 1]} : vector<2x8x32xf32> to vector<2x8x8xf32>
    %219 = arith.truncf %218 : vector<2x8x8xf32> to vector<2x8x8xbf16>
    %220 = vector.extract_strided_slice %215 {offsets = [0, 0, 0], sizes = [2, 8, 8], strides = [1, 1, 1]} : vector<2x8x32xf32> to vector<2x8x8xf32>
    %221 = arith.truncf %220 : vector<2x8x8xf32> to vector<2x8x8xbf16>
    "tpu.trace_start"() <{level = 10 : i32, message = "bqd,bkd->bqk"}> : () -> ()
    %cst_84 = arith.constant dense<0.000000e+00> : vector<2x8x8xf32>
    %222 = tpu.matmul %217, %219, %cst_84 {dimension_numbers = #tpu.dot_dimension_numbers<[2], [2], [1], [1], [0, 0, 0, 1, 1, 1], [0], [0]>} : vector<2x8x8xbf16>, vector<2x8x8xbf16>, vector<2x8x8xf32> -> vector<2x8x8xf32>
    "tpu.trace_stop"() : () -> ()
    %223 = vector.shape_cast %13 : vector<8x8xf32> to vector<1x8x8xf32>
    %224 = vector.broadcast %223 : vector<1x8x8xf32> to vector<2x8x8xf32>
    %225 = arith.addf %222, %224 : vector<2x8x8xf32>
    %cst_85 = arith.constant dense<0xFF800000> : vector<2x8xf32>
    %226 = vector.multi_reduction <maximumf>, %225, %cst_85 [2] : vector<2x8x8xf32> to vector<2x8xf32>
    %227 = vector.shape_cast %226 : vector<2x8xf32> to vector<2x8x1xf32>
    %228 = vector.broadcast %227 : vector<2x8x1xf32> to vector<2x8x8xf32>
    %229 = arith.subf %225, %228 : vector<2x8x8xf32>
    %230 = math.exp %229 : vector<2x8x8xf32>
    %cst_86 = arith.constant dense<0.000000e+00> : vector<2x8xf32>
    %231 = vector.multi_reduction <add>, %230, %cst_86 [2] : vector<2x8x8xf32> to vector<2x8xf32>
    %232 = vector.shape_cast %231 : vector<2x8xf32> to vector<2x8x1xf32>
    %233 = tpu.reciprocal %232 {approx = true} : vector<2x8x1xf32> -> vector<2x8x1xf32>
    %234 = vector.broadcast %233 : vector<2x8x1xf32> to vector<2x8x8xf32>
    %235 = arith.mulf %230, %234 : vector<2x8x8xf32>
    %236 = arith.truncf %235 : vector<2x8x8xf32> to vector<2x8x8xbf16>
    "tpu.trace_start"() <{level = 10 : i32, message = "bqk,bkd->bqd"}> : () -> ()
    %cst_87 = arith.constant dense<0.000000e+00> : vector<2x8x8xf32>
    %237 = tpu.matmul %236, %221, %cst_87 {dimension_numbers = #tpu.dot_dimension_numbers<[2], [1], [1], [2], [0, 0, 0, 1, 1, 2], [0], [0]>} : vector<2x8x8xbf16>, vector<2x8x8xbf16>, vector<2x8x8xf32> -> vector<2x8x8xf32>
    "tpu.trace_stop"() : () -> ()
    %238 = vector.extract_strided_slice %211 {offsets = [0, 0, 8], sizes = [2, 8, 8], strides = [1, 1, 1]} : vector<2x8x32xf32> to vector<2x8x8xf32>
    %239 = arith.truncf %238 : vector<2x8x8xf32> to vector<2x8x8xbf16>
    %240 = vector.extract_strided_slice %213 {offsets = [0, 0, 8], sizes = [2, 8, 8], strides = [1, 1, 1]} : vector<2x8x32xf32> to vector<2x8x8xf32>
    %241 = arith.truncf %240 : vector<2x8x8xf32> to vector<2x8x8xbf16>
    %242 = vector.extract_strided_slice %215 {offsets = [0, 0, 8], sizes = [2, 8, 8], strides = [1, 1, 1]} : vector<2x8x32xf32> to vector<2x8x8xf32>
    %243 = arith.truncf %242 : vector<2x8x8xf32> to vector<2x8x8xbf16>
    "tpu.trace_start"() <{level = 10 : i32, message = "bqd,bkd->bqk"}> : () -> ()
    %cst_88 = arith.constant dense<0.000000e+00> : vector<2x8x8xf32>
    %244 = tpu.matmul %239, %241, %cst_88 {dimension_numbers = #tpu.dot_dimension_numbers<[2], [2], [1], [1], [0, 0, 0, 1, 1, 1], [0], [0]>} : vector<2x8x8xbf16>, vector<2x8x8xbf16>, vector<2x8x8xf32> -> vector<2x8x8xf32>
    "tpu.trace_stop"() : () -> ()
    %245 = vector.shape_cast %13 : vector<8x8xf32> to vector<1x8x8xf32>
    %246 = vector.broadcast %245 : vector<1x8x8xf32> to vector<2x8x8xf32>
    %247 = arith.addf %244, %246 : vector<2x8x8xf32>
    %cst_89 = arith.constant dense<0xFF800000> : vector<2x8xf32>
    %248 = vector.multi_reduction <maximumf>, %247, %cst_89 [2] : vector<2x8x8xf32> to vector<2x8xf32>
    %249 = vector.shape_cast %248 : vector<2x8xf32> to vector<2x8x1xf32>
    %250 = vector.broadcast %249 : vector<2x8x1xf32> to vector<2x8x8xf32>
    %251 = arith.subf %247, %250 : vector<2x8x8xf32>
    %252 = math.exp %251 : vector<2x8x8xf32>
    %cst_90 = arith.constant dense<0.000000e+00> : vector<2x8xf32>
    %253 = vector.multi_reduction <add>, %252, %cst_90 [2] : vector<2x8x8xf32> to vector<2x8xf32>
    %254 = vector.shape_cast %253 : vector<2x8xf32> to vector<2x8x1xf32>
    %255 = tpu.reciprocal %254 {approx = true} : vector<2x8x1xf32> -> vector<2x8x1xf32>
    %256 = vector.broadcast %255 : vector<2x8x1xf32> to vector<2x8x8xf32>
    %257 = arith.mulf %252, %256 : vector<2x8x8xf32>
    %258 = arith.truncf %257 : vector<2x8x8xf32> to vector<2x8x8xbf16>
    "tpu.trace_start"() <{level = 10 : i32, message = "bqk,bkd->bqd"}> : () -> ()
    %cst_91 = arith.constant dense<0.000000e+00> : vector<2x8x8xf32>
    %259 = tpu.matmul %258, %243, %cst_91 {dimension_numbers = #tpu.dot_dimension_numbers<[2], [1], [1], [2], [0, 0, 0, 1, 1, 2], [0], [0]>} : vector<2x8x8xbf16>, vector<2x8x8xbf16>, vector<2x8x8xf32> -> vector<2x8x8xf32>
    "tpu.trace_stop"() : () -> ()
    %260 = vector.extract_strided_slice %211 {offsets = [0, 0, 16], sizes = [2, 8, 8], strides = [1, 1, 1]} : vector<2x8x32xf32> to vector<2x8x8xf32>
    %261 = arith.truncf %260 : vector<2x8x8xf32> to vector<2x8x8xbf16>
    %262 = vector.extract_strided_slice %213 {offsets = [0, 0, 16], sizes = [2, 8, 8], strides = [1, 1, 1]} : vector<2x8x32xf32> to vector<2x8x8xf32>
    %263 = arith.truncf %262 : vector<2x8x8xf32> to vector<2x8x8xbf16>
    %264 = vector.extract_strided_slice %215 {offsets = [0, 0, 16], sizes = [2, 8, 8], strides = [1, 1, 1]} : vector<2x8x32xf32> to vector<2x8x8xf32>
    %265 = arith.truncf %264 : vector<2x8x8xf32> to vector<2x8x8xbf16>
    "tpu.trace_start"() <{level = 10 : i32, message = "bqd,bkd->bqk"}> : () -> ()
    %cst_92 = arith.constant dense<0.000000e+00> : vector<2x8x8xf32>
    %266 = tpu.matmul %261, %263, %cst_92 {dimension_numbers = #tpu.dot_dimension_numbers<[2], [2], [1], [1], [0, 0, 0, 1, 1, 1], [0], [0]>} : vector<2x8x8xbf16>, vector<2x8x8xbf16>, vector<2x8x8xf32> -> vector<2x8x8xf32>
    "tpu.trace_stop"() : () -> ()
    %267 = vector.shape_cast %13 : vector<8x8xf32> to vector<1x8x8xf32>
    %268 = vector.broadcast %267 : vector<1x8x8xf32> to vector<2x8x8xf32>
    %269 = arith.addf %266, %268 : vector<2x8x8xf32>
    %cst_93 = arith.constant dense<0xFF800000> : vector<2x8xf32>
    %270 = vector.multi_reduction <maximumf>, %269, %cst_93 [2] : vector<2x8x8xf32> to vector<2x8xf32>
    %271 = vector.shape_cast %270 : vector<2x8xf32> to vector<2x8x1xf32>
    %272 = vector.broadcast %271 : vector<2x8x1xf32> to vector<2x8x8xf32>
    %273 = arith.subf %269, %272 : vector<2x8x8xf32>
    %274 = math.exp %273 : vector<2x8x8xf32>
    %cst_94 = arith.constant dense<0.000000e+00> : vector<2x8xf32>
    %275 = vector.multi_reduction <add>, %274, %cst_94 [2] : vector<2x8x8xf32> to vector<2x8xf32>
    %276 = vector.shape_cast %275 : vector<2x8xf32> to vector<2x8x1xf32>
    %277 = tpu.reciprocal %276 {approx = true} : vector<2x8x1xf32> -> vector<2x8x1xf32>
    %278 = vector.broadcast %277 : vector<2x8x1xf32> to vector<2x8x8xf32>
    %279 = arith.mulf %274, %278 : vector<2x8x8xf32>
    %280 = arith.truncf %279 : vector<2x8x8xf32> to vector<2x8x8xbf16>
    "tpu.trace_start"() <{level = 10 : i32, message = "bqk,bkd->bqd"}> : () -> ()
    %cst_95 = arith.constant dense<0.000000e+00> : vector<2x8x8xf32>
    %281 = tpu.matmul %280, %265, %cst_95 {dimension_numbers = #tpu.dot_dimension_numbers<[2], [1], [1], [2], [0, 0, 0, 1, 1, 2], [0], [0]>} : vector<2x8x8xbf16>, vector<2x8x8xbf16>, vector<2x8x8xf32> -> vector<2x8x8xf32>
    "tpu.trace_stop"() : () -> ()
    %282 = vector.extract_strided_slice %211 {offsets = [0, 0, 24], sizes = [2, 8, 8], strides = [1, 1, 1]} : vector<2x8x32xf32> to vector<2x8x8xf32>
    %283 = arith.truncf %282 : vector<2x8x8xf32> to vector<2x8x8xbf16>
    %284 = vector.extract_strided_slice %213 {offsets = [0, 0, 24], sizes = [2, 8, 8], strides = [1, 1, 1]} : vector<2x8x32xf32> to vector<2x8x8xf32>
    %285 = arith.truncf %284 : vector<2x8x8xf32> to vector<2x8x8xbf16>
    %286 = vector.extract_strided_slice %215 {offsets = [0, 0, 24], sizes = [2, 8, 8], strides = [1, 1, 1]} : vector<2x8x32xf32> to vector<2x8x8xf32>
    %287 = arith.truncf %286 : vector<2x8x8xf32> to vector<2x8x8xbf16>
    "tpu.trace_start"() <{level = 10 : i32, message = "bqd,bkd->bqk"}> : () -> ()
    %cst_96 = arith.constant dense<0.000000e+00> : vector<2x8x8xf32>
    %288 = tpu.matmul %283, %285, %cst_96 {dimension_numbers = #tpu.dot_dimension_numbers<[2], [2], [1], [1], [0, 0, 0, 1, 1, 1], [0], [0]>} : vector<2x8x8xbf16>, vector<2x8x8xbf16>, vector<2x8x8xf32> -> vector<2x8x8xf32>
    "tpu.trace_stop"() : () -> ()
    %289 = vector.shape_cast %13 : vector<8x8xf32> to vector<1x8x8xf32>
    %290 = vector.broadcast %289 : vector<1x8x8xf32> to vector<2x8x8xf32>
    %291 = arith.addf %288, %290 : vector<2x8x8xf32>
    %cst_97 = arith.constant dense<0xFF800000> : vector<2x8xf32>
    %292 = vector.multi_reduction <maximumf>, %291, %cst_97 [2] : vector<2x8x8xf32> to vector<2x8xf32>
    %293 = vector.shape_cast %292 : vector<2x8xf32> to vector<2x8x1xf32>
    %294 = vector.broadcast %293 : vector<2x8x1xf32> to vector<2x8x8xf32>
    %295 = arith.subf %291, %294 : vector<2x8x8xf32>
    %296 = math.exp %295 : vector<2x8x8xf32>
    %cst_98 = arith.constant dense<0.000000e+00> : vector<2x8xf32>
    %297 = vector.multi_reduction <add>, %296, %cst_98 [2] : vector<2x8x8xf32> to vector<2x8xf32>
    %298 = vector.shape_cast %297 : vector<2x8xf32> to vector<2x8x1xf32>
    %299 = tpu.reciprocal %298 {approx = true} : vector<2x8x1xf32> -> vector<2x8x1xf32>
    %300 = vector.broadcast %299 : vector<2x8x1xf32> to vector<2x8x8xf32>
    %301 = arith.mulf %296, %300 : vector<2x8x8xf32>
    %302 = arith.truncf %301 : vector<2x8x8xf32> to vector<2x8x8xbf16>
    "tpu.trace_start"() <{level = 10 : i32, message = "bqk,bkd->bqd"}> : () -> ()
    %cst_99 = arith.constant dense<0.000000e+00> : vector<2x8x8xf32>
    %303 = tpu.matmul %302, %287, %cst_99 {dimension_numbers = #tpu.dot_dimension_numbers<[2], [1], [1], [2], [0, 0, 0, 1, 1, 2], [0], [0]>} : vector<2x8x8xbf16>, vector<2x8x8xbf16>, vector<2x8x8xf32> -> vector<2x8x8xf32>
    "tpu.trace_stop"() : () -> ()
    %304 = tpu.concatenate %237, %259, %281, %303 in 2 : vector<2x8x8xf32>, vector<2x8x8xf32>, vector<2x8x8xf32>, vector<2x8x8xf32> -> vector<2x8x32xf32>
    %305 = vector.shape_cast %304 : vector<2x8x32xf32> to vector<16x32xf32>
    %306 = arith.truncf %305 : vector<16x32xf32> to vector<16x32xbf16>
    %c1_100 = arith.constant 1 : index
    %c0_101 = arith.constant 0 : index
    %c0_102 = arith.constant 0 : index
    %307 = vector.load %arg11[%c1_100, %c0_101, %c0_102] : memref<2x32x32xbf16, #tpu.memory_space<vmem>>, vector<1x32x32xbf16>
    %308 = vector.shape_cast %307 : vector<1x32x32xbf16> to vector<32x32xbf16>
    %cst_103 = arith.constant dense<0.000000e+00> : vector<16x32xf32>
    %309 = tpu.matmul %306, %308, %cst_103 {dimension_numbers = #tpu.dot_dimension_numbers<[1], [0], [0], [1], [0, 0, 1, 1], [], []>} : vector<16x32xbf16>, vector<32x32xbf16>, vector<16x32xf32> -> vector<16x32xf32>
    %c1_104 = arith.constant 1 : index
    %c0_105 = arith.constant 0 : index
    %c0_106 = arith.constant 0 : index
    %310 = vector.load %arg12[%c1_104, %c0_105, %c0_106] : memref<2x1x32xf32, #tpu.memory_space<vmem>>, vector<1x1x32xf32>
    %311 = vector.shape_cast %310 : vector<1x1x32xf32> to vector<1x32xf32>
    %312 = vector.broadcast %311 : vector<1x32xf32> to vector<16x32xf32>
    %313 = arith.addf %309, %312 : vector<16x32xf32>
    %314 = arith.addf %199, %313 : vector<16x32xf32>
    %c1_107 = arith.constant 1 : index
    %c0_108 = arith.constant 0 : index
    %c0_109 = arith.constant 0 : index
    %315 = vector.load %arg17[%c1_107, %c0_108, %c0_109] : memref<2x1x32xf32, #tpu.memory_space<vmem>>, vector<1x1x32xf32>
    %316 = vector.shape_cast %315 : vector<1x1x32xf32> to vector<1x32xf32>
    %c1_110 = arith.constant 1 : index
    %c0_111 = arith.constant 0 : index
    %c0_112 = arith.constant 0 : index
    %317 = vector.load %arg18[%c1_110, %c0_111, %c0_112] : memref<2x1x32xf32, #tpu.memory_space<vmem>>, vector<1x1x32xf32>
    %318 = vector.shape_cast %317 : vector<1x1x32xf32> to vector<1x32xf32>
    %cst_113 = arith.constant dense<0.000000e+00> : vector<16xf32>
    %319 = vector.multi_reduction <add>, %314, %cst_113 [1] : vector<16x32xf32> to vector<16xf32>
    %320 = vector.shape_cast %319 : vector<16xf32> to vector<16x1xf32>
    %cst_114 = arith.constant 3.200000e+01 : f32
    %321 = vector.broadcast %cst_114 : f32 to vector<16x1xf32>
    %322 = arith.divf %320, %321 : vector<16x1xf32>
    %323 = vector.broadcast %322 : vector<16x1xf32> to vector<16x32xf32>
    %324 = arith.subf %314, %323 : vector<16x32xf32>
    %325 = arith.mulf %324, %324 : vector<16x32xf32>
    %cst_115 = arith.constant dense<0.000000e+00> : vector<16xf32>
    %326 = vector.multi_reduction <add>, %325, %cst_115 [1] : vector<16x32xf32> to vector<16xf32>
    %327 = vector.shape_cast %326 : vector<16xf32> to vector<16x1xf32>
    %cst_116 = arith.constant 3.200000e+01 : f32
    %328 = vector.broadcast %cst_116 : f32 to vector<16x1xf32>
    %329 = arith.divf %327, %328 : vector<16x1xf32>
    %330 = vector.broadcast %322 : vector<16x1xf32> to vector<16x32xf32>
    %331 = arith.subf %314, %330 : vector<16x32xf32>
    %cst_117 = arith.constant 9.99999974E-6 : f32
    %332 = vector.broadcast %cst_117 : f32 to vector<16x1xf32>
    %333 = arith.addf %329, %332 : vector<16x1xf32>
    %334 = math.rsqrt %333 : vector<16x1xf32>
    %335 = vector.broadcast %334 : vector<16x1xf32> to vector<16x32xf32>
    %336 = arith.mulf %331, %335 : vector<16x32xf32>
    %337 = vector.broadcast %316 : vector<1x32xf32> to vector<16x32xf32>
    %338 = arith.mulf %336, %337 : vector<16x32xf32>
    %339 = vector.broadcast %318 : vector<1x32xf32> to vector<16x32xf32>
    %340 = arith.addf %338, %339 : vector<16x32xf32>
    %341 = arith.truncf %340 : vector<16x32xf32> to vector<16x32xbf16>
    %c1_118 = arith.constant 1 : index
    %c0_119 = arith.constant 0 : index
    %c0_120 = arith.constant 0 : index
    %342 = vector.load %arg13[%c1_118, %c0_119, %c0_120] : memref<2x32x128xbf16, #tpu.memory_space<vmem>>, vector<1x32x128xbf16>
    %343 = vector.shape_cast %342 : vector<1x32x128xbf16> to vector<32x128xbf16>
    %cst_121 = arith.constant dense<0.000000e+00> : vector<16x128xf32>
    %344 = tpu.matmul %341, %343, %cst_121 {dimension_numbers = #tpu.dot_dimension_numbers<[1], [0], [0], [1], [0, 0, 1, 1], [], []>} : vector<16x32xbf16>, vector<32x128xbf16>, vector<16x128xf32> -> vector<16x128xf32>
    %c1_122 = arith.constant 1 : index
    %c0_123 = arith.constant 0 : index
    %c0_124 = arith.constant 0 : index
    %345 = vector.load %arg14[%c1_122, %c0_123, %c0_124] : memref<2x1x128xf32, #tpu.memory_space<vmem>>, vector<1x1x128xf32>
    %346 = vector.shape_cast %345 : vector<1x1x128xf32> to vector<1x128xf32>
    %347 = vector.broadcast %346 : vector<1x128xf32> to vector<16x128xf32>
    %348 = arith.addf %344, %347 : vector<16x128xf32>
    %cst_125 = arith.constant 0.000000e+00 : f32
    %349 = vector.broadcast %cst_125 : f32 to vector<16x128xf32>
    %350 = arith.maximumf %348, %349 : vector<16x128xf32>
    %351 = arith.truncf %350 : vector<16x128xf32> to vector<16x128xbf16>
    %c1_126 = arith.constant 1 : index
    %c0_127 = arith.constant 0 : index
    %c0_128 = arith.constant 0 : index
    %352 = vector.load %arg15[%c1_126, %c0_127, %c0_128] : memref<2x128x32xbf16, #tpu.memory_space<vmem>>, vector<1x128x32xbf16>
    %353 = vector.shape_cast %352 : vector<1x128x32xbf16> to vector<128x32xbf16>
    %cst_129 = arith.constant dense<0.000000e+00> : vector<16x32xf32>
    %354 = tpu.matmul %351, %353, %cst_129 {dimension_numbers = #tpu.dot_dimension_numbers<[1], [0], [0], [1], [0, 0, 1, 1], [], []>} : vector<16x128xbf16>, vector<128x32xbf16>, vector<16x32xf32> -> vector<16x32xf32>
    %c1_130 = arith.constant 1 : index
    %c0_131 = arith.constant 0 : index
    %c0_132 = arith.constant 0 : index
    %355 = vector.load %arg16[%c1_130, %c0_131, %c0_132] : memref<2x1x32xf32, #tpu.memory_space<vmem>>, vector<1x1x32xf32>
    %356 = vector.shape_cast %355 : vector<1x1x32xf32> to vector<1x32xf32>
    %357 = vector.broadcast %356 : vector<1x32xf32> to vector<16x32xf32>
    %358 = arith.addf %354, %357 : vector<16x32xf32>
    %359 = arith.addf %340, %358 : vector<16x32xf32>
    %c1_133 = arith.constant 1 : index
    %c0_134 = arith.constant 0 : index
    %c0_135 = arith.constant 0 : index
    %360 = vector.load %arg19[%c1_133, %c0_134, %c0_135] : memref<2x1x32xf32, #tpu.memory_space<vmem>>, vector<1x1x32xf32>
    %361 = vector.shape_cast %360 : vector<1x1x32xf32> to vector<1x32xf32>
    %c1_136 = arith.constant 1 : index
    %c0_137 = arith.constant 0 : index
    %c0_138 = arith.constant 0 : index
    %362 = vector.load %arg20[%c1_136, %c0_137, %c0_138] : memref<2x1x32xf32, #tpu.memory_space<vmem>>, vector<1x1x32xf32>
    %363 = vector.shape_cast %362 : vector<1x1x32xf32> to vector<1x32xf32>
    %cst_139 = arith.constant dense<0.000000e+00> : vector<16xf32>
    %364 = vector.multi_reduction <add>, %359, %cst_139 [1] : vector<16x32xf32> to vector<16xf32>
    %365 = vector.shape_cast %364 : vector<16xf32> to vector<16x1xf32>
    %cst_140 = arith.constant 3.200000e+01 : f32
    %366 = vector.broadcast %cst_140 : f32 to vector<16x1xf32>
    %367 = arith.divf %365, %366 : vector<16x1xf32>
    %368 = vector.broadcast %367 : vector<16x1xf32> to vector<16x32xf32>
    %369 = arith.subf %359, %368 : vector<16x32xf32>
    %370 = arith.mulf %369, %369 : vector<16x32xf32>
    %cst_141 = arith.constant dense<0.000000e+00> : vector<16xf32>
    %371 = vector.multi_reduction <add>, %370, %cst_141 [1] : vector<16x32xf32> to vector<16xf32>
    %372 = vector.shape_cast %371 : vector<16xf32> to vector<16x1xf32>
    %cst_142 = arith.constant 3.200000e+01 : f32
    %373 = vector.broadcast %cst_142 : f32 to vector<16x1xf32>
    %374 = arith.divf %372, %373 : vector<16x1xf32>
    %375 = vector.broadcast %367 : vector<16x1xf32> to vector<16x32xf32>
    %376 = arith.subf %359, %375 : vector<16x32xf32>
    %cst_143 = arith.constant 9.99999974E-6 : f32
    %377 = vector.broadcast %cst_143 : f32 to vector<16x1xf32>
    %378 = arith.addf %374, %377 : vector<16x1xf32>
    %379 = math.rsqrt %378 : vector<16x1xf32>
    %380 = vector.broadcast %379 : vector<16x1xf32> to vector<16x32xf32>
    %381 = arith.mulf %376, %380 : vector<16x32xf32>
    %382 = vector.broadcast %361 : vector<1x32xf32> to vector<16x32xf32>
    %383 = arith.mulf %381, %382 : vector<16x32xf32>
    %384 = vector.broadcast %363 : vector<1x32xf32> to vector<16x32xf32>
    %385 = arith.addf %383, %384 : vector<16x32xf32>
    %c0_144 = arith.constant 0 : index
    %c0_145 = arith.constant 0 : index
    %386 = vector.load %arg2[%c0_144, %c0_145] : memref<16x19xf32, #tpu.memory_space<vmem>>, vector<16x19xf32>
    %c0_146 = arith.constant 0 : index
    %c0_147 = arith.constant 0 : index
    %387 = vector.load %arg3[%c0_146, %c0_147] : memref<16x7xf32, #tpu.memory_space<vmem>>, vector<16x7xf32>
    %388 = tpu.concatenate %385, %386 in 1 : vector<16x32xf32>, vector<16x19xf32> -> vector<16x51xf32>
    %389 = arith.truncf %388 : vector<16x51xf32> to vector<16x51xbf16>
    %c0_148 = arith.constant 0 : index
    %c0_149 = arith.constant 0 : index
    %390 = vector.load %arg21[%c0_148, %c0_149] : memref<51x128xbf16, #tpu.memory_space<vmem>>, vector<51x128xbf16>
    %cst_150 = arith.constant dense<0.000000e+00> : vector<16x128xf32>
    %391 = tpu.matmul %389, %390, %cst_150 {dimension_numbers = #tpu.dot_dimension_numbers<[1], [0], [0], [1], [0, 0, 1, 1], [], []>} : vector<16x51xbf16>, vector<51x128xbf16>, vector<16x128xf32> -> vector<16x128xf32>
    %c0_151 = arith.constant 0 : index
    %c0_152 = arith.constant 0 : index
    %392 = vector.load %arg22[%c0_151, %c0_152] : memref<1x128xf32, #tpu.memory_space<vmem>>, vector<1x128xf32>
    %393 = vector.broadcast %392 : vector<1x128xf32> to vector<16x128xf32>
    %394 = arith.addf %391, %393 : vector<16x128xf32>
    %395 = vector.extract_strided_slice %394 {offsets = [0, 0], sizes = [16, 12], strides = [1, 1]} : vector<16x128xf32> to vector<16x12xf32>
    %396 = vector.extract_strided_slice %394 {offsets = [0, 16], sizes = [16, 27], strides = [1, 1]} : vector<16x128xf32> to vector<16x27xf32>
    %397 = vector.extract_strided_slice %394 {offsets = [0, 48], sizes = [16, 27], strides = [1, 1]} : vector<16x128xf32> to vector<16x27xf32>
    %398 = vector.extract_strided_slice %394 {offsets = [0, 80], sizes = [16, 27], strides = [1, 1]} : vector<16x128xf32> to vector<16x27xf32>
    %cst_153 = arith.constant 0.000000e+00 : f32
    %399 = vector.broadcast %cst_153 : f32 to vector<1x1xf32>
    %400 = vector.extract_strided_slice %395 {offsets = [0, 0], sizes = [16, 2], strides = [1, 1]} : vector<16x12xf32> to vector<16x2xf32>
    %cst_154 = arith.constant dense<0xFF800000> : vector<16xf32>
    %401 = vector.multi_reduction <maximumf>, %400, %cst_154 [1] : vector<16x2xf32> to vector<16xf32>
    %402 = vector.shape_cast %401 : vector<16xf32> to vector<16x1xf32>
    %403 = vector.broadcast %402 : vector<16x1xf32> to vector<16x2xf32>
    %404 = arith.subf %400, %403 : vector<16x2xf32>
    %405 = vector.broadcast %402 : vector<16x1xf32> to vector<16x2xf32>
    %406 = arith.subf %400, %405 : vector<16x2xf32>
    %407 = math.exp %406 : vector<16x2xf32>
    %cst_155 = arith.constant dense<0.000000e+00> : vector<16xf32>
    %408 = vector.multi_reduction <add>, %407, %cst_155 [1] : vector<16x2xf32> to vector<16xf32>
    %409 = vector.shape_cast %408 : vector<16xf32> to vector<16x1xf32>
    %410 = math.log %409 : vector<16x1xf32>
    %411 = vector.broadcast %410 : vector<16x1xf32> to vector<16x2xf32>
    %412 = arith.subf %404, %411 : vector<16x2xf32>
    %413 = vector.extract_strided_slice %387 {offsets = [0, 0], sizes = [16, 1], strides = [1, 1]} : vector<16x7xf32> to vector<16x1xf32>
    %414 = arith.fptosi %413 : vector<16x1xf32> to vector<16x1xi32>
    %c0_i32 = arith.constant 0 : i32
    %c1_i32 = arith.constant 1 : i32
    %415 = vector.broadcast %c0_i32 : i32 to vector<16x1xi32>
    %416 = arith.maxsi %415, %414 : vector<16x1xi32>
    %417 = vector.broadcast %c1_i32 : i32 to vector<16x1xi32>
    %418 = arith.minsi %417, %416 : vector<16x1xi32>
    %419 = tpu.iota {dimensions = array<i32: 1>} : vector<16x2xi32>
    %420 = vector.broadcast %418 : vector<16x1xi32> to vector<16x2xi32>
    %421 = arith.cmpi eq, %419, %420 : vector<16x2xi32>
    %422 = arith.extui %421 : vector<16x2xi1> to vector<16x2xi32>
    %423 = arith.sitofp %422 : vector<16x2xi32> to vector<16x2xf32>
    %424 = arith.mulf %412, %423 : vector<16x2xf32>
    %425 = vector.shape_cast %424 : vector<16x2xf32> to vector<1x16x2xf32>
    %cst_156 = arith.constant dense<0.000000e+00> : vector<1xf32>
    %426 = vector.multi_reduction <add>, %425, %cst_156 [1, 2] : vector<1x16x2xf32> to vector<1xf32>
    %427 = vector.shape_cast %426 : vector<1xf32> to vector<1x1x1xf32>
    %428 = vector.extract %427[0, 0, 0] : f32 from vector<1x1x1xf32>
    %429 = vector.broadcast %428 : f32 to vector<1x1xf32>
    %430 = arith.addf %399, %429 : vector<1x1xf32>
    %431 = vector.extract_strided_slice %395 {offsets = [0, 2], sizes = [16, 10], strides = [1, 1]} : vector<16x12xf32> to vector<16x10xf32>
    %cst_157 = arith.constant dense<0xFF800000> : vector<16xf32>
    %432 = vector.multi_reduction <maximumf>, %431, %cst_157 [1] : vector<16x10xf32> to vector<16xf32>
    %433 = vector.shape_cast %432 : vector<16xf32> to vector<16x1xf32>
    %434 = vector.broadcast %433 : vector<16x1xf32> to vector<16x10xf32>
    %435 = arith.subf %431, %434 : vector<16x10xf32>
    %436 = vector.broadcast %433 : vector<16x1xf32> to vector<16x10xf32>
    %437 = arith.subf %431, %436 : vector<16x10xf32>
    %438 = math.exp %437 : vector<16x10xf32>
    %cst_158 = arith.constant dense<0.000000e+00> : vector<16xf32>
    %439 = vector.multi_reduction <add>, %438, %cst_158 [1] : vector<16x10xf32> to vector<16xf32>
    %440 = vector.shape_cast %439 : vector<16xf32> to vector<16x1xf32>
    %441 = math.log %440 : vector<16x1xf32>
    %442 = vector.broadcast %441 : vector<16x1xf32> to vector<16x10xf32>
    %443 = arith.subf %435, %442 : vector<16x10xf32>
    %444 = vector.extract_strided_slice %387 {offsets = [0, 1], sizes = [16, 1], strides = [1, 1]} : vector<16x7xf32> to vector<16x1xf32>
    %445 = arith.fptosi %444 : vector<16x1xf32> to vector<16x1xi32>
    %c0_i32_159 = arith.constant 0 : i32
    %c9_i32 = arith.constant 9 : i32
    %446 = vector.broadcast %c0_i32_159 : i32 to vector<16x1xi32>
    %447 = arith.maxsi %446, %445 : vector<16x1xi32>
    %448 = vector.broadcast %c9_i32 : i32 to vector<16x1xi32>
    %449 = arith.minsi %448, %447 : vector<16x1xi32>
    %450 = tpu.iota {dimensions = array<i32: 1>} : vector<16x10xi32>
    %451 = vector.broadcast %449 : vector<16x1xi32> to vector<16x10xi32>
    %452 = arith.cmpi eq, %450, %451 : vector<16x10xi32>
    %453 = arith.extui %452 : vector<16x10xi1> to vector<16x10xi32>
    %454 = arith.sitofp %453 : vector<16x10xi32> to vector<16x10xf32>
    %455 = arith.mulf %443, %454 : vector<16x10xf32>
    %456 = vector.shape_cast %455 : vector<16x10xf32> to vector<1x16x10xf32>
    %cst_160 = arith.constant dense<0.000000e+00> : vector<1xf32>
    %457 = vector.multi_reduction <add>, %456, %cst_160 [1, 2] : vector<1x16x10xf32> to vector<1xf32>
    %458 = vector.shape_cast %457 : vector<1xf32> to vector<1x1x1xf32>
    %459 = vector.extract %458[0, 0, 0] : f32 from vector<1x1x1xf32>
    %460 = vector.broadcast %459 : f32 to vector<1x1xf32>
    %461 = arith.addf %430, %460 : vector<1x1xf32>
    %cst_161 = arith.constant 0.000000e+00 : f32
    %462 = vector.broadcast %cst_161 : f32 to vector<16x27xf32>
    %463 = arith.maximumf %398, %462 : vector<16x27xf32>
    %464 = math.absf %398 : vector<16x27xf32>
    %cst_162 = arith.constant 0.000000e+00 : f32
    %465 = vector.broadcast %cst_162 : f32 to vector<16x27xf32>
    %466 = arith.subf %465, %464 : vector<16x27xf32>
    %467 = math.exp %466 : vector<16x27xf32>
    %cst_163 = arith.constant 1.000000e+00 : f32
    %468 = vector.broadcast %cst_163 : f32 to vector<16x27xf32>
    %469 = arith.addf %468, %467 : vector<16x27xf32>
    %470 = math.log %469 : vector<16x27xf32>
    %471 = arith.addf %463, %470 : vector<16x27xf32>
    %cst_164 = arith.constant 1.000000e-03 : f32
    %472 = vector.broadcast %cst_164 : f32 to vector<16x27xf32>
    %473 = arith.addf %471, %472 : vector<16x27xf32>
    %474 = vector.extract_strided_slice %387 {offsets = [0, 2], sizes = [16, 1], strides = [1, 1]} : vector<16x7xf32> to vector<16x1xf32>
    %475 = vector.extract_strided_slice %387 {offsets = [0, 3], sizes = [16, 1], strides = [1, 1]} : vector<16x7xf32> to vector<16x1xf32>
    %476 = vector.extract_strided_slice %387 {offsets = [0, 4], sizes = [16, 1], strides = [1, 1]} : vector<16x7xf32> to vector<16x1xf32>
    %477 = vector.extract_strided_slice %387 {offsets = [0, 5], sizes = [16, 1], strides = [1, 1]} : vector<16x7xf32> to vector<16x1xf32>
    %478 = vector.extract_strided_slice %387 {offsets = [0, 6], sizes = [16, 1], strides = [1, 1]} : vector<16x7xf32> to vector<16x1xf32>
    %479 = vector.shape_cast %474 : vector<16x1xf32> to vector<16x1xf32>
    %480 = vector.broadcast %479 : vector<16x1xf32> to vector<16x8xf32>
    %481 = vector.shape_cast %475 : vector<16x1xf32> to vector<16x1xf32>
    %482 = vector.broadcast %481 : vector<16x1xf32> to vector<16x5xf32>
    %483 = vector.shape_cast %476 : vector<16x1xf32> to vector<16x1xf32>
    %484 = vector.broadcast %483 : vector<16x1xf32> to vector<16x5xf32>
    %485 = vector.shape_cast %477 : vector<16x1xf32> to vector<16x1xf32>
    %486 = vector.broadcast %485 : vector<16x1xf32> to vector<16x6xf32>
    %487 = vector.shape_cast %478 : vector<16x1xf32> to vector<16x1xf32>
    %488 = vector.broadcast %487 : vector<16x1xf32> to vector<16x3xf32>
    %489 = tpu.concatenate %480, %482, %484, %486, %488 in 1 : vector<16x8xf32>, vector<16x5xf32>, vector<16x5xf32>, vector<16x6xf32>, vector<16x3xf32> -> vector<16x27xf32>
    %490 = arith.subf %489, %397 : vector<16x27xf32>
    %491 = arith.divf %490, %473 : vector<16x27xf32>
    %cst_165 = arith.constant -5.000000e-01 : f32
    %492 = vector.broadcast %cst_165 : f32 to vector<16x27xf32>
    %493 = arith.mulf %492, %491 : vector<16x27xf32>
    %494 = arith.mulf %493, %491 : vector<16x27xf32>
    %495 = math.log %473 : vector<16x27xf32>
    %496 = arith.subf %494, %495 : vector<16x27xf32>
    %cst_166 = arith.constant 0.918938517 : f32
    %497 = vector.broadcast %cst_166 : f32 to vector<16x27xf32>
    %498 = arith.subf %496, %497 : vector<16x27xf32>
    %499 = vector.extract_strided_slice %396 {offsets = [0, 0], sizes = [16, 8], strides = [1, 1]} : vector<16x27xf32> to vector<16x8xf32>
    %cst_167 = arith.constant dense<0xFF800000> : vector<16xf32>
    %500 = vector.multi_reduction <maximumf>, %499, %cst_167 [1] : vector<16x8xf32> to vector<16xf32>
    %501 = vector.shape_cast %500 : vector<16xf32> to vector<16x1xf32>
    %502 = vector.extract_strided_slice %396 {offsets = [0, 8], sizes = [16, 5], strides = [1, 1]} : vector<16x27xf32> to vector<16x5xf32>
    %cst_168 = arith.constant dense<0xFF800000> : vector<16xf32>
    %503 = vector.multi_reduction <maximumf>, %502, %cst_168 [1] : vector<16x5xf32> to vector<16xf32>
    %504 = vector.shape_cast %503 : vector<16xf32> to vector<16x1xf32>
    %505 = vector.extract_strided_slice %396 {offsets = [0, 13], sizes = [16, 5], strides = [1, 1]} : vector<16x27xf32> to vector<16x5xf32>
    %cst_169 = arith.constant dense<0xFF800000> : vector<16xf32>
    %506 = vector.multi_reduction <maximumf>, %505, %cst_169 [1] : vector<16x5xf32> to vector<16xf32>
    %507 = vector.shape_cast %506 : vector<16xf32> to vector<16x1xf32>
    %508 = vector.extract_strided_slice %396 {offsets = [0, 18], sizes = [16, 6], strides = [1, 1]} : vector<16x27xf32> to vector<16x6xf32>
    %cst_170 = arith.constant dense<0xFF800000> : vector<16xf32>
    %509 = vector.multi_reduction <maximumf>, %508, %cst_170 [1] : vector<16x6xf32> to vector<16xf32>
    %510 = vector.shape_cast %509 : vector<16xf32> to vector<16x1xf32>
    %511 = vector.extract_strided_slice %396 {offsets = [0, 24], sizes = [16, 3], strides = [1, 1]} : vector<16x27xf32> to vector<16x3xf32>
    %cst_171 = arith.constant dense<0xFF800000> : vector<16xf32>
    %512 = vector.multi_reduction <maximumf>, %511, %cst_171 [1] : vector<16x3xf32> to vector<16xf32>
    %513 = vector.shape_cast %512 : vector<16xf32> to vector<16x1xf32>
    %514 = vector.shape_cast %501 : vector<16x1xf32> to vector<16x1xf32>
    %515 = vector.broadcast %514 : vector<16x1xf32> to vector<16x8xf32>
    %516 = vector.shape_cast %504 : vector<16x1xf32> to vector<16x1xf32>
    %517 = vector.broadcast %516 : vector<16x1xf32> to vector<16x5xf32>
    %518 = vector.shape_cast %507 : vector<16x1xf32> to vector<16x1xf32>
    %519 = vector.broadcast %518 : vector<16x1xf32> to vector<16x5xf32>
    %520 = vector.shape_cast %510 : vector<16x1xf32> to vector<16x1xf32>
    %521 = vector.broadcast %520 : vector<16x1xf32> to vector<16x6xf32>
    %522 = vector.shape_cast %513 : vector<16x1xf32> to vector<16x1xf32>
    %523 = vector.broadcast %522 : vector<16x1xf32> to vector<16x3xf32>
    %524 = tpu.concatenate %515, %517, %519, %521, %523 in 1 : vector<16x8xf32>, vector<16x5xf32>, vector<16x5xf32>, vector<16x6xf32>, vector<16x3xf32> -> vector<16x27xf32>
    %525 = arith.subf %396, %524 : vector<16x27xf32>
    %526 = math.exp %525 : vector<16x27xf32>
    %527 = vector.extract_strided_slice %526 {offsets = [0, 0], sizes = [16, 8], strides = [1, 1]} : vector<16x27xf32> to vector<16x8xf32>
    %cst_172 = arith.constant dense<0.000000e+00> : vector<16xf32>
    %528 = vector.multi_reduction <add>, %527, %cst_172 [1] : vector<16x8xf32> to vector<16xf32>
    %529 = vector.shape_cast %528 : vector<16xf32> to vector<16x1xf32>
    %530 = vector.extract_strided_slice %526 {offsets = [0, 8], sizes = [16, 5], strides = [1, 1]} : vector<16x27xf32> to vector<16x5xf32>
    %cst_173 = arith.constant dense<0.000000e+00> : vector<16xf32>
    %531 = vector.multi_reduction <add>, %530, %cst_173 [1] : vector<16x5xf32> to vector<16xf32>
    %532 = vector.shape_cast %531 : vector<16xf32> to vector<16x1xf32>
    %533 = vector.extract_strided_slice %526 {offsets = [0, 13], sizes = [16, 5], strides = [1, 1]} : vector<16x27xf32> to vector<16x5xf32>
    %cst_174 = arith.constant dense<0.000000e+00> : vector<16xf32>
    %534 = vector.multi_reduction <add>, %533, %cst_174 [1] : vector<16x5xf32> to vector<16xf32>
    %535 = vector.shape_cast %534 : vector<16xf32> to vector<16x1xf32>
    %536 = vector.extract_strided_slice %526 {offsets = [0, 18], sizes = [16, 6], strides = [1, 1]} : vector<16x27xf32> to vector<16x6xf32>
    %cst_175 = arith.constant dense<0.000000e+00> : vector<16xf32>
    %537 = vector.multi_reduction <add>, %536, %cst_175 [1] : vector<16x6xf32> to vector<16xf32>
    %538 = vector.shape_cast %537 : vector<16xf32> to vector<16x1xf32>
    %539 = vector.extract_strided_slice %526 {offsets = [0, 24], sizes = [16, 3], strides = [1, 1]} : vector<16x27xf32> to vector<16x3xf32>
    %cst_176 = arith.constant dense<0.000000e+00> : vector<16xf32>
    %540 = vector.multi_reduction <add>, %539, %cst_176 [1] : vector<16x3xf32> to vector<16xf32>
    %541 = vector.shape_cast %540 : vector<16xf32> to vector<16x1xf32>
    %542 = vector.shape_cast %529 : vector<16x1xf32> to vector<16x1xf32>
    %543 = vector.broadcast %542 : vector<16x1xf32> to vector<16x8xf32>
    %544 = vector.shape_cast %532 : vector<16x1xf32> to vector<16x1xf32>
    %545 = vector.broadcast %544 : vector<16x1xf32> to vector<16x5xf32>
    %546 = vector.shape_cast %535 : vector<16x1xf32> to vector<16x1xf32>
    %547 = vector.broadcast %546 : vector<16x1xf32> to vector<16x5xf32>
    %548 = vector.shape_cast %538 : vector<16x1xf32> to vector<16x1xf32>
    %549 = vector.broadcast %548 : vector<16x1xf32> to vector<16x6xf32>
    %550 = vector.shape_cast %541 : vector<16x1xf32> to vector<16x1xf32>
    %551 = vector.broadcast %550 : vector<16x1xf32> to vector<16x3xf32>
    %552 = tpu.concatenate %543, %545, %547, %549, %551 in 1 : vector<16x8xf32>, vector<16x5xf32>, vector<16x5xf32>, vector<16x6xf32>, vector<16x3xf32> -> vector<16x27xf32>
    %553 = arith.subf %396, %524 : vector<16x27xf32>
    %554 = math.log %552 : vector<16x27xf32>
    %555 = arith.subf %553, %554 : vector<16x27xf32>
    %556 = arith.divf %526, %552 : vector<16x27xf32>
    %557 = arith.mulf %556, %397 : vector<16x27xf32>
    %558 = arith.addf %555, %498 : vector<16x27xf32>
    %559 = vector.extract_strided_slice %558 {offsets = [0, 0], sizes = [16, 8], strides = [1, 1]} : vector<16x27xf32> to vector<16x8xf32>
    %cst_177 = arith.constant dense<0xFF800000> : vector<16xf32>
    %560 = vector.multi_reduction <maximumf>, %559, %cst_177 [1] : vector<16x8xf32> to vector<16xf32>
    %561 = vector.shape_cast %560 : vector<16xf32> to vector<16x1xf32>
    %562 = vector.extract_strided_slice %558 {offsets = [0, 8], sizes = [16, 5], strides = [1, 1]} : vector<16x27xf32> to vector<16x5xf32>
    %cst_178 = arith.constant dense<0xFF800000> : vector<16xf32>
    %563 = vector.multi_reduction <maximumf>, %562, %cst_178 [1] : vector<16x5xf32> to vector<16xf32>
    %564 = vector.shape_cast %563 : vector<16xf32> to vector<16x1xf32>
    %565 = vector.extract_strided_slice %558 {offsets = [0, 13], sizes = [16, 5], strides = [1, 1]} : vector<16x27xf32> to vector<16x5xf32>
    %cst_179 = arith.constant dense<0xFF800000> : vector<16xf32>
    %566 = vector.multi_reduction <maximumf>, %565, %cst_179 [1] : vector<16x5xf32> to vector<16xf32>
    %567 = vector.shape_cast %566 : vector<16xf32> to vector<16x1xf32>
    %568 = vector.extract_strided_slice %558 {offsets = [0, 18], sizes = [16, 6], strides = [1, 1]} : vector<16x27xf32> to vector<16x6xf32>
    %cst_180 = arith.constant dense<0xFF800000> : vector<16xf32>
    %569 = vector.multi_reduction <maximumf>, %568, %cst_180 [1] : vector<16x6xf32> to vector<16xf32>
    %570 = vector.shape_cast %569 : vector<16xf32> to vector<16x1xf32>
    %571 = vector.extract_strided_slice %558 {offsets = [0, 24], sizes = [16, 3], strides = [1, 1]} : vector<16x27xf32> to vector<16x3xf32>
    %cst_181 = arith.constant dense<0xFF800000> : vector<16xf32>
    %572 = vector.multi_reduction <maximumf>, %571, %cst_181 [1] : vector<16x3xf32> to vector<16xf32>
    %573 = vector.shape_cast %572 : vector<16xf32> to vector<16x1xf32>
    %574 = vector.shape_cast %561 : vector<16x1xf32> to vector<16x1xf32>
    %575 = vector.broadcast %574 : vector<16x1xf32> to vector<16x8xf32>
    %576 = vector.shape_cast %564 : vector<16x1xf32> to vector<16x1xf32>
    %577 = vector.broadcast %576 : vector<16x1xf32> to vector<16x5xf32>
    %578 = vector.shape_cast %567 : vector<16x1xf32> to vector<16x1xf32>
    %579 = vector.broadcast %578 : vector<16x1xf32> to vector<16x5xf32>
    %580 = vector.shape_cast %570 : vector<16x1xf32> to vector<16x1xf32>
    %581 = vector.broadcast %580 : vector<16x1xf32> to vector<16x6xf32>
    %582 = vector.shape_cast %573 : vector<16x1xf32> to vector<16x1xf32>
    %583 = vector.broadcast %582 : vector<16x1xf32> to vector<16x3xf32>
    %584 = tpu.concatenate %575, %577, %579, %581, %583 in 1 : vector<16x8xf32>, vector<16x5xf32>, vector<16x5xf32>, vector<16x6xf32>, vector<16x3xf32> -> vector<16x27xf32>
    %585 = arith.subf %558, %584 : vector<16x27xf32>
    %586 = math.exp %585 : vector<16x27xf32>
    %587 = vector.extract_strided_slice %586 {offsets = [0, 0], sizes = [16, 8], strides = [1, 1]} : vector<16x27xf32> to vector<16x8xf32>
    %cst_182 = arith.constant dense<0.000000e+00> : vector<16xf32>
    %588 = vector.multi_reduction <add>, %587, %cst_182 [1] : vector<16x8xf32> to vector<16xf32>
    %589 = vector.shape_cast %588 : vector<16xf32> to vector<16x1xf32>
    %590 = vector.extract_strided_slice %586 {offsets = [0, 8], sizes = [16, 5], strides = [1, 1]} : vector<16x27xf32> to vector<16x5xf32>
    %cst_183 = arith.constant dense<0.000000e+00> : vector<16xf32>
    %591 = vector.multi_reduction <add>, %590, %cst_183 [1] : vector<16x5xf32> to vector<16xf32>
    %592 = vector.shape_cast %591 : vector<16xf32> to vector<16x1xf32>
    %593 = vector.extract_strided_slice %586 {offsets = [0, 13], sizes = [16, 5], strides = [1, 1]} : vector<16x27xf32> to vector<16x5xf32>
    %cst_184 = arith.constant dense<0.000000e+00> : vector<16xf32>
    %594 = vector.multi_reduction <add>, %593, %cst_184 [1] : vector<16x5xf32> to vector<16xf32>
    %595 = vector.shape_cast %594 : vector<16xf32> to vector<16x1xf32>
    %596 = vector.extract_strided_slice %586 {offsets = [0, 18], sizes = [16, 6], strides = [1, 1]} : vector<16x27xf32> to vector<16x6xf32>
    %cst_185 = arith.constant dense<0.000000e+00> : vector<16xf32>
    %597 = vector.multi_reduction <add>, %596, %cst_185 [1] : vector<16x6xf32> to vector<16xf32>
    %598 = vector.shape_cast %597 : vector<16xf32> to vector<16x1xf32>
    %599 = vector.extract_strided_slice %586 {offsets = [0, 24], sizes = [16, 3], strides = [1, 1]} : vector<16x27xf32> to vector<16x3xf32>
    %cst_186 = arith.constant dense<0.000000e+00> : vector<16xf32>
    %600 = vector.multi_reduction <add>, %599, %cst_186 [1] : vector<16x3xf32> to vector<16xf32>
    %601 = vector.shape_cast %600 : vector<16xf32> to vector<16x1xf32>
    %602 = vector.extract_strided_slice %557 {offsets = [0, 0], sizes = [16, 8], strides = [1, 1]} : vector<16x27xf32> to vector<16x8xf32>
    %cst_187 = arith.constant dense<0.000000e+00> : vector<16xf32>
    %603 = vector.multi_reduction <add>, %602, %cst_187 [1] : vector<16x8xf32> to vector<16xf32>
    %604 = vector.shape_cast %603 : vector<16xf32> to vector<16x1xf32>
    %605 = vector.extract_strided_slice %557 {offsets = [0, 8], sizes = [16, 5], strides = [1, 1]} : vector<16x27xf32> to vector<16x5xf32>
    %cst_188 = arith.constant dense<0.000000e+00> : vector<16xf32>
    %606 = vector.multi_reduction <add>, %605, %cst_188 [1] : vector<16x5xf32> to vector<16xf32>
    %607 = vector.shape_cast %606 : vector<16xf32> to vector<16x1xf32>
    %608 = vector.extract_strided_slice %557 {offsets = [0, 13], sizes = [16, 5], strides = [1, 1]} : vector<16x27xf32> to vector<16x5xf32>
    %cst_189 = arith.constant dense<0.000000e+00> : vector<16xf32>
    %609 = vector.multi_reduction <add>, %608, %cst_189 [1] : vector<16x5xf32> to vector<16xf32>
    %610 = vector.shape_cast %609 : vector<16xf32> to vector<16x1xf32>
    %611 = vector.extract_strided_slice %557 {offsets = [0, 18], sizes = [16, 6], strides = [1, 1]} : vector<16x27xf32> to vector<16x6xf32>
    %cst_190 = arith.constant dense<0.000000e+00> : vector<16xf32>
    %612 = vector.multi_reduction <add>, %611, %cst_190 [1] : vector<16x6xf32> to vector<16xf32>
    %613 = vector.shape_cast %612 : vector<16xf32> to vector<16x1xf32>
    %614 = vector.extract_strided_slice %557 {offsets = [0, 24], sizes = [16, 3], strides = [1, 1]} : vector<16x27xf32> to vector<16x3xf32>
    %cst_191 = arith.constant dense<0.000000e+00> : vector<16xf32>
    %615 = vector.multi_reduction <add>, %614, %cst_191 [1] : vector<16x3xf32> to vector<16xf32>
    %616 = vector.shape_cast %615 : vector<16xf32> to vector<16x1xf32>
    %617 = vector.extract_strided_slice %584 {offsets = [0, 0], sizes = [16, 1], strides = [1, 1]} : vector<16x27xf32> to vector<16x1xf32>
    %618 = math.log %589 : vector<16x1xf32>
    %619 = arith.addf %617, %618 : vector<16x1xf32>
    %620 = vector.shape_cast %619 : vector<16x1xf32> to vector<1x16x1xf32>
    %cst_192 = arith.constant dense<0.000000e+00> : vector<1xf32>
    %621 = vector.multi_reduction <add>, %620, %cst_192 [1, 2] : vector<1x16x1xf32> to vector<1xf32>
    %622 = vector.shape_cast %621 : vector<1xf32> to vector<1x1x1xf32>
    %623 = vector.extract %622[0, 0, 0] : f32 from vector<1x1x1xf32>
    %624 = vector.broadcast %623 : f32 to vector<1x1xf32>
    %625 = arith.addf %461, %624 : vector<1x1xf32>
    %626 = vector.extract_strided_slice %584 {offsets = [0, 8], sizes = [16, 1], strides = [1, 1]} : vector<16x27xf32> to vector<16x1xf32>
    %627 = math.log %592 : vector<16x1xf32>
    %628 = arith.addf %626, %627 : vector<16x1xf32>
    %629 = vector.shape_cast %628 : vector<16x1xf32> to vector<1x16x1xf32>
    %cst_193 = arith.constant dense<0.000000e+00> : vector<1xf32>
    %630 = vector.multi_reduction <add>, %629, %cst_193 [1, 2] : vector<1x16x1xf32> to vector<1xf32>
    %631 = vector.shape_cast %630 : vector<1xf32> to vector<1x1x1xf32>
    %632 = vector.extract %631[0, 0, 0] : f32 from vector<1x1x1xf32>
    %633 = vector.broadcast %632 : f32 to vector<1x1xf32>
    %634 = arith.addf %625, %633 : vector<1x1xf32>
    %635 = vector.extract_strided_slice %584 {offsets = [0, 13], sizes = [16, 1], strides = [1, 1]} : vector<16x27xf32> to vector<16x1xf32>
    %636 = math.log %595 : vector<16x1xf32>
    %637 = arith.addf %635, %636 : vector<16x1xf32>
    %638 = vector.shape_cast %637 : vector<16x1xf32> to vector<1x16x1xf32>
    %cst_194 = arith.constant dense<0.000000e+00> : vector<1xf32>
    %639 = vector.multi_reduction <add>, %638, %cst_194 [1, 2] : vector<1x16x1xf32> to vector<1xf32>
    %640 = vector.shape_cast %639 : vector<1xf32> to vector<1x1x1xf32>
    %641 = vector.extract %640[0, 0, 0] : f32 from vector<1x1x1xf32>
    %642 = vector.broadcast %641 : f32 to vector<1x1xf32>
    %643 = arith.addf %634, %642 : vector<1x1xf32>
    %644 = vector.extract_strided_slice %584 {offsets = [0, 18], sizes = [16, 1], strides = [1, 1]} : vector<16x27xf32> to vector<16x1xf32>
    %645 = math.log %598 : vector<16x1xf32>
    %646 = arith.addf %644, %645 : vector<16x1xf32>
    %647 = vector.shape_cast %646 : vector<16x1xf32> to vector<1x16x1xf32>
    %cst_195 = arith.constant dense<0.000000e+00> : vector<1xf32>
    %648 = vector.multi_reduction <add>, %647, %cst_195 [1, 2] : vector<1x16x1xf32> to vector<1xf32>
    %649 = vector.shape_cast %648 : vector<1xf32> to vector<1x1x1xf32>
    %650 = vector.extract %649[0, 0, 0] : f32 from vector<1x1x1xf32>
    %651 = vector.broadcast %650 : f32 to vector<1x1xf32>
    %652 = arith.addf %643, %651 : vector<1x1xf32>
    %653 = vector.extract_strided_slice %584 {offsets = [0, 24], sizes = [16, 1], strides = [1, 1]} : vector<16x27xf32> to vector<16x1xf32>
    %654 = math.log %601 : vector<16x1xf32>
    %655 = arith.addf %653, %654 : vector<16x1xf32>
    %656 = vector.shape_cast %655 : vector<16x1xf32> to vector<1x16x1xf32>
    %cst_196 = arith.constant dense<0.000000e+00> : vector<1xf32>
    %657 = vector.multi_reduction <add>, %656, %cst_196 [1, 2] : vector<1x16x1xf32> to vector<1xf32>
    %658 = vector.shape_cast %657 : vector<1xf32> to vector<1x1x1xf32>
    %659 = vector.extract %658[0, 0, 0] : f32 from vector<1x1x1xf32>
    %660 = vector.broadcast %659 : f32 to vector<1x1xf32>
    %661 = arith.addf %652, %660 : vector<1x1xf32>
    %662 = tpu.concatenate %604, %607, %610, %613, %616 in 1 : vector<16x1xf32>, vector<16x1xf32>, vector<16x1xf32>, vector<16x1xf32>, vector<16x1xf32> -> vector<16x5xf32>
    %663 = vector.extract_strided_slice %386 {offsets = [0, 0], sizes = [16, 1], strides = [1, 1]} : vector<16x19xf32> to vector<16x1xf32>
    %664 = vector.extract_strided_slice %386 {offsets = [0, 14], sizes = [16, 1], strides = [1, 1]} : vector<16x19xf32> to vector<16x1xf32>
    %665 = vector.extract_strided_slice %662 {offsets = [0, 3], sizes = [16, 1], strides = [1, 1]} : vector<16x5xf32> to vector<16x1xf32>
    %666 = arith.subf %664, %665 : vector<16x1xf32>
    %cst_197 = arith.constant 1.000000e+00 : f32
    %667 = vector.broadcast %cst_197 : f32 to vector<16x1xf32>
    %668 = arith.subf %667, %663 : vector<16x1xf32>
    %669 = arith.mulf %668, %666 : vector<16x1xf32>
    %cst_198 = arith.constant 0.000000e+00 : f32
    %670 = vector.broadcast %cst_198 : f32 to vector<16x1xf32>
    %671 = arith.maximumf %669, %670 : vector<16x1xf32>
    %cst_199 = arith.constant 0.000000e+00 : f32
    %672 = vector.broadcast %cst_199 : f32 to vector<16x1xf32>
    %673 = arith.subf %672, %663 : vector<16x1xf32>
    %674 = arith.mulf %673, %666 : vector<16x1xf32>
    %cst_200 = arith.constant 0.000000e+00 : f32
    %675 = vector.broadcast %cst_200 : f32 to vector<16x1xf32>
    %676 = arith.maximumf %674, %675 : vector<16x1xf32>
    %677 = arith.mulf %671, %671 : vector<16x1xf32>
    %678 = arith.mulf %676, %676 : vector<16x1xf32>
    %679 = arith.addf %677, %678 : vector<16x1xf32>
    %680 = vector.shape_cast %679 : vector<16x1xf32> to vector<1x16x1xf32>
    %cst_201 = arith.constant dense<0.000000e+00> : vector<1xf32>
    %681 = vector.multi_reduction <add>, %680, %cst_201 [1, 2] : vector<1x16x1xf32> to vector<1xf32>
    %682 = vector.shape_cast %681 : vector<1xf32> to vector<1x1x1xf32>
    %683 = vector.extract %682[0, 0, 0] : f32 from vector<1x1x1xf32>
    %684 = vector.broadcast %683 : f32 to vector<1x1xf32>
    %cst_202 = arith.constant 1.000000e+00 : f32
    %685 = vector.broadcast %cst_202 : f32 to vector<16x5xf32>
    %686 = arith.subf %662, %685 : vector<16x5xf32>
    %cst_203 = arith.constant 0.000000e+00 : f32
    %687 = vector.broadcast %cst_203 : f32 to vector<16x5xf32>
    %688 = arith.maximumf %686, %687 : vector<16x5xf32>
    %cst_204 = arith.constant 0.000000e+00 : f32
    %689 = vector.broadcast %cst_204 : f32 to vector<16x5xf32>
    %690 = arith.subf %689, %662 : vector<16x5xf32>
    %cst_205 = arith.constant 0.000000e+00 : f32
    %691 = vector.broadcast %cst_205 : f32 to vector<16x5xf32>
    %692 = arith.maximumf %690, %691 : vector<16x5xf32>
    %693 = arith.mulf %688, %688 : vector<16x5xf32>
    %694 = arith.mulf %692, %692 : vector<16x5xf32>
    %695 = arith.addf %693, %694 : vector<16x5xf32>
    %696 = vector.shape_cast %695 : vector<16x5xf32> to vector<1x16x5xf32>
    %cst_206 = arith.constant dense<0.000000e+00> : vector<1xf32>
    %697 = vector.multi_reduction <add>, %696, %cst_206 [1, 2] : vector<1x16x5xf32> to vector<1xf32>
    %698 = vector.shape_cast %697 : vector<1xf32> to vector<1x1x1xf32>
    %699 = vector.extract %698[0, 0, 0] : f32 from vector<1x1x1xf32>
    %700 = vector.broadcast %699 : f32 to vector<1x1xf32>
    %c0_207 = arith.constant 0 : index
    %c0_208 = arith.constant 0 : index
    %701 = vector.load %arg4[%c0_207, %c0_208] : memref<4x6xf32, #tpu.memory_space<vmem>>, vector<4x6xf32>
    %702 = arith.truncf %701 : vector<4x6xf32> to vector<4x6xbf16>
    %c0_209 = arith.constant 0 : index
    %c0_210 = arith.constant 0 : index
    %703 = vector.load %arg23[%c0_209, %c0_210] : memref<6x256xbf16, #tpu.memory_space<vmem>>, vector<6x256xbf16>
    %cst_211 = arith.constant dense<0.000000e+00> : vector<4x256xf32>
    %704 = tpu.matmul %702, %703, %cst_211 {dimension_numbers = #tpu.dot_dimension_numbers<[1], [0], [0], [1], [0, 0, 1, 1], [], []>} : vector<4x6xbf16>, vector<6x256xbf16>, vector<4x256xf32> -> vector<4x256xf32>
    %c0_212 = arith.constant 0 : index
    %c0_213 = arith.constant 0 : index
    %705 = vector.load %arg24[%c0_212, %c0_213] : memref<1x256xf32, #tpu.memory_space<vmem>>, vector<1x256xf32>
    %706 = vector.broadcast %705 : vector<1x256xf32> to vector<4x256xf32>
    %707 = arith.addf %704, %706 : vector<4x256xf32>
    %cst_214 = arith.constant 0.000000e+00 : f32
    %708 = vector.broadcast %cst_214 : f32 to vector<4x256xf32>
    %709 = arith.maximumf %707, %708 : vector<4x256xf32>
    %710 = arith.truncf %709 : vector<4x256xf32> to vector<4x256xbf16>
    %c0_215 = arith.constant 0 : index
    %c0_216 = arith.constant 0 : index
    %711 = vector.load %arg25[%c0_215, %c0_216] : memref<256x6xbf16, #tpu.memory_space<vmem>>, vector<256x6xbf16>
    %cst_217 = arith.constant dense<0.000000e+00> : vector<4x6xf32>
    %712 = tpu.matmul %710, %711, %cst_217 {dimension_numbers = #tpu.dot_dimension_numbers<[1], [0], [0], [1], [0, 0, 1, 1], [], []>} : vector<4x256xbf16>, vector<256x6xbf16>, vector<4x6xf32> -> vector<4x6xf32>
    %c0_218 = arith.constant 0 : index
    %c0_219 = arith.constant 0 : index
    %713 = vector.load %arg26[%c0_218, %c0_219] : memref<1x6xf32, #tpu.memory_space<vmem>>, vector<1x6xf32>
    %714 = vector.broadcast %713 : vector<1x6xf32> to vector<4x6xf32>
    %715 = arith.addf %712, %714 : vector<4x6xf32>
    %716 = arith.mulf %715, %715 : vector<4x6xf32>
    %717 = vector.shape_cast %716 : vector<4x6xf32> to vector<1x4x6xf32>
    %cst_220 = arith.constant dense<0.000000e+00> : vector<1xf32>
    %718 = vector.multi_reduction <add>, %717, %cst_220 [1, 2] : vector<1x4x6xf32> to vector<1xf32>
    %719 = vector.shape_cast %718 : vector<1xf32> to vector<1x1x1xf32>
    %720 = vector.extract %719[0, 0, 0] : f32 from vector<1x1x1xf32>
    %721 = vector.broadcast %720 : f32 to vector<1x1xf32>
    %cst_221 = arith.constant 2.400000e+01 : f32
    %722 = vector.broadcast %cst_221 : f32 to vector<1x1xf32>
    %723 = arith.divf %721, %722 : vector<1x1xf32>
    %724 = tpu.iota {dimensions = array<i32: 1>} : vector<1x128xi32>
    %c0_i32_222 = arith.constant 0 : i32
    %725 = vector.broadcast %c0_i32_222 : i32 to vector<1x128xi32>
    %726 = arith.cmpi eq, %724, %725 : vector<1x128xi32>
    %cst_223 = arith.constant 0.000000e+00 : f32
    %727 = vector.shape_cast %661 : vector<1x1xf32> to vector<1x1xf32>
    %728 = vector.broadcast %727 : vector<1x1xf32> to vector<1x128xf32>
    %729 = vector.broadcast %cst_223 : f32 to vector<1x128xf32>
    %730 = arith.select %726, %728, %729 : vector<1x128xi1>, vector<1x128xf32>
    %c1_i32_224 = arith.constant 1 : i32
    %731 = vector.broadcast %c1_i32_224 : i32 to vector<1x128xi32>
    %732 = arith.cmpi eq, %724, %731 : vector<1x128xi32>
    %cst_225 = arith.constant 0.000000e+00 : f32
    %733 = vector.shape_cast %684 : vector<1x1xf32> to vector<1x1xf32>
    %734 = vector.broadcast %733 : vector<1x1xf32> to vector<1x128xf32>
    %735 = vector.broadcast %cst_225 : f32 to vector<1x128xf32>
    %736 = arith.select %732, %734, %735 : vector<1x128xi1>, vector<1x128xf32>
    %737 = arith.addf %730, %736 : vector<1x128xf32>
    %c2_i32 = arith.constant 2 : i32
    %738 = vector.broadcast %c2_i32 : i32 to vector<1x128xi32>
    %739 = arith.cmpi eq, %724, %738 : vector<1x128xi32>
    %cst_226 = arith.constant 0.000000e+00 : f32
    %740 = vector.shape_cast %700 : vector<1x1xf32> to vector<1x1xf32>
    %741 = vector.broadcast %740 : vector<1x1xf32> to vector<1x128xf32>
    %742 = vector.broadcast %cst_226 : f32 to vector<1x128xf32>
    %743 = arith.select %739, %741, %742 : vector<1x128xi1>, vector<1x128xf32>
    %744 = arith.addf %737, %743 : vector<1x128xf32>
    %c3_i32 = arith.constant 3 : i32
    %745 = vector.broadcast %c3_i32 : i32 to vector<1x128xi32>
    %746 = arith.cmpi eq, %724, %745 : vector<1x128xi32>
    %cst_227 = arith.constant 0.000000e+00 : f32
    %747 = vector.shape_cast %723 : vector<1x1xf32> to vector<1x1xf32>
    %748 = vector.broadcast %747 : vector<1x1xf32> to vector<1x128xf32>
    %749 = vector.broadcast %cst_227 : f32 to vector<1x128xf32>
    %750 = arith.select %746, %748, %749 : vector<1x128xi1>, vector<1x128xf32>
    %751 = arith.addf %744, %750 : vector<1x128xf32>
    %752 = vector.shape_cast %751 : vector<1x128xf32> to vector<1x1x128xf32>
    %c0_228 = arith.constant 0 : index
    %c0_229 = arith.constant 0 : index
    %c0_230 = arith.constant 0 : index
    %753 = vector.load %arg27[%c0_228, %c0_229, %c0_230] : memref<1x1x128xf32, #tpu.memory_space<vmem>>, vector<1x1x128xf32>
    tpu.vector_store %arg27[%c0_228, %c0_229, %c0_230], %752 {strides = array<i32>} : memref<1x1x128xf32, #tpu.memory_space<vmem>>, vector<1x1x128xf32>,
    return
  }
  func.func @transform_0(%arg0: i32) -> (i32, i32) {
    %c0_i32 = arith.constant 0 : i32
    %c0_i32_0 = arith.constant 0 : i32
    return %arg0, %c0_i32 : i32, i32
  }
  func.func @transform_1(%arg0: i32) -> (i32, i32) {
    %c0_i32 = arith.constant 0 : i32
    %c0_i32_0 = arith.constant 0 : i32
    return %arg0, %c0_i32 : i32, i32
  }
  func.func @transform_2(%arg0: i32) -> (i32, i32) {
    %c0_i32 = arith.constant 0 : i32
    %c0_i32_0 = arith.constant 0 : i32
    return %arg0, %c0_i32 : i32, i32
  }
  func.func @transform_3(%arg0: i32) -> (i32, i32) {
    %c0_i32 = arith.constant 0 : i32
    %c0_i32_0 = arith.constant 0 : i32
    %c0_i32_1 = arith.constant 0 : i32
    return %c0_i32, %c0_i32_0 : i32, i32
  }
  func.func @transform_4(%arg0: i32) -> (i32, i32) {
    %c0_i32 = arith.constant 0 : i32
    %c0_i32_0 = arith.constant 0 : i32
    %c0_i32_1 = arith.constant 0 : i32
    return %c0_i32, %c0_i32_0 : i32, i32
  }
  func.func @transform_5(%arg0: i32) -> (i32, i32) {
    %c0_i32 = arith.constant 0 : i32
    %c0_i32_0 = arith.constant 0 : i32
    %c0_i32_1 = arith.constant 0 : i32
    return %c0_i32, %c0_i32_0 : i32, i32
  }
  func.func @transform_6(%arg0: i32) -> (i32, i32) {
    %c0_i32 = arith.constant 0 : i32
    %c0_i32_0 = arith.constant 0 : i32
    %c0_i32_1 = arith.constant 0 : i32
    return %c0_i32, %c0_i32_0 : i32, i32
  }
  func.func @transform_7(%arg0: i32) -> (i32, i32) {
    %c0_i32 = arith.constant 0 : i32
    %c0_i32_0 = arith.constant 0 : i32
    %c0_i32_1 = arith.constant 0 : i32
    return %c0_i32, %c0_i32_0 : i32, i32
  }
  func.func @transform_8(%arg0: i32) -> (i32, i32, i32) {
    %c0_i32 = arith.constant 0 : i32
    %c0_i32_0 = arith.constant 0 : i32
    %c0_i32_1 = arith.constant 0 : i32
    %c0_i32_2 = arith.constant 0 : i32
    return %c0_i32, %c0_i32_0, %c0_i32_1 : i32, i32, i32
  }
  func.func @transform_9(%arg0: i32) -> (i32, i32, i32) {
    %c0_i32 = arith.constant 0 : i32
    %c0_i32_0 = arith.constant 0 : i32
    %c0_i32_1 = arith.constant 0 : i32
    %c0_i32_2 = arith.constant 0 : i32
    return %c0_i32, %c0_i32_0, %c0_i32_1 : i32, i32, i32
  }
  func.func @transform_10(%arg0: i32) -> (i32, i32, i32) {
    %c0_i32 = arith.constant 0 : i32
    %c0_i32_0 = arith.constant 0 : i32
    %c0_i32_1 = arith.constant 0 : i32
    %c0_i32_2 = arith.constant 0 : i32
    return %c0_i32, %c0_i32_0, %c0_i32_1 : i32, i32, i32
  }
  func.func @transform_11(%arg0: i32) -> (i32, i32, i32) {
    %c0_i32 = arith.constant 0 : i32
    %c0_i32_0 = arith.constant 0 : i32
    %c0_i32_1 = arith.constant 0 : i32
    %c0_i32_2 = arith.constant 0 : i32
    return %c0_i32, %c0_i32_0, %c0_i32_1 : i32, i32, i32
  }
  func.func @transform_12(%arg0: i32) -> (i32, i32, i32) {
    %c0_i32 = arith.constant 0 : i32
    %c0_i32_0 = arith.constant 0 : i32
    %c0_i32_1 = arith.constant 0 : i32
    %c0_i32_2 = arith.constant 0 : i32
    return %c0_i32, %c0_i32_0, %c0_i32_1 : i32, i32, i32
  }
  func.func @transform_13(%arg0: i32) -> (i32, i32, i32) {
    %c0_i32 = arith.constant 0 : i32
    %c0_i32_0 = arith.constant 0 : i32
    %c0_i32_1 = arith.constant 0 : i32
    %c0_i32_2 = arith.constant 0 : i32
    return %c0_i32, %c0_i32_0, %c0_i32_1 : i32, i32, i32
  }
  func.func @transform_14(%arg0: i32) -> (i32, i32, i32) {
    %c0_i32 = arith.constant 0 : i32
    %c0_i32_0 = arith.constant 0 : i32
    %c0_i32_1 = arith.constant 0 : i32
    %c0_i32_2 = arith.constant 0 : i32
    return %c0_i32, %c0_i32_0, %c0_i32_1 : i32, i32, i32
  }
  func.func @transform_15(%arg0: i32) -> (i32, i32, i32) {
    %c0_i32 = arith.constant 0 : i32
    %c0_i32_0 = arith.constant 0 : i32
    %c0_i32_1 = arith.constant 0 : i32
    %c0_i32_2 = arith.constant 0 : i32
    return %c0_i32, %c0_i32_0, %c0_i32_1 : i32, i32, i32
  }
  func.func @transform_16(%arg0: i32) -> (i32, i32, i32) {
    %c0_i32 = arith.constant 0 : i32
    %c0_i32_0 = arith.constant 0 : i32
    %c0_i32_1 = arith.constant 0 : i32
    %c0_i32_2 = arith.constant 0 : i32
    return %c0_i32, %c0_i32_0, %c0_i32_1 : i32, i32, i32
  }
  func.func @transform_17(%arg0: i32) -> (i32, i32, i32) {
    %c0_i32 = arith.constant 0 : i32
    %c0_i32_0 = arith.constant 0 : i32
    %c0_i32_1 = arith.constant 0 : i32
    %c0_i32_2 = arith.constant 0 : i32
    return %c0_i32, %c0_i32_0, %c0_i32_1 : i32, i32, i32
  }
  func.func @transform_18(%arg0: i32) -> (i32, i32, i32) {
    %c0_i32 = arith.constant 0 : i32
    %c0_i32_0 = arith.constant 0 : i32
    %c0_i32_1 = arith.constant 0 : i32
    %c0_i32_2 = arith.constant 0 : i32
    return %c0_i32, %c0_i32_0, %c0_i32_1 : i32, i32, i32
  }
  func.func @transform_19(%arg0: i32) -> (i32, i32, i32) {
    %c0_i32 = arith.constant 0 : i32
    %c0_i32_0 = arith.constant 0 : i32
    %c0_i32_1 = arith.constant 0 : i32
    %c0_i32_2 = arith.constant 0 : i32
    return %c0_i32, %c0_i32_0, %c0_i32_1 : i32, i32, i32
  }
  func.func @transform_20(%arg0: i32) -> (i32, i32) {
    %c0_i32 = arith.constant 0 : i32
    %c0_i32_0 = arith.constant 0 : i32
    %c0_i32_1 = arith.constant 0 : i32
    return %c0_i32, %c0_i32_0 : i32, i32
  }
  func.func @transform_21(%arg0: i32) -> (i32, i32) {
    %c0_i32 = arith.constant 0 : i32
    %c0_i32_0 = arith.constant 0 : i32
    %c0_i32_1 = arith.constant 0 : i32
    return %c0_i32, %c0_i32_0 : i32, i32
  }
  func.func @transform_22(%arg0: i32) -> (i32, i32) {
    %c0_i32 = arith.constant 0 : i32
    %c0_i32_0 = arith.constant 0 : i32
    %c0_i32_1 = arith.constant 0 : i32
    return %c0_i32, %c0_i32_0 : i32, i32
  }
  func.func @transform_23(%arg0: i32) -> (i32, i32) {
    %c0_i32 = arith.constant 0 : i32
    %c0_i32_0 = arith.constant 0 : i32
    %c0_i32_1 = arith.constant 0 : i32
    return %c0_i32, %c0_i32_0 : i32, i32
  }
  func.func @transform_24(%arg0: i32) -> (i32, i32) {
    %c0_i32 = arith.constant 0 : i32
    %c0_i32_0 = arith.constant 0 : i32
    %c0_i32_1 = arith.constant 0 : i32
    return %c0_i32, %c0_i32_0 : i32, i32
  }
  func.func @transform_25(%arg0: i32) -> (i32, i32) {
    %c0_i32 = arith.constant 0 : i32
    %c0_i32_0 = arith.constant 0 : i32
    %c0_i32_1 = arith.constant 0 : i32
    return %c0_i32, %c0_i32_0 : i32, i32
  }
  func.func @transform_26(%arg0: i32) -> (i32, i32, i32) {
    %c0_i32 = arith.constant 0 : i32
    %c0_i32_0 = arith.constant 0 : i32
    %c0_i32_1 = arith.constant 0 : i32
    return %arg0, %c0_i32, %c0_i32_0 : i32, i32, i32
  }
}

</mosaic_0001>

<llo_original>
// kernel: forward.1
$region0: #{forward.1}
  #allocation0 [shape = 'u32[]', space=smem, size = 0x4, offset = 0x4, fixed_abs, tag = 'smem constant byte address 0x4 - core index']
  #allocation1 [shape = 'u32[144,128]{1,0:T(1,128)}', space=vmem, size = 0x12000, scoped, tag = 'internal scratch']
  %s0 = inlined_call_operand.vmem [shape: f32[32,19], index: 0, kind: input, shape index: {}]
  %s1 = inlined_call_operand.vmem [shape: f32[32,19], index: 1, kind: input, shape index: {}]
  %s2 = inlined_call_operand.vmem [shape: f32[32,7], index: 2, kind: input, shape index: {}]
  %s3 = inlined_call_operand.vmem [shape: f32[4,6], index: 3, kind: input, shape index: {}]
  %s4 = inlined_call_operand.vmem [shape: bf16[19,32], index: 4, kind: input, shape index: {}]
  %s5 = inlined_call_operand.vmem [shape: f32[1,32], index: 5, kind: input, shape index: {}]
  %s6 = inlined_call_operand.vmem [shape: f32[8,32], index: 6, kind: input, shape index: {}]
  %s7 = inlined_call_operand.vmem [shape: f32[8,8], index: 7, kind: input, shape index: {}]
  %s8 = inlined_call_operand.vmem [shape: bf16[2,32,96], index: 8, kind: input, shape index: {}]
  %s9 = inlined_call_operand.vmem [shape: f32[2,1,96], index: 9, kind: input, shape index: {}]
  %s10 = inlined_call_operand.vmem [shape: bf16[2,32,32], index: 10, kind: input, shape index: {}]
  %s11 = inlined_call_operand.vmem [shape: f32[2,1,32], index: 11, kind: input, shape index: {}]
  %s12 = inlined_call_operand.vmem [shape: bf16[2,32,128], index: 12, kind: input, shape index: {}]
  %s13 = inlined_call_operand.vmem [shape: f32[2,1,128], index: 13, kind: input, shape index: {}]
  %s14 = inlined_call_operand.vmem [shape: bf16[2,128,32], index: 14, kind: input, shape index: {}]
  %s15 = inlined_call_operand.vmem [shape: f32[2,1,32], index: 15, kind: input, shape index: {}]
  %s16 = inlined_call_operand.vmem [shape: f32[2,1,32], index: 16, kind: input, shape index: {}, may-alias: {16,18}]
  %s17 = inlined_call_operand.vmem [shape: f32[2,1,32], index: 17, kind: input, shape index: {}, may-alias: {17,19}]
  %s18 = inlined_call_operand.vmem [shape: f32[2,1,32], index: 18, kind: input, shape index: {}, may-alias: {16,18}]
  %s19 = inlined_call_operand.vmem [shape: f32[2,1,32], index: 19, kind: input, shape index: {}, may-alias: {17,19}]
  %s20 = inlined_call_operand.vmem [shape: bf16[51,128], index: 20, kind: input, shape index: {}]
  %s21 = inlined_call_operand.vmem [shape: f32[1,128], index: 21, kind: input, shape index: {}]
  %s22 = inlined_call_operand.vmem [shape: bf16[6,256], index: 22, kind: input, shape index: {}]
  %s23 = inlined_call_operand.vmem [shape: f32[1,256], index: 23, kind: input, shape index: {}]
  %s24 = inlined_call_operand.vmem [shape: bf16[256,6], index: 24, kind: input, shape index: {}]
  %s25 = inlined_call_operand.vmem [shape: f32[1,6], index: 25, kind: input, shape index: {}]
  %s26 = inlined_call_operand.vmem [shape: f32[2,1,128], index: 26, kind: output, shape index: {}]
  %s27 = sld [smem:[#allocation0]]
  $region137: #{forward.1} parent=0
    _
  %s29 = ssub.s32 1, %s27
  %s30 = scalar_select 0, %s29, %s27
  loop: start=0, step=1, limit=4
  $region2: #{forward.1} parent=0 // loop_pre_header
    _
  $region3: #{forward.1} parent=0 // loop_header
    %s32 = sphi 0, %s36
    %p33 = scmp.ge.s32.totalorder %s32, 4
    %s42 = sphi 0, %s44
    %s45 = sphi 0, %s42
    %s46 = sphi 0, %s45
    %s62 = sphi 0, %s46
    %s68 = sphi 0, %s70
    %s71 = sphi 0, %s68
    %s72 = sphi 0, %s71
    %s88 = sphi 0, %s72
    %s94 = sphi 0, %s96
    %s97 = sphi 0, %s94
    %s98 = sphi 0, %s97
    %s114 = sphi 0, %s98
    %s118 = sphi 0, %s118
    %s120 = sphi 0, %s118
    %s121 = sphi 0, %s120
    %s135 = sphi 0, %s121
    %s139 = sphi 0, %s139
    %s141 = sphi 0, %s139
    %s142 = sphi 0, %s141
    %s156 = sphi 0, %s142
    %s160 = sphi 0, %s160
    %s162 = sphi 0, %s160
    %s163 = sphi 0, %s162
    %s177 = sphi 0, %s163
    %s181 = sphi 0, %s181
    %s183 = sphi 0, %s181
    %s184 = sphi 0, %s183
    %s198 = sphi 0, %s184
    %s202 = sphi 0, %s202
    %s204 = sphi 0, %s202
    %s205 = sphi 0, %s204
    %s219 = sphi 0, %s205
    %s223 = sphi 0, %s223
    %s225 = sphi 0, %s223
    %s226 = sphi 0, %s225
    %s240 = sphi 0, %s226
    %s244 = sphi 0, %s244
    %s246 = sphi 0, %s244
    %s247 = sphi 0, %s246
    %s261 = sphi 0, %s247
    %s265 = sphi 0, %s265
    %s267 = sphi 0, %s265
    %s268 = sphi 0, %s267
    %s282 = sphi 0, %s268
    %s286 = sphi 0, %s286
    %s288 = sphi 0, %s286
    %s289 = sphi 0, %s288
    %s303 = sphi 0, %s289
    %s307 = sphi 0, %s307
    %s309 = sphi 0, %s307
    %s310 = sphi 0, %s309
    %s324 = sphi 0, %s310
    %s328 = sphi 0, %s328
    %s330 = sphi 0, %s328
    %s331 = sphi 0, %s330
    %s345 = sphi 0, %s331
    %s349 = sphi 0, %s349
    %s351 = sphi 0, %s349
    %s352 = sphi 0, %s351
    %s366 = sphi 0, %s352
    %s370 = sphi 0, %s370
    %s372 = sphi 0, %s370
    %s373 = sphi 0, %s372
    %s387 = sphi 0, %s373
    %s391 = sphi 0, %s391
    %s393 = sphi 0, %s391
    %s394 = sphi 0, %s393
    %s408 = sphi 0, %s394
    %s412 = sphi 0, %s412
    %s414 = sphi 0, %s412
    %s415 = sphi 0, %s414
    %s429 = sphi 0, %s415
    %s433 = sphi 0, %s433
    %s435 = sphi 0, %s433
    %s436 = sphi 0, %s435
    %s450 = sphi 0, %s436
    %s454 = sphi 0, %s454
    %s456 = sphi 0, %s454
    %s457 = sphi 0, %s456
    %s471 = sphi 0, %s457
    %s475 = sphi 0, %s475
    %s477 = sphi 0, %s475
    %s478 = sphi 0, %s477
    %s492 = sphi 0, %s478
    %s496 = sphi 0, %s496
    %s498 = sphi 0, %s496
    %s499 = sphi 0, %s498
    %s513 = sphi 0, %s499
    %s517 = sphi 0, %s517
    %s519 = sphi 0, %s517
    %s520 = sphi 0, %s519
    %s534 = sphi 0, %s520
    %s538 = sphi 0, %s538
    %s540 = sphi 0, %s538
    %s541 = sphi 0, %s540
    %s555 = sphi 0, %s541
    %s559 = sphi 0, %s559
    %s561 = sphi 0, %s559
    %s562 = sphi 0, %s561
    %s576 = sphi 0, %s562
    %s580 = sphi 0, %s580
    %s582 = sphi 0, %s580
    %s583 = sphi 0, %s582
    %s597 = sphi 0, %s583
    %s603 = sphi 0, %s605
    %s606 = sphi 0, %s603
    %s607 = sphi 0, %s606
    %s623 = sphi 0, %s607
  $region4: #{forward.1} parent=0 // loop_header_branch
    %35 = sbr.rel (%p33) target = $region8
  $region5: #{forward.1} parent=0 // loop_body
    %s37 = ssub.s32 %s32, 1
    %s38 = ssub.s32 %s32, 2
    %s39 = sadd.s32 %s32, 1
    %s40 = ssub.s32 %s32, %s39
    %p41 = scmp.eq.s32.totalorder %s40, 0
    %s43 = sadd.s32 %s42, 1
    %s44 = scalar_select %p41, %s42, %s43
    %p47 = pneg %p41
    %p48 = scmp.eq.s32.totalorder %s32, 1
    %p49 = por %p47, %p48
    %p50 = scmp.ne.s32.totalorder %s42, %s45
    %p51 = scmp.eq.s32.totalorder %s32, 0
    %p52 = por %p50, %p51
    %p53 = scmp.ne.s32.totalorder %s42, %s45
    %p54 = scmp.eq.s32.totalorder %s37, 1
    %p55 = por %p53, %p54
    %p56 = scmp.ne.s32.totalorder %s45, %s46
    %p57 = scmp.eq.s32.totalorder %s37, 0
    %p58 = por %p56, %p57
    %p59 = scmp.ne.s32.totalorder %s45, %s46
    %p60 = scmp.eq.s32.totalorder %s38, 1
    %p61 = por %p59, %p60
    %p63 = scmp.ne.s32.totalorder %s46, %s62
    %p64 = scmp.eq.s32.totalorder %s38, 0
    %p65 = por %p63, %p64
    %s66 = ssub.s32 %s32, %s39
    %p67 = scmp.eq.s32.totalorder %s66, 0
    %s69 = sadd.s32 %s68, 1
    %s70 = scalar_select %p67, %s68, %s69
    %p73 = pneg %p67
    %p74 = scmp.eq.s32.totalorder %s32, 1
    %p75 = por %p73, %p74
    %p76 = scmp.ne.s32.totalorder %s68, %s71
    %p77 = scmp.eq.s32.totalorder %s32, 0
    %p78 = por %p76, %p77
    %p79 = scmp.ne.s32.totalorder %s68, %s71
    %p80 = scmp.eq.s32.totalorder %s37, 1
    %p81 = por %p79, %p80
    %p82 = scmp.ne.s32.totalorder %s71, %s72
    %p83 = scmp.eq.s32.totalorder %s37, 0
    %p84 = por %p82, %p83
    %p85 = scmp.ne.s32.totalorder %s71, %s72
    %p86 = scmp.eq.s32.totalorder %s38, 1
    %p87 = por %p85, %p86
    %p89 = scmp.ne.s32.totalorder %s72, %s88
    %p90 = scmp.eq.s32.totalorder %s38, 0
    %p91 = por %p89, %p90
    %s92 = ssub.s32 %s32, %s39
    %p93 = scmp.eq.s32.totalorder %s92, 0
    %s95 = sadd.s32 %s94, 1
    %s96 = scalar_select %p93, %s94, %s95
    %p99 = pneg %p93
    %p100 = scmp.eq.s32.totalorder %s32, 1
    %p101 = por %p99, %p100
    %p102 = scmp.ne.s32.totalorder %s94, %s97
    %p103 = scmp.eq.s32.totalorder %s32, 0
    %p104 = por %p102, %p103
    %p105 = scmp.ne.s32.totalorder %s94, %s97
    %p106 = scmp.eq.s32.totalorder %s37, 1
    %p107 = por %p105, %p106
    %p108 = scmp.ne.s32.totalorder %s97, %s98
    %p109 = scmp.eq.s32.totalorder %s37, 0
    %p110 = por %p108, %p109
    %p111 = scmp.ne.s32.totalorder %s97, %s98
    %p112 = scmp.eq.s32.totalorder %s38, 1
    %p113 = por %p111, %p112
    %p115 = scmp.ne.s32.totalorder %s98, %s114
    %p116 = scmp.eq.s32.totalorder %s38, 0
    %p117 = por %p115, %p116
    %s119 = sadd.s32 %s118, 1
    %p122 = scmp.eq.s32.totalorder %s32, 1
    %p123 = scmp.ne.s32.totalorder %s118, %s120
    %p124 = scmp.eq.s32.totalorder %s32, 0
    %p125 = por %p123, %p124
    %p126 = scmp.ne.s32.totalorder %s118, %s120
    %p127 = scmp.eq.s32.totalorder %s37, 1
    %p128 = por %p126, %p127
    %p129 = scmp.ne.s32.totalorder %s120, %s121
    %p130 = scmp.eq.s32.totalorder %s37, 0
    %p131 = por %p129, %p130
    %p132 = scmp.ne.s32.totalorder %s120, %s121
    %p133 = scmp.eq.s32.totalorder %s38, 1
    %p134 = por %p132, %p133
    %p136 = scmp.ne.s32.totalorder %s121, %s135
    %p137 = scmp.eq.s32.totalorder %s38, 0
    %p138 = por %p136, %p137
    %s140 = sadd.s32 %s139, 1
    %p143 = scmp.eq.s32.totalorder %s32, 1
    %p144 = scmp.ne.s32.totalorder %s139, %s141
    %p145 = scmp.eq.s32.totalorder %s32, 0
    %p146 = por %p144, %p145
    %p147 = scmp.ne.s32.totalorder %s139, %s141
    %p148 = scmp.eq.s32.totalorder %s37, 1
    %p149 = por %p147, %p148
    %p150 = scmp.ne.s32.totalorder %s141, %s142
    %p151 = scmp.eq.s32.totalorder %s37, 0
    %p152 = por %p150, %p151
    %p153 = scmp.ne.s32.totalorder %s141, %s142
    %p154 = scmp.eq.s32.totalorder %s38, 1
    %p155 = por %p153, %p154
    %p157 = scmp.ne.s32.totalorder %s142, %s156
    %p158 = scmp.eq.s32.totalorder %s38, 0
    %p159 = por %p157, %p158
    %s161 = sadd.s32 %s160, 1
    %p164 = scmp.eq.s32.totalorder %s32, 1
    %p165 = scmp.ne.s32.totalorder %s160, %s162
    %p166 = scmp.eq.s32.totalorder %s32, 0
    %p167 = por %p165, %p166
    %p168 = scmp.ne.s32.totalorder %s160, %s162
    %p169 = scmp.eq.s32.totalorder %s37, 1
    %p170 = por %p168, %p169
    %p171 = scmp.ne.s32.totalorder %s162, %s163
    %p172 = scmp.eq.s32.totalorder %s37, 0
    %p173 = por %p171, %p172
    %p174 = scmp.ne.s32.totalorder %s162, %s163
    %p175 = scmp.eq.s32.totalorder %s38, 1
    %p176 = por %p174, %p175
    %p178 = scmp.ne.s32.totalorder %s163, %s177
    %p179 = scmp.eq.s32.totalorder %s38, 0
    %p180 = por %p178, %p179
    %s182 = sadd.s32 %s181, 1
    %p185 = scmp.eq.s32.totalorder %s32, 1
    %p186 = scmp.ne.s32.totalorder %s181, %s183
    %p187 = scmp.eq.s32.totalorder %s32, 0
    %p188 = por %p186, %p187
    %p189 = scmp.ne.s32.totalorder %s181, %s183
    %p190 = scmp.eq.s32.totalorder %s37, 1
    %p191 = por %p189, %p190
    %p192 = scmp.ne.s32.totalorder %s183, %s184
    %p193 = scmp.eq.s32.totalorder %s37, 0
    %p194 = por %p192, %p193
    %p195 = scmp.ne.s32.totalorder %s183, %s184
    %p196 = scmp.eq.s32.totalorder %s38, 1
    %p197 = por %p195, %p196
    %p199 = scmp.ne.s32.totalorder %s184, %s198
    %p200 = scmp.eq.s32.totalorder %s38, 0
    %p201 = por %p199, %p200
    %s203 = sadd.s32 %s202, 1
    %p206 = scmp.eq.s32.totalorder %s32, 1
    %p207 = scmp.ne.s32.totalorder %s202, %s204
    %p208 = scmp.eq.s32.totalorder %s32, 0
    %p209 = por %p207, %p208
    %p210 = scmp.ne.s32.totalorder %s202, %s204
    %p211 = scmp.eq.s32.totalorder %s37, 1
    %p212 = por %p210, %p211
    %p213 = scmp.ne.s32.totalorder %s204, %s205
    %p214 = scmp.eq.s32.totalorder %s37, 0
    %p215 = por %p213, %p214
    %p216 = scmp.ne.s32.totalorder %s204, %s205
    %p217 = scmp.eq.s32.totalorder %s38, 1
    %p218 = por %p216, %p217
    %p220 = scmp.ne.s32.totalorder %s205, %s219
    %p221 = scmp.eq.s32.totalorder %s38, 0
    %p222 = por %p220, %p221
    %s224 = sadd.s32 %s223, 1
    %p227 = scmp.eq.s32.totalorder %s32, 1
    %p228 = scmp.ne.s32.totalorder %s223, %s225
    %p229 = scmp.eq.s32.totalorder %s32, 0
    %p230 = por %p228, %p229
    %p231 = scmp.ne.s32.totalorder %s223, %s225
    %p232 = scmp.eq.s32.totalorder %s37, 1
    %p233 = por %p231, %p232
    %p234 = scmp.ne.s32.totalorder %s225, %s226
    %p235 = scmp.eq.s32.totalorder %s37, 0
    %p236 = por %p234, %p235
    %p237 = scmp.ne.s32.totalorder %s225, %s226
    %p238 = scmp.eq.s32.totalorder %s38, 1
    %p239 = por %p237, %p238
    %p241 = scmp.ne.s32.totalorder %s226, %s240
    %p242 = scmp.eq.s32.totalorder %s38, 0
    %p243 = por %p241, %p242
    %s245 = sadd.s32 %s244, 1
    %p248 = scmp.eq.s32.totalorder %s32, 1
    %p249 = scmp.ne.s32.totalorder %s244, %s246
    %p250 = scmp.eq.s32.totalorder %s32, 0
    %p251 = por %p249, %p250
    %p252 = scmp.ne.s32.totalorder %s244, %s246
    %p253 = scmp.eq.s32.totalorder %s37, 1
    %p254 = por %p252, %p253
    %p255 = scmp.ne.s32.totalorder %s246, %s247
    %p256 = scmp.eq.s32.totalorder %s37, 0
    %p257 = por %p255, %p256
    %p258 = scmp.ne.s32.totalorder %s246, %s247
    %p259 = scmp.eq.s32.totalorder %s38, 1
    %p260 = por %p258, %p259
    %p262 = scmp.ne.s32.totalorder %s247, %s261
    %p263 = scmp.eq.s32.totalorder %s38, 0
    %p264 = por %p262, %p263
    %s266 = sadd.s32 %s265, 1
    %p269 = scmp.eq.s32.totalorder %s32, 1
    %p270 = scmp.ne.s32.totalorder %s265, %s267
    %p271 = scmp.eq.s32.totalorder %s32, 0
    %p272 = por %p270, %p271
    %p273 = scmp.ne.s32.totalorder %s265, %s267
    %p274 = scmp.eq.s32.totalorder %s37, 1
    %p275 = por %p273, %p274
    %p276 = scmp.ne.s32.totalorder %s267, %s268
    %p277 = scmp.eq.s32.totalorder %s37, 0
    %p278 = por %p276, %p277
    %p279 = scmp.ne.s32.totalorder %s267, %s268
    %p280 = scmp.eq.s32.totalorder %s38, 1
    %p281 = por %p279, %p280
    %p283 = scmp.ne.s32.totalorder %s268, %s282
    %p284 = scmp.eq.s32.totalorder %s38, 0
    %p285 = por %p283, %p284
    %s287 = sadd.s32 %s286, 1
    %p290 = scmp.eq.s32.totalorder %s32, 1
    %p291 = scmp.ne.s32.totalorder %s286, %s288
    %p292 = scmp.eq.s32.totalorder %s32, 0
    %p293 = por %p291, %p292
    %p294 = scmp.ne.s32.totalorder %s286, %s288
    %p295 = scmp.eq.s32.totalorder %s37, 1
    %p296 = por %p294, %p295
    %p297 = scmp.ne.s32.totalorder %s288, %s289
    %p298 = scmp.eq.s32.totalorder %s37, 0
    %p299 = por %p297, %p298
    %p300 = scmp.ne.s32.totalorder %s288, %s289
    %p301 = scmp.eq.s32.totalorder %s38, 1
    %p302 = por %p300, %p301
    %p304 = scmp.ne.s32.totalorder %s289, %s303
    %p305 = scmp.eq.s32.totalorder %s38, 0
    %p306 = por %p304, %p305
    %s308 = sadd.s32 %s307, 1
    %p311 = scmp.eq.s32.totalorder %s32, 1
    %p312 = scmp.ne.s32.totalorder %s307, %s309
    %p313 = scmp.eq.s32.totalorder %s32, 0
    %p314 = por %p312, %p313
    %p315 = scmp.ne.s32.totalorder %s307, %s309
    %p316 = scmp.eq.s32.totalorder %s37, 1
    %p317 = por %p315, %p316
    %p318 = scmp.ne.s32.totalorder %s309, %s310
    %p319 = scmp.eq.s32.totalorder %s37, 0
    %p320 = por %p318, %p319
    %p321 = scmp.ne.s32.totalorder %s309, %s310
    %p322 = scmp.eq.s32.totalorder %s38, 1
    %p323 = por %p321, %p322
    %p325 = scmp.ne.s32.totalorder %s310, %s324
    %p326 = scmp.eq.s32.totalorder %s38, 0
    %p327 = por %p325, %p326
    %s329 = sadd.s32 %s328, 1
    %p332 = scmp.eq.s32.totalorder %s32, 1
    %p333 = scmp.ne.s32.totalorder %s328, %s330
    %p334 = scmp.eq.s32.totalorder %s32, 0
    %p335 = por %p333, %p334
    %p336 = scmp.ne.s32.totalorder %s328, %s330
    %p337 = scmp.eq.s32.totalorder %s37, 1
    %p338 = por %p336, %p337
    %p339 = scmp.ne.s32.totalorder %s330, %s331
    %p340 = scmp.eq.s32.totalorder %s37, 0
    %p341 = por %p339, %p340
    %p342 = scmp.ne.s32.totalorder %s330, %s331
    %p343 = scmp.eq.s32.totalorder %s38, 1
    %p344 = por %p342, %p343
    %p346 = scmp.ne.s32.totalorder %s331, %s345
    %p347 = scmp.eq.s32.totalorder %s38, 0
    %p348 = por %p346, %p347
    %s350 = sadd.s32 %s349, 1
    %p353 = scmp.eq.s32.totalorder %s32, 1
    %p354 = scmp.ne.s32.totalorder %s349, %s351
    %p355 = scmp.eq.s32.totalorder %s32, 0
    %p356 = por %p354, %p355
    %p357 = scmp.ne.s32.totalorder %s349, %s351
    %p358 = scmp.eq.s32.totalorder %s37, 1
    %p359 = por %p357, %p358
    %p360 = scmp.ne.s32.totalorder %s351, %s352
    %p361 = scmp.eq.s32.totalorder %s37, 0
    %p362 = por %p360, %p361
    %p363 = scmp.ne.s32.totalorder %s351, %s352
    %p364 = scmp.eq.s32.totalorder %s38, 1
    %p365 = por %p363, %p364
    %p367 = scmp.ne.s32.totalorder %s352, %s366
    %p368 = scmp.eq.s32.totalorder %s38, 0
    %p369 = por %p367, %p368
    %s371 = sadd.s32 %s370, 1
    %p374 = scmp.eq.s32.totalorder %s32, 1
    %p375 = scmp.ne.s32.totalorder %s370, %s372
    %p376 = scmp.eq.s32.totalorder %s32, 0
    %p377 = por %p375, %p376
    %p378 = scmp.ne.s32.totalorder %s370, %s372
    %p379 = scmp.eq.s32.totalorder %s37, 1
    %p380 = por %p378, %p379
    %p381 = scmp.ne.s32.totalorder %s372, %s373
    %p382 = scmp.eq.s32.totalorder %s37, 0
    %p383 = por %p381, %p382
    %p384 = scmp.ne.s32.totalorder %s372, %s373
    %p385 = scmp.eq.s32.totalorder %s38, 1
    %p386 = por %p384, %p385
    %p388 = scmp.ne.s32.totalorder %s373, %s387
    %p389 = scmp.eq.s32.totalorder %s38, 0
    %p390 = por %p388, %p389
    %s392 = sadd.s32 %s391, 1
    %p395 = scmp.eq.s32.totalorder %s32, 1
    %p396 = scmp.ne.s32.totalorder %s391, %s393
    %p397 = scmp.eq.s32.totalorder %s32, 0
    %p398 = por %p396, %p397
    %p399 = scmp.ne.s32.totalorder %s391, %s393
    %p400 = scmp.eq.s32.totalorder %s37, 1
    %p401 = por %p399, %p400
    %p402 = scmp.ne.s32.totalorder %s393, %s394
    %p403 = scmp.eq.s32.totalorder %s37, 0
    %p404 = por %p402, %p403
    %p405 = scmp.ne.s32.totalorder %s393, %s394
    %p406 = scmp.eq.s32.totalorder %s38, 1
    %p407 = por %p405, %p406
    %p409 = scmp.ne.s32.totalorder %s394, %s408
    %p410 = scmp.eq.s32.totalorder %s38, 0
    %p411 = por %p409, %p410
    %s413 = sadd.s32 %s412, 1
    %p416 = scmp.eq.s32.totalorder %s32, 1
    %p417 = scmp.ne.s32.totalorder %s412, %s414
    %p418 = scmp.eq.s32.totalorder %s32, 0
    %p419 = por %p417, %p418
    %p420 = scmp.ne.s32.totalorder %s412, %s414
    %p421 = scmp.eq.s32.totalorder %s37, 1
    %p422 = por %p420, %p421
    %p423 = scmp.ne.s32.totalorder %s414, %s415
    %p424 = scmp.eq.s32.totalorder %s37, 0
    %p425 = por %p423, %p424
    %p426 = scmp.ne.s32.totalorder %s414, %s415
    %p427 = scmp.eq.s32.totalorder %s38, 1
    %p428 = por %p426, %p427
    %p430 = scmp.ne.s32.totalorder %s415, %s429
    %p431 = scmp.eq.s32.totalorder %s38, 0
    %p432 = por %p430, %p431
    %s434 = sadd.s32 %s433, 1
    %p437 = scmp.eq.s32.totalorder %s32, 1
    %p438 = scmp.ne.s32.totalorder %s433, %s435
    %p439 = scmp.eq.s32.totalorder %s32, 0
    %p440 = por %p438, %p439
    %p441 = scmp.ne.s32.totalorder %s433, %s435
    %p442 = scmp.eq.s32.totalorder %s37, 1
    %p443 = por %p441, %p442
    %p444 = scmp.ne.s32.totalorder %s435, %s436
    %p445 = scmp.eq.s32.totalorder %s37, 0
    %p446 = por %p444, %p445
    %p447 = scmp.ne.s32.totalorder %s435, %s436
    %p448 = scmp.eq.s32.totalorder %s38, 1
    %p449 = por %p447, %p448
    %p451 = scmp.ne.s32.totalorder %s436, %s450
    %p452 = scmp.eq.s32.totalorder %s38, 0
    %p453 = por %p451, %p452
    %s455 = sadd.s32 %s454, 1
    %p458 = scmp.eq.s32.totalorder %s32, 1
    %p459 = scmp.ne.s32.totalorder %s454, %s456
    %p460 = scmp.eq.s32.totalorder %s32, 0
    %p461 = por %p459, %p460
    %p462 = scmp.ne.s32.totalorder %s454, %s456
    %p463 = scmp.eq.s32.totalorder %s37, 1
    %p464 = por %p462, %p463
    %p465 = scmp.ne.s32.totalorder %s456, %s457
    %p466 = scmp.eq.s32.totalorder %s37, 0
    %p467 = por %p465, %p466
    %p468 = scmp.ne.s32.totalorder %s456, %s457
    %p469 = scmp.eq.s32.totalorder %s38, 1
    %p470 = por %p468, %p469
    %p472 = scmp.ne.s32.totalorder %s457, %s471
    %p473 = scmp.eq.s32.totalorder %s38, 0
    %p474 = por %p472, %p473
    %s476 = sadd.s32 %s475, 1
    %p479 = scmp.eq.s32.totalorder %s32, 1
    %p480 = scmp.ne.s32.totalorder %s475, %s477
    %p481 = scmp.eq.s32.totalorder %s32, 0
    %p482 = por %p480, %p481
    %p483 = scmp.ne.s32.totalorder %s475, %s477
    %p484 = scmp.eq.s32.totalorder %s37, 1
    %p485 = por %p483, %p484
    %p486 = scmp.ne.s32.totalorder %s477, %s478
    %p487 = scmp.eq.s32.totalorder %s37, 0
    %p488 = por %p486, %p487
    %p489 = scmp.ne.s32.totalorder %s477, %s478
    %p490 = scmp.eq.s32.totalorder %s38, 1
    %p491 = por %p489, %p490
    %p493 = scmp.ne.s32.totalorder %s478, %s492
    %p494 = scmp.eq.s32.totalorder %s38, 0
    %p495 = por %p493, %p494
    %s497 = sadd.s32 %s496, 1
    %p500 = scmp.eq.s32.totalorder %s32, 1
    %p501 = scmp.ne.s32.totalorder %s496, %s498
    %p502 = scmp.eq.s32.totalorder %s32, 0
    %p503 = por %p501, %p502
    %p504 = scmp.ne.s32.totalorder %s496, %s498
    %p505 = scmp.eq.s32.totalorder %s37, 1
    %p506 = por %p504, %p505
    %p507 = scmp.ne.s32.totalorder %s498, %s499
    %p508 = scmp.eq.s32.totalorder %s37, 0
    %p509 = por %p507, %p508
    %p510 = scmp.ne.s32.totalorder %s498, %s499
    %p511 = scmp.eq.s32.totalorder %s38, 1
    %p512 = por %p510, %p511
    %p514 = scmp.ne.s32.totalorder %s499, %s513
    %p515 = scmp.eq.s32.totalorder %s38, 0
    %p516 = por %p514, %p515
    %s518 = sadd.s32 %s517, 1
    %p521 = scmp.eq.s32.totalorder %s32, 1
    %p522 = scmp.ne.s32.totalorder %s517, %s519
    %p523 = scmp.eq.s32.totalorder %s32, 0
    %p524 = por %p522, %p523
    %p525 = scmp.ne.s32.totalorder %s517, %s519
    %p526 = scmp.eq.s32.totalorder %s37, 1
    %p527 = por %p525, %p526
    %p528 = scmp.ne.s32.totalorder %s519, %s520
    %p529 = scmp.eq.s32.totalorder %s37, 0
    %p530 = por %p528, %p529
    %p531 = scmp.ne.s32.totalorder %s519, %s520
    %p532 = scmp.eq.s32.totalorder %s38, 1
    %p533 = por %p531, %p532
    %p535 = scmp.ne.s32.totalorder %s520, %s534
    %p536 = scmp.eq.s32.totalorder %s38, 0
    %p537 = por %p535, %p536
    %s539 = sadd.s32 %s538, 1
    %p542 = scmp.eq.s32.totalorder %s32, 1
    %p543 = scmp.ne.s32.totalorder %s538, %s540
    %p544 = scmp.eq.s32.totalorder %s32, 0
    %p545 = por %p543, %p544
    %p546 = scmp.ne.s32.totalorder %s538, %s540
    %p547 = scmp.eq.s32.totalorder %s37, 1
    %p548 = por %p546, %p547
    %p549 = scmp.ne.s32.totalorder %s540, %s541
    %p550 = scmp.eq.s32.totalorder %s37, 0
    %p551 = por %p549, %p550
    %p552 = scmp.ne.s32.totalorder %s540, %s541
    %p553 = scmp.eq.s32.totalorder %s38, 1
    %p554 = por %p552, %p553
    %p556 = scmp.ne.s32.totalorder %s541, %s555
    %p557 = scmp.eq.s32.totalorder %s38, 0
    %p558 = por %p556, %p557
    %s560 = sadd.s32 %s559, 1
    %p563 = scmp.eq.s32.totalorder %s32, 1
    %p564 = scmp.ne.s32.totalorder %s559, %s561
    %p565 = scmp.eq.s32.totalorder %s32, 0
    %p566 = por %p564, %p565
    %p567 = scmp.ne.s32.totalorder %s559, %s561
    %p568 = scmp.eq.s32.totalorder %s37, 1
    %p569 = por %p567, %p568
    %p570 = scmp.ne.s32.totalorder %s561, %s562
    %p571 = scmp.eq.s32.totalorder %s37, 0
    %p572 = por %p570, %p571
    %p573 = scmp.ne.s32.totalorder %s561, %s562
    %p574 = scmp.eq.s32.totalorder %s38, 1
    %p575 = por %p573, %p574
    %p577 = scmp.ne.s32.totalorder %s562, %s576
    %p578 = scmp.eq.s32.totalorder %s38, 0
    %p579 = por %p577, %p578
    %s581 = sadd.s32 %s580, 1
    %p584 = scmp.eq.s32.totalorder %s32, 1
    %p585 = scmp.ne.s32.totalorder %s580, %s582
    %p586 = scmp.eq.s32.totalorder %s32, 0
    %p587 = por %p585, %p586
    %p588 = scmp.ne.s32.totalorder %s580, %s582
    %p589 = scmp.eq.s32.totalorder %s37, 1
    %p590 = por %p588, %p589
    %p591 = scmp.ne.s32.totalorder %s582, %s583
    %p592 = scmp.eq.s32.totalorder %s37, 0
    %p593 = por %p591, %p592
    %p594 = scmp.ne.s32.totalorder %s582, %s583
    %p595 = scmp.eq.s32.totalorder %s38, 1
    %p596 = por %p594, %p595
    %p598 = scmp.ne.s32.totalorder %s583, %s597
    %p599 = scmp.eq.s32.totalorder %s38, 0
    %p600 = por %p598, %p599
    %s601 = ssub.s32 %s32, %s39
    %p602 = scmp.eq.s32.totalorder %s601, 0
    %s604 = sadd.s32 %s603, 1
    %s605 = scalar_select %p602, %s603, %s604
    %p608 = pneg %p602
    %p609 = scmp.eq.s32.totalorder %s32, 1
    %p610 = por %p608, %p609
    %p611 = scmp.ne.s32.totalorder %s603, %s606
    %p612 = scmp.eq.s32.totalorder %s32, 0
    %p613 = por %p611, %p612
    %p614 = scmp.ne.s32.totalorder %s603, %s606
    %p615 = scmp.eq.s32.totalorder %s37, 1
    %p616 = por %p614, %p615
    %p617 = scmp.ne.s32.totalorder %s606, %s607
    %p618 = scmp.eq.s32.totalorder %s37, 0
    %p619 = por %p617, %p618
    %p620 = scmp.ne.s32.totalorder %s606, %s607
    %p621 = scmp.eq.s32.totalorder %s38, 1
    %p622 = por %p620, %p621
    %p624 = scmp.ne.s32.totalorder %s607, %s623
    %p625 = scmp.eq.s32.totalorder %s38, 0
    %p626 = por %p624, %p625
    %p627 = scmp.le.s32.totalorder 1, %s32
    %p628 = scmp.lt.s32.totalorder %s32, 3
    %p629 = pnand %p627, %p628
    %p630 = pneg %p629
    // Predicated region
    $region9: #{forward.1} parent=5 // pred_check
      _
    $region10: #{forward.1} parent=5 // pred_check_branch
      %632 = sbr.rel (%p629) target = $region12
    $region11: #{forward.1} parent=5 // pred_region
      %s633 = ssub.s32 %s32, 1
      // Predicated region
      $region13: #{forward.1} parent=11 // pred_check
        %p634 = pneg %p131
      $region14: #{forward.1} parent=11 // pred_check_branch
        %636 = sbr.rel (%p634) target = $region16
      $region15: #{forward.1} parent=11 // pred_region
        _
      $region16: #{forward.1} parent=11 // pred_fallthru
        _
      // Predicated region
      $region17: #{forward.1} parent=11 // pred_check
        %p637 = pneg %p152
      $region18: #{forward.1} parent=11 // pred_check_branch
        %639 = sbr.rel (%p637) target = $region20
      $region19: #{forward.1} parent=11 // pred_region
        _
      $region20: #{forward.1} parent=11 // pred_fallthru
        _
      // Predicated region
      $region21: #{forward.1} parent=11 // pred_check
        %p640 = pneg %p173
      $region22: #{forward.1} parent=11 // pred_check_branch
        %642 = sbr.rel (%p640) target = $region24
      $region23: #{forward.1} parent=11 // pred_region
        _
      $region24: #{forward.1} parent=11 // pred_fallthru
        _
      // Predicated region
      $region25: #{forward.1} parent=11 // pred_check
        %p643 = pneg %p194
      $region26: #{forward.1} parent=11 // pred_check_branch
        %645 = sbr.rel (%p643) target = $region28
      $region27: #{forward.1} parent=11 // pred_region
        _
      $region28: #{forward.1} parent=11 // pred_fallthru
        _
      // Predicated region
      $region29: #{forward.1} parent=11 // pred_check
        %p646 = pneg %p215
      $region30: #{forward.1} parent=11 // pred_check_branch
        %648 = sbr.rel (%p646) target = $region32
      $region31: #{forward.1} parent=11 // pred_region
        _
      $region32: #{forward.1} parent=11 // pred_fallthru
        _
      // Predicated region
      $region33: #{forward.1} parent=11 // pred_check
        %p649 = pneg %p236
      $region34: #{forward.1} parent=11 // pred_check_branch
        %651 = sbr.rel (%p649) target = $region36
      $region35: #{forward.1} parent=11 // pred_region
        _
      $region36: #{forward.1} parent=11 // pred_fallthru
        _
      // Predicated region
      $region37: #{forward.1} parent=11 // pred_check
        %p652 = pneg %p257
      $region38: #{forward.1} parent=11 // pred_check_branch
        %654 = sbr.rel (%p652) target = $region40
      $region39: #{forward.1} parent=11 // pred_region
        _
      $region40: #{forward.1} parent=11 // pred_fallthru
        _
      // Predicated region
      $region41: #{forward.1} parent=11 // pred_check
        %p655 = pneg %p278
      $region42: #{forward.1} parent=11 // pred_check_branch
        %657 = sbr.rel (%p655) target = $region44
      $region43: #{forward.1} parent=11 // pred_region
        _
      $region44: #{forward.1} parent=11 // pred_fallthru
        _
      // Predicated region
      $region45: #{forward.1} parent=11 // pred_check
        %p658 = pneg %p299
      $region46: #{forward.1} parent=11 // pred_check_branch
        %660 = sbr.rel (%p658) target = $region48
      $region47: #{forward.1} parent=11 // pred_region
        _
      $region48: #{forward.1} parent=11 // pred_fallthru
        _
      // Predicated region
      $region49: #{forward.1} parent=11 // pred_check
        %p661 = pneg %p320
      $region50: #{forward.1} parent=11 // pred_check_branch
        %663 = sbr.rel (%p661) target = $region52
      $region51: #{forward.1} parent=11 // pred_region
        _
      $region52: #{forward.1} parent=11 // pred_fallthru
        _
      // Predicated region
      $region53: #{forward.1} parent=11 // pred_check
        %p664 = pneg %p341
      $region54: #{forward.1} parent=11 // pred_check_branch
        %666 = sbr.rel (%p664) target = $region56
      $region55: #{forward.1} parent=11 // pred_region
        _
      $region56: #{forward.1} parent=11 // pred_fallthru
        _
      // Predicated region
      $region57: #{forward.1} parent=11 // pred_check
        %p667 = pneg %p362
      $region58: #{forward.1} parent=11 // pred_check_branch
        %669 = sbr.rel (%p667) target = $region60
      $region59: #{forward.1} parent=11 // pred_region
        _
      $region60: #{forward.1} parent=11 // pred_fallthru
        _
      // Predicated region
      $region61: #{forward.1} parent=11 // pred_check
        %p670 = pneg %p383
      $region62: #{forward.1} parent=11 // pred_check_branch
        %672 = sbr.rel (%p670) target = $region64
      $region63: #{forward.1} parent=11 // pred_region
        _
      $region64: #{forward.1} parent=11 // pred_fallthru
        _
      // Predicated region
      $region65: #{forward.1} parent=11 // pred_check
        %p673 = pneg %p404
      $region66: #{forward.1} parent=11 // pred_check_branch
        %675 = sbr.rel (%p673) target = $region68
      $region67: #{forward.1} parent=11 // pred_region
        _
      $region68: #{forward.1} parent=11 // pred_fallthru
        _
      // Predicated region
      $region69: #{forward.1} parent=11 // pred_check
        %p676 = pneg %p425
      $region70: #{forward.1} parent=11 // pred_check_branch
        %678 = sbr.rel (%p676) target = $region72
      $region71: #{forward.1} parent=11 // pred_region
        _
      $region72: #{forward.1} parent=11 // pred_fallthru
        _
      // Predicated region
      $region73: #{forward.1} parent=11 // pred_check
        %p679 = pneg %p446
      $region74: #{forward.1} parent=11 // pred_check_branch
        %681 = sbr.rel (%p679) target = $region76
      $region75: #{forward.1} parent=11 // pred_region
        _
      $region76: #{forward.1} parent=11 // pred_fallthru
        _
      // Predicated region
      $region77: #{forward.1} parent=11 // pred_check
        %p682 = pneg %p467
      $region78: #{forward.1} parent=11 // pred_check_branch
        %684 = sbr.rel (%p682) target = $region80
      $region79: #{forward.1} parent=11 // pred_region
        _
      $region80: #{forward.1} parent=11 // pred_fallthru
        _
      // Predicated region
      $region81: #{forward.1} parent=11 // pred_check
        %p685 = pneg %p488
      $region82: #{forward.1} parent=11 // pred_check_branch
        %687 = sbr.rel (%p685) target = $region84
      $region83: #{forward.1} parent=11 // pred_region
        _
      $region84: #{forward.1} parent=11 // pred_fallthru
        _
      // Predicated region
      $region85: #{forward.1} parent=11 // pred_check
        %p688 = pneg %p509
      $region86: #{forward.1} parent=11 // pred_check_branch
        %690 = sbr.rel (%p688) target = $region88
      $region87: #{forward.1} parent=11 // pred_region
        _
      $region88: #{forward.1} parent=11 // pred_fallthru
        _
      // Predicated region
      $region89: #{forward.1} parent=11 // pred_check
        %p691 = pneg %p530
      $region90: #{forward.1} parent=11 // pred_check_branch
        %693 = sbr.rel (%p691) target = $region92
      $region91: #{forward.1} parent=11 // pred_region
        _
      $region92: #{forward.1} parent=11 // pred_fallthru
        _
      // Predicated region
      $region93: #{forward.1} parent=11 // pred_check
        %p694 = pneg %p551
      $region94: #{forward.1} parent=11 // pred_check_branch
        %696 = sbr.rel (%p694) target = $region96
      $region95: #{forward.1} parent=11 // pred_region
        _
      $region96: #{forward.1} parent=11 // pred_fallthru
        _
      // Predicated region
      $region97: #{forward.1} parent=11 // pred_check
        %p697 = pneg %p572
      $region98: #{forward.1} parent=11 // pred_check_branch
        %699 = sbr.rel (%p697) target = $region100
      $region99: #{forward.1} parent=11 // pred_region
        _
      $region100: #{forward.1} parent=11 // pred_fallthru
        _
      // Predicated region
      $region101: #{forward.1} parent=11 // pred_check
        %p700 = pneg %p593
      $region102: #{forward.1} parent=11 // pred_check_branch
        %702 = sbr.rel (%p700) target = $region104
      $region103: #{forward.1} parent=11 // pred_region
        _
      $region104: #{forward.1} parent=11 // pred_fallthru
        _
    $region12: #{forward.1} parent=5 // pred_fallthru
      _
    %p703 = scmp.lt.s32.totalorder %s32, 2
    // Predicated region
    $region105: #{forward.1} parent=5 // pred_check
      %p704 = pneg %p703
    $region106: #{forward.1} parent=5 // pred_check_branch
      %706 = sbr.rel (%p704) target = $region108
    $region107: #{forward.1} parent=5 // pred_region
      // Predicated region
      $region109: #{forward.1} parent=107 // pred_check
        %p707 = pneg %p52
      $region110: #{forward.1} parent=107 // pred_check_branch
        %709 = sbr.rel (%p707) target = $region112
      $region111: #{forward.1} parent=107 // pred_region
        %s710 = smul.u32 2, %s32
        %p711 = scmp.lt.s32.totalorder %s710, 3
        %s712 = scalar_select %p711, %s710, 3
        %s713 = smul.addr %s712, 8
        %s714 = scalar_lea.vmem %s0, %s713
        %s715 = smul.u32 2, %s32
      $region112: #{forward.1} parent=107 // pred_fallthru
        _
      // Predicated region
      $region113: #{forward.1} parent=107 // pred_check
        %p716 = pneg %p78
      $region114: #{forward.1} parent=107 // pred_check_branch
        %718 = sbr.rel (%p716) target = $region116
      $region115: #{forward.1} parent=107 // pred_region
        %s719 = smul.u32 2, %s32
        %p720 = scmp.lt.s32.totalorder %s719, 3
        %s721 = scalar_select %p720, %s719, 3
        %s722 = smul.addr %s721, 8
        %s723 = scalar_lea.vmem %s1, %s722
        %s724 = smul.u32 2, %s32
      $region116: #{forward.1} parent=107 // pred_fallthru
        _
      // Predicated region
      $region117: #{forward.1} parent=107 // pred_check
        %p725 = pneg %p104
      $region118: #{forward.1} parent=107 // pred_check_branch
        %727 = sbr.rel (%p725) target = $region120
      $region119: #{forward.1} parent=107 // pred_region
        %s728 = smul.u32 2, %s32
        %p729 = scmp.lt.s32.totalorder %s728, 3
        %s730 = scalar_select %p729, %s728, 3
        %s731 = smul.addr %s730, 8
        %s732 = scalar_lea.vmem %s2, %s731
        %s733 = smul.u32 2, %s32
      $region120: #{forward.1} parent=107 // pred_fallthru
        _
    $region108: #{forward.1} parent=5 // pred_fallthru
      _
    %p734 = scmp.le.s32.totalorder 1, %s32
    %p735 = scmp.lt.s32.totalorder %s32, 3
    %p736 = pnand %p734, %p735
    %p737 = pneg %p736
    // Predicated region
    $region121: #{forward.1} parent=5 // pred_check
      _
    $region122: #{forward.1} parent=5 // pred_check_branch
      %739 = sbr.rel (%p736) target = $region124
    $region123: #{forward.1} parent=5 // pred_region
      %s740 = ssub.s32 %s32, 1
      %s741 = smul.u32 2, %s37
      %p742 = scmp.lt.s32.totalorder %s741, 3
      %s743 = scalar_select %p742, %s741, 3
      %s744 = smul.addr %s743, 8
      %s745 = scalar_lea.vmem %s0, %s744
      %p746 = pneg %p58
      %p747 = pneg %p55
      %s748 = smul.u32 2, %s37
      %p749 = scmp.lt.s32.totalorder %s748, 3
      %s750 = scalar_select %p749, %s748, 3
      %s751 = smul.addr %s750, 8
      %s752 = scalar_lea.vmem %s1, %s751
      %p753 = pneg %p84
      %p754 = pneg %p81
      %s755 = smul.u32 2, %s37
      %p756 = scmp.lt.s32.totalorder %s755, 3
      %s757 = scalar_select %p756, %s755, 3
      %s758 = smul.addr %s757, 8
      %s759 = scalar_lea.vmem %s2, %s758
      %p760 = pneg %p110
      %p761 = pneg %p107
      %p762 = pneg %p131
      %p763 = pneg %p128
      %p764 = pneg %p152
      %p765 = pneg %p149
      %p766 = pneg %p173
      %p767 = pneg %p170
      %p768 = pneg %p194
      %p769 = pneg %p191
      %p770 = pneg %p215
      %p771 = pneg %p212
      %p772 = pneg %p236
      %p773 = pneg %p233
      %p774 = pneg %p257
      %p775 = pneg %p254
      %p776 = pneg %p278
      %p777 = pneg %p275
      %p778 = pneg %p299
      %p779 = pneg %p296
      %p780 = pneg %p320
      %p781 = pneg %p317
      %p782 = pneg %p341
      %p783 = pneg %p338
      %p784 = pneg %p362
      %p785 = pneg %p359
      %p786 = pneg %p383
      %p787 = pneg %p380
      %p788 = pneg %p404
      %p789 = pneg %p401
      %p790 = pneg %p425
      %p791 = pneg %p422
      %p792 = pneg %p446
      %p793 = pneg %p443
      %p794 = pneg %p467
      %p795 = pneg %p464
      %p796 = pneg %p488
      %p797 = pneg %p485
      %p798 = pneg %p509
      %p799 = pneg %p506
      %p800 = pneg %p530
      %p801 = pneg %p527
      %p802 = pneg %p551
      %p803 = pneg %p548
      %p804 = pneg %p572
      %p805 = pneg %p569
      %p806 = pneg %p593
      %p807 = pneg %p590
      %p808 = pneg %p619
      %p809 = pneg %p616
      %p810 = scmp.lt.s32.totalorder %s37, 1
      %s811 = scalar_select %p810, %s37, 1
      %s812 = scalar_lea.vmem %s26, %s811
      %s813 = smul.u32 2, %s37
      %p814 = scmp.lt.s32.totalorder %s813, 3
      %s815 = scalar_select %p814, %s813, 3
      %s816 = smul.addr %s815, 8
      %s817 = scalar_lea.vmem %s0, %s816
      %s818 = smul.u32 2, %s37
      %s819 = smul.u32 2, %s37
      %p820 = scmp.lt.s32.totalorder %s819, 3
      %s821 = scalar_select %p820, %s819, 3
      %s822 = smul.addr %s821, 8
      %s823 = scalar_lea.vmem %s1, %s822
      %s824 = smul.u32 2, %s37
      %s825 = smul.u32 2, %s37
      %p826 = scmp.lt.s32.totalorder %s825, 3
      %s827 = scalar_select %p826, %s825, 3
      %s828 = smul.addr %s827, 8
      %s829 = scalar_lea.vmem %s2, %s828
      %s830 = smul.u32 2, %s37
      %p831 = scmp.lt.s32.totalorder %s37, 1
      %s832 = scalar_select %p831, %s37, 1
      %s833 = scalar_lea.vmem %s26, %s832
      %v835 = vld [vmem:[%s817] sm:$0xff]
      %v836 = vld [vmem:[%s817 + $0x8] sm:$0xff]
      %v837 = vpack.c.bf16 %v836, %v835
      %v838 = vld [vmem:[%s4] sm:$0xf]
      %v839 = vld [vmem:[%s4 + $0x4] sm:$0xf]
      %v840 = vld [vmem:[%s4 + $0x8] sm:$0x3]
      %v841 = vld [vmem:[%s5] sm:$0x1]
      %v843 = vlaneseq
      %v844 = vshrl.u32 %v843, 7
      %v845 = vsub.s32 0, %v844
      %v846 = vrot.slane %v841, %v845
      %v851 = vunpack.c.l.b16 %v838
      %v852 = vunpack.c.l.b16 %v839
      %v853 = vunpack.c.l.b16 %v840
      %v854 = vpack.c.b16 %v852, %v851
      %v855 = vpack.c.b16 %v853, %v853
      %vm857 = vcmask 154624
      %v859 = vsel %vm857, %v837, 0
      %vm861 = vcmask 1040384
      %vm862 = vcmask 1041408
      %v863 = vsel %vm861, 4294967295, 65535
      %v864 = vsel %vm862, %v863, 0
      %v866 = vand.u32 %v855, %v864
      %868 = vmatprep.subr.bf16.mxu0 0
      %869 = vmatpush1.bf16.msra.mxu0 %v854
      %870 = vmatprep.subr.bf16.mxu0 0
      %871 = vmatpush1.bf16.msra.mxu0 %v866
      %872 = vmatprep.subr.bf16.mxu0 0
      %873 = vmatpush1.bf16.msra.mxu0 0
      %874 = vmatprep.subr.bf16.mxu0 0
      %875 = vmatpush1.bf16.msra.mxu0 0
      %876 = vmatprep.subr.bf16.mxu0 0
      %877 = vmatpush1.bf16.msra.mxu0 0
      %878 = vmatprep.subr.bf16.mxu0 0
      %879 = vmatpush1.bf16.msra.mxu0 0
      %880 = vmatprep.subr.bf16.mxu0 0
      %881 = vmatpush1.bf16.msra.mxu0 0
      %882 = vmatprep.subr.bf16.mxu0 0
      %883 = vmatpush1.bf16.msra.mxu0 0
      %884 = vmatprep.subr.bf16.mxu0 0
      %885 = vmatpush1.bf16.msra.mxu0 0
      %886 = vmatprep.subr.bf16.mxu0 0
      %887 = vmatpush1.bf16.msra.mxu0 0
      %888 = vmatprep.subr.bf16.mxu0 0
      %889 = vmatpush1.bf16.msra.mxu0 0
      %890 = vmatprep.subr.bf16.mxu0 0
      %891 = vmatpush1.bf16.msra.mxu0 0
      %892 = vmatprep.subr.bf16.mxu0 0
      %893 = vmatpush1.bf16.msra.mxu0 0
      %894 = vmatprep.subr.bf16.mxu0 0
      %895 = vmatpush1.bf16.msra.mxu0 0
      %896 = vmatprep.subr.bf16.mxu0 0
      %897 = vmatpush1.bf16.msra.mxu0 0
      %898 = vmatprep.subr.bf16.mxu0 0
      %899 = vmatpush1.bf16.msra.mxu0 0
      %900 = vmatprep.mubr.bf16.mxu0 0
      %901 = vmatmul.mubr.bf16.gmra.mrb[0].mxu0 %v859
      %v902 = vpop.f32.mrb[0].mxu0
      %v903 = vadd.f32 %v846, %v902
      %v904 = vpop.f32.mrb[0].mxu0
      %v905 = vpop.f32.mrb[0].mxu0
      %v906 = vadd.f32 %v846, %v905
      %v907 = vpop.f32.mrb[0].mxu0
      %908 = vdwg.mxu0
      %v909 = vld [vmem:[%s6] sm:$0xff]
      %v910 = vadd.f32 %v903, %v909
      %v911 = vadd.f32 %v906, %v909
      %v912 = vld [vmem:[%s7] sm:$0xff]
      %v913 = vpack.c.bf16 %v911, %v910
      %v914 = vld [vmem:[%s8] sm:$0xf]
      %v915 = vld [vmem:[%s8 + $0x4] sm:$0xf]
      %v916 = vld [vmem:[%s8 + $0x8] sm:$0xf]
      %v917 = vld [vmem:[%s8 + $0xc] sm:$0xf]
      %v918 = vld [vmem:[%s9] sm:$0x1]
      %v920 = vlaneseq
      %v921 = vshrl.u32 %v920, 7
      %v922 = vsub.s32 0, %v921
      %v923 = vrot.slane %v918, %v922
      %v929 = vunpack.c.l.b16 %v914
      %v930 = vunpack.c.l.b16 %v915
      %v931 = vunpack.c.l.b16 %v916
      %v932 = vunpack.c.l.b16 %v917
      %v933 = vpack.c.b16 %v930, %v929
      %v934 = vpack.c.b16 %v932, %v931
      %vm937 = vcmask 261120
      %v939 = vsel %vm937, %v913, 0
      %941 = vmatprep.subr.bf16.mxu0 0
      %942 = vmatpush1.bf16.msra.mxu0 %v933
      %943 = vmatprep.subr.bf16.mxu0 0
      %944 = vmatpush1.bf16.msra.mxu0 %v934
      %945 = vmatprep.subr.bf16.mxu0 0
      %946 = vmatpush1.bf16.msra.mxu0 0
      %947 = vmatprep.subr.bf16.mxu0 0
      %948 = vmatpush1.bf16.msra.mxu0 0
      %949 = vmatprep.subr.bf16.mxu0 0
      %950 = vmatpush1.bf16.msra.mxu0 0
      %951 = vmatprep.subr.bf16.mxu0 0
      %952 = vmatpush1.bf16.msra.mxu0 0
      %953 = vmatprep.subr.bf16.mxu0 0
      %954 = vmatpush1.bf16.msra.mxu0 0
      %955 = vmatprep.subr.bf16.mxu0 0
      %956 = vmatpush1.bf16.msra.mxu0 0
      %957 = vmatprep.subr.bf16.mxu0 0
      %958 = vmatpush1.bf16.msra.mxu0 0
      %959 = vmatprep.subr.bf16.mxu0 0
      %960 = vmatpush1.bf16.msra.mxu0 0
      %961 = vmatprep.subr.bf16.mxu0 0
      %962 = vmatpush1.bf16.msra.mxu0 0
      %963 = vmatprep.subr.bf16.mxu0 0
      %964 = vmatpush1.bf16.msra.mxu0 0
      %965 = vmatprep.subr.bf16.mxu0 0
      %966 = vmatpush1.bf16.msra.mxu0 0
      %967 = vmatprep.subr.bf16.mxu0 0
      %968 = vmatpush1.bf16.msra.mxu0 0
      %969 = vmatprep.subr.bf16.mxu0 0
      %970 = vmatpush1.bf16.msra.mxu0 0
      %971 = vmatprep.subr.bf16.mxu0 0
      %972 = vmatpush1.bf16.msra.mxu0 0
      %973 = vmatprep.mubr.bf16.mxu0 0
      %974 = vmatmul.mubr.bf16.gmra.mrb[0].mxu0 %v939
      %v975 = vpop.f32.mrb[0].mxu0
      %v976 = vadd.f32 %v923, %v975
      %v977 = vpop.f32.mrb[0].mxu0
      %v978 = vpop.f32.mrb[0].mxu0
      %v979 = vadd.f32 %v923, %v978
      %v980 = vpop.f32.mrb[0].mxu0
      %981 = vdwg.mxu0
      %v982 = vmul.f32 %v976, 0.35355338
      %v983 = vmul.f32 %v979, 0.35355338
      %v984 = vpack.c.bf16 %v982, %v982
      %v985 = vpack.c.bf16 %v983, %v983
      %v986 = vpack.c.bf16 %v976, %v976
      %v987 = vpack.c.bf16 %v979, %v979
      %989 = vrot.lane.b32.xlu0 %v986, 96
      %v990 = vpop.permute.xlu0 %989
      %vm991 = vcmask 64512
      %v993 = vsel %vm991, %v984, 0
      %v996 = vsel %vm991, %v990, 0
      %998 = vmatprep.subr.bf16.mxu0 0
      %999 = vmatpush1.bf16.xpose.msra.mxu0 %v996
      %1000 = vmatprep.subr.bf16.mxu0 0
      %1001 = vmatpush1.bf16.xpose.msra.mxu0 0
      %1002 = vmatprep.subr.bf16.mxu0 0
      %1003 = vmatpush1.bf16.xpose.msra.mxu0 0
      %1004 = vmatprep.subr.bf16.mxu0 0
      %1005 = vmatpush1.bf16.xpose.msra.mxu0 0
      %1006 = vmatprep.subr.bf16.mxu0 0
      %1007 = vmatpush1.bf16.xpose.msra.mxu0 0
      %1008 = vmatprep.subr.bf16.mxu0 0
      %1009 = vmatpush1.bf16.xpose.msra.mxu0 0
      %1010 = vmatprep.subr.bf16.mxu0 0
      %1011 = vmatpush1.bf16.xpose.msra.mxu0 0
      %1012 = vmatprep.subr.bf16.mxu0 0
      %1013 = vmatpush1.bf16.xpose.msra.mxu0 0
      %1014 = vmatprep.subr.bf16.mxu0 0
      %1015 = vmatpush1.bf16.xpose.msra.mxu0 0
      %1016 = vmatprep.subr.bf16.mxu0 0
      %1017 = vmatpush1.bf16.xpose.msra.mxu0 0
      %1018 = vmatprep.subr.bf16.mxu0 0
      %1019 = vmatpush1.bf16.xpose.msra.mxu0 0
      %1020 = vmatprep.subr.bf16.mxu0 0
      %1021 = vmatpush1.bf16.xpose.msra.mxu0 0
      %1022 = vmatprep.subr.bf16.mxu0 0
      %1023 = vmatpush1.bf16.xpose.msra.mxu0 0
      %1024 = vmatprep.subr.bf16.mxu0 0
      %1025 = vmatpush1.bf16.xpose.msra.mxu0 0
      %1026 = vmatprep.subr.bf16.mxu0 0
      %1027 = vmatpush1.bf16.xpose.msra.mxu0 0
      %1028 = vmatprep.subr.bf16.mxu0 0
      %1029 = vmatpush1.bf16.xpose.msra.mxu0 0
      %1030 = vmatprep.mubr.bf16.mxu0 0
      %1031 = vmatmul.mubr.bf16.gmra.mrb[0].mxu0 %v993
      %v1032 = vpop.f32.mrb[0].mxu0
      %v1033 = vadd.f32 %v912, %v1032
      %v1034 = vpop.f32.mrb[0].mxu0
      %v1035 = vpop.f32.mrb[0].mxu0
      %v1036 = vpop.f32.mrb[0].mxu0
      %1037 = vdwg.mxu0
      %1039 = vrot.lane.b32.xlu0 %v987, 96
      %v1040 = vpop.permute.xlu0 %1039
      %v1042 = vsel %vm991, %v985, 0
      %v1045 = vsel %vm991, %v1040, 0
      %1047 = vmatprep.subr.bf16.mxu0 0
      %1048 = vmatpush1.bf16.xpose.msra.mxu0 %v1045
      %1049 = vmatprep.subr.bf16.mxu0 0
      %1050 = vmatpush1.bf16.xpose.msra.mxu0 0
      %1051 = vmatprep.subr.bf16.mxu0 0
      %1052 = vmatpush1.bf16.xpose.msra.mxu0 0
      %1053 = vmatprep.subr.bf16.mxu0 0
      %1054 = vmatpush1.bf16.xpose.msra.mxu0 0
      %1055 = vmatprep.subr.bf16.mxu0 0
      %1056 = vmatpush1.bf16.xpose.msra.mxu0 0
      %1057 = vmatprep.subr.bf16.mxu0 0
      %1058 = vmatpush1.bf16.xpose.msra.mxu0 0
      %1059 = vmatprep.subr.bf16.mxu0 0
      %1060 = vmatpush1.bf16.xpose.msra.mxu0 0
      %1061 = vmatprep.subr.bf16.mxu0 0
      %1062 = vmatpush1.bf16.xpose.msra.mxu0 0
      %1063 = vmatprep.subr.bf16.mxu0 0
      %1064 = vmatpush1.bf16.xpose.msra.mxu0 0
      %1065 = vmatprep.subr.bf16.mxu0 0
      %1066 = vmatpush1.bf16.xpose.msra.mxu0 0
      %1067 = vmatprep.subr.bf16.mxu0 0
      %1068 = vmatpush1.bf16.xpose.msra.mxu0 0
      %1069 = vmatprep.subr.bf16.mxu0 0
      %1070 = vmatpush1.bf16.xpose.msra.mxu0 0
      %1071 = vmatprep.subr.bf16.mxu0 0
      %1072 = vmatpush1.bf16.xpose.msra.mxu0 0
      %1073 = vmatprep.subr.bf16.mxu0 0
      %1074 = vmatpush1.bf16.xpose.msra.mxu0 0
      %1075 = vmatprep.subr.bf16.mxu0 0
      %1076 = vmatpush1.bf16.xpose.msra.mxu0 0
      %1077 = vmatprep.subr.bf16.mxu0 0
      %1078 = vmatpush1.bf16.xpose.msra.mxu0 0
      %1079 = vmatprep.mubr.bf16.mxu0 0
      %1080 = vmatmul.mubr.bf16.gmra.mrb[0].mxu0 %v1042
      %v1081 = vpop.f32.mrb[0].mxu0
      %v1082 = vadd.f32 %v912, %v1081
      %v1083 = vpop.f32.mrb[0].mxu0
      %v1084 = vpop.f32.mrb[0].mxu0
      %v1085 = vpop.f32.mrb[0].mxu0
      %1086 = vdwg.mxu0
      %v1087 = vsel %vm991, %v1033, -inf
      %1088 = vmax.xlane.f32.xlu0 %v1087
      %v1089 = vpop.xlane.xlu0 %1088
      %v1090 = vsel %vm991, %v1082, -inf
      %1091 = vmax.xlane.f32.xlu0 %v1090
      %v1092 = vpop.xlane.xlu0 %1091
      %v1093 = vsub.f32 %v1033, %v1089
      %v1094 = vsub.f32 %v1082, %v1092
      %v1095 = vmul.f32 %v1093, 1.442695
      %v1096 = vpow.pop %v1095
      %v1097 = vmul.f32 %v1094, 1.442695
      %v1098 = vpow.pop %v1097
      %v1099 = vsel %vm991, %v1096, 0.0
      %1100 = vadd.xlane.f32.xlu0 %v1099
      %v1101 = vpop.xlane.xlu0 %1100
      %v1102 = vsel %vm991, %v1098, 0.0
      %1103 = vadd.xlane.f32.xlu0 %v1102
      %v1104 = vpop.xlane.xlu0 %1103
      %v1105 = vrcp.pop %v1101
      %v1106 = vrcp.pop %v1104
      %v1107 = vmul.f32 %v1096, %v1105
      %v1108 = vmul.f32 %v1098, %v1106
      %v1109 = vpack.c.bf16 %v1107, %v1107
      %v1110 = vpack.c.bf16 %v1108, %v1108
      %1111 = vrot.lane.b32.xlu0 %v986, 64
      %v1112 = vpop.permute.xlu0 %1111
      %v1114 = vsel %vm991, %v1109, 0
      %vm1116 = vcmask 1043456
      %v1118 = vsel %vm1116, %v1112, 0
      %1120 = vmatprep.subr.bf16.mxu0 0
      %1121 = vmatpush1.bf16.msra.mxu0 %v1118
      %1122 = vmatprep.subr.bf16.mxu0 0
      %1123 = vmatpush1.bf16.msra.mxu0 0
      %1124 = vmatprep.subr.bf16.mxu0 0
      %1125 = vmatpush1.bf16.msra.mxu0 0
      %1126 = vmatprep.subr.bf16.mxu0 0
      %1127 = vmatpush1.bf16.msra.mxu0 0
      %1128 = vmatprep.subr.bf16.mxu0 0
      %1129 = vmatpush1.bf16.msra.mxu0 0
      %1130 = vmatprep.subr.bf16.mxu0 0
      %1131 = vmatpush1.bf16.msra.mxu0 0
      %1132 = vmatprep.subr.bf16.mxu0 0
      %1133 = vmatpush1.bf16.msra.mxu0 0
      %1134 = vmatprep.subr.bf16.mxu0 0
      %1135 = vmatpush1.bf16.msra.mxu0 0
      %1136 = vmatprep.subr.bf16.mxu0 0
      %1137 = vmatpush1.bf16.msra.mxu0 0
      %1138 = vmatprep.subr.bf16.mxu0 0
      %1139 = vmatpush1.bf16.msra.mxu0 0
      %1140 = vmatprep.subr.bf16.mxu0 0
      %1141 = vmatpush1.bf16.msra.mxu0 0
      %1142 = vmatprep.subr.bf16.mxu0 0
      %1143 = vmatpush1.bf16.msra.mxu0 0
      %1144 = vmatprep.subr.bf16.mxu0 0
      %1145 = vmatpush1.bf16.msra.mxu0 0
      %1146 = vmatprep.subr.bf16.mxu0 0
      %1147 = vmatpush1.bf16.msra.mxu0 0
      %1148 = vmatprep.subr.bf16.mxu0 0
      %1149 = vmatpush1.bf16.msra.mxu0 0
      %1150 = vmatprep.subr.bf16.mxu0 0
      %1151 = vmatpush1.bf16.msra.mxu0 0
      %1152 = vmatprep.mubr.bf16.mxu0 0
      %1153 = vmatmul.mubr.bf16.gmra.mrb[0].mxu0 %v1114
      %v1154 = vpop.f32.mrb[0].mxu0
      %v1155 = vadd.f32 0.0, %v1154
      %v1156 = vpop.f32.mrb[0].mxu0
      %v1157 = vpop.f32.mrb[0].mxu0
      %v1158 = vpop.f32.mrb[0].mxu0
      %1159 = vdwg.mxu0
      %1160 = vrot.lane.b32.xlu0 %v987, 64
      %v1161 = vpop.permute.xlu0 %1160
      %v1163 = vsel %vm991, %v1110, 0
      %v1166 = vsel %vm1116, %v1161, 0
      %1168 = vmatprep.subr.bf16.mxu0 0
      %1169 = vmatpush1.bf16.msra.mxu0 %v1166
      %1170 = vmatprep.subr.bf16.mxu0 0
      %1171 = vmatpush1.bf16.msra.mxu0 0
      %1172 = vmatprep.subr.bf16.mxu0 0
      %1173 = vmatpush1.bf16.msra.mxu0 0
      %1174 = vmatprep.subr.bf16.mxu0 0
      %1175 = vmatpush1.bf16.msra.mxu0 0
      %1176 = vmatprep.subr.bf16.mxu0 0
      %1177 = vmatpush1.bf16.msra.mxu0 0
      %1178 = vmatprep.subr.bf16.mxu0 0
      %1179 = vmatpush1.bf16.msra.mxu0 0
      %1180 = vmatprep.subr.bf16.mxu0 0
      %1181 = vmatpush1.bf16.msra.mxu0 0
      %1182 = vmatprep.subr.bf16.mxu0 0
      %1183 = vmatpush1.bf16.msra.mxu0 0
      %1184 = vmatprep.subr.bf16.mxu0 0
      %1185 = vmatpush1.bf16.msra.mxu0 0
      %1186 = vmatprep.subr.bf16.mxu0 0
      %1187 = vmatpush1.bf16.msra.mxu0 0
      %1188 = vmatprep.subr.bf16.mxu0 0
      %1189 = vmatpush1.bf16.msra.mxu0 0
      %1190 = vmatprep.subr.bf16.mxu0 0
      %1191 = vmatpush1.bf16.msra.mxu0 0
      %1192 = vmatprep.subr.bf16.mxu0 0
      %1193 = vmatpush1.bf16.msra.mxu0 0
      %1194 = vmatprep.subr.bf16.mxu0 0
      %1195 = vmatpush1.bf16.msra.mxu0 0
      %1196 = vmatprep.subr.bf16.mxu0 0
      %1197 = vmatpush1.bf16.msra.mxu0 0
      %1198 = vmatprep.subr.bf16.mxu0 0
      %1199 = vmatpush1.bf16.msra.mxu0 0
      %1200 = vmatprep.mubr.bf16.mxu0 0
      %1201 = vmatmul.mubr.bf16.gmra.mrb[0].mxu0 %v1163
      %v1202 = vpop.f32.mrb[0].mxu0
      %v1203 = vadd.f32 0.0, %v1202
      %v1204 = vpop.f32.mrb[0].mxu0
      %v1205 = vpop.f32.mrb[0].mxu0
      %v1206 = vpop.f32.mrb[0].mxu0
      %1207 = vdwg.mxu0
      %1209 = vrot.lane.b32.xlu0 %v984, 120
      %v1210 = vpop.permute.xlu0 %1209
      %1211 = vrot.lane.b32.xlu0 %v986, 88
      %v1212 = vpop.permute.xlu0 %1211
      %v1214 = vsel %vm991, %v1210, 0
      %v1217 = vsel %vm991, %v1212, 0
      %1219 = vmatprep.subr.bf16.mxu0 0
      %1220 = vmatpush1.bf16.xpose.msra.mxu0 %v1217
      %1221 = vmatprep.subr.bf16.mxu0 0
      %1222 = vmatpush1.bf16.xpose.msra.mxu0 0
      %1223 = vmatprep.subr.bf16.mxu0 0
      %1224 = vmatpush1.bf16.xpose.msra.mxu0 0
      %1225 = vmatprep.subr.bf16.mxu0 0
      %1226 = vmatpush1.bf16.xpose.msra.mxu0 0
      %1227 = vmatprep.subr.bf16.mxu0 0
      %1228 = vmatpush1.bf16.xpose.msra.mxu0 0
      %1229 = vmatprep.subr.bf16.mxu0 0
      %1230 = vmatpush1.bf16.xpose.msra.mxu0 0
      %1231 = vmatprep.subr.bf16.mxu0 0
      %1232 = vmatpush1.bf16.xpose.msra.mxu0 0
      %1233 = vmatprep.subr.bf16.mxu0 0
      %1234 = vmatpush1.bf16.xpose.msra.mxu0 0
      %1235 = vmatprep.subr.bf16.mxu0 0
      %1236 = vmatpush1.bf16.xpose.msra.mxu0 0
      %1237 = vmatprep.subr.bf16.mxu0 0
      %1238 = vmatpush1.bf16.xpose.msra.mxu0 0
      %1239 = vmatprep.subr.bf16.mxu0 0
      %1240 = vmatpush1.bf16.xpose.msra.mxu0 0
      %1241 = vmatprep.subr.bf16.mxu0 0
      %1242 = vmatpush1.bf16.xpose.msra.mxu0 0
      %1243 = vmatprep.subr.bf16.mxu0 0
      %1244 = vmatpush1.bf16.xpose.msra.mxu0 0
      %1245 = vmatprep.subr.bf16.mxu0 0
      %1246 = vmatpush1.bf16.xpose.msra.mxu0 0
      %1247 = vmatprep.subr.bf16.mxu0 0
      %1248 = vmatpush1.bf16.xpose.msra.mxu0 0
      %1249 = vmatprep.subr.bf16.mxu0 0
      %1250 = vmatpush1.bf16.xpose.msra.mxu0 0
      %1251 = vmatprep.mubr.bf16.mxu0 0
      %1252 = vmatmul.mubr.bf16.gmra.mrb[0].mxu0 %v1214
      %v1253 = vpop.f32.mrb[0].mxu0
      %v1254 = vadd.f32 %v912, %v1253
      %v1255 = vpop.f32.mrb[0].mxu0
      %v1256 = vpop.f32.mrb[0].mxu0
      %v1257 = vpop.f32.mrb[0].mxu0
      %1258 = vdwg.mxu0
      %1260 = vrot.lane.b32.xlu0 %v985, 120
      %v1261 = vpop.permute.xlu0 %1260
      %1262 = vrot.lane.b32.xlu0 %v987, 88
      %v1263 = vpop.permute.xlu0 %1262
      %v1265 = vsel %vm991, %v1261, 0
      %v1268 = vsel %vm991, %v1263, 0
      %1270 = vmatprep.subr.bf16.mxu0 0
      %1271 = vmatpush1.bf16.xpose.msra.mxu0 %v1268
      %1272 = vmatprep.subr.bf16.mxu0 0
      %1273 = vmatpush1.bf16.xpose.msra.mxu0 0
      %1274 = vmatprep.subr.bf16.mxu0 0
      %1275 = vmatpush1.bf16.xpose.msra.mxu0 0
      %1276 = vmatprep.subr.bf16.mxu0 0
      %1277 = vmatpush1.bf16.xpose.msra.mxu0 0
      %1278 = vmatprep.subr.bf16.mxu0 0
      %1279 = vmatpush1.bf16.xpose.msra.mxu0 0
      %1280 = vmatprep.subr.bf16.mxu0 0
      %1281 = vmatpush1.bf16.xpose.msra.mxu0 0
      %1282 = vmatprep.subr.bf16.mxu0 0
      %1283 = vmatpush1.bf16.xpose.msra.mxu0 0
      %1284 = vmatprep.subr.bf16.mxu0 0
      %1285 = vmatpush1.bf16.xpose.msra.mxu0 0
      %1286 = vmatprep.subr.bf16.mxu0 0
      %1287 = vmatpush1.bf16.xpose.msra.mxu0 0
      %1288 = vmatprep.subr.bf16.mxu0 0
      %1289 = vmatpush1.bf16.xpose.msra.mxu0 0
      %1290 = vmatprep.subr.bf16.mxu0 0
      %1291 = vmatpush1.bf16.xpose.msra.mxu0 0
      %1292 = vmatprep.subr.bf16.mxu0 0
      %1293 = vmatpush1.bf16.xpose.msra.mxu0 0
      %1294 = vmatprep.subr.bf16.mxu0 0
      %1295 = vmatpush1.bf16.xpose.msra.mxu0 0
      %1296 = vmatprep.subr.bf16.mxu0 0
      %1297 = vmatpush1.bf16.xpose.msra.mxu0 0
      %1298 = vmatprep.subr.bf16.mxu0 0
      %1299 = vmatpush1.bf16.xpose.msra.mxu0 0
      %1300 = vmatprep.subr.bf16.mxu0 0
      %1301 = vmatpush1.bf16.xpose.msra.mxu0 0
      %1302 = vmatprep.mubr.bf16.mxu0 0
      %1303 = vmatmul.mubr.bf16.gmra.mrb[0].mxu0 %v1265
      %v1304 = vpop.f32.mrb[0].mxu0
      %v1305 = vadd.f32 %v912, %v1304
      %v1306 = vpop.f32.mrb[0].mxu0
      %v1307 = vpop.f32.mrb[0].mxu0
      %v1308 = vpop.f32.mrb[0].mxu0
      %1309 = vdwg.mxu0
      %v1310 = vsel %vm991, %v1254, -inf
      %1311 = vmax.xlane.f32.xlu0 %v1310
      %v1312 = vpop.xlane.xlu0 %1311
      %v1313 = vsel %vm991, %v1305, -inf
      %1314 = vmax.xlane.f32.xlu0 %v1313
      %v1315 = vpop.xlane.xlu0 %1314
      %v1316 = vsub.f32 %v1254, %v1312
      %v1317 = vsub.f32 %v1305, %v1315
      %v1318 = vmul.f32 %v1316, 1.442695
      %v1319 = vpow.pop %v1318
      %v1320 = vmul.f32 %v1317, 1.442695
      %v1321 = vpow.pop %v1320
      %v1322 = vsel %vm991, %v1319, 0.0
      %1323 = vadd.xlane.f32.xlu0 %v1322
      %v1324 = vpop.xlane.xlu0 %1323
      %v1325 = vsel %vm991, %v1321, 0.0
      %1326 = vadd.xlane.f32.xlu0 %v1325
      %v1327 = vpop.xlane.xlu0 %1326
      %v1328 = vrcp.pop %v1324
      %v1329 = vrcp.pop %v1327
      %v1330 = vmul.f32 %v1319, %v1328
      %v1331 = vmul.f32 %v1321, %v1329
      %v1332 = vpack.c.bf16 %v1330, %v1330
      %v1333 = vpack.c.bf16 %v1331, %v1331
      %1334 = vrot.lane.b32.xlu0 %v986, 56
      %v1335 = vpop.permute.xlu0 %1334
      %v1337 = vsel %vm991, %v1332, 0
      %v1340 = vsel %vm1116, %v1335, 0
      %1342 = vmatprep.subr.bf16.mxu0 0
      %1343 = vmatpush1.bf16.msra.mxu0 %v1340
      %1344 = vmatprep.subr.bf16.mxu0 0
      %1345 = vmatpush1.bf16.msra.mxu0 0
      %1346 = vmatprep.subr.bf16.mxu0 0
      %1347 = vmatpush1.bf16.msra.mxu0 0
      %1348 = vmatprep.subr.bf16.mxu0 0
      %1349 = vmatpush1.bf16.msra.mxu0 0
      %1350 = vmatprep.subr.bf16.mxu0 0
      %1351 = vmatpush1.bf16.msra.mxu0 0
      %1352 = vmatprep.subr.bf16.mxu0 0
      %1353 = vmatpush1.bf16.msra.mxu0 0
      %1354 = vmatprep.subr.bf16.mxu0 0
      %1355 = vmatpush1.bf16.msra.mxu0 0
      %1356 = vmatprep.subr.bf16.mxu0 0
      %1357 = vmatpush1.bf16.msra.mxu0 0
      %1358 = vmatprep.subr.bf16.mxu0 0
      %1359 = vmatpush1.bf16.msra.mxu0 0
      %1360 = vmatprep.subr.bf16.mxu0 0
      %1361 = vmatpush1.bf16.msra.mxu0 0
      %1362 = vmatprep.subr.bf16.mxu0 0
      %1363 = vmatpush1.bf16.msra.mxu0 0
      %1364 = vmatprep.subr.bf16.mxu0 0
      %1365 = vmatpush1.bf16.msra.mxu0 0
      %1366 = vmatprep.subr.bf16.mxu0 0
      %1367 = vmatpush1.bf16.msra.mxu0 0
      %1368 = vmatprep.subr.bf16.mxu0 0
      %1369 = vmatpush1.bf16.msra.mxu0 0
      %1370 = vmatprep.subr.bf16.mxu0 0
      %1371 = vmatpush1.bf16.msra.mxu0 0
      %1372 = vmatprep.subr.bf16.mxu0 0
      %1373 = vmatpush1.bf16.msra.mxu0 0
      %1374 = vmatprep.mubr.bf16.mxu0 0
      %1375 = vmatmul.mubr.bf16.gmra.mrb[0].mxu0 %v1337
      %v1376 = vpop.f32.mrb[0].mxu0
      %v1377 = vadd.f32 0.0, %v1376
      %v1378 = vpop.f32.mrb[0].mxu0
      %v1379 = vpop.f32.mrb[0].mxu0
      %v1380 = vpop.f32.mrb[0].mxu0
      %1381 = vdwg.mxu0
      %1382 = vrot.lane.b32.xlu0 %v987, 56
      %v1383 = vpop.permute.xlu0 %1382
      %v1385 = vsel %vm991, %v1333, 0
      %v1388 = vsel %vm1116, %v1383, 0
      %1390 = vmatprep.subr.bf16.mxu0 0
      %1391 = vmatpush1.bf16.msra.mxu0 %v1388
      %1392 = vmatprep.subr.bf16.mxu0 0
      %1393 = vmatpush1.bf16.msra.mxu0 0
      %1394 = vmatprep.subr.bf16.mxu0 0
      %1395 = vmatpush1.bf16.msra.mxu0 0
      %1396 = vmatprep.subr.bf16.mxu0 0
      %1397 = vmatpush1.bf16.msra.mxu0 0
      %1398 = vmatprep.subr.bf16.mxu0 0
      %1399 = vmatpush1.bf16.msra.mxu0 0
      %1400 = vmatprep.subr.bf16.mxu0 0
      %1401 = vmatpush1.bf16.msra.mxu0 0
      %1402 = vmatprep.subr.bf16.mxu0 0
      %1403 = vmatpush1.bf16.msra.mxu0 0
      %1404 = vmatprep.subr.bf16.mxu0 0
      %1405 = vmatpush1.bf16.msra.mxu0 0
      %1406 = vmatprep.subr.bf16.mxu0 0
      %1407 = vmatpush1.bf16.msra.mxu0 0
      %1408 = vmatprep.subr.bf16.mxu0 0
      %1409 = vmatpush1.bf16.msra.mxu0 0
      %1410 = vmatprep.subr.bf16.mxu0 0
      %1411 = vmatpush1.bf16.msra.mxu0 0
      %1412 = vmatprep.subr.bf16.mxu0 0
      %1413 = vmatpush1.bf16.msra.mxu0 0
      %1414 = vmatprep.subr.bf16.mxu0 0
      %1415 = vmatpush1.bf16.msra.mxu0 0
      %1416 = vmatprep.subr.bf16.mxu0 0
      %1417 = vmatpush1.bf16.msra.mxu0 0
      %1418 = vmatprep.subr.bf16.mxu0 0
      %1419 = vmatpush1.bf16.msra.mxu0 0
      %1420 = vmatprep.subr.bf16.mxu0 0
      %1421 = vmatpush1.bf16.msra.mxu0 0
      %1422 = vmatprep.mubr.bf16.mxu0 0
      %1423 = vmatmul.mubr.bf16.gmra.mrb[0].mxu0 %v1385
      %v1424 = vpop.f32.mrb[0].mxu0
      %v1425 = vadd.f32 0.0, %v1424
      %v1426 = vpop.f32.mrb[0].mxu0
      %v1427 = vpop.f32.mrb[0].mxu0
      %v1428 = vpop.f32.mrb[0].mxu0
      %1429 = vdwg.mxu0
      %1430 = vrot.lane.b32.xlu0 %v984, 112
      %v1431 = vpop.permute.xlu0 %1430
      %1432 = vrot.lane.b32.xlu0 %v986, 80
      %v1433 = vpop.permute.xlu0 %1432
      %v1435 = vsel %vm991, %v1431, 0
      %v1438 = vsel %vm991, %v1433, 0
      %1440 = vmatprep.subr.bf16.mxu0 0
      %1441 = vmatpush1.bf16.xpose.msra.mxu0 %v1438
      %1442 = vmatprep.subr.bf16.mxu0 0
      %1443 = vmatpush1.bf16.xpose.msra.mxu0 0
      %1444 = vmatprep.subr.bf16.mxu0 0
      %1445 = vmatpush1.bf16.xpose.msra.mxu0 0
      %1446 = vmatprep.subr.bf16.mxu0 0
      %1447 = vmatpush1.bf16.xpose.msra.mxu0 0
      %1448 = vmatprep.subr.bf16.mxu0 0
      %1449 = vmatpush1.bf16.xpose.msra.mxu0 0
      %1450 = vmatprep.subr.bf16.mxu0 0
      %1451 = vmatpush1.bf16.xpose.msra.mxu0 0
      %1452 = vmatprep.subr.bf16.mxu0 0
      %1453 = vmatpush1.bf16.xpose.msra.mxu0 0
      %1454 = vmatprep.subr.bf16.mxu0 0
      %1455 = vmatpush1.bf16.xpose.msra.mxu0 0
      %1456 = vmatprep.subr.bf16.mxu0 0
      %1457 = vmatpush1.bf16.xpose.msra.mxu0 0
      %1458 = vmatprep.subr.bf16.mxu0 0
      %1459 = vmatpush1.bf16.xpose.msra.mxu0 0
      %1460 = vmatprep.subr.bf16.mxu0 0
      %1461 = vmatpush1.bf16.xpose.msra.mxu0 0
      %1462 = vmatprep.subr.bf16.mxu0 0
      %1463 = vmatpush1.bf16.xpose.msra.mxu0 0
      %1464 = vmatprep.subr.bf16.mxu0 0
      %1465 = vmatpush1.bf16.xpose.msra.mxu0 0
      %1466 = vmatprep.subr.bf16.mxu0 0
      %1467 = vmatpush1.bf16.xpose.msra.mxu0 0
      %1468 = vmatprep.subr.bf16.mxu0 0
      %1469 = vmatpush1.bf16.xpose.msra.mxu0 0
      %1470 = vmatprep.subr.bf16.mxu0 0
      %1471 = vmatpush1.bf16.xpose.msra.mxu0 0
      %1472 = vmatprep.mubr.bf16.mxu0 0
      %1473 = vmatmul.mubr.bf16.gmra.mrb[0].mxu0 %v1435
      %v1474 = vpop.f32.mrb[0].mxu0
      %v1475 = vadd.f32 %v912, %v1474
      %v1476 = vpop.f32.mrb[0].mxu0
      %v1477 = vpop.f32.mrb[0].mxu0
      %v1478 = vpop.f32.mrb[0].mxu0
      %1479 = vdwg.mxu0
      %1480 = vrot.lane.b32.xlu0 %v985, 112
      %v1481 = vpop.permute.xlu0 %1480
      %1482 = vrot.lane.b32.xlu0 %v987, 80
      %v1483 = vpop.permute.xlu0 %1482
      %v1485 = vsel %vm991, %v1481, 0
      %v1488 = vsel %vm991, %v1483, 0
      %1490 = vmatprep.subr.bf16.mxu0 0
      %1491 = vmatpush1.bf16.xpose.msra.mxu0 %v1488
      %1492 = vmatprep.subr.bf16.mxu0 0
      %1493 = vmatpush1.bf16.xpose.msra.mxu0 0
      %1494 = vmatprep.subr.bf16.mxu0 0
      %1495 = vmatpush1.bf16.xpose.msra.mxu0 0
      %1496 = vmatprep.subr.bf16.mxu0 0
      %1497 = vmatpush1.bf16.xpose.msra.mxu0 0
      %1498 = vmatprep.subr.bf16.mxu0 0
      %1499 = vmatpush1.bf16.xpose.msra.mxu0 0
      %1500 = vmatprep.subr.bf16.mxu0 0
      %1501 = vmatpush1.bf16.xpose.msra.mxu0 0
      %1502 = vmatprep.subr.bf16.mxu0 0
      %1503 = vmatpush1.bf16.xpose.msra.mxu0 0
      %1504 = vmatprep.subr.bf16.mxu0 0
      %1505 = vmatpush1.bf16.xpose.msra.mxu0 0
      %1506 = vmatprep.subr.bf16.mxu0 0
      %1507 = vmatpush1.bf16.xpose.msra.mxu0 0
      %1508 = vmatprep.subr.bf16.mxu0 0
      %1509 = vmatpush1.bf16.xpose.msra.mxu0 0
      %1510 = vmatprep.subr.bf16.mxu0 0
      %1511 = vmatpush1.bf16.xpose.msra.mxu0 0
      %1512 = vmatprep.subr.bf16.mxu0 0
      %1513 = vmatpush1.bf16.xpose.msra.mxu0 0
      %1514 = vmatprep.subr.bf16.mxu0 0
      %1515 = vmatpush1.bf16.xpose.msra.mxu0 0
      %1516 = vmatprep.subr.bf16.mxu0 0
      %1517 = vmatpush1.bf16.xpose.msra.mxu0 0
      %1518 = vmatprep.subr.bf16.mxu0 0
      %1519 = vmatpush1.bf16.xpose.msra.mxu0 0
      %1520 = vmatprep.subr.bf16.mxu0 0
      %1521 = vmatpush1.bf16.xpose.msra.mxu0 0
      %1522 = vmatprep.mubr.bf16.mxu0 0
      %1523 = vmatmul.mubr.bf16.gmra.mrb[0].mxu0 %v1485
      %v1524 = vpop.f32.mrb[0].mxu0
      %v1525 = vadd.f32 %v912, %v1524
      %v1526 = vpop.f32.mrb[0].mxu0
      %v1527 = vpop.f32.mrb[0].mxu0
      %v1528 = vpop.f32.mrb[0].mxu0
      %1529 = vdwg.mxu0
      %v1530 = vsel %vm991, %v1475, -inf
      %1531 = vmax.xlane.f32.xlu0 %v1530
      %v1532 = vpop.xlane.xlu0 %1531
      %v1533 = vsel %vm991, %v1525, -inf
      %1534 = vmax.xlane.f32.xlu0 %v1533
      %v1535 = vpop.xlane.xlu0 %1534
      %v1536 = vsub.f32 %v1475, %v1532
      %v1537 = vsub.f32 %v1525, %v1535
      %v1538 = vmul.f32 %v1536, 1.442695
      %v1539 = vpow.pop %v1538
      %v1540 = vmul.f32 %v1537, 1.442695
      %v1541 = vpow.pop %v1540
      %v1542 = vsel %vm991, %v1539, 0.0
      %1543 = vadd.xlane.f32.xlu0 %v1542
      %v1544 = vpop.xlane.xlu0 %1543
      %v1545 = vsel %vm991, %v1541, 0.0
      %1546 = vadd.xlane.f32.xlu0 %v1545
      %v1547 = vpop.xlane.xlu0 %1546
      %v1548 = vrcp.pop %v1544
      %v1549 = vrcp.pop %v1547
      %v1550 = vmul.f32 %v1539, %v1548
      %v1551 = vmul.f32 %v1541, %v1549
      %v1552 = vpack.c.bf16 %v1550, %v1550
      %v1553 = vpack.c.bf16 %v1551, %v1551
      %1554 = vrot.lane.b32.xlu0 %v986, 48
      %v1555 = vpop.permute.xlu0 %1554
      %v1557 = vsel %vm991, %v1552, 0
      %v1560 = vsel %vm1116, %v1555, 0
      %1562 = vmatprep.subr.bf16.mxu0 0
      %1563 = vmatpush1.bf16.msra.mxu0 %v1560
      %1564 = vmatprep.subr.bf16.mxu0 0
      %1565 = vmatpush1.bf16.msra.mxu0 0
      %1566 = vmatprep.subr.bf16.mxu0 0
      %1567 = vmatpush1.bf16.msra.mxu0 0
      %1568 = vmatprep.subr.bf16.mxu0 0
      %1569 = vmatpush1.bf16.msra.mxu0 0
      %1570 = vmatprep.subr.bf16.mxu0 0
      %1571 = vmatpush1.bf16.msra.mxu0 0
      %1572 = vmatprep.subr.bf16.mxu0 0
      %1573 = vmatpush1.bf16.msra.mxu0 0
      %1574 = vmatprep.subr.bf16.mxu0 0
      %1575 = vmatpush1.bf16.msra.mxu0 0
      %1576 = vmatprep.subr.bf16.mxu0 0
      %1577 = vmatpush1.bf16.msra.mxu0 0
      %1578 = vmatprep.subr.bf16.mxu0 0
      %1579 = vmatpush1.bf16.msra.mxu0 0
      %1580 = vmatprep.subr.bf16.mxu0 0
      %1581 = vmatpush1.bf16.msra.mxu0 0
      %1582 = vmatprep.subr.bf16.mxu0 0
      %1583 = vmatpush1.bf16.msra.mxu0 0
      %1584 = vmatprep.subr.bf16.mxu0 0
      %1585 = vmatpush1.bf16.msra.mxu0 0
      %1586 = vmatprep.subr.bf16.mxu0 0
      %1587 = vmatpush1.bf16.msra.mxu0 0
      %1588 = vmatprep.subr.bf16.mxu0 0
      %1589 = vmatpush1.bf16.msra.mxu0 0
      %1590 = vmatprep.subr.bf16.mxu0 0
      %1591 = vmatpush1.bf16.msra.mxu0 0
      %1592 = vmatprep.subr.bf16.mxu0 0
      %1593 = vmatpush1.bf16.msra.mxu0 0
      %1594 = vmatprep.mubr.bf16.mxu0 0
      %1595 = vmatmul.mubr.bf16.gmra.mrb[0].mxu0 %v1557
      %v1596 = vpop.f32.mrb[0].mxu0
      %v1597 = vadd.f32 0.0, %v1596
      %v1598 = vpop.f32.mrb[0].mxu0
      %v1599 = vpop.f32.mrb[0].mxu0
      %v1600 = vpop.f32.mrb[0].mxu0
      %1601 = vdwg.mxu0
      %1602 = vrot.lane.b32.xlu0 %v987, 48
      %v1603 = vpop.permute.xlu0 %1602
      %v1605 = vsel %vm991, %v1553, 0
      %v1608 = vsel %vm1116, %v1603, 0
      %1610 = vmatprep.subr.bf16.mxu0 0
      %1611 = vmatpush1.bf16.msra.mxu0 %v1608
      %1612 = vmatprep.subr.bf16.mxu0 0
      %1613 = vmatpush1.bf16.msra.mxu0 0
      %1614 = vmatprep.subr.bf16.mxu0 0
      %1615 = vmatpush1.bf16.msra.mxu0 0
      %1616 = vmatprep.subr.bf16.mxu0 0
      %1617 = vmatpush1.bf16.msra.mxu0 0
      %1618 = vmatprep.subr.bf16.mxu0 0
      %1619 = vmatpush1.bf16.msra.mxu0 0
      %1620 = vmatprep.subr.bf16.mxu0 0
      %1621 = vmatpush1.bf16.msra.mxu0 0
      %1622 = vmatprep.subr.bf16.mxu0 0
      %1623 = vmatpush1.bf16.msra.mxu0 0
      %1624 = vmatprep.subr.bf16.mxu0 0
      %1625 = vmatpush1.bf16.msra.mxu0 0
      %1626 = vmatprep.subr.bf16.mxu0 0
      %1627 = vmatpush1.bf16.msra.mxu0 0
      %1628 = vmatprep.subr.bf16.mxu0 0
      %1629 = vmatpush1.bf16.msra.mxu0 0
      %1630 = vmatprep.subr.bf16.mxu0 0
      %1631 = vmatpush1.bf16.msra.mxu0 0
      %1632 = vmatprep.subr.bf16.mxu0 0
      %1633 = vmatpush1.bf16.msra.mxu0 0
      %1634 = vmatprep.subr.bf16.mxu0 0
      %1635 = vmatpush1.bf16.msra.mxu0 0
      %1636 = vmatprep.subr.bf16.mxu0 0
      %1637 = vmatpush1.bf16.msra.mxu0 0
      %1638 = vmatprep.subr.bf16.mxu0 0
      %1639 = vmatpush1.bf16.msra.mxu0 0
      %1640 = vmatprep.subr.bf16.mxu0 0
      %1641 = vmatpush1.bf16.msra.mxu0 0
      %1642 = vmatprep.mubr.bf16.mxu0 0
      %1643 = vmatmul.mubr.bf16.gmra.mrb[0].mxu0 %v1605
      %v1644 = vpop.f32.mrb[0].mxu0
      %v1645 = vadd.f32 0.0, %v1644
      %v1646 = vpop.f32.mrb[0].mxu0
      %v1647 = vpop.f32.mrb[0].mxu0
      %v1648 = vpop.f32.mrb[0].mxu0
      %1649 = vdwg.mxu0
      %1650 = vrot.lane.b32.xlu0 %v984, 104
      %v1651 = vpop.permute.xlu0 %1650
      %1652 = vrot.lane.b32.xlu0 %v986, 72
      %v1653 = vpop.permute.xlu0 %1652
      %v1655 = vsel %vm991, %v1651, 0
      %v1658 = vsel %vm991, %v1653, 0
      %1660 = vmatprep.subr.bf16.mxu0 0
      %1661 = vmatpush1.bf16.xpose.msra.mxu0 %v1658
      %1662 = vmatprep.subr.bf16.mxu0 0
      %1663 = vmatpush1.bf16.xpose.msra.mxu0 0
      %1664 = vmatprep.subr.bf16.mxu0 0
      %1665 = vmatpush1.bf16.xpose.msra.mxu0 0
      %1666 = vmatprep.subr.bf16.mxu0 0
      %1667 = vmatpush1.bf16.xpose.msra.mxu0 0
      %1668 = vmatprep.subr.bf16.mxu0 0
      %1669 = vmatpush1.bf16.xpose.msra.mxu0 0
      %1670 = vmatprep.subr.bf16.mxu0 0
      %1671 = vmatpush1.bf16.xpose.msra.mxu0 0
      %1672 = vmatprep.subr.bf16.mxu0 0
      %1673 = vmatpush1.bf16.xpose.msra.mxu0 0
      %1674 = vmatprep.subr.bf16.mxu0 0
      %1675 = vmatpush1.bf16.xpose.msra.mxu0 0
      %1676 = vmatprep.subr.bf16.mxu0 0
      %1677 = vmatpush1.bf16.xpose.msra.mxu0 0
      %1678 = vmatprep.subr.bf16.mxu0 0
      %1679 = vmatpush1.bf16.xpose.msra.mxu0 0
      %1680 = vmatprep.subr.bf16.mxu0 0
      %1681 = vmatpush1.bf16.xpose.msra.mxu0 0
      %1682 = vmatprep.subr.bf16.mxu0 0
      %1683 = vmatpush1.bf16.xpose.msra.mxu0 0
      %1684 = vmatprep.subr.bf16.mxu0 0
      %1685 = vmatpush1.bf16.xpose.msra.mxu0 0
      %1686 = vmatprep.subr.bf16.mxu0 0
      %1687 = vmatpush1.bf16.xpose.msra.mxu0 0
      %1688 = vmatprep.subr.bf16.mxu0 0
      %1689 = vmatpush1.bf16.xpose.msra.mxu0 0
      %1690 = vmatprep.subr.bf16.mxu0 0
      %1691 = vmatpush1.bf16.xpose.msra.mxu0 0
      %1692 = vmatprep.mubr.bf16.mxu0 0
      %1693 = vmatmul.mubr.bf16.gmra.mrb[0].mxu0 %v1655
      %v1694 = vpop.f32.mrb[0].mxu0
      %v1695 = vadd.f32 %v912, %v1694
      %v1696 = vpop.f32.mrb[0].mxu0
      %v1697 = vpop.f32.mrb[0].mxu0
      %v1698 = vpop.f32.mrb[0].mxu0
      %1699 = vdwg.mxu0
      %1700 = vrot.lane.b32.xlu0 %v985, 104
      %v1701 = vpop.permute.xlu0 %1700
      %1702 = vrot.lane.b32.xlu0 %v987, 72
      %v1703 = vpop.permute.xlu0 %1702
      %v1705 = vsel %vm991, %v1701, 0
      %v1708 = vsel %vm991, %v1703, 0
      %1710 = vmatprep.subr.bf16.mxu0 0
      %1711 = vmatpush1.bf16.xpose.msra.mxu0 %v1708
      %1712 = vmatprep.subr.bf16.mxu0 0
      %1713 = vmatpush1.bf16.xpose.msra.mxu0 0
      %1714 = vmatprep.subr.bf16.mxu0 0
      %1715 = vmatpush1.bf16.xpose.msra.mxu0 0
      %1716 = vmatprep.subr.bf16.mxu0 0
      %1717 = vmatpush1.bf16.xpose.msra.mxu0 0
      %1718 = vmatprep.subr.bf16.mxu0 0
      %1719 = vmatpush1.bf16.xpose.msra.mxu0 0
      %1720 = vmatprep.subr.bf16.mxu0 0
      %1721 = vmatpush1.bf16.xpose.msra.mxu0 0
      %1722 = vmatprep.subr.bf16.mxu0 0
      %1723 = vmatpush1.bf16.xpose.msra.mxu0 0
      %1724 = vmatprep.subr.bf16.mxu0 0
      %1725 = vmatpush1.bf16.xpose.msra.mxu0 0
      %1726 = vmatprep.subr.bf16.mxu0 0
      %1727 = vmatpush1.bf16.xpose.msra.mxu0 0
      %1728 = vmatprep.subr.bf16.mxu0 0
      %1729 = vmatpush1.bf16.xpose.msra.mxu0 0
      %1730 = vmatprep.subr.bf16.mxu0 0
      %1731 = vmatpush1.bf16.xpose.msra.mxu0 0
      %1732 = vmatprep.subr.bf16.mxu0 0
      %1733 = vmatpush1.bf16.xpose.msra.mxu0 0
      %1734 = vmatprep.subr.bf16.mxu0 0
      %1735 = vmatpush1.bf16.xpose.msra.mxu0 0
      %1736 = vmatprep.subr.bf16.mxu0 0
      %1737 = vmatpush1.bf16.xpose.msra.mxu0 0
      %1738 = vmatprep.subr.bf16.mxu0 0
      %1739 = vmatpush1.bf16.xpose.msra.mxu0 0
      %1740 = vmatprep.subr.bf16.mxu0 0
      %1741 = vmatpush1.bf16.xpose.msra.mxu0 0
      %1742 = vmatprep.mubr.bf16.mxu0 0
      %1743 = vmatmul.mubr.bf16.gmra.mrb[0].mxu0 %v1705
      %v1744 = vpop.f32.mrb[0].mxu0
      %v1745 = vadd.f32 %v912, %v1744
      %v1746 = vpop.f32.mrb[0].mxu0
      %v1747 = vpop.f32.mrb[0].mxu0
      %v1748 = vpop.f32.mrb[0].mxu0
      %1749 = vdwg.mxu0
      %v1750 = vsel %vm991, %v1695, -inf
      %1751 = vmax.xlane.f32.xlu0 %v1750
      %v1752 = vpop.xlane.xlu0 %1751
      %v1753 = vsel %vm991, %v1745, -inf
      %1754 = vmax.xlane.f32.xlu0 %v1753
      %v1755 = vpop.xlane.xlu0 %1754
      %v1756 = vsub.f32 %v1695, %v1752
      %v1757 = vsub.f32 %v1745, %v1755
      %v1758 = vmul.f32 %v1756, 1.442695
      %v1759 = vpow.pop %v1758
      %v1760 = vmul.f32 %v1757, 1.442695
      %v1761 = vpow.pop %v1760
      %v1762 = vsel %vm991, %v1759, 0.0
      %1763 = vadd.xlane.f32.xlu0 %v1762
      %v1764 = vpop.xlane.xlu0 %1763
      %v1765 = vsel %vm991, %v1761, 0.0
      %1766 = vadd.xlane.f32.xlu0 %v1765
      %v1767 = vpop.xlane.xlu0 %1766
      %v1768 = vrcp.pop %v1764
      %v1769 = vrcp.pop %v1767
      %v1770 = vmul.f32 %v1759, %v1768
      %v1771 = vmul.f32 %v1761, %v1769
      %v1772 = vpack.c.bf16 %v1770, %v1770
      %v1773 = vpack.c.bf16 %v1771, %v1771
      %1774 = vrot.lane.b32.xlu0 %v986, 40
      %v1775 = vpop.permute.xlu0 %1774
      %v1777 = vsel %vm991, %v1772, 0
      %v1780 = vsel %vm1116, %v1775, 0
      %1782 = vmatprep.subr.bf16.mxu0 0
      %1783 = vmatpush1.bf16.msra.mxu0 %v1780
      %1784 = vmatprep.subr.bf16.mxu0 0
      %1785 = vmatpush1.bf16.msra.mxu0 0
      %1786 = vmatprep.subr.bf16.mxu0 0
      %1787 = vmatpush1.bf16.msra.mxu0 0
      %1788 = vmatprep.subr.bf16.mxu0 0
      %1789 = vmatpush1.bf16.msra.mxu0 0
      %1790 = vmatprep.subr.bf16.mxu0 0
      %1791 = vmatpush1.bf16.msra.mxu0 0
      %1792 = vmatprep.subr.bf16.mxu0 0
      %1793 = vmatpush1.bf16.msra.mxu0 0
      %1794 = vmatprep.subr.bf16.mxu0 0
      %1795 = vmatpush1.bf16.msra.mxu0 0
      %1796 = vmatprep.subr.bf16.mxu0 0
      %1797 = vmatpush1.bf16.msra.mxu0 0
      %1798 = vmatprep.subr.bf16.mxu0 0
      %1799 = vmatpush1.bf16.msra.mxu0 0
      %1800 = vmatprep.subr.bf16.mxu0 0
      %1801 = vmatpush1.bf16.msra.mxu0 0
      %1802 = vmatprep.subr.bf16.mxu0 0
      %1803 = vmatpush1.bf16.msra.mxu0 0
      %1804 = vmatprep.subr.bf16.mxu0 0
      %1805 = vmatpush1.bf16.msra.mxu0 0
      %1806 = vmatprep.subr.bf16.mxu0 0
      %1807 = vmatpush1.bf16.msra.mxu0 0
      %1808 = vmatprep.subr.bf16.mxu0 0
      %1809 = vmatpush1.bf16.msra.mxu0 0
      %1810 = vmatprep.subr.bf16.mxu0 0
      %1811 = vmatpush1.bf16.msra.mxu0 0
      %1812 = vmatprep.subr.bf16.mxu0 0
      %1813 = vmatpush1.bf16.msra.mxu0 0
      %1814 = vmatprep.mubr.bf16.mxu0 0
      %1815 = vmatmul.mubr.bf16.gmra.mrb[0].mxu0 %v1777
      %v1816 = vpop.f32.mrb[0].mxu0
      %v1817 = vadd.f32 0.0, %v1816
      %v1818 = vpop.f32.mrb[0].mxu0
      %v1819 = vpop.f32.mrb[0].mxu0
      %v1820 = vpop.f32.mrb[0].mxu0
      %1821 = vdwg.mxu0
      %1822 = vrot.lane.b32.xlu0 %v987, 40
      %v1823 = vpop.permute.xlu0 %1822
      %v1825 = vsel %vm991, %v1773, 0
      %v1828 = vsel %vm1116, %v1823, 0
      %1830 = vmatprep.subr.bf16.mxu0 0
      %1831 = vmatpush1.bf16.msra.mxu0 %v1828
      %1832 = vmatprep.subr.bf16.mxu0 0
      %1833 = vmatpush1.bf16.msra.mxu0 0
      %1834 = vmatprep.subr.bf16.mxu0 0
      %1835 = vmatpush1.bf16.msra.mxu0 0
      %1836 = vmatprep.subr.bf16.mxu0 0
      %1837 = vmatpush1.bf16.msra.mxu0 0
      %1838 = vmatprep.subr.bf16.mxu0 0
      %1839 = vmatpush1.bf16.msra.mxu0 0
      %1840 = vmatprep.subr.bf16.mxu0 0
      %1841 = vmatpush1.bf16.msra.mxu0 0
      %1842 = vmatprep.subr.bf16.mxu0 0
      %1843 = vmatpush1.bf16.msra.mxu0 0
      %1844 = vmatprep.subr.bf16.mxu0 0
      %1845 = vmatpush1.bf16.msra.mxu0 0
      %1846 = vmatprep.subr.bf16.mxu0 0
      %1847 = vmatpush1.bf16.msra.mxu0 0
      %1848 = vmatprep.subr.bf16.mxu0 0
      %1849 = vmatpush1.bf16.msra.mxu0 0
      %1850 = vmatprep.subr.bf16.mxu0 0
      %1851 = vmatpush1.bf16.msra.mxu0 0
      %1852 = vmatprep.subr.bf16.mxu0 0
      %1853 = vmatpush1.bf16.msra.mxu0 0
      %1854 = vmatprep.subr.bf16.mxu0 0
      %1855 = vmatpush1.bf16.msra.mxu0 0
      %1856 = vmatprep.subr.bf16.mxu0 0
      %1857 = vmatpush1.bf16.msra.mxu0 0
      %1858 = vmatprep.subr.bf16.mxu0 0
      %1859 = vmatpush1.bf16.msra.mxu0 0
      %1860 = vmatprep.subr.bf16.mxu0 0
      %1861 = vmatpush1.bf16.msra.mxu0 0
      %1862 = vmatprep.mubr.bf16.mxu0 0
      %1863 = vmatmul.mubr.bf16.gmra.mrb[0].mxu0 %v1825
      %v1864 = vpop.f32.mrb[0].mxu0
      %v1865 = vadd.f32 0.0, %v1864
      %v1866 = vpop.f32.mrb[0].mxu0
      %v1867 = vpop.f32.mrb[0].mxu0
      %v1868 = vpop.f32.mrb[0].mxu0
      %1869 = vdwg.mxu0
      %1872 = vrot.lane.b32.xlu0 %v1377, 8
      %v1873 = vpop.permute.xlu0 %1872
      %1874 = vrot.lane.b32.xlu0 %v1425, 8
      %v1875 = vpop.permute.xlu0 %1874
      %1880 = vrot.lane.b32.xlu0 %v1597, 16
      %v1881 = vpop.permute.xlu0 %1880
      %1882 = vrot.lane.b32.xlu0 %v1645, 16
      %v1883 = vpop.permute.xlu0 %1882
      %1888 = vrot.lane.b32.xlu0 %v1817, 24
      %v1889 = vpop.permute.xlu0 %1888
      %1890 = vrot.lane.b32.xlu0 %v1865, 24
      %v1891 = vpop.permute.xlu0 %1890
      %v1894 = vsel %vm991, %v1155, %v1873
      %v1895 = vsel %vm991, %v1203, %v1875
      %vm1896 = vcmask 130048
      %v1897 = vsel %vm1896, %v1894, %v1881
      %v1898 = vsel %vm1896, %v1895, %v1883
      %vm1899 = vcmask 195584
      %v1900 = vsel %vm1899, %v1897, %v1889
      %v1901 = vsel %vm1899, %v1898, %v1891
      %v1902 = vpack.c.bf16 %v1901, %v1900
      %v1903 = vld [vmem:[%s10] sm:$0xf]
      %v1904 = vld [vmem:[%s10 + $0x4] sm:$0xf]
      %v1905 = vld [vmem:[%s10 + $0x8] sm:$0xf]
      %v1906 = vld [vmem:[%s10 + $0xc] sm:$0xf]
      %v1907 = vld [vmem:[%s11] sm:$0x1]
      %v1909 = vlaneseq
      %v1910 = vshrl.u32 %v1909, 7
      %v1911 = vsub.s32 0, %v1910
      %v1912 = vrot.slane %v1907, %v1911
      %v1918 = vunpack.c.l.b16 %v1903
      %v1919 = vunpack.c.l.b16 %v1904
      %v1920 = vunpack.c.l.b16 %v1905
      %v1921 = vunpack.c.l.b16 %v1906
      %v1922 = vpack.c.b16 %v1919, %v1918
      %v1923 = vpack.c.b16 %v1921, %v1920
      %v1927 = vsel %vm937, %v1902, 0
      %1929 = vmatprep.subr.bf16.mxu0 0
      %1930 = vmatpush1.bf16.msra.mxu0 %v1922
      %1931 = vmatprep.subr.bf16.mxu0 0
      %1932 = vmatpush1.bf16.msra.mxu0 %v1923
      %1933 = vmatprep.subr.bf16.mxu0 0
      %1934 = vmatpush1.bf16.msra.mxu0 0
      %1935 = vmatprep.subr.bf16.mxu0 0
      %1936 = vmatpush1.bf16.msra.mxu0 0
      %1937 = vmatprep.subr.bf16.mxu0 0
      %1938 = vmatpush1.bf16.msra.mxu0 0
      %1939 = vmatprep.subr.bf16.mxu0 0
      %1940 = vmatpush1.bf16.msra.mxu0 0
      %1941 = vmatprep.subr.bf16.mxu0 0
      %1942 = vmatpush1.bf16.msra.mxu0 0
      %1943 = vmatprep.subr.bf16.mxu0 0
      %1944 = vmatpush1.bf16.msra.mxu0 0
      %1945 = vmatprep.subr.bf16.mxu0 0
      %1946 = vmatpush1.bf16.msra.mxu0 0
      %1947 = vmatprep.subr.bf16.mxu0 0
      %1948 = vmatpush1.bf16.msra.mxu0 0
      %1949 = vmatprep.subr.bf16.mxu0 0
      %1950 = vmatpush1.bf16.msra.mxu0 0
      %1951 = vmatprep.subr.bf16.mxu0 0
      %1952 = vmatpush1.bf16.msra.mxu0 0
      %1953 = vmatprep.subr.bf16.mxu0 0
      %1954 = vmatpush1.bf16.msra.mxu0 0
      %1955 = vmatprep.subr.bf16.mxu0 0
      %1956 = vmatpush1.bf16.msra.mxu0 0
      %1957 = vmatprep.subr.bf16.mxu0 0
      %1958 = vmatpush1.bf16.msra.mxu0 0
      %1959 = vmatprep.subr.bf16.mxu0 0
      %1960 = vmatpush1.bf16.msra.mxu0 0
      %1961 = vmatprep.mubr.bf16.mxu0 0
      %1962 = vmatmul.mubr.bf16.gmra.mrb[0].mxu0 %v1927
      %v1963 = vpop.f32.mrb[0].mxu0
      %v1964 = vadd.f32 %v1912, %v1963
      %v1965 = vpop.f32.mrb[0].mxu0
      %v1966 = vpop.f32.mrb[0].mxu0
      %v1967 = vadd.f32 %v1912, %v1966
      %v1968 = vpop.f32.mrb[0].mxu0
      %1969 = vdwg.mxu0
      %v1970 = vadd.f32 %v910, %v1964
      %v1971 = vadd.f32 %v911, %v1967
      %v1972 = vld [vmem:[%s16] sm:$0x1]
      %v1973 = vld [vmem:[%s17] sm:$0x1]
      %v1974 = vsel %vm937, %v1970, 0.0
      %1975 = vadd.xlane.f32.xlu0 %v1974
      %v1976 = vpop.xlane.xlu0 %1975
      %v1977 = vsel %vm937, %v1971, 0.0
      %1978 = vadd.xlane.f32.xlu0 %v1977
      %v1979 = vpop.xlane.xlu0 %1978
      %v1980 = vrcp.pop 32.0
      %v1981 = vmul.f32 %v1976, %v1980
      %v1982 = vmul.f32 %v1979, %v1980
      %v1983 = vsub.f32 %v1970, %v1981
      %v1984 = vsub.f32 %v1971, %v1982
      %v1985 = vmul.f32 %v1983, %v1983
      %v1986 = vmul.f32 %v1984, %v1984
      %v1987 = vsel %vm937, %v1985, 0.0
      %1988 = vadd.xlane.f32.xlu0 %v1987
      %v1989 = vpop.xlane.xlu0 %1988
      %v1990 = vsel %vm937, %v1986, 0.0
      %1991 = vadd.xlane.f32.xlu0 %v1990
      %v1992 = vpop.xlane.xlu0 %1991
      %v1993 = vmul.f32 %v1989, %v1980
      %v1994 = vmul.f32 %v1992, %v1980
      %v1995 = vadd.f32 %v1993, 1e-05
      %v1996 = vadd.f32 %v1994, 1e-05
      %v1997 = vrsqrt.pop %v1995
      %v1998 = vrsqrt.pop %v1996
      %v1999 = vmul.f32 %v1983, %v1997
      %v2000 = vmul.f32 %v1984, %v1998
      %v2002 = vlaneseq
      %v2003 = vshrl.u32 %v2002, 7
      %v2004 = vsub.s32 0, %v2003
      %v2005 = vrot.slane %v1972, %v2004
      %v2007 = vmul.f32 %v1999, %v2005
      %v2008 = vmul.f32 %v2000, %v2005
      %v2010 = vlaneseq
      %v2011 = vshrl.u32 %v2010, 7
      %v2012 = vsub.s32 0, %v2011
      %v2013 = vrot.slane %v1973, %v2012
      %v2015 = vadd.f32 %v2007, %v2013
      %v2016 = vadd.f32 %v2008, %v2013
      %v2017 = vpack.c.bf16 %v2016, %v2015
      %v2018 = vld [vmem:[%s12] sm:$0xf]
      %v2019 = vld [vmem:[%s12 + $0x4] sm:$0xf]
      %v2020 = vld [vmem:[%s12 + $0x8] sm:$0xf]
      %v2021 = vld [vmem:[%s12 + $0xc] sm:$0xf]
      %v2022 = vld [vmem:[%s13] sm:$0x1]
      %v2024 = vlaneseq
      %v2025 = vshrl.u32 %v2024, 7
      %v2026 = vsub.s32 0, %v2025
      %v2027 = vrot.slane %v2022, %v2026
      %v2033 = vunpack.c.l.b16 %v2018
      %v2034 = vunpack.c.l.b16 %v2019
      %v2035 = vunpack.c.l.b16 %v2020
      %v2036 = vunpack.c.l.b16 %v2021
      %v2037 = vpack.c.b16 %v2034, %v2033
      %v2038 = vpack.c.b16 %v2036, %v2035
      %v2042 = vsel %vm937, %v2017, 0
      %2044 = vmatprep.subr.bf16.mxu0 0
      %2045 = vmatpush1.bf16.msra.mxu0 %v2037
      %2046 = vmatprep.subr.bf16.mxu0 0
      %2047 = vmatpush1.bf16.msra.mxu0 %v2038
      %2048 = vmatprep.subr.bf16.mxu0 0
      %2049 = vmatpush1.bf16.msra.mxu0 0
      %2050 = vmatprep.subr.bf16.mxu0 0
      %2051 = vmatpush1.bf16.msra.mxu0 0
      %2052 = vmatprep.subr.bf16.mxu0 0
      %2053 = vmatpush1.bf16.msra.mxu0 0
      %2054 = vmatprep.subr.bf16.mxu0 0
      %2055 = vmatpush1.bf16.msra.mxu0 0
      %2056 = vmatprep.subr.bf16.mxu0 0
      %2057 = vmatpush1.bf16.msra.mxu0 0
      %2058 = vmatprep.subr.bf16.mxu0 0
      %2059 = vmatpush1.bf16.msra.mxu0 0
      %2060 = vmatprep.subr.bf16.mxu0 0
      %2061 = vmatpush1.bf16.msra.mxu0 0
      %2062 = vmatprep.subr.bf16.mxu0 0
      %2063 = vmatpush1.bf16.msra.mxu0 0
      %2064 = vmatprep.subr.bf16.mxu0 0
      %2065 = vmatpush1.bf16.msra.mxu0 0
      %2066 = vmatprep.subr.bf16.mxu0 0
      %2067 = vmatpush1.bf16.msra.mxu0 0
      %2068 = vmatprep.subr.bf16.mxu0 0
      %2069 = vmatpush1.bf16.msra.mxu0 0
      %2070 = vmatprep.subr.bf16.mxu0 0
      %2071 = vmatpush1.bf16.msra.mxu0 0
      %2072 = vmatprep.subr.bf16.mxu0 0
      %2073 = vmatpush1.bf16.msra.mxu0 0
      %2074 = vmatprep.subr.bf16.mxu0 0
      %2075 = vmatpush1.bf16.msra.mxu0 0
      %2076 = vmatprep.mubr.bf16.mxu0 0
      %2077 = vmatmul.mubr.bf16.gmra.mrb[0].mxu0 %v2042
      %v2078 = vpop.f32.mrb[0].mxu0
      %v2079 = vadd.f32 %v2027, %v2078
      %v2080 = vpop.f32.mrb[0].mxu0
      %v2081 = vpop.f32.mrb[0].mxu0
      %v2082 = vadd.f32 %v2027, %v2081
      %v2083 = vpop.f32.mrb[0].mxu0
      %2084 = vdwg.mxu0
      %v2085 = vmax.f32 %v2079, 0.0
      %v2086 = vmax.f32 %v2082, 0.0
      %v2087 = vpack.c.bf16 %v2086, %v2085
      %v2088 = vld [vmem:[%s14] sm:$0xf]
      %v2089 = vld [vmem:[%s14 + $0x4] sm:$0xf]
      %v2090 = vld [vmem:[%s14 + $0x8] sm:$0xf]
      %v2091 = vld [vmem:[%s14 + $0xc] sm:$0xf]
      %v2092 = vld [vmem:[%s14 + $0x10] sm:$0xf]
      %v2093 = vld [vmem:[%s14 + $0x14] sm:$0xf]
      %v2094 = vld [vmem:[%s14 + $0x18] sm:$0xf]
      %v2095 = vld [vmem:[%s14 + $0x1c] sm:$0xf]
      %v2096 = vld [vmem:[%s14 + $0x20] sm:$0xf]
      %v2097 = vld [vmem:[%s14 + $0x24] sm:$0xf]
      %v2098 = vld [vmem:[%s14 + $0x28] sm:$0xf]
      %v2099 = vld [vmem:[%s14 + $0x2c] sm:$0xf]
      %v2100 = vld [vmem:[%s14 + $0x30] sm:$0xf]
      %v2101 = vld [vmem:[%s14 + $0x34] sm:$0xf]
      %v2102 = vld [vmem:[%s14 + $0x38] sm:$0xf]
      %v2103 = vld [vmem:[%s14 + $0x3c] sm:$0xf]
      %v2104 = vld [vmem:[%s15] sm:$0x1]
      %v2106 = vlaneseq
      %v2107 = vshrl.u32 %v2106, 7
      %v2108 = vsub.s32 0, %v2107
      %v2109 = vrot.slane %v2104, %v2108
      %v2127 = vunpack.c.l.b16 %v2088
      %v2128 = vunpack.c.l.b16 %v2089
      %v2129 = vunpack.c.l.b16 %v2090
      %v2130 = vunpack.c.l.b16 %v2091
      %v2131 = vunpack.c.l.b16 %v2092
      %v2132 = vunpack.c.l.b16 %v2093
      %v2133 = vunpack.c.l.b16 %v2094
      %v2134 = vunpack.c.l.b16 %v2095
      %v2135 = vunpack.c.l.b16 %v2096
      %v2136 = vunpack.c.l.b16 %v2097
      %v2137 = vunpack.c.l.b16 %v2098
      %v2138 = vunpack.c.l.b16 %v2099
      %v2139 = vunpack.c.l.b16 %v2100
      %v2140 = vunpack.c.l.b16 %v2101
      %v2141 = vunpack.c.l.b16 %v2102
      %v2142 = vunpack.c.l.b16 %v2103
      %v2143 = vpack.c.b16 %v2128, %v2127
      %v2144 = vpack.c.b16 %v2130, %v2129
      %v2145 = vpack.c.b16 %v2132, %v2131
      %v2146 = vpack.c.b16 %v2134, %v2133
      %v2147 = vpack.c.b16 %v2136, %v2135
      %v2148 = vpack.c.b16 %v2138, %v2137
      %v2149 = vpack.c.b16 %v2140, %v2139
      %v2150 = vpack.c.b16 %v2142, %v2141
      %2159 = vmatprep.subr.bf16.mxu0 0
      %2160 = vmatpush1.bf16.msra.mxu0 %v2143
      %2161 = vmatprep.subr.bf16.mxu0 0
      %2162 = vmatpush1.bf16.msra.mxu0 %v2144
      %2163 = vmatprep.subr.bf16.mxu0 0
      %2164 = vmatpush1.bf16.msra.mxu0 %v2145
      %2165 = vmatprep.subr.bf16.mxu0 0
      %2166 = vmatpush1.bf16.msra.mxu0 %v2146
      %2167 = vmatprep.subr.bf16.mxu0 0
      %2168 = vmatpush1.bf16.msra.mxu0 %v2147
      %2169 = vmatprep.subr.bf16.mxu0 0
      %2170 = vmatpush1.bf16.msra.mxu0 %v2148
      %2171 = vmatprep.subr.bf16.mxu0 0
      %2172 = vmatpush1.bf16.msra.mxu0 %v2149
      %2173 = vmatprep.subr.bf16.mxu0 0
      %2174 = vmatpush1.bf16.msra.mxu0 %v2150
      %2175 = vmatprep.subr.bf16.mxu0 0
      %2176 = vmatpush1.bf16.msra.mxu0 0
      %2177 = vmatprep.subr.bf16.mxu0 0
      %2178 = vmatpush1.bf16.msra.mxu0 0
      %2179 = vmatprep.subr.bf16.mxu0 0
      %2180 = vmatpush1.bf16.msra.mxu0 0
      %2181 = vmatprep.subr.bf16.mxu0 0
      %2182 = vmatpush1.bf16.msra.mxu0 0
      %2183 = vmatprep.subr.bf16.mxu0 0
      %2184 = vmatpush1.bf16.msra.mxu0 0
      %2185 = vmatprep.subr.bf16.mxu0 0
      %2186 = vmatpush1.bf16.msra.mxu0 0
      %2187 = vmatprep.subr.bf16.mxu0 0
      %2188 = vmatpush1.bf16.msra.mxu0 0
      %2189 = vmatprep.subr.bf16.mxu0 0
      %2190 = vmatpush1.bf16.msra.mxu0 0
      %2191 = vmatprep.mubr.bf16.mxu0 0
      %2192 = vmatmul.mubr.bf16.gmra.mrb[0].mxu0 %v2087
      %v2193 = vpop.f32.mrb[0].mxu0
      %v2194 = vadd.f32 %v2109, %v2193
      %v2195 = vpop.f32.mrb[0].mxu0
      %v2196 = vpop.f32.mrb[0].mxu0
      %v2197 = vadd.f32 %v2109, %v2196
      %v2198 = vpop.f32.mrb[0].mxu0
      %2199 = vdwg.mxu0
      %v2200 = vadd.f32 %v2015, %v2194
      %v2201 = vadd.f32 %v2016, %v2197
      %v2202 = vld [vmem:[%s18] sm:$0x1]
      %v2203 = vld [vmem:[%s19] sm:$0x1]
      %v2204 = vsel %vm937, %v2200, 0.0
      %2205 = vadd.xlane.f32.xlu0 %v2204
      %v2206 = vpop.xlane.xlu0 %2205
      %v2207 = vsel %vm937, %v2201, 0.0
      %2208 = vadd.xlane.f32.xlu0 %v2207
      %v2209 = vpop.xlane.xlu0 %2208
      %v2210 = vmul.f32 %v2206, %v1980
      %v2211 = vmul.f32 %v2209, %v1980
      %v2212 = vsub.f32 %v2200, %v2210
      %v2213 = vsub.f32 %v2201, %v2211
      %v2214 = vmul.f32 %v2212, %v2212
      %v2215 = vmul.f32 %v2213, %v2213
      %v2216 = vsel %vm937, %v2214, 0.0
      %2217 = vadd.xlane.f32.xlu0 %v2216
      %v2218 = vpop.xlane.xlu0 %2217
      %v2219 = vsel %vm937, %v2215, 0.0
      %2220 = vadd.xlane.f32.xlu0 %v2219
      %v2221 = vpop.xlane.xlu0 %2220
      %v2222 = vmul.f32 %v2218, %v1980
      %v2223 = vmul.f32 %v2221, %v1980
      %v2224 = vadd.f32 %v2222, 1e-05
      %v2225 = vadd.f32 %v2223, 1e-05
      %v2226 = vrsqrt.pop %v2224
      %v2227 = vrsqrt.pop %v2225
      %v2228 = vmul.f32 %v2212, %v2226
      %v2229 = vmul.f32 %v2213, %v2227
      %v2231 = vlaneseq
      %v2232 = vshrl.u32 %v2231, 7
      %v2233 = vsub.s32 0, %v2232
      %v2234 = vrot.slane %v2202, %v2233
      %v2236 = vmul.f32 %v2228, %v2234
      %v2237 = vmul.f32 %v2229, %v2234
      %v2239 = vlaneseq
      %v2240 = vshrl.u32 %v2239, 7
      %v2241 = vsub.s32 0, %v2240
      %v2242 = vrot.slane %v2203, %v2241
      %v2244 = vadd.f32 %v2236, %v2242
      %v2245 = vadd.f32 %v2237, %v2242
      %v2246 = vpack.c.bf16 %v2245, %v2244
      %s2247 = scalar_lea.vmem %s8, 16
      %v2248 = vld [vmem:[%s2247] sm:$0xf]
      %v2249 = vld [vmem:[%s2247 + $0x4] sm:$0xf]
      %v2250 = vld [vmem:[%s2247 + $0x8] sm:$0xf]
      %v2251 = vld [vmem:[%s2247 + $0xc] sm:$0xf]
      %s2252 = scalar_lea.vmem %s9, 1
      %v2253 = vld [vmem:[%s2252] sm:$0x1]
      %v2255 = vlaneseq
      %v2256 = vshrl.u32 %v2255, 7
      %v2257 = vsub.s32 0, %v2256
      %v2258 = vrot.slane %v2253, %v2257
      %v2264 = vunpack.c.l.b16 %v2248
      %v2265 = vunpack.c.l.b16 %v2249
      %v2266 = vunpack.c.l.b16 %v2250
      %v2267 = vunpack.c.l.b16 %v2251
      %v2268 = vpack.c.b16 %v2265, %v2264
      %v2269 = vpack.c.b16 %v2267, %v2266
      %v2273 = vsel %vm937, %v2246, 0
      %2275 = vmatprep.subr.bf16.mxu0 0
      %2276 = vmatpush1.bf16.msra.mxu0 %v2268
      %2277 = vmatprep.subr.bf16.mxu0 0
      %2278 = vmatpush1.bf16.msra.mxu0 %v2269
      %2279 = vmatprep.subr.bf16.mxu0 0
      %2280 = vmatpush1.bf16.msra.mxu0 0
      %2281 = vmatprep.subr.bf16.mxu0 0
      %2282 = vmatpush1.bf16.msra.mxu0 0
      %2283 = vmatprep.subr.bf16.mxu0 0
      %2284 = vmatpush1.bf16.msra.mxu0 0
      %2285 = vmatprep.subr.bf16.mxu0 0
      %2286 = vmatpush1.bf16.msra.mxu0 0
      %2287 = vmatprep.subr.bf16.mxu0 0
      %2288 = vmatpush1.bf16.msra.mxu0 0
      %2289 = vmatprep.subr.bf16.mxu0 0
      %2290 = vmatpush1.bf16.msra.mxu0 0
      %2291 = vmatprep.subr.bf16.mxu0 0
      %2292 = vmatpush1.bf16.msra.mxu0 0
      %2293 = vmatprep.subr.bf16.mxu0 0
      %2294 = vmatpush1.bf16.msra.mxu0 0
      %2295 = vmatprep.subr.bf16.mxu0 0
      %2296 = vmatpush1.bf16.msra.mxu0 0
      %2297 = vmatprep.subr.bf16.mxu0 0
      %2298 = vmatpush1.bf16.msra.mxu0 0
      %2299 = vmatprep.subr.bf16.mxu0 0
      %2300 = vmatpush1.bf16.msra.mxu0 0
      %2301 = vmatprep.subr.bf16.mxu0 0
      %2302 = vmatpush1.bf16.msra.mxu0 0
      %2303 = vmatprep.subr.bf16.mxu0 0
      %2304 = vmatpush1.bf16.msra.mxu0 0
      %2305 = vmatprep.subr.bf16.mxu0 0
      %2306 = vmatpush1.bf16.msra.mxu0 0
      %2307 = vmatprep.mubr.bf16.mxu0 0
      %2308 = vmatmul.mubr.bf16.gmra.mrb[0].mxu0 %v2273
      %v2309 = vpop.f32.mrb[0].mxu0
      %v2310 = vadd.f32 %v2258, %v2309
      %v2311 = vpop.f32.mrb[0].mxu0
      %v2312 = vpop.f32.mrb[0].mxu0
      %v2313 = vadd.f32 %v2258, %v2312
      %v2314 = vpop.f32.mrb[0].mxu0
      %2315 = vdwg.mxu0
      %v2316 = vmul.f32 %v2310, 0.35355338
      %v2317 = vmul.f32 %v2313, 0.35355338
      %v2318 = vpack.c.bf16 %v2316, %v2316
      %v2319 = vpack.c.bf16 %v2317, %v2317
      %v2320 = vpack.c.bf16 %v2310, %v2310
      %v2321 = vpack.c.bf16 %v2313, %v2313
      %2323 = vrot.lane.b32.xlu0 %v2320, 96
      %v2324 = vpop.permute.xlu0 %2323
      %v2326 = vsel %vm991, %v2318, 0
      %v2329 = vsel %vm991, %v2324, 0
      %2331 = vmatprep.subr.bf16.mxu0 0
      %2332 = vmatpush1.bf16.xpose.msra.mxu0 %v2329
      %2333 = vmatprep.subr.bf16.mxu0 0
      %2334 = vmatpush1.bf16.xpose.msra.mxu0 0
      %2335 = vmatprep.subr.bf16.mxu0 0
      %2336 = vmatpush1.bf16.xpose.msra.mxu0 0
      %2337 = vmatprep.subr.bf16.mxu0 0
      %2338 = vmatpush1.bf16.xpose.msra.mxu0 0
      %2339 = vmatprep.subr.bf16.mxu0 0
      %2340 = vmatpush1.bf16.xpose.msra.mxu0 0
      %2341 = vmatprep.subr.bf16.mxu0 0
      %2342 = vmatpush1.bf16.xpose.msra.mxu0 0
      %2343 = vmatprep.subr.bf16.mxu0 0
      %2344 = vmatpush1.bf16.xpose.msra.mxu0 0
      %2345 = vmatprep.subr.bf16.mxu0 0
      %2346 = vmatpush1.bf16.xpose.msra.mxu0 0
      %2347 = vmatprep.subr.bf16.mxu0 0
      %2348 = vmatpush1.bf16.xpose.msra.mxu0 0
      %2349 = vmatprep.subr.bf16.mxu0 0
      %2350 = vmatpush1.bf16.xpose.msra.mxu0 0
      %2351 = vmatprep.subr.bf16.mxu0 0
      %2352 = vmatpush1.bf16.xpose.msra.mxu0 0
      %2353 = vmatprep.subr.bf16.mxu0 0
      %2354 = vmatpush1.bf16.xpose.msra.mxu0 0
      %2355 = vmatprep.subr.bf16.mxu0 0
      %2356 = vmatpush1.bf16.xpose.msra.mxu0 0
      %2357 = vmatprep.subr.bf16.mxu0 0
      %2358 = vmatpush1.bf16.xpose.msra.mxu0 0
      %2359 = vmatprep.subr.bf16.mxu0 0
      %2360 = vmatpush1.bf16.xpose.msra.mxu0 0
      %2361 = vmatprep.subr.bf16.mxu0 0
      %2362 = vmatpush1.bf16.xpose.msra.mxu0 0
      %2363 = vmatprep.mubr.bf16.mxu0 0
      %2364 = vmatmul.mubr.bf16.gmra.mrb[0].mxu0 %v2326
      %v2365 = vpop.f32.mrb[0].mxu0
      %v2366 = vadd.f32 %v912, %v2365
      %v2367 = vpop.f32.mrb[0].mxu0
      %v2368 = vpop.f32.mrb[0].mxu0
      %v2369 = vpop.f32.mrb[0].mxu0
      %2370 = vdwg.mxu0
      %2372 = vrot.lane.b32.xlu0 %v2321, 96
      %v2373 = vpop.permute.xlu0 %2372
      %v2375 = vsel %vm991, %v2319, 0
      %v2378 = vsel %vm991, %v2373, 0
      %2380 = vmatprep.subr.bf16.mxu0 0
      %2381 = vmatpush1.bf16.xpose.msra.mxu0 %v2378
      %2382 = vmatprep.subr.bf16.mxu0 0
      %2383 = vmatpush1.bf16.xpose.msra.mxu0 0
      %2384 = vmatprep.subr.bf16.mxu0 0
      %2385 = vmatpush1.bf16.xpose.msra.mxu0 0
      %2386 = vmatprep.subr.bf16.mxu0 0
      %2387 = vmatpush1.bf16.xpose.msra.mxu0 0
      %2388 = vmatprep.subr.bf16.mxu0 0
      %2389 = vmatpush1.bf16.xpose.msra.mxu0 0
      %2390 = vmatprep.subr.bf16.mxu0 0
      %2391 = vmatpush1.bf16.xpose.msra.mxu0 0
      %2392 = vmatprep.subr.bf16.mxu0 0
      %2393 = vmatpush1.bf16.xpose.msra.mxu0 0
      %2394 = vmatprep.subr.bf16.mxu0 0
      %2395 = vmatpush1.bf16.xpose.msra.mxu0 0
      %2396 = vmatprep.subr.bf16.mxu0 0
      %2397 = vmatpush1.bf16.xpose.msra.mxu0 0
      %2398 = vmatprep.subr.bf16.mxu0 0
      %2399 = vmatpush1.bf16.xpose.msra.mxu0 0
      %2400 = vmatprep.subr.bf16.mxu0 0
      %2401 = vmatpush1.bf16.xpose.msra.mxu0 0
      %2402 = vmatprep.subr.bf16.mxu0 0
      %2403 = vmatpush1.bf16.xpose.msra.mxu0 0
      %2404 = vmatprep.subr.bf16.mxu0 0
      %2405 = vmatpush1.bf16.xpose.msra.mxu0 0
      %2406 = vmatprep.subr.bf16.mxu0 0
      %2407 = vmatpush1.bf16.xpose.msra.mxu0 0
      %2408 = vmatprep.subr.bf16.mxu0 0
      %2409 = vmatpush1.bf16.xpose.msra.mxu0 0
      %2410 = vmatprep.subr.bf16.mxu0 0
      %2411 = vmatpush1.bf16.xpose.msra.mxu0 0
      %2412 = vmatprep.mubr.bf16.mxu0 0
      %2413 = vmatmul.mubr.bf16.gmra.mrb[0].mxu0 %v2375
      %v2414 = vpop.f32.mrb[0].mxu0
      %v2415 = vadd.f32 %v912, %v2414
      %v2416 = vpop.f32.mrb[0].mxu0
      %v2417 = vpop.f32.mrb[0].mxu0
      %v2418 = vpop.f32.mrb[0].mxu0
      %2419 = vdwg.mxu0
      %v2420 = vsel %vm991, %v2366, -inf
      %2421 = vmax.xlane.f32.xlu0 %v2420
      %v2422 = vpop.xlane.xlu0 %2421
      %v2423 = vsel %vm991, %v2415, -inf
      %2424 = vmax.xlane.f32.xlu0 %v2423
      %v2425 = vpop.xlane.xlu0 %2424
      %v2426 = vsub.f32 %v2366, %v2422
      %v2427 = vsub.f32 %v2415, %v2425
      %v2428 = vmul.f32 %v2426, 1.442695
      %v2429 = vpow.pop %v2428
      %v2430 = vmul.f32 %v2427, 1.442695
      %v2431 = vpow.pop %v2430
      %v2432 = vsel %vm991, %v2429, 0.0
      %2433 = vadd.xlane.f32.xlu0 %v2432
      %v2434 = vpop.xlane.xlu0 %2433
      %v2435 = vsel %vm991, %v2431, 0.0
      %2436 = vadd.xlane.f32.xlu0 %v2435
      %v2437 = vpop.xlane.xlu0 %2436
      %v2438 = vrcp.pop %v2434
      %v2439 = vrcp.pop %v2437
      %v2440 = vmul.f32 %v2429, %v2438
      %v2441 = vmul.f32 %v2431, %v2439
      %v2442 = vpack.c.bf16 %v2440, %v2440
      %v2443 = vpack.c.bf16 %v2441, %v2441
      %2444 = vrot.lane.b32.xlu0 %v2320, 64
      %v2445 = vpop.permute.xlu0 %2444
      %v2447 = vsel %vm991, %v2442, 0
      %v2450 = vsel %vm1116, %v2445, 0
      %2452 = vmatprep.subr.bf16.mxu0 0
      %2453 = vmatpush1.bf16.msra.mxu0 %v2450
      %2454 = vmatprep.subr.bf16.mxu0 0
      %2455 = vmatpush1.bf16.msra.mxu0 0
      %2456 = vmatprep.subr.bf16.mxu0 0
      %2457 = vmatpush1.bf16.msra.mxu0 0
      %2458 = vmatprep.subr.bf16.mxu0 0
      %2459 = vmatpush1.bf16.msra.mxu0 0
      %2460 = vmatprep.subr.bf16.mxu0 0
      %2461 = vmatpush1.bf16.msra.mxu0 0
      %2462 = vmatprep.subr.bf16.mxu0 0
      %2463 = vmatpush1.bf16.msra.mxu0 0
      %2464 = vmatprep.subr.bf16.mxu0 0
      %2465 = vmatpush1.bf16.msra.mxu0 0
      %2466 = vmatprep.subr.bf16.mxu0 0
      %2467 = vmatpush1.bf16.msra.mxu0 0
      %2468 = vmatprep.subr.bf16.mxu0 0
      %2469 = vmatpush1.bf16.msra.mxu0 0
      %2470 = vmatprep.subr.bf16.mxu0 0
      %2471 = vmatpush1.bf16.msra.mxu0 0
      %2472 = vmatprep.subr.bf16.mxu0 0
      %2473 = vmatpush1.bf16.msra.mxu0 0
      %2474 = vmatprep.subr.bf16.mxu0 0
      %2475 = vmatpush1.bf16.msra.mxu0 0
      %2476 = vmatprep.subr.bf16.mxu0 0
      %2477 = vmatpush1.bf16.msra.mxu0 0
      %2478 = vmatprep.subr.bf16.mxu0 0
      %2479 = vmatpush1.bf16.msra.mxu0 0
      %2480 = vmatprep.subr.bf16.mxu0 0
      %2481 = vmatpush1.bf16.msra.mxu0 0
      %2482 = vmatprep.subr.bf16.mxu0 0
      %2483 = vmatpush1.bf16.msra.mxu0 0
      %2484 = vmatprep.mubr.bf16.mxu0 0
      %2485 = vmatmul.mubr.bf16.gmra.mrb[0].mxu0 %v2447
      %v2486 = vpop.f32.mrb[0].mxu0
      %v2487 = vadd.f32 0.0, %v2486
      %v2488 = vpop.f32.mrb[0].mxu0
      %v2489 = vpop.f32.mrb[0].mxu0
      %v2490 = vpop.f32.mrb[0].mxu0
      %2491 = vdwg.mxu0
      %2492 = vrot.lane.b32.xlu0 %v2321, 64
      %v2493 = vpop.permute.xlu0 %2492
      %v2495 = vsel %vm991, %v2443, 0
      %v2498 = vsel %vm1116, %v2493, 0
      %2500 = vmatprep.subr.bf16.mxu0 0
      %2501 = vmatpush1.bf16.msra.mxu0 %v2498
      %2502 = vmatprep.subr.bf16.mxu0 0
      %2503 = vmatpush1.bf16.msra.mxu0 0
      %2504 = vmatprep.subr.bf16.mxu0 0
      %2505 = vmatpush1.bf16.msra.mxu0 0
      %2506 = vmatprep.subr.bf16.mxu0 0
      %2507 = vmatpush1.bf16.msra.mxu0 0
      %2508 = vmatprep.subr.bf16.mxu0 0
      %2509 = vmatpush1.bf16.msra.mxu0 0
      %2510 = vmatprep.subr.bf16.mxu0 0
      %2511 = vmatpush1.bf16.msra.mxu0 0
      %2512 = vmatprep.subr.bf16.mxu0 0
      %2513 = vmatpush1.bf16.msra.mxu0 0
      %2514 = vmatprep.subr.bf16.mxu0 0
      %2515 = vmatpush1.bf16.msra.mxu0 0
      %2516 = vmatprep.subr.bf16.mxu0 0
      %2517 = vmatpush1.bf16.msra.mxu0 0
      %2518 = vmatprep.subr.bf16.mxu0 0
      %2519 = vmatpush1.bf16.msra.mxu0 0
      %2520 = vmatprep.subr.bf16.mxu0 0
      %2521 = vmatpush1.bf16.msra.mxu0 0
      %2522 = vmatprep.subr.bf16.mxu0 0
      %2523 = vmatpush1.bf16.msra.mxu0 0
      %2524 = vmatprep.subr.bf16.mxu0 0
      %2525 = vmatpush1.bf16.msra.mxu0 0
      %2526 = vmatprep.subr.bf16.mxu0 0
      %2527 = vmatpush1.bf16.msra.mxu0 0
      %2528 = vmatprep.subr.bf16.mxu0 0
      %2529 = vmatpush1.bf16.msra.mxu0 0
      %2530 = vmatprep.subr.bf16.mxu0 0
      %2531 = vmatpush1.bf16.msra.mxu0 0
      %2532 = vmatprep.mubr.bf16.mxu0 0
      %2533 = vmatmul.mubr.bf16.gmra.mrb[0].mxu0 %v2495
      %v2534 = vpop.f32.mrb[0].mxu0
      %v2535 = vadd.f32 0.0, %v2534
      %v2536 = vpop.f32.mrb[0].mxu0
      %v2537 = vpop.f32.mrb[0].mxu0
      %v2538 = vpop.f32.mrb[0].mxu0
      %2539 = vdwg.mxu0
      %2541 = vrot.lane.b32.xlu0 %v2318, 120
      %v2542 = vpop.permute.xlu0 %2541
      %2543 = vrot.lane.b32.xlu0 %v2320, 88
      %v2544 = vpop.permute.xlu0 %2543
      %v2546 = vsel %vm991, %v2542, 0
      %v2549 = vsel %vm991, %v2544, 0
      %2551 = vmatprep.subr.bf16.mxu0 0
      %2552 = vmatpush1.bf16.xpose.msra.mxu0 %v2549
      %2553 = vmatprep.subr.bf16.mxu0 0
      %2554 = vmatpush1.bf16.xpose.msra.mxu0 0
      %2555 = vmatprep.subr.bf16.mxu0 0
      %2556 = vmatpush1.bf16.xpose.msra.mxu0 0
      %2557 = vmatprep.subr.bf16.mxu0 0
      %2558 = vmatpush1.bf16.xpose.msra.mxu0 0
      %2559 = vmatprep.subr.bf16.mxu0 0
      %2560 = vmatpush1.bf16.xpose.msra.mxu0 0
      %2561 = vmatprep.subr.bf16.mxu0 0
      %2562 = vmatpush1.bf16.xpose.msra.mxu0 0
      %2563 = vmatprep.subr.bf16.mxu0 0
      %2564 = vmatpush1.bf16.xpose.msra.mxu0 0
      %2565 = vmatprep.subr.bf16.mxu0 0
      %2566 = vmatpush1.bf16.xpose.msra.mxu0 0
      %2567 = vmatprep.subr.bf16.mxu0 0
      %2568 = vmatpush1.bf16.xpose.msra.mxu0 0
      %2569 = vmatprep.subr.bf16.mxu0 0
      %2570 = vmatpush1.bf16.xpose.msra.mxu0 0
      %2571 = vmatprep.subr.bf16.mxu0 0
      %2572 = vmatpush1.bf16.xpose.msra.mxu0 0
      %2573 = vmatprep.subr.bf16.mxu0 0
      %2574 = vmatpush1.bf16.xpose.msra.mxu0 0
      %2575 = vmatprep.subr.bf16.mxu0 0
      %2576 = vmatpush1.bf16.xpose.msra.mxu0 0
      %2577 = vmatprep.subr.bf16.mxu0 0
      %2578 = vmatpush1.bf16.xpose.msra.mxu0 0
      %2579 = vmatprep.subr.bf16.mxu0 0
      %2580 = vmatpush1.bf16.xpose.msra.mxu0 0
      %2581 = vmatprep.subr.bf16.mxu0 0
      %2582 = vmatpush1.bf16.xpose.msra.mxu0 0
      %2583 = vmatprep.mubr.bf16.mxu0 0
      %2584 = vmatmul.mubr.bf16.gmra.mrb[0].mxu0 %v2546
      %v2585 = vpop.f32.mrb[0].mxu0
      %v2586 = vadd.f32 %v912, %v2585
      %v2587 = vpop.f32.mrb[0].mxu0
      %v2588 = vpop.f32.mrb[0].mxu0
      %v2589 = vpop.f32.mrb[0].mxu0
      %2590 = vdwg.mxu0
      %2592 = vrot.lane.b32.xlu0 %v2319, 120
      %v2593 = vpop.permute.xlu0 %2592
      %2594 = vrot.lane.b32.xlu0 %v2321, 88
      %v2595 = vpop.permute.xlu0 %2594
      %v2597 = vsel %vm991, %v2593, 0
      %v2600 = vsel %vm991, %v2595, 0
      %2602 = vmatprep.subr.bf16.mxu0 0
      %2603 = vmatpush1.bf16.xpose.msra.mxu0 %v2600
      %2604 = vmatprep.subr.bf16.mxu0 0
      %2605 = vmatpush1.bf16.xpose.msra.mxu0 0
      %2606 = vmatprep.subr.bf16.mxu0 0
      %2607 = vmatpush1.bf16.xpose.msra.mxu0 0
      %2608 = vmatprep.subr.bf16.mxu0 0
      %2609 = vmatpush1.bf16.xpose.msra.mxu0 0
      %2610 = vmatprep.subr.bf16.mxu0 0
      %2611 = vmatpush1.bf16.xpose.msra.mxu0 0
      %2612 = vmatprep.subr.bf16.mxu0 0
      %2613 = vmatpush1.bf16.xpose.msra.mxu0 0
      %2614 = vmatprep.subr.bf16.mxu0 0
      %2615 = vmatpush1.bf16.xpose.msra.mxu0 0
      %2616 = vmatprep.subr.bf16.mxu0 0
      %2617 = vmatpush1.bf16.xpose.msra.mxu0 0
      %2618 = vmatprep.subr.bf16.mxu0 0
      %2619 = vmatpush1.bf16.xpose.msra.mxu0 0
      %2620 = vmatprep.subr.bf16.mxu0 0
      %2621 = vmatpush1.bf16.xpose.msra.mxu0 0
      %2622 = vmatprep.subr.bf16.mxu0 0
      %2623 = vmatpush1.bf16.xpose.msra.mxu0 0
      %2624 = vmatprep.subr.bf16.mxu0 0
      %2625 = vmatpush1.bf16.xpose.msra.mxu0 0
      %2626 = vmatprep.subr.bf16.mxu0 0
      %2627 = vmatpush1.bf16.xpose.msra.mxu0 0
      %2628 = vmatprep.subr.bf16.mxu0 0
      %2629 = vmatpush1.bf16.xpose.msra.mxu0 0
      %2630 = vmatprep.subr.bf16.mxu0 0
      %2631 = vmatpush1.bf16.xpose.msra.mxu0 0
      %2632 = vmatprep.subr.bf16.mxu0 0
      %2633 = vmatpush1.bf16.xpose.msra.mxu0 0
      %2634 = vmatprep.mubr.bf16.mxu0 0
      %2635 = vmatmul.mubr.bf16.gmra.mrb[0].mxu0 %v2597
      %v2636 = vpop.f32.mrb[0].mxu0
      %v2637 = vadd.f32 %v912, %v2636
      %v2638 = vpop.f32.mrb[0].mxu0
      %v2639 = vpop.f32.mrb[0].mxu0
      %v2640 = vpop.f32.mrb[0].mxu0
      %2641 = vdwg.mxu0
      %v2642 = vsel %vm991, %v2586, -inf
      %2643 = vmax.xlane.f32.xlu0 %v2642
      %v2644 = vpop.xlane.xlu0 %2643
      %v2645 = vsel %vm991, %v2637, -inf
      %2646 = vmax.xlane.f32.xlu0 %v2645
      %v2647 = vpop.xlane.xlu0 %2646
      %v2648 = vsub.f32 %v2586, %v2644
      %v2649 = vsub.f32 %v2637, %v2647
      %v2650 = vmul.f32 %v2648, 1.442695
      %v2651 = vpow.pop %v2650
      %v2652 = vmul.f32 %v2649, 1.442695
      %v2653 = vpow.pop %v2652
      %v2654 = vsel %vm991, %v2651, 0.0
      %2655 = vadd.xlane.f32.xlu0 %v2654
      %v2656 = vpop.xlane.xlu0 %2655
      %v2657 = vsel %vm991, %v2653, 0.0
      %2658 = vadd.xlane.f32.xlu0 %v2657
      %v2659 = vpop.xlane.xlu0 %2658
      %v2660 = vrcp.pop %v2656
      %v2661 = vrcp.pop %v2659
      %v2662 = vmul.f32 %v2651, %v2660
      %v2663 = vmul.f32 %v2653, %v2661
      %v2664 = vpack.c.bf16 %v2662, %v2662
      %v2665 = vpack.c.bf16 %v2663, %v2663
      %2666 = vrot.lane.b32.xlu0 %v2320, 56
      %v2667 = vpop.permute.xlu0 %2666
      %v2669 = vsel %vm991, %v2664, 0
      %v2672 = vsel %vm1116, %v2667, 0
      %2674 = vmatprep.subr.bf16.mxu0 0
      %2675 = vmatpush1.bf16.msra.mxu0 %v2672
      %2676 = vmatprep.subr.bf16.mxu0 0
      %2677 = vmatpush1.bf16.msra.mxu0 0
      %2678 = vmatprep.subr.bf16.mxu0 0
      %2679 = vmatpush1.bf16.msra.mxu0 0
      %2680 = vmatprep.subr.bf16.mxu0 0
      %2681 = vmatpush1.bf16.msra.mxu0 0
      %2682 = vmatprep.subr.bf16.mxu0 0
      %2683 = vmatpush1.bf16.msra.mxu0 0
      %2684 = vmatprep.subr.bf16.mxu0 0
      %2685 = vmatpush1.bf16.msra.mxu0 0
      %2686 = vmatprep.subr.bf16.mxu0 0
      %2687 = vmatpush1.bf16.msra.mxu0 0
      %2688 = vmatprep.subr.bf16.mxu0 0
      %2689 = vmatpush1.bf16.msra.mxu0 0
      %2690 = vmatprep.subr.bf16.mxu0 0
      %2691 = vmatpush1.bf16.msra.mxu0 0
      %2692 = vmatprep.subr.bf16.mxu0 0
      %2693 = vmatpush1.bf16.msra.mxu0 0
      %2694 = vmatprep.subr.bf16.mxu0 0
      %2695 = vmatpush1.bf16.msra.mxu0 0
      %2696 = vmatprep.subr.bf16.mxu0 0
      %2697 = vmatpush1.bf16.msra.mxu0 0
      %2698 = vmatprep.subr.bf16.mxu0 0
      %2699 = vmatpush1.bf16.msra.mxu0 0
      %2700 = vmatprep.subr.bf16.mxu0 0
      %2701 = vmatpush1.bf16.msra.mxu0 0
      %2702 = vmatprep.subr.bf16.mxu0 0
      %2703 = vmatpush1.bf16.msra.mxu0 0
      %2704 = vmatprep.subr.bf16.mxu0 0
      %2705 = vmatpush1.bf16.msra.mxu0 0
      %2706 = vmatprep.mubr.bf16.mxu0 0
      %2707 = vmatmul.mubr.bf16.gmra.mrb[0].mxu0 %v2669
      %v2708 = vpop.f32.mrb[0].mxu0
      %v2709 = vadd.f32 0.0, %v2708
      %v2710 = vpop.f32.mrb[0].mxu0
      %v2711 = vpop.f32.mrb[0].mxu0
      %v2712 = vpop.f32.mrb[0].mxu0
      %2713 = vdwg.mxu0
      %2714 = vrot.lane.b32.xlu0 %v2321, 56
      %v2715 = vpop.permute.xlu0 %2714
      %v2717 = vsel %vm991, %v2665, 0
      %v2720 = vsel %vm1116, %v2715, 0
      %2722 = vmatprep.subr.bf16.mxu0 0
      %2723 = vmatpush1.bf16.msra.mxu0 %v2720
      %2724 = vmatprep.subr.bf16.mxu0 0
      %2725 = vmatpush1.bf16.msra.mxu0 0
      %2726 = vmatprep.subr.bf16.mxu0 0
      %2727 = vmatpush1.bf16.msra.mxu0 0
      %2728 = vmatprep.subr.bf16.mxu0 0
      %2729 = vmatpush1.bf16.msra.mxu0 0
      %2730 = vmatprep.subr.bf16.mxu0 0
      %2731 = vmatpush1.bf16.msra.mxu0 0
      %2732 = vmatprep.subr.bf16.mxu0 0
      %2733 = vmatpush1.bf16.msra.mxu0 0
      %2734 = vmatprep.subr.bf16.mxu0 0
      %2735 = vmatpush1.bf16.msra.mxu0 0
      %2736 = vmatprep.subr.bf16.mxu0 0
      %2737 = vmatpush1.bf16.msra.mxu0 0
      %2738 = vmatprep.subr.bf16.mxu0 0
      %2739 = vmatpush1.bf16.msra.mxu0 0
      %2740 = vmatprep.subr.bf16.mxu0 0
      %2741 = vmatpush1.bf16.msra.mxu0 0
      %2742 = vmatprep.subr.bf16.mxu0 0
      %2743 = vmatpush1.bf16.msra.mxu0 0
      %2744 = vmatprep.subr.bf16.mxu0 0
      %2745 = vmatpush1.bf16.msra.mxu0 0
      %2746 = vmatprep.subr.bf16.mxu0 0
      %2747 = vmatpush1.bf16.msra.mxu0 0
      %2748 = vmatprep.subr.bf16.mxu0 0
      %2749 = vmatpush1.bf16.msra.mxu0 0
      %2750 = vmatprep.subr.bf16.mxu0 0
      %2751 = vmatpush1.bf16.msra.mxu0 0
      %2752 = vmatprep.subr.bf16.mxu0 0
      %2753 = vmatpush1.bf16.msra.mxu0 0
      %2754 = vmatprep.mubr.bf16.mxu0 0
      %2755 = vmatmul.mubr.bf16.gmra.mrb[0].mxu0 %v2717
      %v2756 = vpop.f32.mrb[0].mxu0
      %v2757 = vadd.f32 0.0, %v2756
      %v2758 = vpop.f32.mrb[0].mxu0
      %v2759 = vpop.f32.mrb[0].mxu0
      %v2760 = vpop.f32.mrb[0].mxu0
      %2761 = vdwg.mxu0
      %2762 = vrot.lane.b32.xlu0 %v2318, 112
      %v2763 = vpop.permute.xlu0 %2762
      %2764 = vrot.lane.b32.xlu0 %v2320, 80
      %v2765 = vpop.permute.xlu0 %2764
      %v2767 = vsel %vm991, %v2763, 0
      %v2770 = vsel %vm991, %v2765, 0
      %2772 = vmatprep.subr.bf16.mxu0 0
      %2773 = vmatpush1.bf16.xpose.msra.mxu0 %v2770
      %2774 = vmatprep.subr.bf16.mxu0 0
      %2775 = vmatpush1.bf16.xpose.msra.mxu0 0
      %2776 = vmatprep.subr.bf16.mxu0 0
      %2777 = vmatpush1.bf16.xpose.msra.mxu0 0
      %2778 = vmatprep.subr.bf16.mxu0 0
      %2779 = vmatpush1.bf16.xpose.msra.mxu0 0
      %2780 = vmatprep.subr.bf16.mxu0 0
      %2781 = vmatpush1.bf16.xpose.msra.mxu0 0
      %2782 = vmatprep.subr.bf16.mxu0 0
      %2783 = vmatpush1.bf16.xpose.msra.mxu0 0
      %2784 = vmatprep.subr.bf16.mxu0 0
      %2785 = vmatpush1.bf16.xpose.msra.mxu0 0
      %2786 = vmatprep.subr.bf16.mxu0 0
      %2787 = vmatpush1.bf16.xpose.msra.mxu0 0
      %2788 = vmatprep.subr.bf16.mxu0 0
      %2789 = vmatpush1.bf16.xpose.msra.mxu0 0
      %2790 = vmatprep.subr.bf16.mxu0 0
      %2791 = vmatpush1.bf16.xpose.msra.mxu0 0
      %2792 = vmatprep.subr.bf16.mxu0 0
      %2793 = vmatpush1.bf16.xpose.msra.mxu0 0
      %2794 = vmatprep.subr.bf16.mxu0 0
      %2795 = vmatpush1.bf16.xpose.msra.mxu0 0
      %2796 = vmatprep.subr.bf16.mxu0 0
      %2797 = vmatpush1.bf16.xpose.msra.mxu0 0
      %2798 = vmatprep.subr.bf16.mxu0 0
      %2799 = vmatpush1.bf16.xpose.msra.mxu0 0
      %2800 = vmatprep.subr.bf16.mxu0 0
      %2801 = vmatpush1.bf16.xpose.msra.mxu0 0
      %2802 = vmatprep.subr.bf16.mxu0 0
      %2803 = vmatpush1.bf16.xpose.msra.mxu0 0
      %2804 = vmatprep.mubr.bf16.mxu0 0
      %2805 = vmatmul.mubr.bf16.gmra.mrb[0].mxu0 %v2767
      %v2806 = vpop.f32.mrb[0].mxu0
      %v2807 = vadd.f32 %v912, %v2806
      %v2808 = vpop.f32.mrb[0].mxu0
      %v2809 = vpop.f32.mrb[0].mxu0
      %v2810 = vpop.f32.mrb[0].mxu0
      %2811 = vdwg.mxu0
      %2812 = vrot.lane.b32.xlu0 %v2319, 112
      %v2813 = vpop.permute.xlu0 %2812
      %2814 = vrot.lane.b32.xlu0 %v2321, 80
      %v2815 = vpop.permute.xlu0 %2814
      %v2817 = vsel %vm991, %v2813, 0
      %v2820 = vsel %vm991, %v2815, 0
      %2822 = vmatprep.subr.bf16.mxu0 0
      %2823 = vmatpush1.bf16.xpose.msra.mxu0 %v2820
      %2824 = vmatprep.subr.bf16.mxu0 0
      %2825 = vmatpush1.bf16.xpose.msra.mxu0 0
      %2826 = vmatprep.subr.bf16.mxu0 0
      %2827 = vmatpush1.bf16.xpose.msra.mxu0 0
      %2828 = vmatprep.subr.bf16.mxu0 0
      %2829 = vmatpush1.bf16.xpose.msra.mxu0 0
      %2830 = vmatprep.subr.bf16.mxu0 0
      %2831 = vmatpush1.bf16.xpose.msra.mxu0 0
      %2832 = vmatprep.subr.bf16.mxu0 0
      %2833 = vmatpush1.bf16.xpose.msra.mxu0 0
      %2834 = vmatprep.subr.bf16.mxu0 0
      %2835 = vmatpush1.bf16.xpose.msra.mxu0 0
      %2836 = vmatprep.subr.bf16.mxu0 0
      %2837 = vmatpush1.bf16.xpose.msra.mxu0 0
      %2838 = vmatprep.subr.bf16.mxu0 0
      %2839 = vmatpush1.bf16.xpose.msra.mxu0 0
      %2840 = vmatprep.subr.bf16.mxu0 0
      %2841 = vmatpush1.bf16.xpose.msra.mxu0 0
      %2842 = vmatprep.subr.bf16.mxu0 0
      %2843 = vmatpush1.bf16.xpose.msra.mxu0 0
      %2844 = vmatprep.subr.bf16.mxu0 0
      %2845 = vmatpush1.bf16.xpose.msra.mxu0 0
      %2846 = vmatprep.subr.bf16.mxu0 0
      %2847 = vmatpush1.bf16.xpose.msra.mxu0 0
      %2848 = vmatprep.subr.bf16.mxu0 0
      %2849 = vmatpush1.bf16.xpose.msra.mxu0 0
      %2850 = vmatprep.subr.bf16.mxu0 0
      %2851 = vmatpush1.bf16.xpose.msra.mxu0 0
      %2852 = vmatprep.subr.bf16.mxu0 0
      %2853 = vmatpush1.bf16.xpose.msra.mxu0 0
      %2854 = vmatprep.mubr.bf16.mxu0 0
      %2855 = vmatmul.mubr.bf16.gmra.mrb[0].mxu0 %v2817
      %v2856 = vpop.f32.mrb[0].mxu0
      %v2857 = vadd.f32 %v912, %v2856
      %v2858 = vpop.f32.mrb[0].mxu0
      %v2859 = vpop.f32.mrb[0].mxu0
      %v2860 = vpop.f32.mrb[0].mxu0
      %2861 = vdwg.mxu0
      %v2862 = vsel %vm991, %v2807, -inf
      %2863 = vmax.xlane.f32.xlu0 %v2862
      %v2864 = vpop.xlane.xlu0 %2863
      %v2865 = vsel %vm991, %v2857, -inf
      %2866 = vmax.xlane.f32.xlu0 %v2865
      %v2867 = vpop.xlane.xlu0 %2866
      %v2868 = vsub.f32 %v2807, %v2864
      %v2869 = vsub.f32 %v2857, %v2867
      %v2870 = vmul.f32 %v2868, 1.442695
      %v2871 = vpow.pop %v2870
      %v2872 = vmul.f32 %v2869, 1.442695
      %v2873 = vpow.pop %v2872
      %v2874 = vsel %vm991, %v2871, 0.0
      %2875 = vadd.xlane.f32.xlu0 %v2874
      %v2876 = vpop.xlane.xlu0 %2875
      %v2877 = vsel %vm991, %v2873, 0.0
      %2878 = vadd.xlane.f32.xlu0 %v2877
      %v2879 = vpop.xlane.xlu0 %2878
      %v2880 = vrcp.pop %v2876
      %v2881 = vrcp.pop %v2879
      %v2882 = vmul.f32 %v2871, %v2880
      %v2883 = vmul.f32 %v2873, %v2881
      %v2884 = vpack.c.bf16 %v2882, %v2882
      %v2885 = vpack.c.bf16 %v2883, %v2883
      %2886 = vrot.lane.b32.xlu0 %v2320, 48
      %v2887 = vpop.permute.xlu0 %2886
      %v2889 = vsel %vm991, %v2884, 0
      %v2892 = vsel %vm1116, %v2887, 0
      %2894 = vmatprep.subr.bf16.mxu0 0
      %2895 = vmatpush1.bf16.msra.mxu0 %v2892
      %2896 = vmatprep.subr.bf16.mxu0 0
      %2897 = vmatpush1.bf16.msra.mxu0 0
      %2898 = vmatprep.subr.bf16.mxu0 0
      %2899 = vmatpush1.bf16.msra.mxu0 0
      %2900 = vmatprep.subr.bf16.mxu0 0
      %2901 = vmatpush1.bf16.msra.mxu0 0
      %2902 = vmatprep.subr.bf16.mxu0 0
      %2903 = vmatpush1.bf16.msra.mxu0 0
      %2904 = vmatprep.subr.bf16.mxu0 0
      %2905 = vmatpush1.bf16.msra.mxu0 0
      %2906 = vmatprep.subr.bf16.mxu0 0
      %2907 = vmatpush1.bf16.msra.mxu0 0
      %2908 = vmatprep.subr.bf16.mxu0 0
      %2909 = vmatpush1.bf16.msra.mxu0 0
      %2910 = vmatprep.subr.bf16.mxu0 0
      %2911 = vmatpush1.bf16.msra.mxu0 0
      %2912 = vmatprep.subr.bf16.mxu0 0
      %2913 = vmatpush1.bf16.msra.mxu0 0
      %2914 = vmatprep.subr.bf16.mxu0 0
      %2915 = vmatpush1.bf16.msra.mxu0 0
      %2916 = vmatprep.subr.bf16.mxu0 0
      %2917 = vmatpush1.bf16.msra.mxu0 0
      %2918 = vmatprep.subr.bf16.mxu0 0
      %2919 = vmatpush1.bf16.msra.mxu0 0
      %2920 = vmatprep.subr.bf16.mxu0 0
      %2921 = vmatpush1.bf16.msra.mxu0 0
      %2922 = vmatprep.subr.bf16.mxu0 0
      %2923 = vmatpush1.bf16.msra.mxu0 0
      %2924 = vmatprep.subr.bf16.mxu0 0
      %2925 = vmatpush1.bf16.msra.mxu0 0
      %2926 = vmatprep.mubr.bf16.mxu0 0
      %2927 = vmatmul.mubr.bf16.gmra.mrb[0].mxu0 %v2889
      %v2928 = vpop.f32.mrb[0].mxu0
      %v2929 = vadd.f32 0.0, %v2928
      %v2930 = vpop.f32.mrb[0].mxu0
      %v2931 = vpop.f32.mrb[0].mxu0
      %v2932 = vpop.f32.mrb[0].mxu0
      %2933 = vdwg.mxu0
      %2934 = vrot.lane.b32.xlu0 %v2321, 48
      %v2935 = vpop.permute.xlu0 %2934
      %v2937 = vsel %vm991, %v2885, 0
      %v2940 = vsel %vm1116, %v2935, 0
      %2942 = vmatprep.subr.bf16.mxu0 0
      %2943 = vmatpush1.bf16.msra.mxu0 %v2940
      %2944 = vmatprep.subr.bf16.mxu0 0
      %2945 = vmatpush1.bf16.msra.mxu0 0
      %2946 = vmatprep.subr.bf16.mxu0 0
      %2947 = vmatpush1.bf16.msra.mxu0 0
      %2948 = vmatprep.subr.bf16.mxu0 0
      %2949 = vmatpush1.bf16.msra.mxu0 0
      %2950 = vmatprep.subr.bf16.mxu0 0
      %2951 = vmatpush1.bf16.msra.mxu0 0
      %2952 = vmatprep.subr.bf16.mxu0 0
      %2953 = vmatpush1.bf16.msra.mxu0 0
      %2954 = vmatprep.subr.bf16.mxu0 0
      %2955 = vmatpush1.bf16.msra.mxu0 0
      %2956 = vmatprep.subr.bf16.mxu0 0
      %2957 = vmatpush1.bf16.msra.mxu0 0
      %2958 = vmatprep.subr.bf16.mxu0 0
      %2959 = vmatpush1.bf16.msra.mxu0 0
      %2960 = vmatprep.subr.bf16.mxu0 0
      %2961 = vmatpush1.bf16.msra.mxu0 0
      %2962 = vmatprep.subr.bf16.mxu0 0
      %2963 = vmatpush1.bf16.msra.mxu0 0
      %2964 = vmatprep.subr.bf16.mxu0 0
      %2965 = vmatpush1.bf16.msra.mxu0 0
      %2966 = vmatprep.subr.bf16.mxu0 0
      %2967 = vmatpush1.bf16.msra.mxu0 0
      %2968 = vmatprep.subr.bf16.mxu0 0
      %2969 = vmatpush1.bf16.msra.mxu0 0
      %2970 = vmatprep.subr.bf16.mxu0 0
      %2971 = vmatpush1.bf16.msra.mxu0 0
      %2972 = vmatprep.subr.bf16.mxu0 0
      %2973 = vmatpush1.bf16.msra.mxu0 0
      %2974 = vmatprep.mubr.bf16.mxu0 0
      %2975 = vmatmul.mubr.bf16.gmra.mrb[0].mxu0 %v2937
      %v2976 = vpop.f32.mrb[0].mxu0
      %v2977 = vadd.f32 0.0, %v2976
      %v2978 = vpop.f32.mrb[0].mxu0
      %v2979 = vpop.f32.mrb[0].mxu0
      %v2980 = vpop.f32.mrb[0].mxu0
      %2981 = vdwg.mxu0
      %2982 = vrot.lane.b32.xlu0 %v2318, 104
      %v2983 = vpop.permute.xlu0 %2982
      %2984 = vrot.lane.b32.xlu0 %v2320, 72
      %v2985 = vpop.permute.xlu0 %2984
      %v2987 = vsel %vm991, %v2983, 0
      %v2990 = vsel %vm991, %v2985, 0
      %2992 = vmatprep.subr.bf16.mxu0 0
      %2993 = vmatpush1.bf16.xpose.msra.mxu0 %v2990
      %2994 = vmatprep.subr.bf16.mxu0 0
      %2995 = vmatpush1.bf16.xpose.msra.mxu0 0
      %2996 = vmatprep.subr.bf16.mxu0 0
      %2997 = vmatpush1.bf16.xpose.msra.mxu0 0
      %2998 = vmatprep.subr.bf16.mxu0 0
      %2999 = vmatpush1.bf16.xpose.msra.mxu0 0
      %3000 = vmatprep.subr.bf16.mxu0 0
      %3001 = vmatpush1.bf16.xpose.msra.mxu0 0
      %3002 = vmatprep.subr.bf16.mxu0 0
      %3003 = vmatpush1.bf16.xpose.msra.mxu0 0
      %3004 = vmatprep.subr.bf16.mxu0 0
      %3005 = vmatpush1.bf16.xpose.msra.mxu0 0
      %3006 = vmatprep.subr.bf16.mxu0 0
      %3007 = vmatpush1.bf16.xpose.msra.mxu0 0
      %3008 = vmatprep.subr.bf16.mxu0 0
      %3009 = vmatpush1.bf16.xpose.msra.mxu0 0
      %3010 = vmatprep.subr.bf16.mxu0 0
      %3011 = vmatpush1.bf16.xpose.msra.mxu0 0
      %3012 = vmatprep.subr.bf16.mxu0 0
      %3013 = vmatpush1.bf16.xpose.msra.mxu0 0
      %3014 = vmatprep.subr.bf16.mxu0 0
      %3015 = vmatpush1.bf16.xpose.msra.mxu0 0
      %3016 = vmatprep.subr.bf16.mxu0 0
      %3017 = vmatpush1.bf16.xpose.msra.mxu0 0
      %3018 = vmatprep.subr.bf16.mxu0 0
      %3019 = vmatpush1.bf16.xpose.msra.mxu0 0
      %3020 = vmatprep.subr.bf16.mxu0 0
      %3021 = vmatpush1.bf16.xpose.msra.mxu0 0
      %3022 = vmatprep.subr.bf16.mxu0 0
      %3023 = vmatpush1.bf16.xpose.msra.mxu0 0
      %3024 = vmatprep.mubr.bf16.mxu0 0
      %3025 = vmatmul.mubr.bf16.gmra.mrb[0].mxu0 %v2987
      %v3026 = vpop.f32.mrb[0].mxu0
      %v3027 = vadd.f32 %v912, %v3026
      %v3028 = vpop.f32.mrb[0].mxu0
      %v3029 = vpop.f32.mrb[0].mxu0
      %v3030 = vpop.f32.mrb[0].mxu0
      %3031 = vdwg.mxu0
      %3032 = vrot.lane.b32.xlu0 %v2319, 104
      %v3033 = vpop.permute.xlu0 %3032
      %3034 = vrot.lane.b32.xlu0 %v2321, 72
      %v3035 = vpop.permute.xlu0 %3034
      %v3037 = vsel %vm991, %v3033, 0
      %v3040 = vsel %vm991, %v3035, 0
      %3042 = vmatprep.subr.bf16.mxu0 0
      %3043 = vmatpush1.bf16.xpose.msra.mxu0 %v3040
      %3044 = vmatprep.subr.bf16.mxu0 0
      %3045 = vmatpush1.bf16.xpose.msra.mxu0 0
      %3046 = vmatprep.subr.bf16.mxu0 0
      %3047 = vmatpush1.bf16.xpose.msra.mxu0 0
      %3048 = vmatprep.subr.bf16.mxu0 0
      %3049 = vmatpush1.bf16.xpose.msra.mxu0 0
      %3050 = vmatprep.subr.bf16.mxu0 0
      %3051 = vmatpush1.bf16.xpose.msra.mxu0 0
      %3052 = vmatprep.subr.bf16.mxu0 0
      %3053 = vmatpush1.bf16.xpose.msra.mxu0 0
      %3054 = vmatprep.subr.bf16.mxu0 0
      %3055 = vmatpush1.bf16.xpose.msra.mxu0 0
      %3056 = vmatprep.subr.bf16.mxu0 0
      %3057 = vmatpush1.bf16.xpose.msra.mxu0 0
      %3058 = vmatprep.subr.bf16.mxu0 0
      %3059 = vmatpush1.bf16.xpose.msra.mxu0 0
      %3060 = vmatprep.subr.bf16.mxu0 0
      %3061 = vmatpush1.bf16.xpose.msra.mxu0 0
      %3062 = vmatprep.subr.bf16.mxu0 0
      %3063 = vmatpush1.bf16.xpose.msra.mxu0 0
      %3064 = vmatprep.subr.bf16.mxu0 0
      %3065 = vmatpush1.bf16.xpose.msra.mxu0 0
      %3066 = vmatprep.subr.bf16.mxu0 0
      %3067 = vmatpush1.bf16.xpose.msra.mxu0 0
      %3068 = vmatprep.subr.bf16.mxu0 0
      %3069 = vmatpush1.bf16.xpose.msra.mxu0 0
      %3070 = vmatprep.subr.bf16.mxu0 0
      %3071 = vmatpush1.bf16.xpose.msra.mxu0 0
      %3072 = vmatprep.subr.bf16.mxu0 0
      %3073 = vmatpush1.bf16.xpose.msra.mxu0 0
      %3074 = vmatprep.mubr.bf16.mxu0 0
      %3075 = vmatmul.mubr.bf16.gmra.mrb[0].mxu0 %v3037
      %v3076 = vpop.f32.mrb[0].mxu0
      %v3077 = vadd.f32 %v912, %v3076
      %v3078 = vpop.f32.mrb[0].mxu0
      %v3079 = vpop.f32.mrb[0].mxu0
      %v3080 = vpop.f32.mrb[0].mxu0
      %3081 = vdwg.mxu0
      %v3082 = vsel %vm991, %v3027, -inf
      %3083 = vmax.xlane.f32.xlu0 %v3082
      %v3084 = vpop.xlane.xlu0 %3083
      %v3085 = vsel %vm991, %v3077, -inf
      %3086 = vmax.xlane.f32.xlu0 %v3085
      %v3087 = vpop.xlane.xlu0 %3086
      %v3088 = vsub.f32 %v3027, %v3084
      %v3089 = vsub.f32 %v3077, %v3087
      %v3090 = vmul.f32 %v3088, 1.442695
      %v3091 = vpow.pop %v3090
      %v3092 = vmul.f32 %v3089, 1.442695
      %v3093 = vpow.pop %v3092
      %v3094 = vsel %vm991, %v3091, 0.0
      %3095 = vadd.xlane.f32.xlu0 %v3094
      %v3096 = vpop.xlane.xlu0 %3095
      %v3097 = vsel %vm991, %v3093, 0.0
      %3098 = vadd.xlane.f32.xlu0 %v3097
      %v3099 = vpop.xlane.xlu0 %3098
      %v3100 = vrcp.pop %v3096
      %v3101 = vrcp.pop %v3099
      %v3102 = vmul.f32 %v3091, %v3100
      %v3103 = vmul.f32 %v3093, %v3101
      %v3104 = vpack.c.bf16 %v3102, %v3102
      %v3105 = vpack.c.bf16 %v3103, %v3103
      %3106 = vrot.lane.b32.xlu0 %v2320, 40
      %v3107 = vpop.permute.xlu0 %3106
      %v3109 = vsel %vm991, %v3104, 0
      %v3112 = vsel %vm1116, %v3107, 0
      %3114 = vmatprep.subr.bf16.mxu0 0
      %3115 = vmatpush1.bf16.msra.mxu0 %v3112
      %3116 = vmatprep.subr.bf16.mxu0 0
      %3117 = vmatpush1.bf16.msra.mxu0 0
      %3118 = vmatprep.subr.bf16.mxu0 0
      %3119 = vmatpush1.bf16.msra.mxu0 0
      %3120 = vmatprep.subr.bf16.mxu0 0
      %3121 = vmatpush1.bf16.msra.mxu0 0
      %3122 = vmatprep.subr.bf16.mxu0 0
      %3123 = vmatpush1.bf16.msra.mxu0 0
      %3124 = vmatprep.subr.bf16.mxu0 0
      %3125 = vmatpush1.bf16.msra.mxu0 0
      %3126 = vmatprep.subr.bf16.mxu0 0
      %3127 = vmatpush1.bf16.msra.mxu0 0
      %3128 = vmatprep.subr.bf16.mxu0 0
      %3129 = vmatpush1.bf16.msra.mxu0 0
      %3130 = vmatprep.subr.bf16.mxu0 0
      %3131 = vmatpush1.bf16.msra.mxu0 0
      %3132 = vmatprep.subr.bf16.mxu0 0
      %3133 = vmatpush1.bf16.msra.mxu0 0
      %3134 = vmatprep.subr.bf16.mxu0 0
      %3135 = vmatpush1.bf16.msra.mxu0 0
      %3136 = vmatprep.subr.bf16.mxu0 0
      %3137 = vmatpush1.bf16.msra.mxu0 0
      %3138 = vmatprep.subr.bf16.mxu0 0
      %3139 = vmatpush1.bf16.msra.mxu0 0
      %3140 = vmatprep.subr.bf16.mxu0 0
      %3141 = vmatpush1.bf16.msra.mxu0 0
      %3142 = vmatprep.subr.bf16.mxu0 0
      %3143 = vmatpush1.bf16.msra.mxu0 0
      %3144 = vmatprep.subr.bf16.mxu0 0
      %3145 = vmatpush1.bf16.msra.mxu0 0
      %3146 = vmatprep.mubr.bf16.mxu0 0
      %3147 = vmatmul.mubr.bf16.gmra.mrb[0].mxu0 %v3109
      %v3148 = vpop.f32.mrb[0].mxu0
      %v3149 = vadd.f32 0.0, %v3148
      %v3150 = vpop.f32.mrb[0].mxu0
      %v3151 = vpop.f32.mrb[0].mxu0
      %v3152 = vpop.f32.mrb[0].mxu0
      %3153 = vdwg.mxu0
      %3154 = vrot.lane.b32.xlu0 %v2321, 40
      %v3155 = vpop.permute.xlu0 %3154
      %v3157 = vsel %vm991, %v3105, 0
      %v3160 = vsel %vm1116, %v3155, 0
      %3162 = vmatprep.subr.bf16.mxu0 0
      %3163 = vmatpush1.bf16.msra.mxu0 %v3160
      %3164 = vmatprep.subr.bf16.mxu0 0
      %3165 = vmatpush1.bf16.msra.mxu0 0
      %3166 = vmatprep.subr.bf16.mxu0 0
      %3167 = vmatpush1.bf16.msra.mxu0 0
      %3168 = vmatprep.subr.bf16.mxu0 0
      %3169 = vmatpush1.bf16.msra.mxu0 0
      %3170 = vmatprep.subr.bf16.mxu0 0
      %3171 = vmatpush1.bf16.msra.mxu0 0
      %3172 = vmatprep.subr.bf16.mxu0 0
      %3173 = vmatpush1.bf16.msra.mxu0 0
      %3174 = vmatprep.subr.bf16.mxu0 0
      %3175 = vmatpush1.bf16.msra.mxu0 0
      %3176 = vmatprep.subr.bf16.mxu0 0
      %3177 = vmatpush1.bf16.msra.mxu0 0
      %3178 = vmatprep.subr.bf16.mxu0 0
      %3179 = vmatpush1.bf16.msra.mxu0 0
      %3180 = vmatprep.subr.bf16.mxu0 0
      %3181 = vmatpush1.bf16.msra.mxu0 0
      %3182 = vmatprep.subr.bf16.mxu0 0
      %3183 = vmatpush1.bf16.msra.mxu0 0
      %3184 = vmatprep.subr.bf16.mxu0 0
      %3185 = vmatpush1.bf16.msra.mxu0 0
      %3186 = vmatprep.subr.bf16.mxu0 0
      %3187 = vmatpush1.bf16.msra.mxu0 0
      %3188 = vmatprep.subr.bf16.mxu0 0
      %3189 = vmatpush1.bf16.msra.mxu0 0
      %3190 = vmatprep.subr.bf16.mxu0 0
      %3191 = vmatpush1.bf16.msra.mxu0 0
      %3192 = vmatprep.subr.bf16.mxu0 0
      %3193 = vmatpush1.bf16.msra.mxu0 0
      %3194 = vmatprep.mubr.bf16.mxu0 0
      %3195 = vmatmul.mubr.bf16.gmra.mrb[0].mxu0 %v3157
      %v3196 = vpop.f32.mrb[0].mxu0
      %v3197 = vadd.f32 0.0, %v3196
      %v3198 = vpop.f32.mrb[0].mxu0
      %v3199 = vpop.f32.mrb[0].mxu0
      %v3200 = vpop.f32.mrb[0].mxu0
      %3201 = vdwg.mxu0
      %3204 = vrot.lane.b32.xlu0 %v2709, 8
      %v3205 = vpop.permute.xlu0 %3204
      %3206 = vrot.lane.b32.xlu0 %v2757, 8
      %v3207 = vpop.permute.xlu0 %3206
      %3212 = vrot.lane.b32.xlu0 %v2929, 16
      %v3213 = vpop.permute.xlu0 %3212
      %3214 = vrot.lane.b32.xlu0 %v2977, 16
      %v3215 = vpop.permute.xlu0 %3214
      %3220 = vrot.lane.b32.xlu0 %v3149, 24
      %v3221 = vpop.permute.xlu0 %3220
      %3222 = vrot.lane.b32.xlu0 %v3197, 24
      %v3223 = vpop.permute.xlu0 %3222
      %v3226 = vsel %vm991, %v2487, %v3205
      %v3227 = vsel %vm991, %v2535, %v3207
      %v3228 = vsel %vm1896, %v3226, %v3213
      %v3229 = vsel %vm1896, %v3227, %v3215
      %v3230 = vsel %vm1899, %v3228, %v3221
      %v3231 = vsel %vm1899, %v3229, %v3223
      %v3232 = vpack.c.bf16 %v3231, %v3230
      %s3233 = scalar_lea.vmem %s10, 16
      %v3234 = vld [vmem:[%s3233] sm:$0xf]
      %v3235 = vld [vmem:[%s3233 + $0x4] sm:$0xf]
      %v3236 = vld [vmem:[%s3233 + $0x8] sm:$0xf]
      %v3237 = vld [vmem:[%s3233 + $0xc] sm:$0xf]
      %s3238 = scalar_lea.vmem %s11, 1
      %v3239 = vld [vmem:[%s3238] sm:$0x1]
      %v3241 = vlaneseq
      %v3242 = vshrl.u32 %v3241, 7
      %v3243 = vsub.s32 0, %v3242
      %v3244 = vrot.slane %v3239, %v3243
      %v3250 = vunpack.c.l.b16 %v3234
      %v3251 = vunpack.c.l.b16 %v3235
      %v3252 = vunpack.c.l.b16 %v3236
      %v3253 = vunpack.c.l.b16 %v3237
      %v3254 = vpack.c.b16 %v3251, %v3250
      %v3255 = vpack.c.b16 %v3253, %v3252
      %v3259 = vsel %vm937, %v3232, 0
      %3261 = vmatprep.subr.bf16.mxu0 0
      %3262 = vmatpush1.bf16.msra.mxu0 %v3254
      %3263 = vmatprep.subr.bf16.mxu0 0
      %3264 = vmatpush1.bf16.msra.mxu0 %v3255
      %3265 = vmatprep.subr.bf16.mxu0 0
      %3266 = vmatpush1.bf16.msra.mxu0 0
      %3267 = vmatprep.subr.bf16.mxu0 0
      %3268 = vmatpush1.bf16.msra.mxu0 0
      %3269 = vmatprep.subr.bf16.mxu0 0
      %3270 = vmatpush1.bf16.msra.mxu0 0
      %3271 = vmatprep.subr.bf16.mxu0 0
      %3272 = vmatpush1.bf16.msra.mxu0 0
      %3273 = vmatprep.subr.bf16.mxu0 0
      %3274 = vmatpush1.bf16.msra.mxu0 0
      %3275 = vmatprep.subr.bf16.mxu0 0
      %3276 = vmatpush1.bf16.msra.mxu0 0
      %3277 = vmatprep.subr.bf16.mxu0 0
      %3278 = vmatpush1.bf16.msra.mxu0 0
      %3279 = vmatprep.subr.bf16.mxu0 0
      %3280 = vmatpush1.bf16.msra.mxu0 0
      %3281 = vmatprep.subr.bf16.mxu0 0
      %3282 = vmatpush1.bf16.msra.mxu0 0
      %3283 = vmatprep.subr.bf16.mxu0 0
      %3284 = vmatpush1.bf16.msra.mxu0 0
      %3285 = vmatprep.subr.bf16.mxu0 0
      %3286 = vmatpush1.bf16.msra.mxu0 0
      %3287 = vmatprep.subr.bf16.mxu0 0
      %3288 = vmatpush1.bf16.msra.mxu0 0
      %3289 = vmatprep.subr.bf16.mxu0 0
      %3290 = vmatpush1.bf16.msra.mxu0 0
      %3291 = vmatprep.subr.bf16.mxu0 0
      %3292 = vmatpush1.bf16.msra.mxu0 0
      %3293 = vmatprep.mubr.bf16.mxu0 0
      %3294 = vmatmul.mubr.bf16.gmra.mrb[0].mxu0 %v3259
      %v3295 = vpop.f32.mrb[0].mxu0
      %v3296 = vadd.f32 %v3244, %v3295
      %v3297 = vpop.f32.mrb[0].mxu0
      %v3298 = vpop.f32.mrb[0].mxu0
      %v3299 = vadd.f32 %v3244, %v3298
      %v3300 = vpop.f32.mrb[0].mxu0
      %3301 = vdwg.mxu0
      %v3302 = vadd.f32 %v2244, %v3296
      %v3303 = vadd.f32 %v2245, %v3299
      %s3304 = scalar_lea.vmem %s16, 1
      %v3305 = vld [vmem:[%s3304] sm:$0x1]
      %s3306 = scalar_lea.vmem %s17, 1
      %v3307 = vld [vmem:[%s3306] sm:$0x1]
      %v3308 = vsel %vm937, %v3302, 0.0
      %3309 = vadd.xlane.f32.xlu0 %v3308
      %v3310 = vpop.xlane.xlu0 %3309
      %v3311 = vsel %vm937, %v3303, 0.0
      %3312 = vadd.xlane.f32.xlu0 %v3311
      %v3313 = vpop.xlane.xlu0 %3312
      %v3314 = vmul.f32 %v3310, %v1980
      %v3315 = vmul.f32 %v3313, %v1980
      %v3316 = vsub.f32 %v3302, %v3314
      %v3317 = vsub.f32 %v3303, %v3315
      %v3318 = vmul.f32 %v3316, %v3316
      %v3319 = vmul.f32 %v3317, %v3317
      %v3320 = vsel %vm937, %v3318, 0.0
      %3321 = vadd.xlane.f32.xlu0 %v3320
      %v3322 = vpop.xlane.xlu0 %3321
      %v3323 = vsel %vm937, %v3319, 0.0
      %3324 = vadd.xlane.f32.xlu0 %v3323
      %v3325 = vpop.xlane.xlu0 %3324
      %v3326 = vmul.f32 %v3322, %v1980
      %v3327 = vmul.f32 %v3325, %v1980
      %v3328 = vadd.f32 %v3326, 1e-05
      %v3329 = vadd.f32 %v3327, 1e-05
      %v3330 = vrsqrt.pop %v3328
      %v3331 = vrsqrt.pop %v3329
      %v3332 = vmul.f32 %v3316, %v3330
      %v3333 = vmul.f32 %v3317, %v3331
      %v3335 = vlaneseq
      %v3336 = vshrl.u32 %v3335, 7
      %v3337 = vsub.s32 0, %v3336
      %v3338 = vrot.slane %v3305, %v3337
      %v3340 = vmul.f32 %v3332, %v3338
      %v3341 = vmul.f32 %v3333, %v3338
      %v3343 = vlaneseq
      %v3344 = vshrl.u32 %v3343, 7
      %v3345 = vsub.s32 0, %v3344
      %v3346 = vrot.slane %v3307, %v3345
      %v3348 = vadd.f32 %v3340, %v3346
      %v3349 = vadd.f32 %v3341, %v3346
      %v3350 = vpack.c.bf16 %v3349, %v3348
      %s3351 = scalar_lea.vmem %s12, 16
      %v3352 = vld [vmem:[%s3351] sm:$0xf]
      %v3353 = vld [vmem:[%s3351 + $0x4] sm:$0xf]
      %v3354 = vld [vmem:[%s3351 + $0x8] sm:$0xf]
      %v3355 = vld [vmem:[%s3351 + $0xc] sm:$0xf]
      %s3356 = scalar_lea.vmem %s13, 1
      %v3357 = vld [vmem:[%s3356] sm:$0x1]
      %v3359 = vlaneseq
      %v3360 = vshrl.u32 %v3359, 7
      %v3361 = vsub.s32 0, %v3360
      %v3362 = vrot.slane %v3357, %v3361
      %v3368 = vunpack.c.l.b16 %v3352
      %v3369 = vunpack.c.l.b16 %v3353
      %v3370 = vunpack.c.l.b16 %v3354
      %v3371 = vunpack.c.l.b16 %v3355
      %v3372 = vpack.c.b16 %v3369, %v3368
      %v3373 = vpack.c.b16 %v3371, %v3370
      %v3377 = vsel %vm937, %v3350, 0
      %3379 = vmatprep.subr.bf16.mxu0 0
      %3380 = vmatpush1.bf16.msra.mxu0 %v3372
      %3381 = vmatprep.subr.bf16.mxu0 0
      %3382 = vmatpush1.bf16.msra.mxu0 %v3373
      %3383 = vmatprep.subr.bf16.mxu0 0
      %3384 = vmatpush1.bf16.msra.mxu0 0
      %3385 = vmatprep.subr.bf16.mxu0 0
      %3386 = vmatpush1.bf16.msra.mxu0 0
      %3387 = vmatprep.subr.bf16.mxu0 0
      %3388 = vmatpush1.bf16.msra.mxu0 0
      %3389 = vmatprep.subr.bf16.mxu0 0
      %3390 = vmatpush1.bf16.msra.mxu0 0
      %3391 = vmatprep.subr.bf16.mxu0 0
      %3392 = vmatpush1.bf16.msra.mxu0 0
      %3393 = vmatprep.subr.bf16.mxu0 0
      %3394 = vmatpush1.bf16.msra.mxu0 0
      %3395 = vmatprep.subr.bf16.mxu0 0
      %3396 = vmatpush1.bf16.msra.mxu0 0
      %3397 = vmatprep.subr.bf16.mxu0 0
      %3398 = vmatpush1.bf16.msra.mxu0 0
      %3399 = vmatprep.subr.bf16.mxu0 0
      %3400 = vmatpush1.bf16.msra.mxu0 0
      %3401 = vmatprep.subr.bf16.mxu0 0
      %3402 = vmatpush1.bf16.msra.mxu0 0
      %3403 = vmatprep.subr.bf16.mxu0 0
      %3404 = vmatpush1.bf16.msra.mxu0 0
      %3405 = vmatprep.subr.bf16.mxu0 0
      %3406 = vmatpush1.bf16.msra.mxu0 0
      %3407 = vmatprep.subr.bf16.mxu0 0
      %3408 = vmatpush1.bf16.msra.mxu0 0
      %3409 = vmatprep.subr.bf16.mxu0 0
      %3410 = vmatpush1.bf16.msra.mxu0 0
      %3411 = vmatprep.mubr.bf16.mxu0 0
      %3412 = vmatmul.mubr.bf16.gmra.mrb[0].mxu0 %v3377
      %v3413 = vpop.f32.mrb[0].mxu0
      %v3414 = vadd.f32 %v3362, %v3413
      %v3415 = vpop.f32.mrb[0].mxu0
      %v3416 = vpop.f32.mrb[0].mxu0
      %v3417 = vadd.f32 %v3362, %v3416
      %v3418 = vpop.f32.mrb[0].mxu0
      %3419 = vdwg.mxu0
      %v3420 = vmax.f32 %v3414, 0.0
      %v3421 = vmax.f32 %v3417, 0.0
      %v3422 = vpack.c.bf16 %v3421, %v3420
      %s3423 = scalar_lea.vmem %s14, 64
      %v3424 = vld [vmem:[%s3423] sm:$0xf]
      %v3425 = vld [vmem:[%s3423 + $0x4] sm:$0xf]
      %v3426 = vld [vmem:[%s3423 + $0x8] sm:$0xf]
      %v3427 = vld [vmem:[%s3423 + $0xc] sm:$0xf]
      %v3428 = vld [vmem:[%s3423 + $0x10] sm:$0xf]
      %v3429 = vld [vmem:[%s3423 + $0x14] sm:$0xf]
      %v3430 = vld [vmem:[%s3423 + $0x18] sm:$0xf]
      %v3431 = vld [vmem:[%s3423 + $0x1c] sm:$0xf]
      %v3432 = vld [vmem:[%s3423 + $0x20] sm:$0xf]
      %v3433 = vld [vmem:[%s3423 + $0x24] sm:$0xf]
      %v3434 = vld [vmem:[%s3423 + $0x28] sm:$0xf]
      %v3435 = vld [vmem:[%s3423 + $0x2c] sm:$0xf]
      %v3436 = vld [vmem:[%s3423 + $0x30] sm:$0xf]
      %v3437 = vld [vmem:[%s3423 + $0x34] sm:$0xf]
      %v3438 = vld [vmem:[%s3423 + $0x38] sm:$0xf]
      %v3439 = vld [vmem:[%s3423 + $0x3c] sm:$0xf]
      %s3440 = scalar_lea.vmem %s15, 1
      %v3441 = vld [vmem:[%s3440] sm:$0x1]
      %v3443 = vlaneseq
      %v3444 = vshrl.u32 %v3443, 7
      %v3445 = vsub.s32 0, %v3444
      %v3446 = vrot.slane %v3441, %v3445
      %v3464 = vunpack.c.l.b16 %v3424
      %v3465 = vunpack.c.l.b16 %v3425
      %v3466 = vunpack.c.l.b16 %v3426
      %v3467 = vunpack.c.l.b16 %v3427
      %v3468 = vunpack.c.l.b16 %v3428
      %v3469 = vunpack.c.l.b16 %v3429
      %v3470 = vunpack.c.l.b16 %v3430
      %v3471 = vunpack.c.l.b16 %v3431
      %v3472 = vunpack.c.l.b16 %v3432
      %v3473 = vunpack.c.l.b16 %v3433
      %v3474 = vunpack.c.l.b16 %v3434
      %v3475 = vunpack.c.l.b16 %v3435
      %v3476 = vunpack.c.l.b16 %v3436
      %v3477 = vunpack.c.l.b16 %v3437
      %v3478 = vunpack.c.l.b16 %v3438
      %v3479 = vunpack.c.l.b16 %v3439
      %v3480 = vpack.c.b16 %v3465, %v3464
      %v3481 = vpack.c.b16 %v3467, %v3466
      %v3482 = vpack.c.b16 %v3469, %v3468
      %v3483 = vpack.c.b16 %v3471, %v3470
      %v3484 = vpack.c.b16 %v3473, %v3472
      %v3485 = vpack.c.b16 %v3475, %v3474
      %v3486 = vpack.c.b16 %v3477, %v3476
      %v3487 = vpack.c.b16 %v3479, %v3478
      %3496 = vmatprep.subr.bf16.mxu0 0
      %3497 = vmatpush1.bf16.msra.mxu0 %v3480
      %3498 = vmatprep.subr.bf16.mxu0 0
      %3499 = vmatpush1.bf16.msra.mxu0 %v3481
      %3500 = vmatprep.subr.bf16.mxu0 0
      %3501 = vmatpush1.bf16.msra.mxu0 %v3482
      %3502 = vmatprep.subr.bf16.mxu0 0
      %3503 = vmatpush1.bf16.msra.mxu0 %v3483
      %3504 = vmatprep.subr.bf16.mxu0 0
      %3505 = vmatpush1.bf16.msra.mxu0 %v3484
      %3506 = vmatprep.subr.bf16.mxu0 0
      %3507 = vmatpush1.bf16.msra.mxu0 %v3485
      %3508 = vmatprep.subr.bf16.mxu0 0
      %3509 = vmatpush1.bf16.msra.mxu0 %v3486
      %3510 = vmatprep.subr.bf16.mxu0 0
      %3511 = vmatpush1.bf16.msra.mxu0 %v3487
      %3512 = vmatprep.subr.bf16.mxu0 0
      %3513 = vmatpush1.bf16.msra.mxu0 0
      %3514 = vmatprep.subr.bf16.mxu0 0
      %3515 = vmatpush1.bf16.msra.mxu0 0
      %3516 = vmatprep.subr.bf16.mxu0 0
      %3517 = vmatpush1.bf16.msra.mxu0 0
      %3518 = vmatprep.subr.bf16.mxu0 0
      %3519 = vmatpush1.bf16.msra.mxu0 0
      %3520 = vmatprep.subr.bf16.mxu0 0
      %3521 = vmatpush1.bf16.msra.mxu0 0
      %3522 = vmatprep.subr.bf16.mxu0 0
      %3523 = vmatpush1.bf16.msra.mxu0 0
      %3524 = vmatprep.subr.bf16.mxu0 0
      %3525 = vmatpush1.bf16.msra.mxu0 0
      %3526 = vmatprep.subr.bf16.mxu0 0
      %3527 = vmatpush1.bf16.msra.mxu0 0
      %3528 = vmatprep.mubr.bf16.mxu0 0
      %3529 = vmatmul.mubr.bf16.gmra.mrb[0].mxu0 %v3422
      %v3530 = vpop.f32.mrb[0].mxu0
      %v3531 = vadd.f32 %v3446, %v3530
      %v3532 = vpop.f32.mrb[0].mxu0
      %v3533 = vpop.f32.mrb[0].mxu0
      %v3534 = vadd.f32 %v3446, %v3533
      %v3535 = vpop.f32.mrb[0].mxu0
      %3536 = vdwg.mxu0
      %v3537 = vadd.f32 %v3348, %v3531
      %v3538 = vadd.f32 %v3349, %v3534
      %s3539 = scalar_lea.vmem %s18, 1
      %v3540 = vld [vmem:[%s3539] sm:$0x1]
      %s3541 = scalar_lea.vmem %s19, 1
      %v3542 = vld [vmem:[%s3541] sm:$0x1]
      %v3543 = vsel %vm937, %v3537, 0.0
      %3544 = vadd.xlane.f32.xlu0 %v3543
      %v3545 = vpop.xlane.xlu0 %3544
      %v3546 = vsel %vm937, %v3538, 0.0
      %3547 = vadd.xlane.f32.xlu0 %v3546
      %v3548 = vpop.xlane.xlu0 %3547
      %v3549 = vmul.f32 %v3545, %v1980
      %v3550 = vmul.f32 %v3548, %v1980
      %v3551 = vsub.f32 %v3537, %v3549
      %v3552 = vsub.f32 %v3538, %v3550
      %v3553 = vmul.f32 %v3551, %v3551
      %v3554 = vmul.f32 %v3552, %v3552
      %v3555 = vsel %vm937, %v3553, 0.0
      %3556 = vadd.xlane.f32.xlu0 %v3555
      %v3557 = vpop.xlane.xlu0 %3556
      %v3558 = vsel %vm937, %v3554, 0.0
      %3559 = vadd.xlane.f32.xlu0 %v3558
      %v3560 = vpop.xlane.xlu0 %3559
      %v3561 = vmul.f32 %v3557, %v1980
      %v3562 = vmul.f32 %v3560, %v1980
      %v3563 = vadd.f32 %v3561, 1e-05
      %v3564 = vadd.f32 %v3562, 1e-05
      %v3565 = vrsqrt.pop %v3563
      %v3566 = vrsqrt.pop %v3564
      %v3567 = vmul.f32 %v3551, %v3565
      %v3568 = vmul.f32 %v3552, %v3566
      %v3570 = vlaneseq
      %v3571 = vshrl.u32 %v3570, 7
      %v3572 = vsub.s32 0, %v3571
      %v3573 = vrot.slane %v3540, %v3572
      %v3575 = vmul.f32 %v3567, %v3573
      %v3576 = vmul.f32 %v3568, %v3573
      %v3578 = vlaneseq
      %v3579 = vshrl.u32 %v3578, 7
      %v3580 = vsub.s32 0, %v3579
      %v3581 = vrot.slane %v3542, %v3580
      %v3583 = vadd.f32 %v3575, %v3581
      %v3584 = vadd.f32 %v3576, %v3581
      %v3585 = vld [vmem:[%s823] sm:$0xff]
      %v3586 = vld [vmem:[%s823 + $0x8] sm:$0xff]
      %v3587 = vld [vmem:[%s829] sm:$0xff]
      %v3588 = vld [vmem:[%s829 + $0x8] sm:$0xff]
      %3591 = vrot.lane.b32.xlu0 %v3585, 32
      %v3592 = vpop.permute.xlu0 %3591
      %3593 = vrot.lane.b32.xlu0 %v3586, 32
      %v3594 = vpop.permute.xlu0 %3593
      %v3597 = vsel %vm937, %v3583, %v3592
      %v3598 = vsel %vm937, %v3584, %v3594
      %v3599 = vpack.c.bf16 %v3598, %v3597
      %v3600 = vld [vmem:[%s20] sm:$0xf]
      %v3601 = vld [vmem:[%s20 + $0x4] sm:$0xf]
      %v3602 = vld [vmem:[%s20 + $0x8] sm:$0xf]
      %v3603 = vld [vmem:[%s20 + $0xc] sm:$0xf]
      %v3604 = vld [vmem:[%s20 + $0x10] sm:$0xf]
      %v3605 = vld [vmem:[%s20 + $0x14] sm:$0xf]
      %v3606 = vld [vmem:[%s20 + $0x18] sm:$0x3]
      %v3607 = vld [vmem:[%s21] sm:$0x1]
      %v3609 = vlaneseq
      %v3610 = vshrl.u32 %v3609, 7
      %v3611 = vsub.s32 0, %v3610
      %v3612 = vrot.slane %v3607, %v3611
      %v3621 = vunpack.c.l.b16 %v3600
      %v3622 = vunpack.c.l.b16 %v3601
      %v3623 = vunpack.c.l.b16 %v3602
      %v3624 = vunpack.c.l.b16 %v3603
      %v3625 = vunpack.c.l.b16 %v3604
      %v3626 = vunpack.c.l.b16 %v3605
      %v3627 = vunpack.c.l.b16 %v3606
      %v3628 = vpack.c.b16 %v3622, %v3621
      %v3629 = vpack.c.b16 %v3624, %v3623
      %v3630 = vpack.c.b16 %v3626, %v3625
      %v3631 = vpack.c.b16 %v3627, %v3627
      %vm3635 = vcmask 416768
      %v3637 = vsel %vm3635, %v3599, 0
      %v3640 = vand.u32 %v3631, %v864
      %3642 = vmatprep.subr.bf16.mxu0 0
      %3643 = vmatpush1.bf16.msra.mxu0 %v3628
      %3644 = vmatprep.subr.bf16.mxu0 0
      %3645 = vmatpush1.bf16.msra.mxu0 %v3629
      %3646 = vmatprep.subr.bf16.mxu0 0
      %3647 = vmatpush1.bf16.msra.mxu0 %v3630
      %3648 = vmatprep.subr.bf16.mxu0 0
      %3649 = vmatpush1.bf16.msra.mxu0 %v3640
      %3650 = vmatprep.subr.bf16.mxu0 0
      %3651 = vmatpush1.bf16.msra.mxu0 0
      %3652 = vmatprep.subr.bf16.mxu0 0
      %3653 = vmatpush1.bf16.msra.mxu0 0
      %3654 = vmatprep.subr.bf16.mxu0 0
      %3655 = vmatpush1.bf16.msra.mxu0 0
      %3656 = vmatprep.subr.bf16.mxu0 0
      %3657 = vmatpush1.bf16.msra.mxu0 0
      %3658 = vmatprep.subr.bf16.mxu0 0
      %3659 = vmatpush1.bf16.msra.mxu0 0
      %3660 = vmatprep.subr.bf16.mxu0 0
      %3661 = vmatpush1.bf16.msra.mxu0 0
      %3662 = vmatprep.subr.bf16.mxu0 0
      %3663 = vmatpush1.bf16.msra.mxu0 0
      %3664 = vmatprep.subr.bf16.mxu0 0
      %3665 = vmatpush1.bf16.msra.mxu0 0
      %3666 = vmatprep.subr.bf16.mxu0 0
      %3667 = vmatpush1.bf16.msra.mxu0 0
      %3668 = vmatprep.subr.bf16.mxu0 0
      %3669 = vmatpush1.bf16.msra.mxu0 0
      %3670 = vmatprep.subr.bf16.mxu0 0
      %3671 = vmatpush1.bf16.msra.mxu0 0
      %3672 = vmatprep.subr.bf16.mxu0 0
      %3673 = vmatpush1.bf16.msra.mxu0 0
      %3674 = vmatprep.mubr.bf16.mxu0 0
      %3675 = vmatmul.mubr.bf16.gmra.mrb[0].mxu0 %v3637
      %v3676 = vpop.f32.mrb[0].mxu0
      %v3677 = vadd.f32 %v3612, %v3676
      %v3678 = vpop.f32.mrb[0].mxu0
      %v3679 = vpop.f32.mrb[0].mxu0
      %v3680 = vadd.f32 %v3612, %v3679
      %v3681 = vpop.f32.mrb[0].mxu0
      %3682 = vdwg.mxu0
      %vm3683 = vcmask 15360
      %v3684 = vsel %vm3683, %v3677, -inf
      %3685 = vmax.xlane.f32.xlu0 %v3684
      %v3686 = vpop.xlane.xlu0 %3685
      %v3687 = vsel %vm3683, %v3680, -inf
      %3688 = vmax.xlane.f32.xlu0 %v3687
      %v3689 = vpop.xlane.xlu0 %3688
      %v3690 = vsub.f32 %v3677, %v3686
      %v3691 = vsub.f32 %v3680, %v3689
      %v3692 = vmul.f32 %v3690, 1.442695
      %v3693 = vpow.pop %v3692
      %v3694 = vmul.f32 %v3691, 1.442695
      %v3695 = vpow.pop %v3694
      %v3696 = vsel %vm3683, %v3693, 0.0
      %3697 = vadd.xlane.f32.xlu0 %v3696
      %v3698 = vpop.xlane.xlu0 %3697
      %v3699 = vsel %vm3683, %v3695, 0.0
      %3700 = vadd.xlane.f32.xlu0 %v3699
      %v3701 = vpop.xlane.xlu0 %3700
      %v3702 = vlog2.pop %v3698
      %v3703 = vmul.f32 %v3702, 0.6931472
      %v3704 = vlog2.pop %v3701
      %v3705 = vmul.f32 %v3704, 0.6931472
      %v3706 = vsub.f32 %v3690, %v3703
      %v3707 = vsub.f32 %v3691, %v3705
      %v3708 = vcvt.f32.s32.to.zero.pseudo %v3587
      %v3709 = vcvt.f32.s32.to.zero.pseudo %v3588
      %vm3710 = vcmp.gt.s32.totalorder %v3708, 0
      %v3711 = vsel %vm3710, %v3708, 0
      %vm3712 = vcmp.gt.s32.totalorder %v3709, 0
      %v3713 = vsel %vm3712, %v3709, 0
      %vm3714 = vcmp.lt.s32.totalorder %v3711, 1
      %v3715 = vsel %vm3714, %v3711, 1
      %vm3716 = vcmp.lt.s32.totalorder %v3713, 1
      %v3717 = vsel %vm3716, %v3713, 1
      %v3718 = vlaneseq
      %v3719 = vand.u32 %v3718, 127
      %3720 = vset.pattern.permute.xlu0 0
      %3721 = vperm.xlu0 %3720, %v3715
      %v3722 = vpop.permute.xlu0 %3721
      %3723 = vset.pattern.permute.xlu0 0
      %3724 = vperm.xlu0 %3723, %v3717
      %v3725 = vpop.permute.xlu0 %3724
      %vm3726 = vcmp.eq.s32.totalorder %v3719, %v3722
      %vm3727 = vcmp.eq.s32.totalorder %v3719, %v3725
      %v3728 = vsel %vm3726, 1, 0
      %v3729 = vsel %vm3727, 1, 0
      %v3730 = vcvt.s32.f32 %v3728
      %v3731 = vcvt.s32.f32 %v3729
      %v3732 = vmul.f32 %v3706, %v3730
      %v3733 = vmul.f32 %v3707, %v3731
      %v3734 = vsel %vm3683, %v3732, 0.0
      %v3735 = vsel %vm3683, %v3733, 0.0
      %v3736 = vadd.f32 %v3734, %v3735
      %3737 = vadd.xlane.f32.xlu0 %v3736
      %v3738 = vpop.xlane.xlu0 %3737
      %v3739 = vrot.slane %v3738, 4
      %v3740 = vadd.f32 %v3738, %v3739
      %v3741 = vrot.slane %v3740, 2
      %v3742 = vadd.f32 %v3740, %v3741
      %v3743 = vrot.slane %v3742, 1
      %v3744 = vadd.f32 %v3742, %v3743
      %s3745 = vtos %v3744
      %v3746 = vstv %s3745
      %v3747 = vadd.f32 %v3746, 0.0
      %vm3748 = vcmask 97296
      %v3749 = vsel %vm3748, %v3677, -inf
      %3750 = vmax.xlane.f32.xlu0 %v3749
      %v3751 = vpop.xlane.xlu0 %3750
      %v3752 = vsel %vm3748, %v3680, -inf
      %3753 = vmax.xlane.f32.xlu0 %v3752
      %v3754 = vpop.xlane.xlu0 %3753
      %v3755 = vsub.f32 %v3677, %v3751
      %v3756 = vsub.f32 %v3680, %v3754
      %v3757 = vmul.f32 %v3755, 1.442695
      %v3758 = vpow.pop %v3757
      %v3759 = vmul.f32 %v3756, 1.442695
      %v3760 = vpow.pop %v3759
      %3763 = vrot.lane.b32.xlu0 %v3758, 126
      %v3764 = vpop.permute.xlu0 %3763
      %3765 = vrot.lane.b32.xlu0 %v3760, 126
      %v3766 = vpop.permute.xlu0 %3765
      %vm3769 = vcmask 80896
      %v3770 = vsel %vm3769, %v3764, 0.0
      %3771 = vadd.xlane.f32.xlu0 %v3770
      %v3772 = vpop.xlane.xlu0 %3771
      %v3773 = vsel %vm3769, %v3766, 0.0
      %3774 = vadd.xlane.f32.xlu0 %v3773
      %v3775 = vpop.xlane.xlu0 %3774
      %v3776 = vlog2.pop %v3772
      %v3777 = vmul.f32 %v3776, 0.6931472
      %v3778 = vlog2.pop %v3775
      %v3779 = vmul.f32 %v3778, 0.6931472
      %v3780 = vsub.f32 %v3755, %v3777
      %v3781 = vsub.f32 %v3756, %v3779
      %vm3782 = vcmp.lt.s32.totalorder %v3711, 9
      %v3783 = vsel %vm3782, %v3711, 9
      %vm3784 = vcmp.lt.s32.totalorder %v3713, 9
      %v3785 = vsel %vm3784, %v3713, 9
      %3786 = vset.pattern.permute.xlu0 1
      %3787 = vperm.xlu0 %3786, %v3783
      %v3788 = vpop.permute.xlu0 %3787
      %3789 = vset.pattern.permute.xlu0 1
      %3790 = vperm.xlu0 %3789, %v3785
      %v3791 = vpop.permute.xlu0 %3790
      %vm3792 = vcmp.eq.s32.totalorder %v3719, %v3788
      %vm3793 = vcmp.eq.s32.totalorder %v3719, %v3791
      %v3794 = vsel %vm3792, 1, 0
      %v3795 = vsel %vm3793, 1, 0
      %v3796 = vcvt.s32.f32 %v3794
      %v3797 = vcvt.s32.f32 %v3795
      %3800 = vrot.lane.b32.xlu0 %v3796, 2
      %v3801 = vpop.permute.xlu0 %3800
      %3802 = vrot.lane.b32.xlu0 %v3797, 2
      %v3803 = vpop.permute.xlu0 %3802
      %v3806 = vmul.f32 %v3780, %v3801
      %v3807 = vmul.f32 %v3781, %v3803
      %3810 = vrot.lane.b32.xlu0 %v3806, 126
      %v3811 = vpop.permute.xlu0 %3810
      %3812 = vrot.lane.b32.xlu0 %v3807, 126
      %v3813 = vpop.permute.xlu0 %3812
      %v3816 = vsel %vm3769, %v3811, 0.0
      %v3817 = vsel %vm3769, %v3813, 0.0
      %v3818 = vadd.f32 %v3816, %v3817
      %3819 = vadd.xlane.f32.xlu0 %v3818
      %v3820 = vpop.xlane.xlu0 %3819
      %v3821 = vrot.slane %v3820, 4
      %v3822 = vadd.f32 %v3820, %v3821
      %v3823 = vrot.slane %v3822, 2
      %v3824 = vadd.f32 %v3822, %v3823
      %v3825 = vrot.slane %v3824, 1
      %v3826 = vadd.f32 %v3824, %v3825
      %s3827 = vtos %v3826
      %v3828 = vstv %s3827
      %v3829 = vadd.f32 %v3747, %v3828
      %v3830 = vmax.f32 %v3677, 0.0
      %v3831 = vmax.f32 %v3680, 0.0
      %v3832 = vand.u32 2147483647, %v3677
      %v3833 = vand.u32 2147483647, %v3680
      %v3834 = vsub.f32 0.0, %v3832
      %v3835 = vsub.f32 0.0, %v3833
      %v3836 = vmul.f32 %v3834, 1.442695
      %v3837 = vpow.pop %v3836
      %v3838 = vmul.f32 %v3835, 1.442695
      %v3839 = vpow.pop %v3838
      %v3840 = vadd.f32 %v3837, 1.0
      %v3841 = vadd.f32 %v3839, 1.0
      %v3842 = vlog2.pop %v3840
      %v3843 = vmul.f32 %v3842, 0.6931472
      %v3844 = vlog2.pop %v3841
      %v3845 = vmul.f32 %v3844, 0.6931472
      %v3846 = vadd.f32 %v3830, %v3843
      %v3847 = vadd.f32 %v3831, %v3845
      %v3848 = vadd.f32 %v3846, 0.001
      %v3849 = vadd.f32 %v3847, 0.001
      %3851 = vset.pattern.permute.xlu0 2
      %3852 = vperm.xlu0 %3851, %v3587
      %v3853 = vpop.permute.xlu0 %3852
      %3856 = vset.pattern.permute.xlu0 2
      %3857 = vperm.xlu0 %3856, %v3588
      %v3858 = vpop.permute.xlu0 %3857
      %3860 = vset.pattern.permute.xlu0 3
      %3861 = vperm.xlu0 %3860, %v3587
      %v3862 = vpop.permute.xlu0 %3861
      %3864 = vset.pattern.permute.xlu0 3
      %3865 = vperm.xlu0 %3864, %v3588
      %v3866 = vpop.permute.xlu0 %3865
      %3868 = vset.pattern.permute.xlu0 4
      %3869 = vperm.xlu0 %3868, %v3587
      %v3870 = vpop.permute.xlu0 %3869
      %3872 = vset.pattern.permute.xlu0 4
      %3873 = vperm.xlu0 %3872, %v3588
      %v3874 = vpop.permute.xlu0 %3873
      %3876 = vset.pattern.permute.xlu0 5
      %3877 = vperm.xlu0 %3876, %v3587
      %v3878 = vpop.permute.xlu0 %3877
      %3880 = vset.pattern.permute.xlu0 5
      %3881 = vperm.xlu0 %3880, %v3588
      %v3882 = vpop.permute.xlu0 %3881
      %3884 = vset.pattern.permute.xlu0 6
      %3885 = vperm.xlu0 %3884, %v3587
      %v3886 = vpop.permute.xlu0 %3885
      %3888 = vset.pattern.permute.xlu0 6
      %3889 = vperm.xlu0 %3888, %v3588
      %v3890 = vpop.permute.xlu0 %3889
      %v3892 = vsel %vm991, %v3853, %v3862
      %v3893 = vsel %vm991, %v3858, %v3866
      %vm3894 = vcmask 105472
      %v3895 = vsel %vm3894, %v3892, %v3870
      %v3896 = vsel %vm3894, %v3893, %v3874
      %vm3897 = vcmask 146432
      %v3898 = vsel %vm3897, %v3895, %v3878
      %v3899 = vsel %vm3897, %v3896, %v3882
      %v3900 = vsel %vm1899, %v3898, %v3886
      %v3901 = vsel %vm1899, %v3899, %v3890
      %3904 = vrot.lane.b32.xlu0 %v3677, 80
      %v3905 = vpop.permute.xlu0 %3904
      %3906 = vrot.lane.b32.xlu0 %v3680, 80
      %v3907 = vpop.permute.xlu0 %3906
      %v3910 = vsub.f32 %v3900, %v3905
      %v3911 = vsub.f32 %v3901, %v3907
      %3914 = vrot.lane.b32.xlu0 %v3848, 48
      %v3915 = vpop.permute.xlu0 %3914
      %3916 = vrot.lane.b32.xlu0 %v3849, 48
      %v3917 = vpop.permute.xlu0 %3916
      %v3920 = vrcp.pop %v3915
      %v3921 = vmul.f32 %v3910, %v3920
      %v3922 = vrcp.pop %v3917
      %v3923 = vmul.f32 %v3911, %v3922
      %v3924 = vmul.f32 %v3921, -0.5
      %v3925 = vmul.f32 %v3923, -0.5
      %v3926 = vmul.f32 %v3924, %v3921
      %v3927 = vmul.f32 %v3925, %v3923
      %v3928 = vlog2.pop %v3848
      %v3929 = vmul.f32 %v3928, 0.6931472
      %v3930 = vlog2.pop %v3849
      %v3931 = vmul.f32 %v3930, 0.6931472
      %3934 = vrot.lane.b32.xlu0 %v3929, 48
      %v3935 = vpop.permute.xlu0 %3934
      %3936 = vrot.lane.b32.xlu0 %v3931, 48
      %v3937 = vpop.permute.xlu0 %3936
      %v3940 = vsub.f32 %v3926, %v3935
      %v3941 = vsub.f32 %v3927, %v3937
      %v3942 = vsub.f32 %v3940, 0.9189385
      %v3943 = vsub.f32 %v3941, 0.9189385
      %vm3944 = vcmask 195712
      %v3945 = vsel %vm3944, %v3677, -inf
      %3946 = vmax.xlane.f32.xlu0 %v3945
      %v3947 = vpop.xlane.xlu0 %3946
      %v3948 = vsel %vm3944, %v3680, -inf
      %3949 = vmax.xlane.f32.xlu0 %v3948
      %v3950 = vpop.xlane.xlu0 %3949
      %vm3951 = vcmask 236736
      %v3952 = vsel %vm3951, %v3677, -inf
      %3953 = vmax.xlane.f32.xlu0 %v3952
      %v3954 = vpop.xlane.xlu0 %3953
      %v3955 = vsel %vm3951, %v3680, -inf
      %3956 = vmax.xlane.f32.xlu0 %v3955
      %v3957 = vpop.xlane.xlu0 %3956
      %vm3958 = vcmask 277736
      %v3959 = vsel %vm3958, %v3677, -inf
      %3960 = vmax.xlane.f32.xlu0 %v3959
      %v3961 = vpop.xlane.xlu0 %3960
      %v3962 = vsel %vm3958, %v3680, -inf
      %3963 = vmax.xlane.f32.xlu0 %v3962
      %v3964 = vpop.xlane.xlu0 %3963
      %vm3965 = vcmask 326928
      %v3966 = vsel %vm3965, %v3677, -inf
      %3967 = vmax.xlane.f32.xlu0 %v3966
      %v3968 = vpop.xlane.xlu0 %3967
      %v3969 = vsel %vm3965, %v3680, -inf
      %3970 = vmax.xlane.f32.xlu0 %v3969
      %v3971 = vpop.xlane.xlu0 %3970
      %vm3972 = vcmask 351552
      %v3973 = vsel %vm3972, %v3677, -inf
      %3974 = vmax.xlane.f32.xlu0 %v3973
      %v3975 = vpop.xlane.xlu0 %3974
      %v3976 = vsel %vm3972, %v3680, -inf
      %3977 = vmax.xlane.f32.xlu0 %v3976
      %v3978 = vpop.xlane.xlu0 %3977
      %v3979 = vsel %vm991, %v3947, %v3954
      %v3980 = vsel %vm991, %v3950, %v3957
      %v3981 = vsel %vm3894, %v3979, %v3961
      %v3982 = vsel %vm3894, %v3980, %v3964
      %v3983 = vsel %vm3897, %v3981, %v3968
      %v3984 = vsel %vm3897, %v3982, %v3971
      %v3985 = vsel %vm1899, %v3983, %v3975
      %v3986 = vsel %vm1899, %v3984, %v3978
      %3989 = vrot.lane.b32.xlu0 %v3985, 16
      %v3990 = vpop.permute.xlu0 %3989
      %3991 = vrot.lane.b32.xlu0 %v3986, 16
      %v3992 = vpop.permute.xlu0 %3991
      %v3995 = vsub.f32 %v3677, %v3990
      %v3996 = vsub.f32 %v3680, %v3992
      %v3997 = vmul.f32 %v3995, 1.442695
      %v3998 = vpow.pop %v3997
      %v3999 = vmul.f32 %v3996, 1.442695
      %v4000 = vpow.pop %v3999
      %4003 = vrot.lane.b32.xlu0 %v3998, 112
      %v4004 = vpop.permute.xlu0 %4003
      %4005 = vrot.lane.b32.xlu0 %v4000, 112
      %v4006 = vpop.permute.xlu0 %4005
      %v4009 = vsel %vm991, %v4004, 0.0
      %4010 = vadd.xlane.f32.xlu0 %v4009
      %v4011 = vpop.xlane.xlu0 %4010
      %v4012 = vsel %vm991, %v4006, 0.0
      %4013 = vadd.xlane.f32.xlu0 %v4012
      %v4014 = vpop.xlane.xlu0 %4013
      %4015 = vrot.lane.b32.xlu0 %v3998, 104
      %v4016 = vpop.permute.xlu0 %4015
      %4017 = vrot.lane.b32.xlu0 %v4000, 104
      %v4018 = vpop.permute.xlu0 %4017
      %vm4021 = vcmask 39936
      %v4022 = vsel %vm4021, %v4016, 0.0
      %4023 = vadd.xlane.f32.xlu0 %v4022
      %v4024 = vpop.xlane.xlu0 %4023
      %v4025 = vsel %vm4021, %v4018, 0.0
      %4026 = vadd.xlane.f32.xlu0 %v4025
      %v4027 = vpop.xlane.xlu0 %4026
      %4028 = vrot.lane.b32.xlu0 %v3998, 99
      %v4029 = vpop.permute.xlu0 %4028
      %4030 = vrot.lane.b32.xlu0 %v4000, 99
      %v4031 = vpop.permute.xlu0 %4030
      %v4034 = vsel %vm4021, %v4029, 0.0
      %4035 = vadd.xlane.f32.xlu0 %v4034
      %v4036 = vpop.xlane.xlu0 %4035
      %v4037 = vsel %vm4021, %v4031, 0.0
      %4038 = vadd.xlane.f32.xlu0 %v4037
      %v4039 = vpop.xlane.xlu0 %4038
      %4040 = vrot.lane.b32.xlu0 %v3998, 94
      %v4041 = vpop.permute.xlu0 %4040
      %4042 = vrot.lane.b32.xlu0 %v4000, 94
      %v4043 = vpop.permute.xlu0 %4042
      %vm4046 = vcmask 48128
      %v4047 = vsel %vm4046, %v4041, 0.0
      %4048 = vadd.xlane.f32.xlu0 %v4047
      %v4049 = vpop.xlane.xlu0 %4048
      %v4050 = vsel %vm4046, %v4043, 0.0
      %4051 = vadd.xlane.f32.xlu0 %v4050
      %v4052 = vpop.xlane.xlu0 %4051
      %4053 = vrot.lane.b32.xlu0 %v3998, 88
      %v4054 = vpop.permute.xlu0 %4053
      %4055 = vrot.lane.b32.xlu0 %v4000, 88
      %v4056 = vpop.permute.xlu0 %4055
      %vm4059 = vcmask 23552
      %v4060 = vsel %vm4059, %v4054, 0.0
      %4061 = vadd.xlane.f32.xlu0 %v4060
      %v4062 = vpop.xlane.xlu0 %4061
      %v4063 = vsel %vm4059, %v4056, 0.0
      %4064 = vadd.xlane.f32.xlu0 %v4063
      %v4065 = vpop.xlane.xlu0 %4064
      %v4066 = vsel %vm991, %v4011, %v4024
      %v4067 = vsel %vm991, %v4014, %v4027
      %v4068 = vsel %vm3894, %v4066, %v4036
      %v4069 = vsel %vm3894, %v4067, %v4039
      %v4070 = vsel %vm3897, %v4068, %v4049
      %v4071 = vsel %vm3897, %v4069, %v4052
      %v4072 = vsel %vm1899, %v4070, %v4062
      %v4073 = vsel %vm1899, %v4071, %v4065
      %v4074 = vlog2.pop %v4072
      %v4075 = vmul.f32 %v4074, 0.6931472
      %v4076 = vlog2.pop %v4073
      %v4077 = vmul.f32 %v4076, 0.6931472
      %4080 = vrot.lane.b32.xlu0 %v4075, 16
      %v4081 = vpop.permute.xlu0 %4080
      %4082 = vrot.lane.b32.xlu0 %v4077, 16
      %v4083 = vpop.permute.xlu0 %4082
      %v4086 = vsub.f32 %v3995, %v4081
      %v4087 = vsub.f32 %v3996, %v4083
      %4090 = vrot.lane.b32.xlu0 %v4072, 16
      %v4091 = vpop.permute.xlu0 %4090
      %4092 = vrot.lane.b32.xlu0 %v4073, 16
      %v4093 = vpop.permute.xlu0 %4092
      %v4096 = vrcp.pop %v4091
      %v4097 = vmul.f32 %v3998, %v4096
      %v4098 = vrcp.pop %v4093
      %v4099 = vmul.f32 %v4000, %v4098
      %4100 = vrot.lane.b32.xlu0 %v3677, 96
      %v4101 = vpop.permute.xlu0 %4100
      %4102 = vrot.lane.b32.xlu0 %v3680, 96
      %v4103 = vpop.permute.xlu0 %4102
      %v4106 = vmul.f32 %v4097, %v4101
      %v4107 = vmul.f32 %v4099, %v4103
      %4110 = vrot.lane.b32.xlu0 %v3942, 16
      %v4111 = vpop.permute.xlu0 %4110
      %4112 = vrot.lane.b32.xlu0 %v3943, 16
      %v4113 = vpop.permute.xlu0 %4112
      %v4116 = vadd.f32 %v4086, %v4111
      %v4117 = vadd.f32 %v4087, %v4113
      %v4118 = vsel %vm3944, %v4116, -inf
      %4119 = vmax.xlane.f32.xlu0 %v4118
      %v4120 = vpop.xlane.xlu0 %4119
      %v4121 = vsel %vm3944, %v4117, -inf
      %4122 = vmax.xlane.f32.xlu0 %v4121
      %v4123 = vpop.xlane.xlu0 %4122
      %v4124 = vsel %vm3951, %v4116, -inf
      %4125 = vmax.xlane.f32.xlu0 %v4124
      %v4126 = vpop.xlane.xlu0 %4125
      %v4127 = vsel %vm3951, %v4117, -inf
      %4128 = vmax.xlane.f32.xlu0 %v4127
      %v4129 = vpop.xlane.xlu0 %4128
      %v4130 = vsel %vm3958, %v4116, -inf
      %4131 = vmax.xlane.f32.xlu0 %v4130
      %v4132 = vpop.xlane.xlu0 %4131
      %v4133 = vsel %vm3958, %v4117, -inf
      %4134 = vmax.xlane.f32.xlu0 %v4133
      %v4135 = vpop.xlane.xlu0 %4134
      %v4136 = vsel %vm3965, %v4116, -inf
      %4137 = vmax.xlane.f32.xlu0 %v4136
      %v4138 = vpop.xlane.xlu0 %4137
      %v4139 = vsel %vm3965, %v4117, -inf
      %4140 = vmax.xlane.f32.xlu0 %v4139
      %v4141 = vpop.xlane.xlu0 %4140
      %v4142 = vsel %vm3972, %v4116, -inf
      %4143 = vmax.xlane.f32.xlu0 %v4142
      %v4144 = vpop.xlane.xlu0 %4143
      %v4145 = vsel %vm3972, %v4117, -inf
      %4146 = vmax.xlane.f32.xlu0 %v4145
      %v4147 = vpop.xlane.xlu0 %4146
      %v4148 = vsel %vm991, %v4120, %v4126
      %v4149 = vsel %vm991, %v4123, %v4129
      %v4150 = vsel %vm3894, %v4148, %v4132
      %v4151 = vsel %vm3894, %v4149, %v4135
      %v4152 = vsel %vm3897, %v4150, %v4138
      %v4153 = vsel %vm3897, %v4151, %v4141
      %v4154 = vsel %vm1899, %v4152, %v4144
      %v4155 = vsel %vm1899, %v4153, %v4147
      %4158 = vrot.lane.b32.xlu0 %v4154, 16
      %v4159 = vpop.permute.xlu0 %4158
      %4160 = vrot.lane.b32.xlu0 %v4155, 16
      %v4161 = vpop.permute.xlu0 %4160
      %v4164 = vsub.f32 %v4116, %v4159
      %v4165 = vsub.f32 %v4117, %v4161
      %v4166 = vmul.f32 %v4164, 1.442695
      %v4167 = vpow.pop %v4166
      %v4168 = vmul.f32 %v4165, 1.442695
      %v4169 = vpow.pop %v4168
      %4172 = vrot.lane.b32.xlu0 %v4167, 112
      %v4173 = vpop.permute.xlu0 %4172
      %4174 = vrot.lane.b32.xlu0 %v4169, 112
      %v4175 = vpop.permute.xlu0 %4174
      %v4178 = vsel %vm991, %v4173, 0.0
      %4179 = vadd.xlane.f32.xlu0 %v4178
      %v4180 = vpop.xlane.xlu0 %4179
      %v4181 = vsel %vm991, %v4175, 0.0
      %4182 = vadd.xlane.f32.xlu0 %v4181
      %v4183 = vpop.xlane.xlu0 %4182
      %4184 = vrot.lane.b32.xlu0 %v4167, 104
      %v4185 = vpop.permute.xlu0 %4184
      %4186 = vrot.lane.b32.xlu0 %v4169, 104
      %v4187 = vpop.permute.xlu0 %4186
      %v4190 = vsel %vm4021, %v4185, 0.0
      %4191 = vadd.xlane.f32.xlu0 %v4190
      %v4192 = vpop.xlane.xlu0 %4191
      %v4193 = vsel %vm4021, %v4187, 0.0
      %4194 = vadd.xlane.f32.xlu0 %v4193
      %v4195 = vpop.xlane.xlu0 %4194
      %4196 = vrot.lane.b32.xlu0 %v4167, 99
      %v4197 = vpop.permute.xlu0 %4196
      %4198 = vrot.lane.b32.xlu0 %v4169, 99
      %v4199 = vpop.permute.xlu0 %4198
      %v4202 = vsel %vm4021, %v4197, 0.0
      %4203 = vadd.xlane.f32.xlu0 %v4202
      %v4204 = vpop.xlane.xlu0 %4203
      %v4205 = vsel %vm4021, %v4199, 0.0
      %4206 = vadd.xlane.f32.xlu0 %v4205
      %v4207 = vpop.xlane.xlu0 %4206
      %4208 = vrot.lane.b32.xlu0 %v4167, 94
      %v4209 = vpop.permute.xlu0 %4208
      %4210 = vrot.lane.b32.xlu0 %v4169, 94
      %v4211 = vpop.permute.xlu0 %4210
      %v4214 = vsel %vm4046, %v4209, 0.0
      %4215 = vadd.xlane.f32.xlu0 %v4214
      %v4216 = vpop.xlane.xlu0 %4215
      %v4217 = vsel %vm4046, %v4211, 0.0
      %4218 = vadd.xlane.f32.xlu0 %v4217
      %v4219 = vpop.xlane.xlu0 %4218
      %4220 = vrot.lane.b32.xlu0 %v4167, 88
      %v4221 = vpop.permute.xlu0 %4220
      %4222 = vrot.lane.b32.xlu0 %v4169, 88
      %v4223 = vpop.permute.xlu0 %4222
      %v4226 = vsel %vm4059, %v4221, 0.0
      %4227 = vadd.xlane.f32.xlu0 %v4226
      %v4228 = vpop.xlane.xlu0 %4227
      %v4229 = vsel %vm4059, %v4223, 0.0
      %4230 = vadd.xlane.f32.xlu0 %v4229
      %v4231 = vpop.xlane.xlu0 %4230
      %4234 = vrot.lane.b32.xlu0 %v4106, 112
      %v4235 = vpop.permute.xlu0 %4234
      %4236 = vrot.lane.b32.xlu0 %v4107, 112
      %v4237 = vpop.permute.xlu0 %4236
      %v4240 = vsel %vm991, %v4235, 0.0
      %4241 = vadd.xlane.f32.xlu0 %v4240
      %v4242 = vpop.xlane.xlu0 %4241
      %v4243 = vsel %vm991, %v4237, 0.0
      %4244 = vadd.xlane.f32.xlu0 %v4243
      %v4245 = vpop.xlane.xlu0 %4244
      %4246 = vrot.lane.b32.xlu0 %v4106, 104
      %v4247 = vpop.permute.xlu0 %4246
      %4248 = vrot.lane.b32.xlu0 %v4107, 104
      %v4249 = vpop.permute.xlu0 %4248
      %v4252 = vsel %vm4021, %v4247, 0.0
      %4253 = vadd.xlane.f32.xlu0 %v4252
      %v4254 = vpop.xlane.xlu0 %4253
      %v4255 = vsel %vm4021, %v4249, 0.0
      %4256 = vadd.xlane.f32.xlu0 %v4255
      %v4257 = vpop.xlane.xlu0 %4256
      %4258 = vrot.lane.b32.xlu0 %v4106, 99
      %v4259 = vpop.permute.xlu0 %4258
      %4260 = vrot.lane.b32.xlu0 %v4107, 99
      %v4261 = vpop.permute.xlu0 %4260
      %v4264 = vsel %vm4021, %v4259, 0.0
      %4265 = vadd.xlane.f32.xlu0 %v4264
      %v4266 = vpop.xlane.xlu0 %4265
      %v4267 = vsel %vm4021, %v4261, 0.0
      %4268 = vadd.xlane.f32.xlu0 %v4267
      %v4269 = vpop.xlane.xlu0 %4268
      %4270 = vrot.lane.b32.xlu0 %v4106, 94
      %v4271 = vpop.permute.xlu0 %4270
      %4272 = vrot.lane.b32.xlu0 %v4107, 94
      %v4273 = vpop.permute.xlu0 %4272
      %v4276 = vsel %vm4046, %v4271, 0.0
      %4277 = vadd.xlane.f32.xlu0 %v4276
      %v4278 = vpop.xlane.xlu0 %4277
      %v4279 = vsel %vm4046, %v4273, 0.0
      %4280 = vadd.xlane.f32.xlu0 %v4279
      %v4281 = vpop.xlane.xlu0 %4280
      %4282 = vrot.lane.b32.xlu0 %v4106, 88
      %v4283 = vpop.permute.xlu0 %4282
      %4284 = vrot.lane.b32.xlu0 %v4107, 88
      %v4285 = vpop.permute.xlu0 %4284
      %v4288 = vsel %vm4059, %v4283, 0.0
      %4289 = vadd.xlane.f32.xlu0 %v4288
      %v4290 = vpop.xlane.xlu0 %4289
      %v4291 = vsel %vm4059, %v4285, 0.0
      %4292 = vadd.xlane.f32.xlu0 %v4291
      %v4293 = vpop.xlane.xlu0 %4292
      %v4294 = vlog2.pop %v4180
      %v4295 = vmul.f32 %v4294, 0.6931472
      %v4296 = vlog2.pop %v4183
      %v4297 = vmul.f32 %v4296, 0.6931472
      %v4298 = vadd.f32 %v4154, %v4295
      %v4299 = vadd.f32 %v4155, %v4297
      %vm4300 = vcmask 7168
      %v4301 = vsel %vm4300, %v4298, 0.0
      %v4302 = vsel %vm4300, %v4299, 0.0
      %v4303 = vadd.f32 %v4301, %v4302
      %4304 = vadd.xlane.f32.xlu0 %v4303
      %v4305 = vpop.xlane.xlu0 %4304
      %v4306 = vrot.slane %v4305, 4
      %v4307 = vadd.f32 %v4305, %v4306
      %v4308 = vrot.slane %v4307, 2
      %v4309 = vadd.f32 %v4307, %v4308
      %v4310 = vrot.slane %v4309, 1
      %v4311 = vadd.f32 %v4309, %v4310
      %s4312 = vtos %v4311
      %v4313 = vstv %s4312
      %v4314 = vadd.f32 %v3829, %v4313
      %v4315 = vlog2.pop %v4192
      %v4316 = vmul.f32 %v4315, 0.6931472
      %v4317 = vlog2.pop %v4195
      %v4318 = vmul.f32 %v4317, 0.6931472
      %v4319 = vadd.f32 %v4154, %v4316
      %v4320 = vadd.f32 %v4155, %v4318
      %4323 = vrot.lane.b32.xlu0 %v4319, 120
      %v4324 = vpop.permute.xlu0 %4323
      %4325 = vrot.lane.b32.xlu0 %v4320, 120
      %v4326 = vpop.permute.xlu0 %4325
      %v4329 = vsel %vm4300, %v4324, 0.0
      %v4330 = vsel %vm4300, %v4326, 0.0
      %v4331 = vadd.f32 %v4329, %v4330
      %4332 = vadd.xlane.f32.xlu0 %v4331
      %v4333 = vpop.xlane.xlu0 %4332
      %v4334 = vrot.slane %v4333, 4
      %v4335 = vadd.f32 %v4333, %v4334
      %v4336 = vrot.slane %v4335, 2
      %v4337 = vadd.f32 %v4335, %v4336
      %v4338 = vrot.slane %v4337, 1
      %v4339 = vadd.f32 %v4337, %v4338
      %s4340 = vtos %v4339
      %v4341 = vstv %s4340
      %v4342 = vadd.f32 %v4314, %v4341
      %v4343 = vlog2.pop %v4204
      %v4344 = vmul.f32 %v4343, 0.6931472
      %v4345 = vlog2.pop %v4207
      %v4346 = vmul.f32 %v4345, 0.6931472
      %v4347 = vadd.f32 %v4154, %v4344
      %v4348 = vadd.f32 %v4155, %v4346
      %4351 = vrot.lane.b32.xlu0 %v4347, 115
      %v4352 = vpop.permute.xlu0 %4351
      %4353 = vrot.lane.b32.xlu0 %v4348, 115
      %v4354 = vpop.permute.xlu0 %4353
      %v4357 = vsel %vm4300, %v4352, 0.0
      %v4358 = vsel %vm4300, %v4354, 0.0
      %v4359 = vadd.f32 %v4357, %v4358
      %4360 = vadd.xlane.f32.xlu0 %v4359
      %v4361 = vpop.xlane.xlu0 %4360
      %v4362 = vrot.slane %v4361, 4
      %v4363 = vadd.f32 %v4361, %v4362
      %v4364 = vrot.slane %v4363, 2
      %v4365 = vadd.f32 %v4363, %v4364
      %v4366 = vrot.slane %v4365, 1
      %v4367 = vadd.f32 %v4365, %v4366
      %s4368 = vtos %v4367
      %v4369 = vstv %s4368
      %v4370 = vadd.f32 %v4342, %v4369
      %v4371 = vlog2.pop %v4216
      %v4372 = vmul.f32 %v4371, 0.6931472
      %v4373 = vlog2.pop %v4219
      %v4374 = vmul.f32 %v4373, 0.6931472
      %v4375 = vadd.f32 %v4154, %v4372
      %v4376 = vadd.f32 %v4155, %v4374
      %4379 = vrot.lane.b32.xlu0 %v4375, 110
      %v4380 = vpop.permute.xlu0 %4379
      %4381 = vrot.lane.b32.xlu0 %v4376, 110
      %v4382 = vpop.permute.xlu0 %4381
      %v4385 = vsel %vm4300, %v4380, 0.0
      %v4386 = vsel %vm4300, %v4382, 0.0
      %v4387 = vadd.f32 %v4385, %v4386
      %4388 = vadd.xlane.f32.xlu0 %v4387
      %v4389 = vpop.xlane.xlu0 %4388
      %v4390 = vrot.slane %v4389, 4
      %v4391 = vadd.f32 %v4389, %v4390
      %v4392 = vrot.slane %v4391, 2
      %v4393 = vadd.f32 %v4391, %v4392
      %v4394 = vrot.slane %v4393, 1
      %v4395 = vadd.f32 %v4393, %v4394
      %s4396 = vtos %v4395
      %v4397 = vstv %s4396
      %v4398 = vadd.f32 %v4370, %v4397
      %v4399 = vlog2.pop %v4228
      %v4400 = vmul.f32 %v4399, 0.6931472
      %v4401 = vlog2.pop %v4231
      %v4402 = vmul.f32 %v4401, 0.6931472
      %v4403 = vadd.f32 %v4154, %v4400
      %v4404 = vadd.f32 %v4155, %v4402
      %4407 = vrot.lane.b32.xlu0 %v4403, 104
      %v4408 = vpop.permute.xlu0 %4407
      %4409 = vrot.lane.b32.xlu0 %v4404, 104
      %v4410 = vpop.permute.xlu0 %4409
      %v4413 = vsel %vm4300, %v4408, 0.0
      %v4414 = vsel %vm4300, %v4410, 0.0
      %v4415 = vadd.f32 %v4413, %v4414
      %4416 = vadd.xlane.f32.xlu0 %v4415
      %v4417 = vpop.xlane.xlu0 %4416
      %v4418 = vrot.slane %v4417, 4
      %v4419 = vadd.f32 %v4417, %v4418
      %v4420 = vrot.slane %v4419, 2
      %v4421 = vadd.f32 %v4419, %v4420
      %v4422 = vrot.slane %v4421, 1
      %v4423 = vadd.f32 %v4421, %v4422
      %s4424 = vtos %v4423
      %v4425 = vstv %s4424
      %v4426 = vadd.f32 %v4398, %v4425
      %v4427 = vsel %vm4300, %v4242, %v4254
      %v4428 = vsel %vm4300, %v4245, %v4257
      %v4429 = vsel %vm3683, %v4427, %v4266
      %v4430 = vsel %vm3683, %v4428, %v4269
      %v4431 = vsel %vm4059, %v4429, %v4278
      %v4432 = vsel %vm4059, %v4430, %v4281
      %vm4433 = vcmask 31744
      %v4434 = vsel %vm4433, %v4431, %v4290
      %v4435 = vsel %vm4433, %v4432, %v4293
      %4438 = vrot.lane.b32.xlu0 %v4434, 11
      %v4439 = vpop.permute.xlu0 %4438
      %4440 = vrot.lane.b32.xlu0 %v4435, 11
      %v4441 = vpop.permute.xlu0 %4440
      %v4444 = vsub.f32 %v3585, %v4439
      %v4445 = vsub.f32 %v3586, %v4441
      %v4446 = vsub.f32 1.0, %v3585
      %v4447 = vsub.f32 1.0, %v3586
      %4450 = vrot.lane.b32.xlu0 %v4444, 114
      %v4451 = vpop.permute.xlu0 %4450
      %4452 = vrot.lane.b32.xlu0 %v4445, 114
      %v4453 = vpop.permute.xlu0 %4452
      %v4456 = vmul.f32 %v4446, %v4451
      %v4457 = vmul.f32 %v4447, %v4453
      %v4458 = vmax.f32 %v4456, 0.0
      %v4459 = vmax.f32 %v4457, 0.0
      %v4460 = vsub.f32 0.0, %v3585
      %v4461 = vsub.f32 0.0, %v3586
      %v4462 = vmul.f32 %v4460, %v4451
      %v4463 = vmul.f32 %v4461, %v4453
      %v4464 = vmax.f32 %v4462, 0.0
      %v4465 = vmax.f32 %v4463, 0.0
      %v4466 = vmul.f32 %v4458, %v4458
      %v4467 = vmul.f32 %v4459, %v4459
      %v4468 = vmul.f32 %v4464, %v4464
      %v4469 = vmul.f32 %v4465, %v4465
      %v4470 = vadd.f32 %v4466, %v4468
      %v4471 = vadd.f32 %v4467, %v4469
      %v4472 = vsel %vm4300, %v4470, 0.0
      %v4473 = vsel %vm4300, %v4471, 0.0
      %v4474 = vadd.f32 %v4472, %v4473
      %4475 = vadd.xlane.f32.xlu0 %v4474
      %v4476 = vpop.xlane.xlu0 %4475
      %v4477 = vrot.slane %v4476, 4
      %v4478 = vadd.f32 %v4476, %v4477
      %v4479 = vrot.slane %v4478, 2
      %v4480 = vadd.f32 %v4478, %v4479
      %v4481 = vrot.slane %v4480, 1
      %v4482 = vadd.f32 %v4480, %v4481
      %s4483 = vtos %v4482
      %v4484 = vsub.f32 %v4434, 1.0
      %v4485 = vsub.f32 %v4435, 1.0
      %v4486 = vmax.f32 %v4484, 0.0
      %v4487 = vmax.f32 %v4485, 0.0
      %v4488 = vsub.f32 0.0, %v4434
      %v4489 = vsub.f32 0.0, %v4435
      %v4490 = vmax.f32 %v4488, 0.0
      %v4491 = vmax.f32 %v4489, 0.0
      %v4492 = vmul.f32 %v4486, %v4486
      %v4493 = vmul.f32 %v4487, %v4487
      %v4494 = vmul.f32 %v4490, %v4490
      %v4495 = vmul.f32 %v4491, %v4491
      %v4496 = vadd.f32 %v4492, %v4494
      %v4497 = vadd.f32 %v4493, %v4495
      %v4498 = vsel %vm4021, %v4496, 0.0
      %v4499 = vsel %vm4021, %v4497, 0.0
      %v4500 = vadd.f32 %v4498, %v4499
      %4501 = vadd.xlane.f32.xlu0 %v4500
      %v4502 = vpop.xlane.xlu0 %4501
      %v4503 = vrot.slane %v4502, 4
      %v4504 = vadd.f32 %v4502, %v4503
      %v4505 = vrot.slane %v4504, 2
      %v4506 = vadd.f32 %v4504, %v4505
      %v4507 = vrot.slane %v4506, 1
      %v4508 = vadd.f32 %v4506, %v4507
      %s4509 = vtos %v4508
      %v4510 = vld [vmem:[%s3] sm:$0xf]
      %v4511 = vpack.c.bf16 %v4510, %v4510
      %v4512 = vld [vmem:[%s22] sm:$0x77]
      %v4513 = vld [vmem:[%s23] sm:$0x3]
      %v4515 = vlaneseq
      %v4516 = vshrl.u32 %v4515, 7
      %v4517 = vsub.s32 0, %v4516
      %v4518 = vrot.slane %v4513, %v4517
      %v4519 = vlaneseq
      %v4520 = vshrl.u32 %v4519, 7
      %v4521 = vsub.s32 1, %v4520
      %v4522 = vrot.slane %v4513, %v4521
      %v4526 = vunpack.c.l.b16 %v4512
      %v4527 = vunpack.c.h.b16 %v4512
      %v4528 = vpack.c.b16 %v4526, %v4526
      %v4529 = vpack.c.b16 %v4527, %v4527
      %v4531 = vsel %vm4046, %v4511, 0
      %vm4533 = vcmask 1042432
      %v4535 = vsel %vm4533, %v4528, 0
      %v4538 = vsel %vm4533, %v4529, 0
      %4540 = vmatprep.subr.bf16.mxu0 %v4538
      %4541 = vmatpush1.bf16.msra.mxu0 %v4535
      %4542 = vmatprep.subr.bf16.mxu0 0
      %4543 = vmatpush1.bf16.msra.mxu0 0
      %4544 = vmatprep.subr.bf16.mxu0 0
      %4545 = vmatpush1.bf16.msra.mxu0 0
      %4546 = vmatprep.subr.bf16.mxu0 0
      %4547 = vmatpush1.bf16.msra.mxu0 0
      %4548 = vmatprep.subr.bf16.mxu0 0
      %4549 = vmatpush1.bf16.msra.mxu0 0
      %4550 = vmatprep.subr.bf16.mxu0 0
      %4551 = vmatpush1.bf16.msra.mxu0 0
      %4552 = vmatprep.subr.bf16.mxu0 0
      %4553 = vmatpush1.bf16.msra.mxu0 0
      %4554 = vmatprep.subr.bf16.mxu0 0
      %4555 = vmatpush1.bf16.msra.mxu0 0
      %4556 = vmatprep.subr.bf16.mxu0 0
      %4557 = vmatpush1.bf16.msra.mxu0 0
      %4558 = vmatprep.subr.bf16.mxu0 0
      %4559 = vmatpush1.bf16.msra.mxu0 0
      %4560 = vmatprep.subr.bf16.mxu0 0
      %4561 = vmatpush1.bf16.msra.mxu0 0
      %4562 = vmatprep.subr.bf16.mxu0 0
      %4563 = vmatpush1.bf16.msra.mxu0 0
      %4564 = vmatprep.subr.bf16.mxu0 0
      %4565 = vmatpush1.bf16.msra.mxu0 0
      %4566 = vmatprep.subr.bf16.mxu0 0
      %4567 = vmatpush1.bf16.msra.mxu0 0
      %4568 = vmatprep.subr.bf16.mxu0 0
      %4569 = vmatpush1.bf16.msra.mxu0 0
      %4570 = vmatprep.subr.bf16.mxu0 0
      %4571 = vmatpush1.bf16.msra.mxu0 0
      %4572 = vmatprep.mubr.bf16.mxu0 0
      %4573 = vmatmul.mubr.bf16.gmra.mrb[0].mxu0 %v4531
      %v4574 = vpop.f32.mrb[0].mxu0
      %v4575 = vadd.f32 %v4518, %v4574
      %v4576 = vpop.f32.mrb[0].mxu0
      %v4577 = vadd.f32 %v4522, %v4576
      %v4578 = vpop.f32.mrb[0].mxu0
      %v4579 = vpop.f32.mrb[0].mxu0
      %4580 = vdwg.mxu0
      %v4581 = vmax.f32 %v4575, 0.0
      %v4582 = vmax.f32 %v4577, 0.0
      %v4583 = vpack.c.bf16 %v4581, %v4581
      %v4584 = vpack.c.bf16 %v4582, %v4582
      %v4585 = vld [vmem:[%s24] sm:$0xf]
      %v4586 = vld [vmem:[%s24 + $0x4] sm:$0xf]
      %v4587 = vld [vmem:[%s24 + $0x8] sm:$0xf]
      %v4588 = vld [vmem:[%s24 + $0xc] sm:$0xf]
      %v4589 = vld [vmem:[%s24 + $0x10] sm:$0xf]
      %v4590 = vld [vmem:[%s24 + $0x14] sm:$0xf]
      %v4591 = vld [vmem:[%s24 + $0x18] sm:$0xf]
      %v4592 = vld [vmem:[%s24 + $0x1c] sm:$0xf]
      %v4593 = vld [vmem:[%s24 + $0x20] sm:$0xf]
      %v4594 = vld [vmem:[%s24 + $0x24] sm:$0xf]
      %v4595 = vld [vmem:[%s24 + $0x28] sm:$0xf]
      %v4596 = vld [vmem:[%s24 + $0x2c] sm:$0xf]
      %v4597 = vld [vmem:[%s24 + $0x30] sm:$0xf]
      %v4598 = vld [vmem:[%s24 + $0x34] sm:$0xf]
      %v4599 = vld [vmem:[%s24 + $0x38] sm:$0xf]
      %v4600 = vld [vmem:[%s24 + $0x3c] sm:$0xf]
      %v4601 = vld [vmem:[%s24 + $0x40] sm:$0xf]
      %v4602 = vld [vmem:[%s24 + $0x44] sm:$0xf]
      %v4603 = vld [vmem:[%s24 + $0x48] sm:$0xf]
      %v4604 = vld [vmem:[%s24 + $0x4c] sm:$0xf]
      %v4605 = vld [vmem:[%s24 + $0x50] sm:$0xf]
      %v4606 = vld [vmem:[%s24 + $0x54] sm:$0xf]
      %v4607 = vld [vmem:[%s24 + $0x58] sm:$0xf]
      %v4608 = vld [vmem:[%s24 + $0x5c] sm:$0xf]
      %v4609 = vld [vmem:[%s24 + $0x60] sm:$0xf]
      %v4610 = vld [vmem:[%s24 + $0x64] sm:$0xf]
      %v4611 = vld [vmem:[%s24 + $0x68] sm:$0xf]
      %v4612 = vld [vmem:[%s24 + $0x6c] sm:$0xf]
      %v4613 = vld [vmem:[%s24 + $0x70] sm:$0xf]
      %v4614 = vld [vmem:[%s24 + $0x74] sm:$0xf]
      %v4615 = vld [vmem:[%s24 + $0x78] sm:$0xf]
      %v4616 = vld [vmem:[%s24 + $0x7c] sm:$0xf]
      %v4617 = vld [vmem:[%s25] sm:$0x1]
      %v4619 = vlaneseq
      %v4620 = vshrl.u32 %v4619, 7
      %v4621 = vsub.s32 0, %v4620
      %v4622 = vrot.slane %v4617, %v4621
      %v4656 = vunpack.c.l.b16 %v4585
      %v4657 = vunpack.c.l.b16 %v4586
      %v4658 = vunpack.c.l.b16 %v4587
      %v4659 = vunpack.c.l.b16 %v4588
      %v4660 = vunpack.c.l.b16 %v4589
      %v4661 = vunpack.c.l.b16 %v4590
      %v4662 = vunpack.c.l.b16 %v4591
      %v4663 = vunpack.c.l.b16 %v4592
      %v4664 = vunpack.c.l.b16 %v4593
      %v4665 = vunpack.c.l.b16 %v4594
      %v4666 = vunpack.c.l.b16 %v4595
      %v4667 = vunpack.c.l.b16 %v4596
      %v4668 = vunpack.c.l.b16 %v4597
      %v4669 = vunpack.c.l.b16 %v4598
      %v4670 = vunpack.c.l.b16 %v4599
      %v4671 = vunpack.c.l.b16 %v4600
      %v4672 = vunpack.c.l.b16 %v4601
      %v4673 = vunpack.c.l.b16 %v4602
      %v4674 = vunpack.c.l.b16 %v4603
      %v4675 = vunpack.c.l.b16 %v4604
      %v4676 = vunpack.c.l.b16 %v4605
      %v4677 = vunpack.c.l.b16 %v4606
      %v4678 = vunpack.c.l.b16 %v4607
      %v4679 = vunpack.c.l.b16 %v4608
      %v4680 = vunpack.c.l.b16 %v4609
      %v4681 = vunpack.c.l.b16 %v4610
      %v4682 = vunpack.c.l.b16 %v4611
      %v4683 = vunpack.c.l.b16 %v4612
      %v4684 = vunpack.c.l.b16 %v4613
      %v4685 = vunpack.c.l.b16 %v4614
      %v4686 = vunpack.c.l.b16 %v4615
      %v4687 = vunpack.c.l.b16 %v4616
      %v4688 = vpack.c.b16 %v4657, %v4656
      %v4689 = vpack.c.b16 %v4659, %v4658
      %v4690 = vpack.c.b16 %v4661, %v4660
      %v4691 = vpack.c.b16 %v4663, %v4662
      %v4692 = vpack.c.b16 %v4665, %v4664
      %v4693 = vpack.c.b16 %v4667, %v4666
      %v4694 = vpack.c.b16 %v4669, %v4668
      %v4695 = vpack.c.b16 %v4671, %v4670
      %v4696 = vpack.c.b16 %v4673, %v4672
      %v4697 = vpack.c.b16 %v4675, %v4674
      %v4698 = vpack.c.b16 %v4677, %v4676
      %v4699 = vpack.c.b16 %v4679, %v4678
      %v4700 = vpack.c.b16 %v4681, %v4680
      %v4701 = vpack.c.b16 %v4683, %v4682
      %v4702 = vpack.c.b16 %v4685, %v4684
      %v4703 = vpack.c.b16 %v4687, %v4686
      %4720 = vmatprep.subr.bf16.mxu0 0
      %4721 = vmatpush1.bf16.msra.mxu0 %v4688
      %4722 = vmatprep.subr.bf16.mxu0 0
      %4723 = vmatpush1.bf16.msra.mxu0 %v4689
      %4724 = vmatprep.subr.bf16.mxu0 0
      %4725 = vmatpush1.bf16.msra.mxu0 %v4690
      %4726 = vmatprep.subr.bf16.mxu0 0
      %4727 = vmatpush1.bf16.msra.mxu0 %v4691
      %4728 = vmatprep.subr.bf16.mxu0 0
      %4729 = vmatpush1.bf16.msra.mxu0 %v4692
      %4730 = vmatprep.subr.bf16.mxu0 0
      %4731 = vmatpush1.bf16.msra.mxu0 %v4693
      %4732 = vmatprep.subr.bf16.mxu0 0
      %4733 = vmatpush1.bf16.msra.mxu0 %v4694
      %4734 = vmatprep.subr.bf16.mxu0 0
      %4735 = vmatpush1.bf16.msra.mxu0 %v4695
      %4736 = vmatprep.subr.bf16.mxu0 0
      %4737 = vmatpush1.bf16.msra.mxu0 %v4696
      %4738 = vmatprep.subr.bf16.mxu0 0
      %4739 = vmatpush1.bf16.msra.mxu0 %v4697
      %4740 = vmatprep.subr.bf16.mxu0 0
      %4741 = vmatpush1.bf16.msra.mxu0 %v4698
      %4742 = vmatprep.subr.bf16.mxu0 0
      %4743 = vmatpush1.bf16.msra.mxu0 %v4699
      %4744 = vmatprep.subr.bf16.mxu0 0
      %4745 = vmatpush1.bf16.msra.mxu0 %v4700
      %4746 = vmatprep.subr.bf16.mxu0 0
      %4747 = vmatpush1.bf16.msra.mxu0 %v4701
      %4748 = vmatprep.subr.bf16.mxu0 0
      %4749 = vmatpush1.bf16.msra.mxu0 %v4702
      %4750 = vmatprep.subr.bf16.mxu0 0
      %4751 = vmatpush1.bf16.msra.mxu0 %v4703
      %4752 = vmatprep.mubr.bf16.mxu0 %v4584
      %4753 = vmatmul.mubr.bf16.gmra.mrb[0].mxu0 %v4583
      %v4754 = vpop.f32.mrb[0].mxu0
      %v4755 = vadd.f32 %v4622, %v4754
      %v4756 = vpop.f32.mrb[0].mxu0
      %v4757 = vpop.f32.mrb[0].mxu0
      %v4758 = vpop.f32.mrb[0].mxu0
      %4759 = vdwg.mxu0
      %v4760 = vmul.f32 %v4755, %v4755
      %vm4761 = vcmask 44032
      %v4762 = vsel %vm4761, %v4760, 0.0
      %4763 = vadd.xlane.f32.xlu0 %v4762
      %v4764 = vpop.xlane.xlu0 %4763
      %v4765 = vrot.slane %v4764, 4
      %v4766 = vadd.f32 %v4764, %v4765
      %v4767 = vrot.slane %v4766, 2
      %v4768 = vadd.f32 %v4766, %v4767
      %v4769 = vrot.slane %v4768, 1
      %v4770 = vadd.f32 %v4768, %v4769
      %s4771 = vtos %v4770
      %v4772 = vstv %s4771
      %v4773 = vrcp.pop 24.0
      %v4774 = vmul.f32 %v4772, %v4773
      %vm4775 = vcmp.eq.s32.totalorder %v3719, 0
      %v4776 = vsel %vm4775, %v4426, 0.0
      %vm4777 = vcmp.eq.s32.totalorder %v3719, 1
      %v4778 = vstv %s4483
      %v4779 = vsel %vm4777, %v4778, 0.0
      %v4780 = vadd.f32 %v4776, %v4779
      %vm4781 = vcmp.eq.s32.totalorder %v3719, 2
      %v4782 = vstv %s4509
      %v4783 = vsel %vm4781, %v4782, 0.0
      %v4784 = vadd.f32 %v4780, %v4783
      %vm4785 = vcmp.eq.s32.totalorder %v3719, 3
      %v4786 = vsel %vm4785, %v4774, 0.0
      %v4787 = vadd.f32 %v4784, %v4786
      %4788 = vst [vmem:[%s833] sm:$0x1] %v4787
      %p4789 = scmp.lt.s32.totalorder %s37, 1
      %s4790 = scalar_select %p4789, %s37, 1
      %s4791 = scalar_lea.vmem %s26, %s4790
      // Predicated region
      $region125: #{forward.1} parent=123 // pred_check
        %p4792 = pneg %p616
      $region126: #{forward.1} parent=123 // pred_check_branch
        %4794 = sbr.rel (%p4792) target = $region128
      $region127: #{forward.1} parent=123 // pred_region
        _
      $region128: #{forward.1} parent=123 // pred_fallthru
        _
    $region124: #{forward.1} parent=5 // pred_fallthru
      _
    %p4795 = scmp.le.s32.totalorder 2, %s32
    // Predicated region
    $region129: #{forward.1} parent=5 // pred_check
      %p4796 = pneg %p4795
    $region130: #{forward.1} parent=5 // pred_check_branch
      %4798 = sbr.rel (%p4796) target = $region132
    $region131: #{forward.1} parent=5 // pred_region
      %s4799 = ssub.s32 %s32, 2
      // Predicated region
      $region133: #{forward.1} parent=131 // pred_check
        %p4800 = pneg %p622
      $region134: #{forward.1} parent=131 // pred_check_branch
        %4802 = sbr.rel (%p4800) target = $region136
      $region135: #{forward.1} parent=131 // pred_region
        %p4803 = scmp.lt.s32.totalorder %s38, 1
        %s4804 = scalar_select %p4803, %s38, 1
        %s4805 = scalar_lea.vmem %s26, %s4804
      $region136: #{forward.1} parent=131 // pred_fallthru
        _
    $region132: #{forward.1} parent=5 // pred_fallthru
      _
  $region6: #{forward.1} parent=0 // loop_footer
    %s36 = sadd.s32 1, %s32
  $region7: #{forward.1} parent=0 // loop_footer_branch
    %31 = sbr.rel target = $region3
  $region8: #{forward.1} parent=0 // loop_exit
    _

</llo_original>
